<compile_context>
chip_gen: v7x
topology: tpu7x:2x2x1
jax: 0.10.0
libtpu: 0.0.40
codegen_flags: <defaults>
</compile_context>

<pallas_src>
import functools

import jax
import jax.numpy as jnp
from jax.experimental import pallas as pl
from jax.experimental.pallas import tpu as pltpu

_LANES = 128

# Scoped-VMEM ceiling handed to Mosaic.  48 MiB is above every generation's
# scoped default (16 MiB v5e / 32 MiB v6e,v7x) and below v7x's 64 MiB physical
# VMEM; on v5e/v6e it can be raised toward ~96-100 MiB for even larger tiles.
_VMEM_LIMIT_BYTES = 48 * 1024 * 1024
# Per-call VMEM footprint targeted when auto-picking the conv row tile.
_VMEM_BUDGET_BYTES = 36 * 1024 * 1024


def _round_up(x, m):
    return (x + m - 1) // m * m


def _pad_axis(a, axis, target):
    pad = target - a.shape[axis]
    if pad == 0:
        return a
    widths = [(0, 0)] * a.ndim
    widths[axis] = (0, pad)
    return jnp.pad(a, widths)


def _largest_fitting_divisor(h, fits):
    """Largest divisor of h satisfying `fits`, preferring multiples of 8."""
    divs = [d for d in range(1, h + 1) if h % d == 0]
    ok = [d for d in divs if fits(d)]
    if not ok:
        return divs[0]
    ok8 = [d for d in ok if d % 8 == 0 or d == h]
    return max(ok8) if ok8 else max(ok)


def _pick_conv_row_tile(h, w, cin, cout, budget=_VMEM_BUDGET_BYTES):
    """Largest row tile whose per-step VMEM footprint fits the budget."""
    def usage(th):
        x_blk = 2 * th * w * cin * 4            # double-buffered input tile (<= f32)
        halos = 2 * 2 * w * cin * 4             # two 1-row halo streams
        wgt = 2 * 9 * cin * cout * 2            # bf16 weights (double-buffered)
        y_blk = 2 * th * w * cout * 2           # bf16 output tile (double-buffered)
        xpad = (th + 2) * (w + 2) * cin * 2     # halo scratch (bf16)
        col = th * w * 3 * cin * 2              # ky-split im2col scratch (bf16)
        acc = th * w * cout * 4                 # f32 accumulator
        return x_blk + halos + wgt + y_blk + xpad + col + acc + (1 << 20)
    return _largest_fitting_divisor(h, lambda th: usage(th) <= budget)


def _pick_elem_row_tile(h, w, c, budget=8 * 1024 * 1024):
    # The final BN+ReLU is purely HBM-bound: just make each block a few MiB.
    def usage(th):
        return 2 * th * w * c * (2 + 4)         # bf16 in + f32 out, double-buffered
    return _largest_fitting_divisor(h, lambda th: usage(th) <= budget)


# -------- fused conv3x3 'same' (+ prologue BN/ReLU + single-pass BN stats) -- #
def _conv3x3_kernel(x_ref, up_ref, dn_ref, w_ref, b_ref, sc_ref, sh_ref,
                    y_ref, s1_ref, s2_ref, xpad_ref, col_ref,
                    *, apply_input_bn_relu):
    # x_ref : (1, TH, W, Cin)    row tile of the raw input activation
    # up_ref: (1, 1, W, Cin)     row just above the tile (zeros at image top)
    # dn_ref: (1, 1, W, Cin)     row just below the tile (zeros at image bottom)
    # w_ref : (3, 3*Cin, Cout)   conv weight, HWIO grouped per ky, bf16
    # b_ref : (1, Cout)          conv bias (f32)
    # sc/sh : (1, Cin)           previous layer's BN scale/shift (prologue only)
    # y_ref : (1, TH, W, Cout)   conv output tile (bf16, lane-dense: Cout % 128 == 0)
    # s1/s2 : (1, 1, 1, Cout)    per-tile sum / sum-of-squares of the f32 conv output
    # xpad_ref: VMEM (TH+2, W+2, Cin)  zero-padded, prologue-applied input tile
    # col_ref : VMEM (TH*W, 3*Cin)     ky-split im2col operand (reused 3x)
    th, width, cin = x_ref.shape[1], x_ref.shape[2], x_ref.shape[3]
    cout = y_ref.shape[3]
    h = pl.program_id(1)
    nh = pl.num_programs(1)

    def prep(raw):
        # Previous layer's BatchNorm+ReLU fused as a prologue (f32 math), then
        # cast to the MXU dtype.  Never applied to the zero 'same' padding.
        v = raw.astype(jnp.float32)
        if apply_input_bn_relu:
            v = jnp.maximum(v * sc_ref[0] + sh_ref[0], 0.0)
        return v.astype(xpad_ref.dtype)

    # ---- assemble the zero-padded ('same') halo tile in VMEM ---------------
    # VMEM scratch persists across grid steps, so every border element must be
    # rewritten each step: the left/right padding columns unconditionally
    # (cheap: 2 columns), and the top/bottom halo rows either with real data or
    # with zeros under complementary pl.when conditions.  No full-tile zero
    # fill, no jnp.pad HBM copy.
    zcol = jnp.zeros((th + 2, 1, cin), xpad_ref.dtype)
    zrow = jnp.zeros((1, width, cin), xpad_ref.dtype)
    xpad_ref[:, 0:1, :] = zcol                      # left padding column
    xpad_ref[:, width + 1:width + 2, :] = zcol      # right padding column
    xpad_ref[1:th + 1, 1:width + 1, :] = prep(x_ref[0])

    @pl.when(h > 0)                                 # real row above this tile
    def _():
        xpad_ref[0:1, 1:width + 1, :] = prep(up_ref[0])

    @pl.when(h == 0)                                # image top: zero padding
    def _():
        xpad_ref[0:1, 1:width + 1, :] = zrow

    @pl.when(h < nh - 1)                            # real row below this tile
    def _():
        xpad_ref[th + 1:th + 2, 1:width + 1, :] = prep(dn_ref[0])

    @pl.when(h == nh - 1)                           # image bottom: zero padding
    def _():
        xpad_ref[th + 1:th + 2, 1:width + 1, :] = zrow

    # ---- ky-split im2col: 3 fat-K MXU matmuls (K = 3*Cin), f32 accumulate ---
    acc = None
    for ky in range(3):
        for kx in range(3):
            col_ref[:, kx * cin:(kx + 1) * cin] = (
                xpad_ref[ky:ky + th, kx:kx + width, :].reshape(th * width, cin))
        d = jnp.dot(col_ref[...], w_ref[ky],
                    preferred_element_type=jnp.float32)     # (TH*W, Cout)
        acc = d if acc is None else acc + d
    acc = acc + b_ref[0]                                     # conv bias (f32)

    # Single-pass BatchNorm statistics for THIS conv's output (finalized in JAX).
    # TODO(synk): route these reductions through a ones-row MXU matmul to ride
    # idle MXU slack instead of the XLU/VPU.
    s1_ref[...] = jnp.sum(acc, axis=0).reshape(1, 1, 1, cout)
    s2_ref[...] = jnp.sum(acc * acc, axis=0).reshape(1, 1, 1, cout)

    # Lane-dense bf16 conv-output store (Cout is a 128 multiple).
    y_ref[0] = acc.reshape(th, width, cout).astype(y_ref.dtype)


def fused_conv3x3_bn_stats(x, w_hwio, b, prev_scale=None, prev_shift=None, *,
                           row_tile=None, mxu_dtype=jnp.bfloat16,
                           out_dtype=jnp.bfloat16):
    """3x3 'same' conv with fused prologue BN+ReLU and fused BN statistics.

    Expects lane-padded channels (Cin % 128 == 0, Cout % 128 == 0).
    Returns (y, sum, sum_sq): y is (N, H, W, Cout) in `out_dtype` (bf16 HBM
    intermediate) and the per-tile channel sums are (N, n_tiles, 1, Cout) f32.
    """
    N, H, W, Cin = x.shape
    Cout = w_hwio.shape[-1]
    assert Cin % _LANES == 0 and Cout % _LANES == 0, "lane-pad channels first"

    TH = _pick_conv_row_tile(H, W, Cin, Cout) if row_tile is None else row_tile
    assert H % TH == 0, "row tile must divide H"
    nh = H // TH

    apply_prologue = prev_scale is not None
    if not apply_prologue:
        prev_scale = jnp.ones((Cin,), jnp.float32)
        prev_shift = jnp.zeros((Cin,), jnp.float32)

    # Single-row halos per row tile (2 extra rows per TH-row tile).
    # TODO(synk): switch to memory_space=pl.ANY + in-kernel halo DMA to drop
    # this XLA gather and the two extra per-step input streams.
    zrow = jnp.zeros((N, 1, W, Cin), x.dtype)
    if nh > 1:
        idx = jnp.arange(1, nh) * TH
        above = jnp.concatenate([zrow, jnp.take(x, idx - 1, axis=1)], axis=1)
        below = jnp.concatenate([jnp.take(x, idx, axis=1), zrow], axis=1)
    else:
        above, below = zrow, zrow

    # HWIO weight grouped per ky: (3, 3*Cin, Cout), bf16 MXU operand.
    w3 = w_hwio.reshape(3, 3 * Cin, Cout).astype(mxu_dtype)
    kernel = functools.partial(_conv3x3_kernel,
                               apply_input_bn_relu=apply_prologue)

    # TODO(synk): for Cout > 256 add a third ("parallel") grid axis tiling Cout
    # to 256 (128 on v5e) with matching weight/out/s1/s2 BlockSpecs.
    y, s1, s2 = pl.pallas_call(
        kernel,
        out_shape=[
            jax.ShapeDtypeStruct((N, H, W, Cout), out_dtype),
            jax.ShapeDtypeStruct((N, nh, 1, Cout), jnp.float32),
            jax.ShapeDtypeStruct((N, nh, 1, Cout), jnp.float32),
        ],
        grid=(N, nh),
        in_specs=[
            pl.BlockSpec((1, TH, W, Cin), lambda n, h: (n, h, 0, 0)),
            pl.BlockSpec((1, 1, W, Cin), lambda n, h: (n, h, 0, 0)),
            pl.BlockSpec((1, 1, W, Cin), lambda n, h: (n, h, 0, 0)),
            pl.BlockSpec((3, 3 * Cin, Cout), lambda n, h: (0, 0, 0)),
            pl.BlockSpec((1, Cout), lambda n, h: (0, 0)),
            pl.BlockSpec((1, Cin), lambda n, h: (0, 0)),
            pl.BlockSpec((1, Cin), lambda n, h: (0, 0)),
        ],
        out_specs=[
            pl.BlockSpec((1, TH, W, Cout), lambda n, h: (n, h, 0, 0)),
            pl.BlockSpec((1, 1, 1, Cout), lambda n, h: (n, h, 0, 0)),
            pl.BlockSpec((1, 1, 1, Cout), lambda n, h: (n, h, 0, 0)),
        ],
        scratch_shapes=[
            pltpu.VMEM((TH + 2, W + 2, Cin), mxu_dtype),   # padded halo tile
            pltpu.VMEM((TH * W, 3 * Cin), mxu_dtype),      # ky-split im2col
        ],
        compiler_params=pltpu.CompilerParams(
            dimension_semantics=("parallel", "parallel"),
            vmem_limit_bytes=_VMEM_LIMIT_BYTES),
    )(x, above, below, w3,
      b.reshape(1, Cout).astype(jnp.float32),
      prev_scale.reshape(1, Cin).astype(jnp.float32),
      prev_shift.reshape(1, Cin).astype(jnp.float32))
    return y, s1, s2


def _finalize_bn(psum, psumsq, gamma, beta, count, eps):
    # Tiny (C,)-vector math in plain JAX; f32 throughout.  Biased variance,
    # matching PyTorch training-mode BatchNorm normalization.
    total = jnp.sum(psum, axis=(0, 1, 2))
    total_sq = jnp.sum(psumsq, axis=(0, 1, 2))
    mean = total / count
    var = jnp.maximum(total_sq / count - mean * mean, 0.0)
    scale = gamma * jax.lax.rsqrt(var + eps)
    shift = beta - mean * scale
    return scale, shift


# ----------------- final BatchNorm + ReLU (lane-dense elementwise) ---------- #
def _bn_relu_kernel(y_ref, sc_ref, sh_ref, o_ref):
    # y_ref: (1, TH, W, C) bf16 ; sc/sh: (1, C) f32 ; o_ref: (1, TH, W, C) f32
    o_ref[0] = jnp.maximum(
        y_ref[0].astype(jnp.float32) * sc_ref[0] + sh_ref[0], 0.0
    ).astype(o_ref.dtype)


def bn_relu_apply(y_nhwc, scale, shift):
    """Final BN+ReLU; lane-dense since C is a 128 multiple, tile sized by bytes."""
    N, H, W, C = y_nhwc.shape
    TH = _pick_elem_row_tile(H, W, C)
    nh = H // TH
    # TODO(synk): alias input to output (input_output_aliases) when the
    # consumer accepts bf16; the f32 module output prevents aliasing here.
    return pl.pallas_call(
        _bn_relu_kernel,
        out_shape=jax.ShapeDtypeStruct((N, H, W, C), jnp.float32),
        grid=(N, nh),
        in_specs=[
            pl.BlockSpec((1, TH, W, C), lambda n, h: (n, h, 0, 0)),
            pl.BlockSpec((1, C), lambda n, h: (0, 0)),
            pl.BlockSpec((1, C), lambda n, h: (0, 0)),
        ],
        out_specs=pl.BlockSpec((1, TH, W, C), lambda n, h: (n, h, 0, 0)),
        compiler_params=pltpu.CompilerParams(
            dimension_semantics=("parallel", "parallel"),
            vmem_limit_bytes=_VMEM_LIMIT_BYTES),
    )(y_nhwc, scale.reshape(1, C).astype(jnp.float32),
      shift.reshape(1, C).astype(jnp.float32))


# ------------------------------ TwoConvBlock -------------------------------- #
def two_conv_block_nhwc(x, params, *, eps=1e-5, row_tile=None,
                        mxu_dtype=jnp.bfloat16):
    """NHWC core. Channels are lane-padded (zeros) internally and sliced off."""
    N, H, W, Cin = x.shape
    Cmid = params["w1"].shape[-1]
    Cout = params["w2"].shape[-1]
    cin_p = _round_up(Cin, _LANES)
    cmid_p = _round_up(Cmid, _LANES)
    cout_p = _round_up(Cout, _LANES)

    # Lane-pad channels once at the boundary: padded input channels are zero,
    # padded weights/bias/gamma/beta are zero, so padded output channels stay
    # exactly zero through conv, BN and ReLU and never affect real channels.
    xp = _pad_axis(x, 3, cin_p)
    w1 = _pad_axis(_pad_axis(params["w1"], 2, cin_p), 3, cmid_p)
    b1 = _pad_axis(params["b1"], 0, cmid_p)
    g1 = _pad_axis(params["gamma1"], 0, cmid_p)
    be1 = _pad_axis(params["beta1"], 0, cmid_p)
    w2 = _pad_axis(_pad_axis(params["w2"], 2, cmid_p), 3, cout_p)
    b2 = _pad_axis(params["b2"], 0, cout_p)
    g2 = _pad_axis(params["gamma2"], 0, cout_p)
    be2 = _pad_axis(params["beta2"], 0, cout_p)

    count = N * H * W

    # conv1 + fused single-pass BN1 statistics (y1 kept bf16 in HBM).
    y1, s1, q1 = fused_conv3x3_bn_stats(xp, w1, b1, row_tile=row_tile,
                                        mxu_dtype=mxu_dtype)
    scale1, shift1 = _finalize_bn(s1, q1, g1, be1, count, eps)

    # conv2: BN1+ReLU applied on the fly inside the kernel (no extra HBM pass),
    # plus fused single-pass BN2 statistics (y2 kept bf16 in HBM).
    y2, s2, q2 = fused_conv3x3_bn_stats(y1, w2, b2, prev_scale=scale1,
                                        prev_shift=shift1, row_tile=row_tile,
                                        mxu_dtype=mxu_dtype)
    scale2, shift2 = _finalize_bn(s2, q2, g2, be2, count, eps)

    # final BN2 + ReLU (nothing downstream to fuse it into).
    out = bn_relu_apply(y2, scale2, shift2)
    return out[..., :Cout]


def two_conv_block(x_nchw, params, *, eps=1e-5, row_tile=None,
                   mxu_dtype=jnp.bfloat16):
    # TODO(synk): keep the surrounding model NHWC (call two_conv_block_nhwc
    # directly) or fuse these boundary transposes into the first/last kernels;
    # each is a full HBM read+write done by XLA outside the kernels.
    x = jnp.transpose(x_nchw, (0, 2, 3, 1))          # NCHW -> NHWC
    out = two_conv_block_nhwc(x, params, eps=eps, row_tile=row_tile,
                              mxu_dtype=mxu_dtype)
    return jnp.transpose(out, (0, 3, 1, 2))          # NHWC -> NCHW


def init_params(key, in_channels, middle_channels, out_channels):
    k1, k2, k3, k4 = jax.random.split(key, 4)
    bound1 = 1.0 / jnp.sqrt(in_channels * 9)
    bound2 = 1.0 / jnp.sqrt(middle_channels * 9)
    return {
        # HWIO conv weights (PyTorch stores OIHW; same values, transposed layout)
        "w1": jax.random.uniform(k1, (3, 3, in_channels, middle_channels),
                                 jnp.float32, -bound1, bound1),
        "b1": jax.random.uniform(k2, (middle_channels,),
                                 jnp.float32, -bound1, bound1),
        "w2": jax.random.uniform(k3, (3, 3, middle_channels, out_channels),
                                 jnp.float32, -bound2, bound2),
        "b2": jax.random.uniform(k4, (out_channels,),
                                 jnp.float32, -bound2, bound2),
        # PyTorch BatchNorm2d default init
        "gamma1": jnp.ones((middle_channels,), jnp.float32),
        "beta1": jnp.zeros((middle_channels,), jnp.float32),
        "gamma2": jnp.ones((out_channels,), jnp.float32),
        "beta2": jnp.zeros((out_channels,), jnp.float32),
    }


# ------------------------------- reference ---------------------------------- #
def _reference(x_nchw, params, eps=1e-5, mxu_dtype=jnp.bfloat16):
    # Mirrors the kernel's numerics policy exactly: bf16 MXU operands with f32
    # accumulation, bf16 intermediate activations in HBM, f32 bias/BN/ReLU math,
    # biased (training-mode) variance.  Against a pure-f32 PyTorch reference,
    # use rtol/atol ~2e-2 instead.
    def conv(x_nhwc, w_hwio, b):
        y = jax.lax.conv_general_dilated(
            x_nhwc.astype(mxu_dtype), w_hwio.astype(mxu_dtype),
            window_strides=(1, 1), padding="SAME",
            dimension_numbers=("NHWC", "HWIO", "NHWC"),
            preferred_element_type=jnp.float32)
        return y + b

    def bn_scale_shift(y, gamma, beta):
        mean = jnp.mean(y, axis=(0, 1, 2))
        var = jnp.mean(y * y, axis=(0, 1, 2)) - mean * mean
        scale = gamma * jax.lax.rsqrt(var + eps)
        return scale, beta - mean * scale

    x = jnp.transpose(x_nchw, (0, 2, 3, 1))
    y1 = conv(x, params["w1"], params["b1"])                      # f32
    sc1, sh1 = bn_scale_shift(y1, params["gamma1"], params["beta1"])
    y1b = y1.astype(mxu_dtype)                                    # bf16 HBM intermediate
    a1 = jnp.maximum(y1b.astype(jnp.float32) * sc1 + sh1, 0.0)    # conv2 prologue
    y2 = conv(a1, params["w2"], params["b2"])
    sc2, sh2 = bn_scale_shift(y2, params["gamma2"], params["beta2"])
    y2b = y2.astype(mxu_dtype)
    out = jnp.maximum(y2b.astype(jnp.float32) * sc2 + sh2, 0.0)
    return jnp.transpose(out, (0, 3, 1, 2))


if __name__ == "__main__":
    key = jax.random.PRNGKey(0)
    kx, kp = jax.random.split(key)

    N, Cin, H, W = 2, 4, 16, 16
    Cmid, Cout = 8, 4

    x = jax.random.normal(kx, (N, Cin, H, W), jnp.float32)
    params = init_params(kp, Cin, Cmid, Cout)

    # row_tile=8 exercises the spatial tiling + halo-exchange path (grid (2, 2)).
    fwd = jax.jit(functools.partial(two_conv_block, row_tile=8))
    out = jax.block_until_ready(fwd(x, params))

    ref = _reference(x, params)
    assert out.shape == (N, Cout, H, W)
    max_err = float(jnp.max(jnp.abs(out - ref)))
    assert jnp.allclose(out, ref, rtol=1e-2, atol=1e-2), \
        f"mismatch vs reference (max abs err {max_err})"

    print("KERNEL_OK")
</pallas_src>

<mosaic_0001>
module attributes {stable_mosaic.version = 11 : i64} {
  func.func @_conv3x3_kernel(%arg0: i32, %arg1: i32, %arg2: memref<1x8x16x128xf32, #tpu.memory_space<vmem>>, %arg3: memref<1x1x16x128xf32, #tpu.memory_space<vmem>>, %arg4: memref<1x1x16x128xf32, #tpu.memory_space<vmem>>, %arg5: memref<3x384x128xbf16, #tpu.memory_space<vmem>>, %arg6: memref<1x128xf32, #tpu.memory_space<vmem>>, %arg7: memref<1x128xf32, #tpu.memory_space<vmem>>, %arg8: memref<1x128xf32, #tpu.memory_space<vmem>>, %arg9: memref<1x8x16x128xbf16, #tpu.memory_space<vmem>>, %arg10: memref<1x1x1x128xf32, #tpu.memory_space<vmem>>, %arg11: memref<1x1x1x128xf32, #tpu.memory_space<vmem>>, %arg12: memref<10x18x128xbf16, #tpu.memory_space<vmem>>, %arg13: memref<128x384xbf16, #tpu.memory_space<vmem>>) attributes {dimension_semantics = [#tpu.dimension_semantics<parallel>, #tpu.dimension_semantics<parallel>], iteration_bounds = array<i64: 2, 2>, scalar_prefetch = 0 : i64, scratch_operands = 2 : i64, tpu.core_type = #tpu.core_type<tc>, window_params = [{transform_indices = @transform_0, window_bounds = array<i64: 1, 8, 16, 128>}, {transform_indices = @transform_1, window_bounds = array<i64: 1, 1, 16, 128>}, {transform_indices = @transform_2, window_bounds = array<i64: 1, 1, 16, 128>}, {pipeline_mode = #tpu.pipeline_mode<synchronous>, transform_indices = @transform_3, window_bounds = array<i64: 3, 384, 128>}, {pipeline_mode = #tpu.pipeline_mode<synchronous>, transform_indices = @transform_4, window_bounds = array<i64: 1, 128>}, {pipeline_mode = #tpu.pipeline_mode<synchronous>, transform_indices = @transform_5, window_bounds = array<i64: 1, 128>}, {pipeline_mode = #tpu.pipeline_mode<synchronous>, transform_indices = @transform_6, window_bounds = array<i64: 1, 128>}, {transform_indices = @transform_7, window_bounds = array<i64: 1, 8, 16, 128>}, {transform_indices = @transform_8, window_bounds = array<i64: 1, 1, 1, 128>}, {transform_indices = @transform_9, window_bounds = array<i64: 1, 1, 1, 128>}]} {
    %cst = arith.constant 0.000000e+00 : bf16
    %0 = vector.broadcast %cst : bf16 to vector<10x1x128xbf16>
    %cst_0 = arith.constant 0.000000e+00 : bf16
    %1 = vector.broadcast %cst_0 : bf16 to vector<1x16x128xbf16>
    %c0 = arith.constant 0 : index
    %c0_1 = arith.constant 0 : index
    %c0_2 = arith.constant 0 : index
    %2 = vector.load %arg12[%c0, %c0_1, %c0_2] : memref<10x18x128xbf16, #tpu.memory_space<vmem>>, vector<10x1x128xbf16>
    tpu.vector_store %arg12[%c0, %c0_1, %c0_2], %0 {strides = array<i32>} : memref<10x18x128xbf16, #tpu.memory_space<vmem>>, vector<10x1x128xbf16>,
    %c0_3 = arith.constant 0 : index
    %c17 = arith.constant 17 : index
    %c0_4 = arith.constant 0 : index
    %3 = vector.load %arg12[%c0_3, %c17, %c0_4] : memref<10x18x128xbf16, #tpu.memory_space<vmem>>, vector<10x1x128xbf16>
    tpu.vector_store %arg12[%c0_3, %c17, %c0_4], %0 {strides = array<i32>} : memref<10x18x128xbf16, #tpu.memory_space<vmem>>, vector<10x1x128xbf16>,
    %c0_5 = arith.constant 0 : index
    %c0_6 = arith.constant 0 : index
    %c0_7 = arith.constant 0 : index
    %c0_8 = arith.constant 0 : index
    %4 = vector.load %arg2[%c0_5, %c0_6, %c0_7, %c0_8] : memref<1x8x16x128xf32, #tpu.memory_space<vmem>>, vector<1x8x16x128xf32>
    %5 = vector.shape_cast %4 : vector<1x8x16x128xf32> to vector<8x16x128xf32>
    %6 = arith.truncf %5 : vector<8x16x128xf32> to vector<8x16x128xbf16>
    %c1 = arith.constant 1 : index
    %c1_9 = arith.constant 1 : index
    %c0_10 = arith.constant 0 : index
    %7 = vector.load %arg12[%c1, %c1_9, %c0_10] : memref<10x18x128xbf16, #tpu.memory_space<vmem>>, vector<8x16x128xbf16>
    tpu.vector_store %arg12[%c1, %c1_9, %c0_10], %6 {strides = array<i32>} : memref<10x18x128xbf16, #tpu.memory_space<vmem>>, vector<8x16x128xbf16>,
    %c0_i32 = arith.constant 0 : i32
    %8 = arith.cmpi sgt, %arg1, %c0_i32 : i32
    %9 = arith.extui %8 : i1 to i32
    %c0_i32_11 = arith.constant 0 : i32
    %10 = arith.cmpi ne, %9, %c0_i32_11 : i32
    scf.if %10 {
      %c0_93 = arith.constant 0 : index
      %c0_94 = arith.constant 0 : index
      %c0_95 = arith.constant 0 : index
      %c0_96 = arith.constant 0 : index
      %78 = vector.load %arg3[%c0_93, %c0_94, %c0_95, %c0_96] : memref<1x1x16x128xf32, #tpu.memory_space<vmem>>, vector<1x1x16x128xf32>
      %79 = vector.shape_cast %78 : vector<1x1x16x128xf32> to vector<1x16x128xf32>
      %80 = arith.truncf %79 : vector<1x16x128xf32> to vector<1x16x128xbf16>
      %c0_97 = arith.constant 0 : index
      %c1_98 = arith.constant 1 : index
      %c0_99 = arith.constant 0 : index
      %81 = vector.load %arg12[%c0_97, %c1_98, %c0_99] : memref<10x18x128xbf16, #tpu.memory_space<vmem>>, vector<1x16x128xbf16>
      tpu.vector_store %arg12[%c0_97, %c1_98, %c0_99], %80 {strides = array<i32>} : memref<10x18x128xbf16, #tpu.memory_space<vmem>>, vector<1x16x128xbf16>,
    } else {
    }
    %c0_i32_12 = arith.constant 0 : i32
    %11 = arith.cmpi eq, %arg1, %c0_i32_12 : i32
    %12 = arith.extui %11 : i1 to i32
    %c0_i32_13 = arith.constant 0 : i32
    %13 = arith.cmpi ne, %12, %c0_i32_13 : i32
    scf.if %13 {
      %c0_93 = arith.constant 0 : index
      %c1_94 = arith.constant 1 : index
      %c0_95 = arith.constant 0 : index
      %78 = vector.load %arg12[%c0_93, %c1_94, %c0_95] : memref<10x18x128xbf16, #tpu.memory_space<vmem>>, vector<1x16x128xbf16>
      tpu.vector_store %arg12[%c0_93, %c1_94, %c0_95], %1 {strides = array<i32>} : memref<10x18x128xbf16, #tpu.memory_space<vmem>>, vector<1x16x128xbf16>,
    } else {
    }
    %c1_i32 = arith.constant 1 : i32
    %14 = arith.cmpi slt, %arg1, %c1_i32 : i32
    %15 = arith.extui %14 : i1 to i32
    %c0_i32_14 = arith.constant 0 : i32
    %16 = arith.cmpi ne, %15, %c0_i32_14 : i32
    scf.if %16 {
      %c0_93 = arith.constant 0 : index
      %c0_94 = arith.constant 0 : index
      %c0_95 = arith.constant 0 : index
      %c0_96 = arith.constant 0 : index
      %78 = vector.load %arg4[%c0_93, %c0_94, %c0_95, %c0_96] : memref<1x1x16x128xf32, #tpu.memory_space<vmem>>, vector<1x1x16x128xf32>
      %79 = vector.shape_cast %78 : vector<1x1x16x128xf32> to vector<1x16x128xf32>
      %80 = arith.truncf %79 : vector<1x16x128xf32> to vector<1x16x128xbf16>
      %c9 = arith.constant 9 : index
      %c1_97 = arith.constant 1 : index
      %c0_98 = arith.constant 0 : index
      %81 = vector.load %arg12[%c9, %c1_97, %c0_98] : memref<10x18x128xbf16, #tpu.memory_space<vmem>>, vector<1x16x128xbf16>
      tpu.vector_store %arg12[%c9, %c1_97, %c0_98], %80 {strides = array<i32>} : memref<10x18x128xbf16, #tpu.memory_space<vmem>>, vector<1x16x128xbf16>,
    } else {
    }
    %c1_i32_15 = arith.constant 1 : i32
    %17 = arith.cmpi eq, %arg1, %c1_i32_15 : i32
    %18 = arith.extui %17 : i1 to i32
    %c0_i32_16 = arith.constant 0 : i32
    %19 = arith.cmpi ne, %18, %c0_i32_16 : i32
    scf.if %19 {
      %c9 = arith.constant 9 : index
      %c1_93 = arith.constant 1 : index
      %c0_94 = arith.constant 0 : index
      %78 = vector.load %arg12[%c9, %c1_93, %c0_94] : memref<10x18x128xbf16, #tpu.memory_space<vmem>>, vector<1x16x128xbf16>
      tpu.vector_store %arg12[%c9, %c1_93, %c0_94], %1 {strides = array<i32>} : memref<10x18x128xbf16, #tpu.memory_space<vmem>>, vector<1x16x128xbf16>,
    } else {
    }
    %c0_17 = arith.constant 0 : index
    %c0_18 = arith.constant 0 : index
    %c0_19 = arith.constant 0 : index
    %20 = vector.load %arg12[%c0_17, %c0_18, %c0_19] : memref<10x18x128xbf16, #tpu.memory_space<vmem>>, vector<8x16x128xbf16>
    %21 = vector.shape_cast %20 : vector<8x16x128xbf16> to vector<128x128xbf16>
    %c0_20 = arith.constant 0 : index
    %c0_21 = arith.constant 0 : index
    %22 = vector.load %arg13[%c0_20, %c0_21] : memref<128x384xbf16, #tpu.memory_space<vmem>>, vector<128x128xbf16>
    tpu.vector_store %arg13[%c0_20, %c0_21], %21 {strides = array<i32>} : memref<128x384xbf16, #tpu.memory_space<vmem>>, vector<128x128xbf16>,
    %c0_22 = arith.constant 0 : index
    %c1_23 = arith.constant 1 : index
    %c0_24 = arith.constant 0 : index
    %23 = vector.load %arg12[%c0_22, %c1_23, %c0_24] : memref<10x18x128xbf16, #tpu.memory_space<vmem>>, vector<8x16x128xbf16>
    %24 = vector.shape_cast %23 : vector<8x16x128xbf16> to vector<128x128xbf16>
    %c0_25 = arith.constant 0 : index
    %c128 = arith.constant 128 : index
    %25 = vector.load %arg13[%c0_25, %c128] : memref<128x384xbf16, #tpu.memory_space<vmem>>, vector<128x128xbf16>
    tpu.vector_store %arg13[%c0_25, %c128], %24 {strides = array<i32>} : memref<128x384xbf16, #tpu.memory_space<vmem>>, vector<128x128xbf16>,
    %c0_26 = arith.constant 0 : index
    %c2 = arith.constant 2 : index
    %c0_27 = arith.constant 0 : index
    %26 = vector.load %arg12[%c0_26, %c2, %c0_27] : memref<10x18x128xbf16, #tpu.memory_space<vmem>>, vector<8x16x128xbf16>
    %27 = vector.shape_cast %26 : vector<8x16x128xbf16> to vector<128x128xbf16>
    %c0_28 = arith.constant 0 : index
    %c256 = arith.constant 256 : index
    %28 = vector.load %arg13[%c0_28, %c256] : memref<128x384xbf16, #tpu.memory_space<vmem>>, vector<128x128xbf16>
    tpu.vector_store %arg13[%c0_28, %c256], %27 {strides = array<i32>} : memref<128x384xbf16, #tpu.memory_space<vmem>>, vector<128x128xbf16>,
    %c0_29 = arith.constant 0 : index
    %c0_30 = arith.constant 0 : index
    %29 = vector.load %arg13[%c0_29, %c0_30] : memref<128x384xbf16, #tpu.memory_space<vmem>>, vector<128x384xbf16>
    %c0_31 = arith.constant 0 : index
    %c0_32 = arith.constant 0 : index
    %c0_33 = arith.constant 0 : index
    %30 = vector.load %arg5[%c0_31, %c0_32, %c0_33] : memref<3x384x128xbf16, #tpu.memory_space<vmem>>, vector<1x384x128xbf16>
    %31 = vector.shape_cast %30 : vector<1x384x128xbf16> to vector<384x128xbf16>
    %cst_34 = arith.constant dense<0.000000e+00> : vector<128x128xf32>
    %32 = tpu.matmul %29, %31, %cst_34 {dimension_numbers = #tpu.dot_dimension_numbers<[1], [0], [0], [1], [0, 0, 1, 1], [], []>} : vector<128x384xbf16>, vector<384x128xbf16>, vector<128x128xf32> -> vector<128x128xf32>
    %c1_35 = arith.constant 1 : index
    %c0_36 = arith.constant 0 : index
    %c0_37 = arith.constant 0 : index
    %33 = vector.load %arg12[%c1_35, %c0_36, %c0_37] : memref<10x18x128xbf16, #tpu.memory_space<vmem>>, vector<8x16x128xbf16>
    %34 = vector.shape_cast %33 : vector<8x16x128xbf16> to vector<128x128xbf16>
    %c0_38 = arith.constant 0 : index
    %c0_39 = arith.constant 0 : index
    %35 = vector.load %arg13[%c0_38, %c0_39] : memref<128x384xbf16, #tpu.memory_space<vmem>>, vector<128x128xbf16>
    tpu.vector_store %arg13[%c0_38, %c0_39], %34 {strides = array<i32>} : memref<128x384xbf16, #tpu.memory_space<vmem>>, vector<128x128xbf16>,
    %c1_40 = arith.constant 1 : index
    %c1_41 = arith.constant 1 : index
    %c0_42 = arith.constant 0 : index
    %36 = vector.load %arg12[%c1_40, %c1_41, %c0_42] : memref<10x18x128xbf16, #tpu.memory_space<vmem>>, vector<8x16x128xbf16>
    %37 = vector.shape_cast %36 : vector<8x16x128xbf16> to vector<128x128xbf16>
    %c0_43 = arith.constant 0 : index
    %c128_44 = arith.constant 128 : index
    %38 = vector.load %arg13[%c0_43, %c128_44] : memref<128x384xbf16, #tpu.memory_space<vmem>>, vector<128x128xbf16>
    tpu.vector_store %arg13[%c0_43, %c128_44], %37 {strides = array<i32>} : memref<128x384xbf16, #tpu.memory_space<vmem>>, vector<128x128xbf16>,
    %c1_45 = arith.constant 1 : index
    %c2_46 = arith.constant 2 : index
    %c0_47 = arith.constant 0 : index
    %39 = vector.load %arg12[%c1_45, %c2_46, %c0_47] : memref<10x18x128xbf16, #tpu.memory_space<vmem>>, vector<8x16x128xbf16>
    %40 = vector.shape_cast %39 : vector<8x16x128xbf16> to vector<128x128xbf16>
    %c0_48 = arith.constant 0 : index
    %c256_49 = arith.constant 256 : index
    %41 = vector.load %arg13[%c0_48, %c256_49] : memref<128x384xbf16, #tpu.memory_space<vmem>>, vector<128x128xbf16>
    tpu.vector_store %arg13[%c0_48, %c256_49], %40 {strides = array<i32>} : memref<128x384xbf16, #tpu.memory_space<vmem>>, vector<128x128xbf16>,
    %c0_50 = arith.constant 0 : index
    %c0_51 = arith.constant 0 : index
    %42 = vector.load %arg13[%c0_50, %c0_51] : memref<128x384xbf16, #tpu.memory_space<vmem>>, vector<128x384xbf16>
    %c1_52 = arith.constant 1 : index
    %c0_53 = arith.constant 0 : index
    %c0_54 = arith.constant 0 : index
    %43 = vector.load %arg5[%c1_52, %c0_53, %c0_54] : memref<3x384x128xbf16, #tpu.memory_space<vmem>>, vector<1x384x128xbf16>
    %44 = vector.shape_cast %43 : vector<1x384x128xbf16> to vector<384x128xbf16>
    %cst_55 = arith.constant dense<0.000000e+00> : vector<128x128xf32>
    %45 = tpu.matmul %42, %44, %cst_55 {dimension_numbers = #tpu.dot_dimension_numbers<[1], [0], [0], [1], [0, 0, 1, 1], [], []>} : vector<128x384xbf16>, vector<384x128xbf16>, vector<128x128xf32> -> vector<128x128xf32>
    %46 = arith.addf %32, %45 : vector<128x128xf32>
    %c2_56 = arith.constant 2 : index
    %c0_57 = arith.constant 0 : index
    %c0_58 = arith.constant 0 : index
    %47 = vector.load %arg12[%c2_56, %c0_57, %c0_58] : memref<10x18x128xbf16, #tpu.memory_space<vmem>>, vector<8x16x128xbf16>
    %48 = vector.shape_cast %47 : vector<8x16x128xbf16> to vector<128x128xbf16>
    %c0_59 = arith.constant 0 : index
    %c0_60 = arith.constant 0 : index
    %49 = vector.load %arg13[%c0_59, %c0_60] : memref<128x384xbf16, #tpu.memory_space<vmem>>, vector<128x128xbf16>
    tpu.vector_store %arg13[%c0_59, %c0_60], %48 {strides = array<i32>} : memref<128x384xbf16, #tpu.memory_space<vmem>>, vector<128x128xbf16>,
    %c2_61 = arith.constant 2 : index
    %c1_62 = arith.constant 1 : index
    %c0_63 = arith.constant 0 : index
    %50 = vector.load %arg12[%c2_61, %c1_62, %c0_63] : memref<10x18x128xbf16, #tpu.memory_space<vmem>>, vector<8x16x128xbf16>
    %51 = vector.shape_cast %50 : vector<8x16x128xbf16> to vector<128x128xbf16>
    %c0_64 = arith.constant 0 : index
    %c128_65 = arith.constant 128 : index
    %52 = vector.load %arg13[%c0_64, %c128_65] : memref<128x384xbf16, #tpu.memory_space<vmem>>, vector<128x128xbf16>
    tpu.vector_store %arg13[%c0_64, %c128_65], %51 {strides = array<i32>} : memref<128x384xbf16, #tpu.memory_space<vmem>>, vector<128x128xbf16>,
    %c2_66 = arith.constant 2 : index
    %c2_67 = arith.constant 2 : index
    %c0_68 = arith.constant 0 : index
    %53 = vector.load %arg12[%c2_66, %c2_67, %c0_68] : memref<10x18x128xbf16, #tpu.memory_space<vmem>>, vector<8x16x128xbf16>
    %54 = vector.shape_cast %53 : vector<8x16x128xbf16> to vector<128x128xbf16>
    %c0_69 = arith.constant 0 : index
    %c256_70 = arith.constant 256 : index
    %55 = vector.load %arg13[%c0_69, %c256_70] : memref<128x384xbf16, #tpu.memory_space<vmem>>, vector<128x128xbf16>
    tpu.vector_store %arg13[%c0_69, %c256_70], %54 {strides = array<i32>} : memref<128x384xbf16, #tpu.memory_space<vmem>>, vector<128x128xbf16>,
    %c0_71 = arith.constant 0 : index
    %c0_72 = arith.constant 0 : index
    %56 = vector.load %arg13[%c0_71, %c0_72] : memref<128x384xbf16, #tpu.memory_space<vmem>>, vector<128x384xbf16>
    %c2_73 = arith.constant 2 : index
    %c0_74 = arith.constant 0 : index
    %c0_75 = arith.constant 0 : index
    %57 = vector.load %arg5[%c2_73, %c0_74, %c0_75] : memref<3x384x128xbf16, #tpu.memory_space<vmem>>, vector<1x384x128xbf16>
    %58 = vector.shape_cast %57 : vector<1x384x128xbf16> to vector<384x128xbf16>
    %cst_76 = arith.constant dense<0.000000e+00> : vector<128x128xf32>
    %59 = tpu.matmul %56, %58, %cst_76 {dimension_numbers = #tpu.dot_dimension_numbers<[1], [0], [0], [1], [0, 0, 1, 1], [], []>} : vector<128x384xbf16>, vector<384x128xbf16>, vector<128x128xf32> -> vector<128x128xf32>
    %60 = arith.addf %46, %59 : vector<128x128xf32>
    %c0_77 = arith.constant 0 : index
    %c0_78 = arith.constant 0 : index
    %61 = vector.load %arg6[%c0_77, %c0_78] : memref<1x128xf32, #tpu.memory_space<vmem>>, vector<1x128xf32>
    %62 = vector.shape_cast %61 : vector<1x128xf32> to vector<128xf32>
    %63 = vector.shape_cast %62 : vector<128xf32> to vector<1x128xf32>
    %64 = vector.broadcast %63 : vector<1x128xf32> to vector<128x128xf32>
    %65 = arith.addf %60, %64 : vector<128x128xf32>
    %cst_79 = arith.constant dense<0.000000e+00> : vector<128xf32>
    %66 = vector.multi_reduction <add>, %65, %cst_79 [0] : vector<128x128xf32> to vector<128xf32>
    %67 = vector.shape_cast %66 : vector<128xf32> to vector<1x1x1x128xf32>
    %c0_80 = arith.constant 0 : index
    %c0_81 = arith.constant 0 : index
    %c0_82 = arith.constant 0 : index
    %c0_83 = arith.constant 0 : index
    %68 = vector.load %arg10[%c0_80, %c0_81, %c0_82, %c0_83] : memref<1x1x1x128xf32, #tpu.memory_space<vmem>>, vector<1x1x1x128xf32>
    tpu.vector_store %arg10[%c0_80, %c0_81, %c0_82, %c0_83], %67 {strides = array<i32>} : memref<1x1x1x128xf32, #tpu.memory_space<vmem>>, vector<1x1x1x128xf32>,
    %69 = arith.mulf %65, %65 : vector<128x128xf32>
    %cst_84 = arith.constant dense<0.000000e+00> : vector<128xf32>
    %70 = vector.multi_reduction <add>, %69, %cst_84 [0] : vector<128x128xf32> to vector<128xf32>
    %71 = vector.shape_cast %70 : vector<128xf32> to vector<1x1x1x128xf32>
    %c0_85 = arith.constant 0 : index
    %c0_86 = arith.constant 0 : index
    %c0_87 = arith.constant 0 : index
    %c0_88 = arith.constant 0 : index
    %72 = vector.load %arg11[%c0_85, %c0_86, %c0_87, %c0_88] : memref<1x1x1x128xf32, #tpu.memory_space<vmem>>, vector<1x1x1x128xf32>
    tpu.vector_store %arg11[%c0_85, %c0_86, %c0_87, %c0_88], %71 {strides = array<i32>} : memref<1x1x1x128xf32, #tpu.memory_space<vmem>>, vector<1x1x1x128xf32>,
    %73 = vector.shape_cast %65 : vector<128x128xf32> to vector<8x16x128xf32>
    %74 = arith.truncf %73 : vector<8x16x128xf32> to vector<8x16x128xbf16>
    %c0_89 = arith.constant 0 : index
    %c0_90 = arith.constant 0 : index
    %c0_91 = arith.constant 0 : index
    %c0_92 = arith.constant 0 : index
    %75 = vector.load %arg9[%c0_89, %c0_90, %c0_91, %c0_92] : memref<1x8x16x128xbf16, #tpu.memory_space<vmem>>, vector<1x8x16x128xbf16>
    %76 = vector.shape_cast %75 : vector<1x8x16x128xbf16> to vector<8x16x128xbf16>
    %77 = vector.shape_cast %74 : vector<8x16x128xbf16> to vector<1x8x16x128xbf16>
    tpu.vector_store %arg9[%c0_89, %c0_90, %c0_91, %c0_92], %77 {strides = array<i32>} : memref<1x8x16x128xbf16, #tpu.memory_space<vmem>>, vector<1x8x16x128xbf16>,
    return
  }
  func.func @transform_0(%arg0: i32, %arg1: i32) -> (i32, i32, i32, i32) {
    %c0_i32 = arith.constant 0 : i32
    %c0_i32_0 = arith.constant 0 : i32
    %c0_i32_1 = arith.constant 0 : i32
    return %arg0, %arg1, %c0_i32, %c0_i32_0 : i32, i32, i32, i32
  }
  func.func @transform_1(%arg0: i32, %arg1: i32) -> (i32, i32, i32, i32) {
    %c0_i32 = arith.constant 0 : i32
    %c0_i32_0 = arith.constant 0 : i32
    %c0_i32_1 = arith.constant 0 : i32
    return %arg0, %arg1, %c0_i32, %c0_i32_0 : i32, i32, i32, i32
  }
  func.func @transform_2(%arg0: i32, %arg1: i32) -> (i32, i32, i32, i32) {
    %c0_i32 = arith.constant 0 : i32
    %c0_i32_0 = arith.constant 0 : i32
    %c0_i32_1 = arith.constant 0 : i32
    return %arg0, %arg1, %c0_i32, %c0_i32_0 : i32, i32, i32, i32
  }
  func.func @transform_3(%arg0: i32, %arg1: i32) -> (i32, i32, i32) {
    %c0_i32 = arith.constant 0 : i32
    %c0_i32_0 = arith.constant 0 : i32
    %c0_i32_1 = arith.constant 0 : i32
    %c0_i32_2 = arith.constant 0 : i32
    return %c0_i32, %c0_i32_0, %c0_i32_1 : i32, i32, i32
  }
  func.func @transform_4(%arg0: i32, %arg1: i32) -> (i32, i32) {
    %c0_i32 = arith.constant 0 : i32
    %c0_i32_0 = arith.constant 0 : i32
    %c0_i32_1 = arith.constant 0 : i32
    return %c0_i32, %c0_i32_0 : i32, i32
  }
  func.func @transform_5(%arg0: i32, %arg1: i32) -> (i32, i32) {
    %c0_i32 = arith.constant 0 : i32
    %c0_i32_0 = arith.constant 0 : i32
    %c0_i32_1 = arith.constant 0 : i32
    return %c0_i32, %c0_i32_0 : i32, i32
  }
  func.func @transform_6(%arg0: i32, %arg1: i32) -> (i32, i32) {
    %c0_i32 = arith.constant 0 : i32
    %c0_i32_0 = arith.constant 0 : i32
    %c0_i32_1 = arith.constant 0 : i32
    return %c0_i32, %c0_i32_0 : i32, i32
  }
  func.func @transform_7(%arg0: i32, %arg1: i32) -> (i32, i32, i32, i32) {
    %c0_i32 = arith.constant 0 : i32
    %c0_i32_0 = arith.constant 0 : i32
    %c0_i32_1 = arith.constant 0 : i32
    return %arg0, %arg1, %c0_i32, %c0_i32_0 : i32, i32, i32, i32
  }
  func.func @transform_8(%arg0: i32, %arg1: i32) -> (i32, i32, i32, i32) {
    %c0_i32 = arith.constant 0 : i32
    %c0_i32_0 = arith.constant 0 : i32
    %c0_i32_1 = arith.constant 0 : i32
    return %arg0, %arg1, %c0_i32, %c0_i32_0 : i32, i32, i32, i32
  }
  func.func @transform_9(%arg0: i32, %arg1: i32) -> (i32, i32, i32, i32) {
    %c0_i32 = arith.constant 0 : i32
    %c0_i32_0 = arith.constant 0 : i32
    %c0_i32_1 = arith.constant 0 : i32
    return %arg0, %arg1, %c0_i32, %c0_i32_0 : i32, i32, i32, i32
  }
}

module attributes {stable_mosaic.version = 11 : i64} {
  func.func @_bn_relu_kernel(%arg0: i32, %arg1: i32, %arg2: memref<1x16x16x128xbf16, #tpu.memory_space<vmem>>, %arg3: memref<1x128xf32, #tpu.memory_space<vmem>>, %arg4: memref<1x128xf32, #tpu.memory_space<vmem>>, %arg5: memref<1x16x16x128xf32, #tpu.memory_space<vmem>>) attributes {dimension_semantics = [#tpu.dimension_semantics<parallel>, #tpu.dimension_semantics<parallel>], iteration_bounds = array<i64: 2, 1>, scalar_prefetch = 0 : i64, scratch_operands = 0 : i64, tpu.core_type = #tpu.core_type<tc>, window_params = [{transform_indices = @transform_0, window_bounds = array<i64: 1, 16, 16, 128>}, {pipeline_mode = #tpu.pipeline_mode<synchronous>, transform_indices = @transform_1, window_bounds = array<i64: 1, 128>}, {pipeline_mode = #tpu.pipeline_mode<synchronous>, transform_indices = @transform_2, window_bounds = array<i64: 1, 128>}, {transform_indices = @transform_3, window_bounds = array<i64: 1, 16, 16, 128>}]} {
    %c0 = arith.constant 0 : index
    %c0_0 = arith.constant 0 : index
    %c0_1 = arith.constant 0 : index
    %c0_2 = arith.constant 0 : index
    %0 = vector.load %arg2[%c0, %c0_0, %c0_1, %c0_2] : memref<1x16x16x128xbf16, #tpu.memory_space<vmem>>, vector<1x16x16x128xbf16>
    %1 = vector.shape_cast %0 : vector<1x16x16x128xbf16> to vector<16x16x128xbf16>
    %2 = arith.extf %1 : vector<16x16x128xbf16> to vector<16x16x128xf32>
    %c0_3 = arith.constant 0 : index
    %c0_4 = arith.constant 0 : index
    %3 = vector.load %arg3[%c0_3, %c0_4] : memref<1x128xf32, #tpu.memory_space<vmem>>, vector<1x128xf32>
    %4 = vector.shape_cast %3 : vector<1x128xf32> to vector<128xf32>
    %5 = vector.shape_cast %4 : vector<128xf32> to vector<1x1x128xf32>
    %6 = vector.broadcast %5 : vector<1x1x128xf32> to vector<16x16x128xf32>
    %7 = arith.mulf %2, %6 : vector<16x16x128xf32>
    %c0_5 = arith.constant 0 : index
    %c0_6 = arith.constant 0 : index
    %8 = vector.load %arg4[%c0_5, %c0_6] : memref<1x128xf32, #tpu.memory_space<vmem>>, vector<1x128xf32>
    %9 = vector.shape_cast %8 : vector<1x128xf32> to vector<128xf32>
    %10 = vector.shape_cast %9 : vector<128xf32> to vector<1x1x128xf32>
    %11 = vector.broadcast %10 : vector<1x1x128xf32> to vector<16x16x128xf32>
    %12 = arith.addf %7, %11 : vector<16x16x128xf32>
    %cst = arith.constant 0.000000e+00 : f32
    %13 = vector.broadcast %cst : f32 to vector<16x16x128xf32>
    %14 = arith.maximumf %12, %13 : vector<16x16x128xf32>
    %c0_7 = arith.constant 0 : index
    %c0_8 = arith.constant 0 : index
    %c0_9 = arith.constant 0 : index
    %c0_10 = arith.constant 0 : index
    %15 = vector.load %arg5[%c0_7, %c0_8, %c0_9, %c0_10] : memref<1x16x16x128xf32, #tpu.memory_space<vmem>>, vector<1x16x16x128xf32>
    %16 = vector.shape_cast %15 : vector<1x16x16x128xf32> to vector<16x16x128xf32>
    %17 = vector.shape_cast %14 : vector<16x16x128xf32> to vector<1x16x16x128xf32>
    tpu.vector_store %arg5[%c0_7, %c0_8, %c0_9, %c0_10], %17 {strides = array<i32>} : memref<1x16x16x128xf32, #tpu.memory_space<vmem>>, vector<1x16x16x128xf32>,
    return
  }
  func.func @transform_0(%arg0: i32, %arg1: i32) -> (i32, i32, i32, i32) {
    %c0_i32 = arith.constant 0 : i32
    %c0_i32_0 = arith.constant 0 : i32
    %c0_i32_1 = arith.constant 0 : i32
    return %arg0, %arg1, %c0_i32, %c0_i32_0 : i32, i32, i32, i32
  }
  func.func @transform_1(%arg0: i32, %arg1: i32) -> (i32, i32) {
    %c0_i32 = arith.constant 0 : i32
    %c0_i32_0 = arith.constant 0 : i32
    %c0_i32_1 = arith.constant 0 : i32
    return %c0_i32, %c0_i32_0 : i32, i32
  }
  func.func @transform_2(%arg0: i32, %arg1: i32) -> (i32, i32) {
    %c0_i32 = arith.constant 0 : i32
    %c0_i32_0 = arith.constant 0 : i32
    %c0_i32_1 = arith.constant 0 : i32
    return %c0_i32, %c0_i32_0 : i32, i32
  }
  func.func @transform_3(%arg0: i32, %arg1: i32) -> (i32, i32, i32, i32) {
    %c0_i32 = arith.constant 0 : i32
    %c0_i32_0 = arith.constant 0 : i32
    %c0_i32_1 = arith.constant 0 : i32
    return %arg0, %arg1, %c0_i32, %c0_i32_0 : i32, i32, i32, i32
  }
}

module attributes {stable_mosaic.version = 11 : i64} {
  func.func @_conv3x3_kernel(%arg0: i32, %arg1: i32, %arg2: memref<1x8x16x128xbf16, #tpu.memory_space<vmem>>, %arg3: memref<1x1x16x128xbf16, #tpu.memory_space<vmem>>, %arg4: memref<1x1x16x128xbf16, #tpu.memory_space<vmem>>, %arg5: memref<3x384x128xbf16, #tpu.memory_space<vmem>>, %arg6: memref<1x128xf32, #tpu.memory_space<vmem>>, %arg7: memref<1x128xf32, #tpu.memory_space<vmem>>, %arg8: memref<1x128xf32, #tpu.memory_space<vmem>>, %arg9: memref<1x8x16x128xbf16, #tpu.memory_space<vmem>>, %arg10: memref<1x1x1x128xf32, #tpu.memory_space<vmem>>, %arg11: memref<1x1x1x128xf32, #tpu.memory_space<vmem>>, %arg12: memref<10x18x128xbf16, #tpu.memory_space<vmem>>, %arg13: memref<128x384xbf16, #tpu.memory_space<vmem>>) attributes {dimension_semantics = [#tpu.dimension_semantics<parallel>, #tpu.dimension_semantics<parallel>], iteration_bounds = array<i64: 2, 2>, scalar_prefetch = 0 : i64, scratch_operands = 2 : i64, tpu.core_type = #tpu.core_type<tc>, window_params = [{transform_indices = @transform_0, window_bounds = array<i64: 1, 8, 16, 128>}, {transform_indices = @transform_1, window_bounds = array<i64: 1, 1, 16, 128>}, {transform_indices = @transform_2, window_bounds = array<i64: 1, 1, 16, 128>}, {pipeline_mode = #tpu.pipeline_mode<synchronous>, transform_indices = @transform_3, window_bounds = array<i64: 3, 384, 128>}, {pipeline_mode = #tpu.pipeline_mode<synchronous>, transform_indices = @transform_4, window_bounds = array<i64: 1, 128>}, {pipeline_mode = #tpu.pipeline_mode<synchronous>, transform_indices = @transform_5, window_bounds = array<i64: 1, 128>}, {pipeline_mode = #tpu.pipeline_mode<synchronous>, transform_indices = @transform_6, window_bounds = array<i64: 1, 128>}, {transform_indices = @transform_7, window_bounds = array<i64: 1, 8, 16, 128>}, {transform_indices = @transform_8, window_bounds = array<i64: 1, 1, 1, 128>}, {transform_indices = @transform_9, window_bounds = array<i64: 1, 1, 1, 128>}]} {
    %cst = arith.constant 0.000000e+00 : bf16
    %0 = vector.broadcast %cst : bf16 to vector<10x1x128xbf16>
    %cst_0 = arith.constant 0.000000e+00 : bf16
    %1 = vector.broadcast %cst_0 : bf16 to vector<1x16x128xbf16>
    %c0 = arith.constant 0 : index
    %c0_1 = arith.constant 0 : index
    %c0_2 = arith.constant 0 : index
    %2 = vector.load %arg12[%c0, %c0_1, %c0_2] : memref<10x18x128xbf16, #tpu.memory_space<vmem>>, vector<10x1x128xbf16>
    tpu.vector_store %arg12[%c0, %c0_1, %c0_2], %0 {strides = array<i32>} : memref<10x18x128xbf16, #tpu.memory_space<vmem>>, vector<10x1x128xbf16>,
    %c0_3 = arith.constant 0 : index
    %c17 = arith.constant 17 : index
    %c0_4 = arith.constant 0 : index
    %3 = vector.load %arg12[%c0_3, %c17, %c0_4] : memref<10x18x128xbf16, #tpu.memory_space<vmem>>, vector<10x1x128xbf16>
    tpu.vector_store %arg12[%c0_3, %c17, %c0_4], %0 {strides = array<i32>} : memref<10x18x128xbf16, #tpu.memory_space<vmem>>, vector<10x1x128xbf16>,
    %c0_5 = arith.constant 0 : index
    %c0_6 = arith.constant 0 : index
    %c0_7 = arith.constant 0 : index
    %c0_8 = arith.constant 0 : index
    %4 = vector.load %arg2[%c0_5, %c0_6, %c0_7, %c0_8] : memref<1x8x16x128xbf16, #tpu.memory_space<vmem>>, vector<1x8x16x128xbf16>
    %5 = vector.shape_cast %4 : vector<1x8x16x128xbf16> to vector<8x16x128xbf16>
    %6 = arith.extf %5 : vector<8x16x128xbf16> to vector<8x16x128xf32>
    %c0_9 = arith.constant 0 : index
    %c0_10 = arith.constant 0 : index
    %7 = vector.load %arg7[%c0_9, %c0_10] : memref<1x128xf32, #tpu.memory_space<vmem>>, vector<1x128xf32>
    %8 = vector.shape_cast %7 : vector<1x128xf32> to vector<128xf32>
    %9 = vector.shape_cast %8 : vector<128xf32> to vector<1x1x128xf32>
    %10 = vector.broadcast %9 : vector<1x1x128xf32> to vector<8x16x128xf32>
    %11 = arith.mulf %6, %10 : vector<8x16x128xf32>
    %c0_11 = arith.constant 0 : index
    %c0_12 = arith.constant 0 : index
    %12 = vector.load %arg8[%c0_11, %c0_12] : memref<1x128xf32, #tpu.memory_space<vmem>>, vector<1x128xf32>
    %13 = vector.shape_cast %12 : vector<1x128xf32> to vector<128xf32>
    %14 = vector.shape_cast %13 : vector<128xf32> to vector<1x1x128xf32>
    %15 = vector.broadcast %14 : vector<1x1x128xf32> to vector<8x16x128xf32>
    %16 = arith.addf %11, %15 : vector<8x16x128xf32>
    %cst_13 = arith.constant 0.000000e+00 : f32
    %17 = vector.broadcast %cst_13 : f32 to vector<8x16x128xf32>
    %18 = arith.maximumf %16, %17 : vector<8x16x128xf32>
    %19 = arith.truncf %18 : vector<8x16x128xf32> to vector<8x16x128xbf16>
    %c1 = arith.constant 1 : index
    %c1_14 = arith.constant 1 : index
    %c0_15 = arith.constant 0 : index
    %20 = vector.load %arg12[%c1, %c1_14, %c0_15] : memref<10x18x128xbf16, #tpu.memory_space<vmem>>, vector<8x16x128xbf16>
    tpu.vector_store %arg12[%c1, %c1_14, %c0_15], %19 {strides = array<i32>} : memref<10x18x128xbf16, #tpu.memory_space<vmem>>, vector<8x16x128xbf16>,
    %c0_i32 = arith.constant 0 : i32
    %21 = arith.cmpi sgt, %arg1, %c0_i32 : i32
    %22 = arith.extui %21 : i1 to i32
    %c0_i32_16 = arith.constant 0 : i32
    %23 = arith.cmpi ne, %22, %c0_i32_16 : i32
    scf.if %23 {
      %c0_98 = arith.constant 0 : index
      %c0_99 = arith.constant 0 : index
      %c0_100 = arith.constant 0 : index
      %c0_101 = arith.constant 0 : index
      %91 = vector.load %arg3[%c0_98, %c0_99, %c0_100, %c0_101] : memref<1x1x16x128xbf16, #tpu.memory_space<vmem>>, vector<1x1x16x128xbf16>
      %92 = vector.shape_cast %91 : vector<1x1x16x128xbf16> to vector<1x16x128xbf16>
      %93 = arith.extf %92 : vector<1x16x128xbf16> to vector<1x16x128xf32>
      %c0_102 = arith.constant 0 : index
      %c0_103 = arith.constant 0 : index
      %94 = vector.load %arg7[%c0_102, %c0_103] : memref<1x128xf32, #tpu.memory_space<vmem>>, vector<1x128xf32>
      %95 = vector.shape_cast %94 : vector<1x128xf32> to vector<128xf32>
      %96 = vector.shape_cast %95 : vector<128xf32> to vector<1x1x128xf32>
      %97 = vector.broadcast %96 : vector<1x1x128xf32> to vector<1x16x128xf32>
      %98 = arith.mulf %93, %97 : vector<1x16x128xf32>
      %c0_104 = arith.constant 0 : index
      %c0_105 = arith.constant 0 : index
      %99 = vector.load %arg8[%c0_104, %c0_105] : memref<1x128xf32, #tpu.memory_space<vmem>>, vector<1x128xf32>
      %100 = vector.shape_cast %99 : vector<1x128xf32> to vector<128xf32>
      %101 = vector.shape_cast %100 : vector<128xf32> to vector<1x1x128xf32>
      %102 = vector.broadcast %101 : vector<1x1x128xf32> to vector<1x16x128xf32>
      %103 = arith.addf %98, %102 : vector<1x16x128xf32>
      %cst_106 = arith.constant 0.000000e+00 : f32
      %104 = vector.broadcast %cst_106 : f32 to vector<1x16x128xf32>
      %105 = arith.maximumf %103, %104 : vector<1x16x128xf32>
      %106 = arith.truncf %105 : vector<1x16x128xf32> to vector<1x16x128xbf16>
      %c0_107 = arith.constant 0 : index
      %c1_108 = arith.constant 1 : index
      %c0_109 = arith.constant 0 : index
      %107 = vector.load %arg12[%c0_107, %c1_108, %c0_109] : memref<10x18x128xbf16, #tpu.memory_space<vmem>>, vector<1x16x128xbf16>
      tpu.vector_store %arg12[%c0_107, %c1_108, %c0_109], %106 {strides = array<i32>} : memref<10x18x128xbf16, #tpu.memory_space<vmem>>, vector<1x16x128xbf16>,
    } else {
    }
    %c0_i32_17 = arith.constant 0 : i32
    %24 = arith.cmpi eq, %arg1, %c0_i32_17 : i32
    %25 = arith.extui %24 : i1 to i32
    %c0_i32_18 = arith.constant 0 : i32
    %26 = arith.cmpi ne, %25, %c0_i32_18 : i32
    scf.if %26 {
      %c0_98 = arith.constant 0 : index
      %c1_99 = arith.constant 1 : index
      %c0_100 = arith.constant 0 : index
      %91 = vector.load %arg12[%c0_98, %c1_99, %c0_100] : memref<10x18x128xbf16, #tpu.memory_space<vmem>>, vector<1x16x128xbf16>
      tpu.vector_store %arg12[%c0_98, %c1_99, %c0_100], %1 {strides = array<i32>} : memref<10x18x128xbf16, #tpu.memory_space<vmem>>, vector<1x16x128xbf16>,
    } else {
    }
    %c1_i32 = arith.constant 1 : i32
    %27 = arith.cmpi slt, %arg1, %c1_i32 : i32
    %28 = arith.extui %27 : i1 to i32
    %c0_i32_19 = arith.constant 0 : i32
    %29 = arith.cmpi ne, %28, %c0_i32_19 : i32
    scf.if %29 {
      %c0_98 = arith.constant 0 : index
      %c0_99 = arith.constant 0 : index
      %c0_100 = arith.constant 0 : index
      %c0_101 = arith.constant 0 : index
      %91 = vector.load %arg4[%c0_98, %c0_99, %c0_100, %c0_101] : memref<1x1x16x128xbf16, #tpu.memory_space<vmem>>, vector<1x1x16x128xbf16>
      %92 = vector.shape_cast %91 : vector<1x1x16x128xbf16> to vector<1x16x128xbf16>
      %93 = arith.extf %92 : vector<1x16x128xbf16> to vector<1x16x128xf32>
      %c0_102 = arith.constant 0 : index
      %c0_103 = arith.constant 0 : index
      %94 = vector.load %arg7[%c0_102, %c0_103] : memref<1x128xf32, #tpu.memory_space<vmem>>, vector<1x128xf32>
      %95 = vector.shape_cast %94 : vector<1x128xf32> to vector<128xf32>
      %96 = vector.shape_cast %95 : vector<128xf32> to vector<1x1x128xf32>
      %97 = vector.broadcast %96 : vector<1x1x128xf32> to vector<1x16x128xf32>
      %98 = arith.mulf %93, %97 : vector<1x16x128xf32>
      %c0_104 = arith.constant 0 : index
      %c0_105 = arith.constant 0 : index
      %99 = vector.load %arg8[%c0_104, %c0_105] : memref<1x128xf32, #tpu.memory_space<vmem>>, vector<1x128xf32>
      %100 = vector.shape_cast %99 : vector<1x128xf32> to vector<128xf32>
      %101 = vector.shape_cast %100 : vector<128xf32> to vector<1x1x128xf32>
      %102 = vector.broadcast %101 : vector<1x1x128xf32> to vector<1x16x128xf32>
      %103 = arith.addf %98, %102 : vector<1x16x128xf32>
      %cst_106 = arith.constant 0.000000e+00 : f32
      %104 = vector.broadcast %cst_106 : f32 to vector<1x16x128xf32>
      %105 = arith.maximumf %103, %104 : vector<1x16x128xf32>
      %106 = arith.truncf %105 : vector<1x16x128xf32> to vector<1x16x128xbf16>
      %c9 = arith.constant 9 : index
      %c1_107 = arith.constant 1 : index
      %c0_108 = arith.constant 0 : index
      %107 = vector.load %arg12[%c9, %c1_107, %c0_108] : memref<10x18x128xbf16, #tpu.memory_space<vmem>>, vector<1x16x128xbf16>
      tpu.vector_store %arg12[%c9, %c1_107, %c0_108], %106 {strides = array<i32>} : memref<10x18x128xbf16, #tpu.memory_space<vmem>>, vector<1x16x128xbf16>,
    } else {
    }
    %c1_i32_20 = arith.constant 1 : i32
    %30 = arith.cmpi eq, %arg1, %c1_i32_20 : i32
    %31 = arith.extui %30 : i1 to i32
    %c0_i32_21 = arith.constant 0 : i32
    %32 = arith.cmpi ne, %31, %c0_i32_21 : i32
    scf.if %32 {
      %c9 = arith.constant 9 : index
      %c1_98 = arith.constant 1 : index
      %c0_99 = arith.constant 0 : index
      %91 = vector.load %arg12[%c9, %c1_98, %c0_99] : memref<10x18x128xbf16, #tpu.memory_space<vmem>>, vector<1x16x128xbf16>
      tpu.vector_store %arg12[%c9, %c1_98, %c0_99], %1 {strides = array<i32>} : memref<10x18x128xbf16, #tpu.memory_space<vmem>>, vector<1x16x128xbf16>,
    } else {
    }
    %c0_22 = arith.constant 0 : index
    %c0_23 = arith.constant 0 : index
    %c0_24 = arith.constant 0 : index
    %33 = vector.load %arg12[%c0_22, %c0_23, %c0_24] : memref<10x18x128xbf16, #tpu.memory_space<vmem>>, vector<8x16x128xbf16>
    %34 = vector.shape_cast %33 : vector<8x16x128xbf16> to vector<128x128xbf16>
    %c0_25 = arith.constant 0 : index
    %c0_26 = arith.constant 0 : index
    %35 = vector.load %arg13[%c0_25, %c0_26] : memref<128x384xbf16, #tpu.memory_space<vmem>>, vector<128x128xbf16>
    tpu.vector_store %arg13[%c0_25, %c0_26], %34 {strides = array<i32>} : memref<128x384xbf16, #tpu.memory_space<vmem>>, vector<128x128xbf16>,
    %c0_27 = arith.constant 0 : index
    %c1_28 = arith.constant 1 : index
    %c0_29 = arith.constant 0 : index
    %36 = vector.load %arg12[%c0_27, %c1_28, %c0_29] : memref<10x18x128xbf16, #tpu.memory_space<vmem>>, vector<8x16x128xbf16>
    %37 = vector.shape_cast %36 : vector<8x16x128xbf16> to vector<128x128xbf16>
    %c0_30 = arith.constant 0 : index
    %c128 = arith.constant 128 : index
    %38 = vector.load %arg13[%c0_30, %c128] : memref<128x384xbf16, #tpu.memory_space<vmem>>, vector<128x128xbf16>
    tpu.vector_store %arg13[%c0_30, %c128], %37 {strides = array<i32>} : memref<128x384xbf16, #tpu.memory_space<vmem>>, vector<128x128xbf16>,
    %c0_31 = arith.constant 0 : index
    %c2 = arith.constant 2 : index
    %c0_32 = arith.constant 0 : index
    %39 = vector.load %arg12[%c0_31, %c2, %c0_32] : memref<10x18x128xbf16, #tpu.memory_space<vmem>>, vector<8x16x128xbf16>
    %40 = vector.shape_cast %39 : vector<8x16x128xbf16> to vector<128x128xbf16>
    %c0_33 = arith.constant 0 : index
    %c256 = arith.constant 256 : index
    %41 = vector.load %arg13[%c0_33, %c256] : memref<128x384xbf16, #tpu.memory_space<vmem>>, vector<128x128xbf16>
    tpu.vector_store %arg13[%c0_33, %c256], %40 {strides = array<i32>} : memref<128x384xbf16, #tpu.memory_space<vmem>>, vector<128x128xbf16>,
    %c0_34 = arith.constant 0 : index
    %c0_35 = arith.constant 0 : index
    %42 = vector.load %arg13[%c0_34, %c0_35] : memref<128x384xbf16, #tpu.memory_space<vmem>>, vector<128x384xbf16>
    %c0_36 = arith.constant 0 : index
    %c0_37 = arith.constant 0 : index
    %c0_38 = arith.constant 0 : index
    %43 = vector.load %arg5[%c0_36, %c0_37, %c0_38] : memref<3x384x128xbf16, #tpu.memory_space<vmem>>, vector<1x384x128xbf16>
    %44 = vector.shape_cast %43 : vector<1x384x128xbf16> to vector<384x128xbf16>
    %cst_39 = arith.constant dense<0.000000e+00> : vector<128x128xf32>
    %45 = tpu.matmul %42, %44, %cst_39 {dimension_numbers = #tpu.dot_dimension_numbers<[1], [0], [0], [1], [0, 0, 1, 1], [], []>} : vector<128x384xbf16>, vector<384x128xbf16>, vector<128x128xf32> -> vector<128x128xf32>
    %c1_40 = arith.constant 1 : index
    %c0_41 = arith.constant 0 : index
    %c0_42 = arith.constant 0 : index
    %46 = vector.load %arg12[%c1_40, %c0_41, %c0_42] : memref<10x18x128xbf16, #tpu.memory_space<vmem>>, vector<8x16x128xbf16>
    %47 = vector.shape_cast %46 : vector<8x16x128xbf16> to vector<128x128xbf16>
    %c0_43 = arith.constant 0 : index
    %c0_44 = arith.constant 0 : index
    %48 = vector.load %arg13[%c0_43, %c0_44] : memref<128x384xbf16, #tpu.memory_space<vmem>>, vector<128x128xbf16>
    tpu.vector_store %arg13[%c0_43, %c0_44], %47 {strides = array<i32>} : memref<128x384xbf16, #tpu.memory_space<vmem>>, vector<128x128xbf16>,
    %c1_45 = arith.constant 1 : index
    %c1_46 = arith.constant 1 : index
    %c0_47 = arith.constant 0 : index
    %49 = vector.load %arg12[%c1_45, %c1_46, %c0_47] : memref<10x18x128xbf16, #tpu.memory_space<vmem>>, vector<8x16x128xbf16>
    %50 = vector.shape_cast %49 : vector<8x16x128xbf16> to vector<128x128xbf16>
    %c0_48 = arith.constant 0 : index
    %c128_49 = arith.constant 128 : index
    %51 = vector.load %arg13[%c0_48, %c128_49] : memref<128x384xbf16, #tpu.memory_space<vmem>>, vector<128x128xbf16>
    tpu.vector_store %arg13[%c0_48, %c128_49], %50 {strides = array<i32>} : memref<128x384xbf16, #tpu.memory_space<vmem>>, vector<128x128xbf16>,
    %c1_50 = arith.constant 1 : index
    %c2_51 = arith.constant 2 : index
    %c0_52 = arith.constant 0 : index
    %52 = vector.load %arg12[%c1_50, %c2_51, %c0_52] : memref<10x18x128xbf16, #tpu.memory_space<vmem>>, vector<8x16x128xbf16>
    %53 = vector.shape_cast %52 : vector<8x16x128xbf16> to vector<128x128xbf16>
    %c0_53 = arith.constant 0 : index
    %c256_54 = arith.constant 256 : index
    %54 = vector.load %arg13[%c0_53, %c256_54] : memref<128x384xbf16, #tpu.memory_space<vmem>>, vector<128x128xbf16>
    tpu.vector_store %arg13[%c0_53, %c256_54], %53 {strides = array<i32>} : memref<128x384xbf16, #tpu.memory_space<vmem>>, vector<128x128xbf16>,
    %c0_55 = arith.constant 0 : index
    %c0_56 = arith.constant 0 : index
    %55 = vector.load %arg13[%c0_55, %c0_56] : memref<128x384xbf16, #tpu.memory_space<vmem>>, vector<128x384xbf16>
    %c1_57 = arith.constant 1 : index
    %c0_58 = arith.constant 0 : index
    %c0_59 = arith.constant 0 : index
    %56 = vector.load %arg5[%c1_57, %c0_58, %c0_59] : memref<3x384x128xbf16, #tpu.memory_space<vmem>>, vector<1x384x128xbf16>
    %57 = vector.shape_cast %56 : vector<1x384x128xbf16> to vector<384x128xbf16>
    %cst_60 = arith.constant dense<0.000000e+00> : vector<128x128xf32>
    %58 = tpu.matmul %55, %57, %cst_60 {dimension_numbers = #tpu.dot_dimension_numbers<[1], [0], [0], [1], [0, 0, 1, 1], [], []>} : vector<128x384xbf16>, vector<384x128xbf16>, vector<128x128xf32> -> vector<128x128xf32>
    %59 = arith.addf %45, %58 : vector<128x128xf32>
    %c2_61 = arith.constant 2 : index
    %c0_62 = arith.constant 0 : index
    %c0_63 = arith.constant 0 : index
    %60 = vector.load %arg12[%c2_61, %c0_62, %c0_63] : memref<10x18x128xbf16, #tpu.memory_space<vmem>>, vector<8x16x128xbf16>
    %61 = vector.shape_cast %60 : vector<8x16x128xbf16> to vector<128x128xbf16>
    %c0_64 = arith.constant 0 : index
    %c0_65 = arith.constant 0 : index
    %62 = vector.load %arg13[%c0_64, %c0_65] : memref<128x384xbf16, #tpu.memory_space<vmem>>, vector<128x128xbf16>
    tpu.vector_store %arg13[%c0_64, %c0_65], %61 {strides = array<i32>} : memref<128x384xbf16, #tpu.memory_space<vmem>>, vector<128x128xbf16>,
    %c2_66 = arith.constant 2 : index
    %c1_67 = arith.constant 1 : index
    %c0_68 = arith.constant 0 : index
    %63 = vector.load %arg12[%c2_66, %c1_67, %c0_68] : memref<10x18x128xbf16, #tpu.memory_space<vmem>>, vector<8x16x128xbf16>
    %64 = vector.shape_cast %63 : vector<8x16x128xbf16> to vector<128x128xbf16>
    %c0_69 = arith.constant 0 : index
    %c128_70 = arith.constant 128 : index
    %65 = vector.load %arg13[%c0_69, %c128_70] : memref<128x384xbf16, #tpu.memory_space<vmem>>, vector<128x128xbf16>
    tpu.vector_store %arg13[%c0_69, %c128_70], %64 {strides = array<i32>} : memref<128x384xbf16, #tpu.memory_space<vmem>>, vector<128x128xbf16>,
    %c2_71 = arith.constant 2 : index
    %c2_72 = arith.constant 2 : index
    %c0_73 = arith.constant 0 : index
    %66 = vector.load %arg12[%c2_71, %c2_72, %c0_73] : memref<10x18x128xbf16, #tpu.memory_space<vmem>>, vector<8x16x128xbf16>
    %67 = vector.shape_cast %66 : vector<8x16x128xbf16> to vector<128x128xbf16>
    %c0_74 = arith.constant 0 : index
    %c256_75 = arith.constant 256 : index
    %68 = vector.load %arg13[%c0_74, %c256_75] : memref<128x384xbf16, #tpu.memory_space<vmem>>, vector<128x128xbf16>
    tpu.vector_store %arg13[%c0_74, %c256_75], %67 {strides = array<i32>} : memref<128x384xbf16, #tpu.memory_space<vmem>>, vector<128x128xbf16>,
    %c0_76 = arith.constant 0 : index
    %c0_77 = arith.constant 0 : index
    %69 = vector.load %arg13[%c0_76, %c0_77] : memref<128x384xbf16, #tpu.memory_space<vmem>>, vector<128x384xbf16>
    %c2_78 = arith.constant 2 : index
    %c0_79 = arith.constant 0 : index
    %c0_80 = arith.constant 0 : index
    %70 = vector.load %arg5[%c2_78, %c0_79, %c0_80] : memref<3x384x128xbf16, #tpu.memory_space<vmem>>, vector<1x384x128xbf16>
    %71 = vector.shape_cast %70 : vector<1x384x128xbf16> to vector<384x128xbf16>
    %cst_81 = arith.constant dense<0.000000e+00> : vector<128x128xf32>
    %72 = tpu.matmul %69, %71, %cst_81 {dimension_numbers = #tpu.dot_dimension_numbers<[1], [0], [0], [1], [0, 0, 1, 1], [], []>} : vector<128x384xbf16>, vector<384x128xbf16>, vector<128x128xf32> -> vector<128x128xf32>
    %73 = arith.addf %59, %72 : vector<128x128xf32>
    %c0_82 = arith.constant 0 : index
    %c0_83 = arith.constant 0 : index
    %74 = vector.load %arg6[%c0_82, %c0_83] : memref<1x128xf32, #tpu.memory_space<vmem>>, vector<1x128xf32>
    %75 = vector.shape_cast %74 : vector<1x128xf32> to vector<128xf32>
    %76 = vector.shape_cast %75 : vector<128xf32> to vector<1x128xf32>
    %77 = vector.broadcast %76 : vector<1x128xf32> to vector<128x128xf32>
    %78 = arith.addf %73, %77 : vector<128x128xf32>
    %cst_84 = arith.constant dense<0.000000e+00> : vector<128xf32>
    %79 = vector.multi_reduction <add>, %78, %cst_84 [0] : vector<128x128xf32> to vector<128xf32>
    %80 = vector.shape_cast %79 : vector<128xf32> to vector<1x1x1x128xf32>
    %c0_85 = arith.constant 0 : index
    %c0_86 = arith.constant 0 : index
    %c0_87 = arith.constant 0 : index
    %c0_88 = arith.constant 0 : index
    %81 = vector.load %arg10[%c0_85, %c0_86, %c0_87, %c0_88] : memref<1x1x1x128xf32, #tpu.memory_space<vmem>>, vector<1x1x1x128xf32>
    tpu.vector_store %arg10[%c0_85, %c0_86, %c0_87, %c0_88], %80 {strides = array<i32>} : memref<1x1x1x128xf32, #tpu.memory_space<vmem>>, vector<1x1x1x128xf32>,
    %82 = arith.mulf %78, %78 : vector<128x128xf32>
    %cst_89 = arith.constant dense<0.000000e+00> : vector<128xf32>
    %83 = vector.multi_reduction <add>, %82, %cst_89 [0] : vector<128x128xf32> to vector<128xf32>
    %84 = vector.shape_cast %83 : vector<128xf32> to vector<1x1x1x128xf32>
    %c0_90 = arith.constant 0 : index
    %c0_91 = arith.constant 0 : index
    %c0_92 = arith.constant 0 : index
    %c0_93 = arith.constant 0 : index
    %85 = vector.load %arg11[%c0_90, %c0_91, %c0_92, %c0_93] : memref<1x1x1x128xf32, #tpu.memory_space<vmem>>, vector<1x1x1x128xf32>
    tpu.vector_store %arg11[%c0_90, %c0_91, %c0_92, %c0_93], %84 {strides = array<i32>} : memref<1x1x1x128xf32, #tpu.memory_space<vmem>>, vector<1x1x1x128xf32>,
    %86 = vector.shape_cast %78 : vector<128x128xf32> to vector<8x16x128xf32>
    %87 = arith.truncf %86 : vector<8x16x128xf32> to vector<8x16x128xbf16>
    %c0_94 = arith.constant 0 : index
    %c0_95 = arith.constant 0 : index
    %c0_96 = arith.constant 0 : index
    %c0_97 = arith.constant 0 : index
    %88 = vector.load %arg9[%c0_94, %c0_95, %c0_96, %c0_97] : memref<1x8x16x128xbf16, #tpu.memory_space<vmem>>, vector<1x8x16x128xbf16>
    %89 = vector.shape_cast %88 : vector<1x8x16x128xbf16> to vector<8x16x128xbf16>
    %90 = vector.shape_cast %87 : vector<8x16x128xbf16> to vector<1x8x16x128xbf16>
    tpu.vector_store %arg9[%c0_94, %c0_95, %c0_96, %c0_97], %90 {strides = array<i32>} : memref<1x8x16x128xbf16, #tpu.memory_space<vmem>>, vector<1x8x16x128xbf16>,
    return
  }
  func.func @transform_0(%arg0: i32, %arg1: i32) -> (i32, i32, i32, i32) {
    %c0_i32 = arith.constant 0 : i32
    %c0_i32_0 = arith.constant 0 : i32
    %c0_i32_1 = arith.constant 0 : i32
    return %arg0, %arg1, %c0_i32, %c0_i32_0 : i32, i32, i32, i32
  }
  func.func @transform_1(%arg0: i32, %arg1: i32) -> (i32, i32, i32, i32) {
    %c0_i32 = arith.constant 0 : i32
    %c0_i32_0 = arith.constant 0 : i32
    %c0_i32_1 = arith.constant 0 : i32
    return %arg0, %arg1, %c0_i32, %c0_i32_0 : i32, i32, i32, i32
  }
  func.func @transform_2(%arg0: i32, %arg1: i32) -> (i32, i32, i32, i32) {
    %c0_i32 = arith.constant 0 : i32
    %c0_i32_0 = arith.constant 0 : i32
    %c0_i32_1 = arith.constant 0 : i32
    return %arg0, %arg1, %c0_i32, %c0_i32_0 : i32, i32, i32, i32
  }
  func.func @transform_3(%arg0: i32, %arg1: i32) -> (i32, i32, i32) {
    %c0_i32 = arith.constant 0 : i32
    %c0_i32_0 = arith.constant 0 : i32
    %c0_i32_1 = arith.constant 0 : i32
    %c0_i32_2 = arith.constant 0 : i32
    return %c0_i32, %c0_i32_0, %c0_i32_1 : i32, i32, i32
  }
  func.func @transform_4(%arg0: i32, %arg1: i32) -> (i32, i32) {
    %c0_i32 = arith.constant 0 : i32
    %c0_i32_0 = arith.constant 0 : i32
    %c0_i32_1 = arith.constant 0 : i32
    return %c0_i32, %c0_i32_0 : i32, i32
  }
  func.func @transform_5(%arg0: i32, %arg1: i32) -> (i32, i32) {
    %c0_i32 = arith.constant 0 : i32
    %c0_i32_0 = arith.constant 0 : i32
    %c0_i32_1 = arith.constant 0 : i32
    return %c0_i32, %c0_i32_0 : i32, i32
  }
  func.func @transform_6(%arg0: i32, %arg1: i32) -> (i32, i32) {
    %c0_i32 = arith.constant 0 : i32
    %c0_i32_0 = arith.constant 0 : i32
    %c0_i32_1 = arith.constant 0 : i32
    return %c0_i32, %c0_i32_0 : i32, i32
  }
  func.func @transform_7(%arg0: i32, %arg1: i32) -> (i32, i32, i32, i32) {
    %c0_i32 = arith.constant 0 : i32
    %c0_i32_0 = arith.constant 0 : i32
    %c0_i32_1 = arith.constant 0 : i32
    return %arg0, %arg1, %c0_i32, %c0_i32_0 : i32, i32, i32, i32
  }
  func.func @transform_8(%arg0: i32, %arg1: i32) -> (i32, i32, i32, i32) {
    %c0_i32 = arith.constant 0 : i32
    %c0_i32_0 = arith.constant 0 : i32
    %c0_i32_1 = arith.constant 0 : i32
    return %arg0, %arg1, %c0_i32, %c0_i32_0 : i32, i32, i32, i32
  }
  func.func @transform_9(%arg0: i32, %arg1: i32) -> (i32, i32, i32, i32) {
    %c0_i32 = arith.constant 0 : i32
    %c0_i32_0 = arith.constant 0 : i32
    %c0_i32_1 = arith.constant 0 : i32
    return %arg0, %arg1, %c0_i32, %c0_i32_0 : i32, i32, i32, i32
  }
}

</mosaic_0001>

<llo_original>
// kernel: two_conv_block.5
$region0: #{two_conv_block.5}
  #allocation0 [shape = 'u32[]', space=smem, size = 0x4, offset = 0x4, fixed_abs, tag = 'smem constant byte address 0x4 - core index']
  #allocation1 [shape = 'u32[144,128]{1,0:T(1,128)}', space=vmem, size = 0x12000, scoped, tag = 'internal scratch']
  %s0 = inlined_call_operand.vmem [shape: bf16[2,16,16,128], index: 0, kind: input, shape index: {}]
  %s1 = inlined_call_operand.vmem [shape: f32[1,128], index: 1, kind: input, shape index: {}]
  %s2 = inlined_call_operand.vmem [shape: f32[1,128], index: 2, kind: input, shape index: {}]
  %s3 = inlined_call_operand.vmem [shape: f32[2,16,16,128], index: 3, kind: output, shape index: {}]
  %s4 = sld [smem:[#allocation0]]
  $region45: #{two_conv_block.5} parent=0
    _
  %s6 = ssub.s32 1, %s4
  %s7 = scalar_select 0, %s6, %s4
  loop: start=0, step=1, limit=4
  $region2: #{two_conv_block.5} parent=0 // loop_pre_header
    _
  $region3: #{two_conv_block.5} parent=0 // loop_header
    %s9 = sphi 0, %s13
    %p10 = scmp.ge.s32.totalorder %s9, 4
    %s16 = sphi 0, %s28
    %s17 = sphi 0, %s24
    %s18 = sphi 0, %s16
    %s19 = sphi 0, %s17
    %s20 = sphi 0, %s18
    %s21 = sphi 0, %s19
    %s33 = sphi 0, %s35
    %s36 = sphi 0, %s33
    %s37 = sphi 0, %s36
    %s53 = sphi 0, %s37
    %s57 = sphi 0, %s57
    %s59 = sphi 0, %s57
    %s60 = sphi 0, %s59
    %s74 = sphi 0, %s60
    %s78 = sphi 0, %s78
    %s80 = sphi 0, %s78
    %s81 = sphi 0, %s80
    %s95 = sphi 0, %s81
    %s103 = sphi 0, %s105
    %s106 = sphi 0, %s103
    %s107 = sphi 0, %s106
    %s123 = sphi 0, %s107
  $region4: #{two_conv_block.5} parent=0 // loop_header_branch
    %12 = sbr.rel (%p10) target = $region8
  $region5: #{two_conv_block.5} parent=0 // loop_body
    %s14 = ssub.s32 %s9, 1
    %s15 = ssub.s32 %s9, 2
    %s22 = sadd.s32 1, %s17
    %p23 = scmp.ge.s32.totalorder %s22, 1
    %s24 = scalar_select %p23, 0, %s22
    %s25 = sadd.s32 1, %s16
    %s26 = scalar_select %p23, %s25, %s16
    %p27 = scmp.ge.s32.totalorder %s26, 2
    %s28 = scalar_select %p27, 0, %s26
    %s29 = ssub.s32 %s16, %s28
    %s30 = ssub.s32 %s17, %s24
    %s31 = sor.u32 %s29, %s30
    %p32 = scmp.eq.s32.totalorder %s31, 0
    %s34 = sadd.s32 %s33, 1
    %s35 = scalar_select %p32, %s33, %s34
    %p38 = pneg %p32
    %p39 = scmp.eq.s32.totalorder %s9, 1
    %p40 = por %p38, %p39
    %p41 = scmp.ne.s32.totalorder %s33, %s36
    %p42 = scmp.eq.s32.totalorder %s9, 0
    %p43 = por %p41, %p42
    %p44 = scmp.ne.s32.totalorder %s33, %s36
    %p45 = scmp.eq.s32.totalorder %s14, 1
    %p46 = por %p44, %p45
    %p47 = scmp.ne.s32.totalorder %s36, %s37
    %p48 = scmp.eq.s32.totalorder %s14, 0
    %p49 = por %p47, %p48
    %p50 = scmp.ne.s32.totalorder %s36, %s37
    %p51 = scmp.eq.s32.totalorder %s15, 1
    %p52 = por %p50, %p51
    %p54 = scmp.ne.s32.totalorder %s37, %s53
    %p55 = scmp.eq.s32.totalorder %s15, 0
    %p56 = por %p54, %p55
    %s58 = sadd.s32 %s57, 1
    %p61 = scmp.eq.s32.totalorder %s9, 1
    %p62 = scmp.ne.s32.totalorder %s57, %s59
    %p63 = scmp.eq.s32.totalorder %s9, 0
    %p64 = por %p62, %p63
    %p65 = scmp.ne.s32.totalorder %s57, %s59
    %p66 = scmp.eq.s32.totalorder %s14, 1
    %p67 = por %p65, %p66
    %p68 = scmp.ne.s32.totalorder %s59, %s60
    %p69 = scmp.eq.s32.totalorder %s14, 0
    %p70 = por %p68, %p69
    %p71 = scmp.ne.s32.totalorder %s59, %s60
    %p72 = scmp.eq.s32.totalorder %s15, 1
    %p73 = por %p71, %p72
    %p75 = scmp.ne.s32.totalorder %s60, %s74
    %p76 = scmp.eq.s32.totalorder %s15, 0
    %p77 = por %p75, %p76
    %s79 = sadd.s32 %s78, 1
    %p82 = scmp.eq.s32.totalorder %s9, 1
    %p83 = scmp.ne.s32.totalorder %s78, %s80
    %p84 = scmp.eq.s32.totalorder %s9, 0
    %p85 = por %p83, %p84
    %p86 = scmp.ne.s32.totalorder %s78, %s80
    %p87 = scmp.eq.s32.totalorder %s14, 1
    %p88 = por %p86, %p87
    %p89 = scmp.ne.s32.totalorder %s80, %s81
    %p90 = scmp.eq.s32.totalorder %s14, 0
    %p91 = por %p89, %p90
    %p92 = scmp.ne.s32.totalorder %s80, %s81
    %p93 = scmp.eq.s32.totalorder %s15, 1
    %p94 = por %p92, %p93
    %p96 = scmp.ne.s32.totalorder %s81, %s95
    %p97 = scmp.eq.s32.totalorder %s15, 0
    %p98 = por %p96, %p97
    %s99 = ssub.s32 %s16, %s28
    %s100 = ssub.s32 %s17, %s24
    %s101 = sor.u32 %s99, %s100
    %p102 = scmp.eq.s32.totalorder %s101, 0
    %s104 = sadd.s32 %s103, 1
    %s105 = scalar_select %p102, %s103, %s104
    %p108 = pneg %p102
    %p109 = scmp.eq.s32.totalorder %s9, 1
    %p110 = por %p108, %p109
    %p111 = scmp.ne.s32.totalorder %s103, %s106
    %p112 = scmp.eq.s32.totalorder %s9, 0
    %p113 = por %p111, %p112
    %p114 = scmp.ne.s32.totalorder %s103, %s106
    %p115 = scmp.eq.s32.totalorder %s14, 1
    %p116 = por %p114, %p115
    %p117 = scmp.ne.s32.totalorder %s106, %s107
    %p118 = scmp.eq.s32.totalorder %s14, 0
    %p119 = por %p117, %p118
    %p120 = scmp.ne.s32.totalorder %s106, %s107
    %p121 = scmp.eq.s32.totalorder %s15, 1
    %p122 = por %p120, %p121
    %p124 = scmp.ne.s32.totalorder %s107, %s123
    %p125 = scmp.eq.s32.totalorder %s15, 0
    %p126 = por %p124, %p125
    %p127 = scmp.le.s32.totalorder 1, %s9
    %p128 = scmp.lt.s32.totalorder %s9, 3
    %p129 = pnand %p127, %p128
    %p130 = pneg %p129
    // Predicated region
    $region9: #{two_conv_block.5} parent=5 // pred_check
      _
    $region10: #{two_conv_block.5} parent=5 // pred_check_branch
      %132 = sbr.rel (%p129) target = $region12
    $region11: #{two_conv_block.5} parent=5 // pred_region
      %s133 = ssub.s32 %s9, 1
      // Predicated region
      $region13: #{two_conv_block.5} parent=11 // pred_check
        %p134 = pneg %p70
      $region14: #{two_conv_block.5} parent=11 // pred_check_branch
        %136 = sbr.rel (%p134) target = $region16
      $region15: #{two_conv_block.5} parent=11 // pred_region
        _
      $region16: #{two_conv_block.5} parent=11 // pred_fallthru
        _
      // Predicated region
      $region17: #{two_conv_block.5} parent=11 // pred_check
        %p137 = pneg %p91
      $region18: #{two_conv_block.5} parent=11 // pred_check_branch
        %139 = sbr.rel (%p137) target = $region20
      $region19: #{two_conv_block.5} parent=11 // pred_region
        _
      $region20: #{two_conv_block.5} parent=11 // pred_fallthru
        _
    $region12: #{two_conv_block.5} parent=5 // pred_fallthru
      _
    %p140 = scmp.lt.s32.totalorder %s9, 2
    // Predicated region
    $region21: #{two_conv_block.5} parent=5 // pred_check
      %p141 = pneg %p140
    $region22: #{two_conv_block.5} parent=5 // pred_check_branch
      %143 = sbr.rel (%p141) target = $region24
    $region23: #{two_conv_block.5} parent=5 // pred_region
      // Predicated region
      $region25: #{two_conv_block.5} parent=23 // pred_check
        %p144 = pneg %p43
      $region26: #{two_conv_block.5} parent=23 // pred_check_branch
        %146 = sbr.rel (%p144) target = $region28
      $region27: #{two_conv_block.5} parent=23 // pred_region
        %s147 = smul.u32 16, %s17
        %p148 = scmp.lt.s32.totalorder %s16, 1
        %s149 = scalar_select %p148, %s16, 1
        %p150 = scmp.lt.s32.totalorder %s147, 15
        %s151 = scalar_select %p150, %s147, 15
        %s152 = smul.addr %s151, 2
        %s153 = smul.addr %s149, 32
        %s154 = sadd.s32 %s152, %s153
        %s155 = smul.addr %s154, 4
        %s156 = scalar_lea.vmem %s0, %s155
        %s157 = smul.u32 16, %s17
      $region28: #{two_conv_block.5} parent=23 // pred_fallthru
        _
    $region24: #{two_conv_block.5} parent=5 // pred_fallthru
      _
    %p158 = scmp.le.s32.totalorder 1, %s9
    %p159 = scmp.lt.s32.totalorder %s9, 3
    %p160 = pnand %p158, %p159
    %p161 = pneg %p160
    // Predicated region
    $region29: #{two_conv_block.5} parent=5 // pred_check
      _
    $region30: #{two_conv_block.5} parent=5 // pred_check_branch
      %163 = sbr.rel (%p160) target = $region32
    $region31: #{two_conv_block.5} parent=5 // pred_region
      %s164 = ssub.s32 %s9, 1
      %s165 = smul.u32 16, %s19
      %p166 = scmp.lt.s32.totalorder %s18, 1
      %s167 = scalar_select %p166, %s18, 1
      %p168 = scmp.lt.s32.totalorder %s165, 15
      %s169 = scalar_select %p168, %s165, 15
      %s170 = smul.addr %s169, 2
      %s171 = smul.addr %s167, 32
      %s172 = sadd.s32 %s170, %s171
      %s173 = smul.addr %s172, 4
      %s174 = scalar_lea.vmem %s0, %s173
      %p175 = pneg %p49
      %p176 = pneg %p46
      %p177 = pneg %p70
      %p178 = pneg %p67
      %p179 = pneg %p91
      %p180 = pneg %p88
      %p181 = pneg %p119
      %p182 = pneg %p116
      %s183 = smul.u32 16, %s19
      %p184 = scmp.lt.s32.totalorder %s18, 1
      %s185 = scalar_select %p184, %s18, 1
      %p186 = scmp.lt.s32.totalorder %s183, 15
      %s187 = scalar_select %p186, %s183, 15
      %s188 = smul.addr %s187, 2
      %s189 = smul.addr %s185, 32
      %s190 = sadd.s32 %s188, %s189
      %s191 = smul.addr %s190, 8
      %s192 = scalar_lea.vmem %s3, %s191
      %s193 = smul.u32 16, %s19
      %p194 = scmp.lt.s32.totalorder %s18, 1
      %s195 = scalar_select %p194, %s18, 1
      %p196 = scmp.lt.s32.totalorder %s193, 15
      %s197 = scalar_select %p196, %s193, 15
      %s198 = smul.addr %s197, 2
      %s199 = smul.addr %s195, 32
      %s200 = sadd.s32 %s198, %s199
      %s201 = smul.addr %s200, 4
      %s202 = scalar_lea.vmem %s0, %s201
      %s203 = smul.u32 16, %s19
      %s204 = smul.u32 16, %s19
      %p205 = scmp.lt.s32.totalorder %s18, 1
      %s206 = scalar_select %p205, %s18, 1
      %p207 = scmp.lt.s32.totalorder %s204, 15
      %s208 = scalar_select %p207, %s204, 15
      %s209 = smul.addr %s208, 2
      %s210 = smul.addr %s206, 32
      %s211 = sadd.s32 %s209, %s210
      %s212 = smul.addr %s211, 8
      %s213 = scalar_lea.vmem %s3, %s212
      %s214 = smul.u32 16, %s19
      %v215 = vld [vmem:[%s202] sm:$0xf]
      %v216 = vld [vmem:[%s202 + $0x4] sm:$0xf]
      %v217 = vld [vmem:[%s202 + $0x8] sm:$0xf]
      %v218 = vld [vmem:[%s202 + $0xc] sm:$0xf]
      %v219 = vld [vmem:[%s202 + $0x10] sm:$0xf]
      %v220 = vld [vmem:[%s202 + $0x14] sm:$0xf]
      %v221 = vld [vmem:[%s202 + $0x18] sm:$0xf]
      %v222 = vld [vmem:[%s202 + $0x1c] sm:$0xf]
      %v223 = vld [vmem:[%s202 + $0x20] sm:$0xf]
      %v224 = vld [vmem:[%s202 + $0x24] sm:$0xf]
      %v225 = vld [vmem:[%s202 + $0x28] sm:$0xf]
      %v226 = vld [vmem:[%s202 + $0x2c] sm:$0xf]
      %v227 = vld [vmem:[%s202 + $0x30] sm:$0xf]
      %v228 = vld [vmem:[%s202 + $0x34] sm:$0xf]
      %v229 = vld [vmem:[%s202 + $0x38] sm:$0xf]
      %v230 = vld [vmem:[%s202 + $0x3c] sm:$0xf]
      %v231 = vld [vmem:[%s202 + $0x40] sm:$0xf]
      %v232 = vld [vmem:[%s202 + $0x44] sm:$0xf]
      %v233 = vld [vmem:[%s202 + $0x48] sm:$0xf]
      %v234 = vld [vmem:[%s202 + $0x4c] sm:$0xf]
      %v235 = vld [vmem:[%s202 + $0x50] sm:$0xf]
      %v236 = vld [vmem:[%s202 + $0x54] sm:$0xf]
      %v237 = vld [vmem:[%s202 + $0x58] sm:$0xf]
      %v238 = vld [vmem:[%s202 + $0x5c] sm:$0xf]
      %v239 = vld [vmem:[%s202 + $0x60] sm:$0xf]
      %v240 = vld [vmem:[%s202 + $0x64] sm:$0xf]
      %v241 = vld [vmem:[%s202 + $0x68] sm:$0xf]
      %v242 = vld [vmem:[%s202 + $0x6c] sm:$0xf]
      %v243 = vld [vmem:[%s202 + $0x70] sm:$0xf]
      %v244 = vld [vmem:[%s202 + $0x74] sm:$0xf]
      %v245 = vld [vmem:[%s202 + $0x78] sm:$0xf]
      %v246 = vld [vmem:[%s202 + $0x7c] sm:$0xf]
      %v247 = vunpack.c.l.bf16 %v215
      %v248 = vunpack.c.l.bf16 %v216
      %v249 = vunpack.c.l.bf16 %v217
      %v250 = vunpack.c.l.bf16 %v218
      %v251 = vunpack.c.l.bf16 %v219
      %v252 = vunpack.c.l.bf16 %v220
      %v253 = vunpack.c.l.bf16 %v221
      %v254 = vunpack.c.l.bf16 %v222
      %v255 = vunpack.c.l.bf16 %v223
      %v256 = vunpack.c.l.bf16 %v224
      %v257 = vunpack.c.l.bf16 %v225
      %v258 = vunpack.c.l.bf16 %v226
      %v259 = vunpack.c.l.bf16 %v227
      %v260 = vunpack.c.l.bf16 %v228
      %v261 = vunpack.c.l.bf16 %v229
      %v262 = vunpack.c.l.bf16 %v230
      %v263 = vunpack.c.l.bf16 %v231
      %v264 = vunpack.c.l.bf16 %v232
      %v265 = vunpack.c.l.bf16 %v233
      %v266 = vunpack.c.l.bf16 %v234
      %v267 = vunpack.c.l.bf16 %v235
      %v268 = vunpack.c.l.bf16 %v236
      %v269 = vunpack.c.l.bf16 %v237
      %v270 = vunpack.c.l.bf16 %v238
      %v271 = vunpack.c.l.bf16 %v239
      %v272 = vunpack.c.l.bf16 %v240
      %v273 = vunpack.c.l.bf16 %v241
      %v274 = vunpack.c.l.bf16 %v242
      %v275 = vunpack.c.l.bf16 %v243
      %v276 = vunpack.c.l.bf16 %v244
      %v277 = vunpack.c.l.bf16 %v245
      %v278 = vunpack.c.l.bf16 %v246
      %v279 = vld [vmem:[%s1] sm:$0x1]
      %v281 = vlaneseq
      %v282 = vshrl.u32 %v281, 7
      %v283 = vsub.s32 0, %v282
      %v284 = vrot.slane %v279, %v283
      %v286 = vmul.f32 %v247, %v284
      %v287 = vmul.f32 %v248, %v284
      %v288 = vmul.f32 %v249, %v284
      %v289 = vmul.f32 %v250, %v284
      %v290 = vmul.f32 %v251, %v284
      %v291 = vmul.f32 %v252, %v284
      %v292 = vmul.f32 %v253, %v284
      %v293 = vmul.f32 %v254, %v284
      %v294 = vmul.f32 %v255, %v284
      %v295 = vmul.f32 %v256, %v284
      %v296 = vmul.f32 %v257, %v284
      %v297 = vmul.f32 %v258, %v284
      %v298 = vmul.f32 %v259, %v284
      %v299 = vmul.f32 %v260, %v284
      %v300 = vmul.f32 %v261, %v284
      %v301 = vmul.f32 %v262, %v284
      %v302 = vmul.f32 %v263, %v284
      %v303 = vmul.f32 %v264, %v284
      %v304 = vmul.f32 %v265, %v284
      %v305 = vmul.f32 %v266, %v284
      %v306 = vmul.f32 %v267, %v284
      %v307 = vmul.f32 %v268, %v284
      %v308 = vmul.f32 %v269, %v284
      %v309 = vmul.f32 %v270, %v284
      %v310 = vmul.f32 %v271, %v284
      %v311 = vmul.f32 %v272, %v284
      %v312 = vmul.f32 %v273, %v284
      %v313 = vmul.f32 %v274, %v284
      %v314 = vmul.f32 %v275, %v284
      %v315 = vmul.f32 %v276, %v284
      %v316 = vmul.f32 %v277, %v284
      %v317 = vmul.f32 %v278, %v284
      %v318 = vld [vmem:[%s2] sm:$0x1]
      %v320 = vlaneseq
      %v321 = vshrl.u32 %v320, 7
      %v322 = vsub.s32 0, %v321
      %v323 = vrot.slane %v318, %v322
      %v325 = vadd.f32 %v286, %v323
      %v326 = vadd.f32 %v287, %v323
      %v327 = vadd.f32 %v288, %v323
      %v328 = vadd.f32 %v289, %v323
      %v329 = vadd.f32 %v290, %v323
      %v330 = vadd.f32 %v291, %v323
      %v331 = vadd.f32 %v292, %v323
      %v332 = vadd.f32 %v293, %v323
      %v333 = vadd.f32 %v294, %v323
      %v334 = vadd.f32 %v295, %v323
      %v335 = vadd.f32 %v296, %v323
      %v336 = vadd.f32 %v297, %v323
      %v337 = vadd.f32 %v298, %v323
      %v338 = vadd.f32 %v299, %v323
      %v339 = vadd.f32 %v300, %v323
      %v340 = vadd.f32 %v301, %v323
      %v341 = vadd.f32 %v302, %v323
      %v342 = vadd.f32 %v303, %v323
      %v343 = vadd.f32 %v304, %v323
      %v344 = vadd.f32 %v305, %v323
      %v345 = vadd.f32 %v306, %v323
      %v346 = vadd.f32 %v307, %v323
      %v347 = vadd.f32 %v308, %v323
      %v348 = vadd.f32 %v309, %v323
      %v349 = vadd.f32 %v310, %v323
      %v350 = vadd.f32 %v311, %v323
      %v351 = vadd.f32 %v312, %v323
      %v352 = vadd.f32 %v313, %v323
      %v353 = vadd.f32 %v314, %v323
      %v354 = vadd.f32 %v315, %v323
      %v355 = vadd.f32 %v316, %v323
      %v356 = vadd.f32 %v317, %v323
      %v357 = vmax.f32 %v325, 0.0
      %v358 = vmax.f32 %v326, 0.0
      %v359 = vmax.f32 %v327, 0.0
      %v360 = vmax.f32 %v328, 0.0
      %v361 = vmax.f32 %v329, 0.0
      %v362 = vmax.f32 %v330, 0.0
      %v363 = vmax.f32 %v331, 0.0
      %v364 = vmax.f32 %v332, 0.0
      %v365 = vmax.f32 %v333, 0.0
      %v366 = vmax.f32 %v334, 0.0
      %v367 = vmax.f32 %v335, 0.0
      %v368 = vmax.f32 %v336, 0.0
      %v369 = vmax.f32 %v337, 0.0
      %v370 = vmax.f32 %v338, 0.0
      %v371 = vmax.f32 %v339, 0.0
      %v372 = vmax.f32 %v340, 0.0
      %v373 = vmax.f32 %v341, 0.0
      %v374 = vmax.f32 %v342, 0.0
      %v375 = vmax.f32 %v343, 0.0
      %v376 = vmax.f32 %v344, 0.0
      %v377 = vmax.f32 %v345, 0.0
      %v378 = vmax.f32 %v346, 0.0
      %v379 = vmax.f32 %v347, 0.0
      %v380 = vmax.f32 %v348, 0.0
      %v381 = vmax.f32 %v349, 0.0
      %v382 = vmax.f32 %v350, 0.0
      %v383 = vmax.f32 %v351, 0.0
      %v384 = vmax.f32 %v352, 0.0
      %v385 = vmax.f32 %v353, 0.0
      %v386 = vmax.f32 %v354, 0.0
      %v387 = vmax.f32 %v355, 0.0
      %v388 = vmax.f32 %v356, 0.0
      %389 = vst [vmem:[%s213] sm:$0xff] %v357
      %390 = vst [vmem:[%s213 + $0x8] sm:$0xff] %v358
      %391 = vst [vmem:[%s213 + $0x10] sm:$0xff] %v359
      %392 = vst [vmem:[%s213 + $0x18] sm:$0xff] %v360
      %393 = vst [vmem:[%s213 + $0x20] sm:$0xff] %v361
      %394 = vst [vmem:[%s213 + $0x28] sm:$0xff] %v362
      %395 = vst [vmem:[%s213 + $0x30] sm:$0xff] %v363
      %396 = vst [vmem:[%s213 + $0x38] sm:$0xff] %v364
      %397 = vst [vmem:[%s213 + $0x40] sm:$0xff] %v365
      %398 = vst [vmem:[%s213 + $0x48] sm:$0xff] %v366
      %399 = vst [vmem:[%s213 + $0x50] sm:$0xff] %v367
      %400 = vst [vmem:[%s213 + $0x58] sm:$0xff] %v368
      %401 = vst [vmem:[%s213 + $0x60] sm:$0xff] %v369
      %402 = vst [vmem:[%s213 + $0x68] sm:$0xff] %v370
      %403 = vst [vmem:[%s213 + $0x70] sm:$0xff] %v371
      %404 = vst [vmem:[%s213 + $0x78] sm:$0xff] %v372
      %405 = vst [vmem:[%s213 + $0x80] sm:$0xff] %v373
      %406 = vst [vmem:[%s213 + $0x88] sm:$0xff] %v374
      %407 = vst [vmem:[%s213 + $0x90] sm:$0xff] %v375
      %408 = vst [vmem:[%s213 + $0x98] sm:$0xff] %v376
      %409 = vst [vmem:[%s213 + $0xa0] sm:$0xff] %v377
      %410 = vst [vmem:[%s213 + $0xa8] sm:$0xff] %v378
      %411 = vst [vmem:[%s213 + $0xb0] sm:$0xff] %v379
      %412 = vst [vmem:[%s213 + $0xb8] sm:$0xff] %v380
      %413 = vst [vmem:[%s213 + $0xc0] sm:$0xff] %v381
      %414 = vst [vmem:[%s213 + $0xc8] sm:$0xff] %v382
      %415 = vst [vmem:[%s213 + $0xd0] sm:$0xff] %v383
      %416 = vst [vmem:[%s213 + $0xd8] sm:$0xff] %v384
      %417 = vst [vmem:[%s213 + $0xe0] sm:$0xff] %v385
      %418 = vst [vmem:[%s213 + $0xe8] sm:$0xff] %v386
      %419 = vst [vmem:[%s213 + $0xf0] sm:$0xff] %v387
      %420 = vst [vmem:[%s213 + $0xf8] sm:$0xff] %v388
      %s421 = smul.u32 16, %s19
      %p422 = scmp.lt.s32.totalorder %s18, 1
      %s423 = scalar_select %p422, %s18, 1
      %p424 = scmp.lt.s32.totalorder %s421, 15
      %s425 = scalar_select %p424, %s421, 15
      %s426 = smul.addr %s425, 2
      %s427 = smul.addr %s423, 32
      %s428 = sadd.s32 %s426, %s427
      %s429 = smul.addr %s428, 8
      %s430 = scalar_lea.vmem %s3, %s429
      // Predicated region
      $region33: #{two_conv_block.5} parent=31 // pred_check
        %p431 = pneg %p116
      $region34: #{two_conv_block.5} parent=31 // pred_check_branch
        %433 = sbr.rel (%p431) target = $region36
      $region35: #{two_conv_block.5} parent=31 // pred_region
        %s434 = smul.u32 16, %s19
      $region36: #{two_conv_block.5} parent=31 // pred_fallthru
        _
    $region32: #{two_conv_block.5} parent=5 // pred_fallthru
      _
    %p435 = scmp.le.s32.totalorder 2, %s9
    // Predicated region
    $region37: #{two_conv_block.5} parent=5 // pred_check
      %p436 = pneg %p435
    $region38: #{two_conv_block.5} parent=5 // pred_check_branch
      %438 = sbr.rel (%p436) target = $region40
    $region39: #{two_conv_block.5} parent=5 // pred_region
      %s439 = ssub.s32 %s9, 2
      // Predicated region
      $region41: #{two_conv_block.5} parent=39 // pred_check
        %p440 = pneg %p122
      $region42: #{two_conv_block.5} parent=39 // pred_check_branch
        %442 = sbr.rel (%p440) target = $region44
      $region43: #{two_conv_block.5} parent=39 // pred_region
        %s443 = smul.u32 16, %s21
        %p444 = scmp.lt.s32.totalorder %s20, 1
        %s445 = scalar_select %p444, %s20, 1
        %p446 = scmp.lt.s32.totalorder %s443, 15
        %s447 = scalar_select %p446, %s443, 15
        %s448 = smul.addr %s447, 2
        %s449 = smul.addr %s445, 32
        %s450 = sadd.s32 %s448, %s449
        %s451 = smul.addr %s450, 8
        %s452 = scalar_lea.vmem %s3, %s451
      $region44: #{two_conv_block.5} parent=39 // pred_fallthru
        _
    $region40: #{two_conv_block.5} parent=5 // pred_fallthru
      _
  $region6: #{two_conv_block.5} parent=0 // loop_footer
    %s13 = sadd.s32 1, %s9
  $region7: #{two_conv_block.5} parent=0 // loop_footer_branch
    %8 = sbr.rel target = $region3
  $region8: #{two_conv_block.5} parent=0 // loop_exit
    _

// kernel: two_conv_block.3
$region0: #{two_conv_block.3}
  #allocation0 [shape = 'u32[]', space=smem, size = 0x4, offset = 0x4, fixed_abs, tag = 'smem constant byte address 0x4 - core index']
  #allocation1 [shape = 'u32[144,128]{1,0:T(1,128)}', space=vmem, size = 0x12000, scoped, tag = 'internal scratch']
  #allocation2 [shape = 'bf16[10,18,128]{2,1,0:T(8,128)(2,1)}', space=vmem, size = 0xf000, scoped, tag = 'scratch operand']
  #allocation3 [shape = 'bf16[128,384]{1,0:T(16,128)(2,1)}', space=vmem, size = 0x18000, scoped, tag = 'scratch operand']
  %s0 = inlined_call_operand.vmem [shape: f32[2,16,16,128], index: 0, kind: input, shape index: {}]
  %s1 = inlined_call_operand.vmem [shape: f32[2,2,16,128], index: 1, kind: input, shape index: {}]
  %s2 = inlined_call_operand.vmem [shape: f32[2,2,16,128], index: 2, kind: input, shape index: {}]
  %s3 = inlined_call_operand.vmem [shape: bf16[3,384,128], index: 3, kind: input, shape index: {}]
  %s4 = inlined_call_operand.vmem [shape: f32[1,128], index: 4, kind: input, shape index: {}]
  %s5 = inlined_call_operand.vmem [shape: f32[1,128], index: 5, kind: input, shape index: {}]
  %s6 = inlined_call_operand.vmem [shape: f32[1,128], index: 6, kind: input, shape index: {}]
  %s7 = inlined_call_operand.vmem [shape: bf16[2,16,16,128], index: 7, kind: output, shape index: {0}]
  %s8 = inlined_call_operand.vmem [shape: f32[2,2,1,128], index: 8, kind: output, shape index: {1}]
  %s9 = inlined_call_operand.vmem [shape: f32[2,2,1,128], index: 9, kind: output, shape index: {2}]
  %10 = xla_tuple %s7, %s8, %s9
  %s11 = sld [smem:[#allocation0]]
  $region93: #{two_conv_block.3} parent=0
    _
  %s13 = ssub.s32 1, %s11
  %s14 = scalar_select 0, %s13, %s11
  loop: start=0, step=1, limit=6
  $region2: #{two_conv_block.3} parent=0 // loop_pre_header
    _
  $region3: #{two_conv_block.3} parent=0 // loop_header
    %s16 = sphi 0, %s20
    %p17 = scmp.ge.s32.totalorder %s16, 6
    %s23 = sphi 0, %s35
    %s24 = sphi 0, %s31
    %s25 = sphi 0, %s23
    %s26 = sphi 0, %s24
    %s27 = sphi 0, %s25
    %s28 = sphi 0, %s26
    %s40 = sphi 0, %s42
    %s43 = sphi 0, %s40
    %s44 = sphi 0, %s43
    %s60 = sphi 0, %s44
    %s68 = sphi 0, %s70
    %s71 = sphi 0, %s68
    %s72 = sphi 0, %s71
    %s88 = sphi 0, %s72
    %s96 = sphi 0, %s98
    %s99 = sphi 0, %s96
    %s100 = sphi 0, %s99
    %s116 = sphi 0, %s100
    %s120 = sphi 0, %s120
    %s122 = sphi 0, %s120
    %s123 = sphi 0, %s122
    %s137 = sphi 0, %s123
    %s141 = sphi 0, %s141
    %s143 = sphi 0, %s141
    %s144 = sphi 0, %s143
    %s158 = sphi 0, %s144
    %s162 = sphi 0, %s162
    %s164 = sphi 0, %s162
    %s165 = sphi 0, %s164
    %s179 = sphi 0, %s165
    %s183 = sphi 0, %s183
    %s185 = sphi 0, %s183
    %s186 = sphi 0, %s185
    %s200 = sphi 0, %s186
    %s208 = sphi 0, %s210
    %s211 = sphi 0, %s208
    %s212 = sphi 0, %s211
    %s228 = sphi 0, %s212
    %s236 = sphi 0, %s238
    %s239 = sphi 0, %s236
    %s240 = sphi 0, %s239
    %s256 = sphi 0, %s240
    %s264 = sphi 0, %s266
    %s267 = sphi 0, %s264
    %s268 = sphi 0, %s267
    %s284 = sphi 0, %s268
  $region4: #{two_conv_block.3} parent=0 // loop_header_branch
    %19 = sbr.rel (%p17) target = $region8
  $region5: #{two_conv_block.3} parent=0 // loop_body
    %s21 = ssub.s32 %s16, 1
    %s22 = ssub.s32 %s16, 2
    %s29 = sadd.s32 1, %s24
    %p30 = scmp.ge.s32.totalorder %s29, 2
    %s31 = scalar_select %p30, 0, %s29
    %s32 = sadd.s32 1, %s23
    %s33 = scalar_select %p30, %s32, %s23
    %p34 = scmp.ge.s32.totalorder %s33, 2
    %s35 = scalar_select %p34, 0, %s33
    %s36 = ssub.s32 %s23, %s35
    %s37 = ssub.s32 %s24, %s31
    %s38 = sor.u32 %s36, %s37
    %p39 = scmp.eq.s32.totalorder %s38, 0
    %s41 = sadd.s32 %s40, 1
    %s42 = scalar_select %p39, %s40, %s41
    %p45 = pneg %p39
    %p46 = scmp.eq.s32.totalorder %s16, 3
    %p47 = por %p45, %p46
    %p48 = scmp.ne.s32.totalorder %s40, %s43
    %p49 = scmp.eq.s32.totalorder %s16, 0
    %p50 = por %p48, %p49
    %p51 = scmp.ne.s32.totalorder %s40, %s43
    %p52 = scmp.eq.s32.totalorder %s21, 3
    %p53 = por %p51, %p52
    %p54 = scmp.ne.s32.totalorder %s43, %s44
    %p55 = scmp.eq.s32.totalorder %s21, 0
    %p56 = por %p54, %p55
    %p57 = scmp.ne.s32.totalorder %s43, %s44
    %p58 = scmp.eq.s32.totalorder %s22, 3
    %p59 = por %p57, %p58
    %p61 = scmp.ne.s32.totalorder %s44, %s60
    %p62 = scmp.eq.s32.totalorder %s22, 0
    %p63 = por %p61, %p62
    %s64 = ssub.s32 %s23, %s35
    %s65 = ssub.s32 %s24, %s31
    %s66 = sor.u32 %s64, %s65
    %p67 = scmp.eq.s32.totalorder %s66, 0
    %s69 = sadd.s32 %s68, 1
    %s70 = scalar_select %p67, %s68, %s69
    %p73 = pneg %p67
    %p74 = scmp.eq.s32.totalorder %s16, 3
    %p75 = por %p73, %p74
    %p76 = scmp.ne.s32.totalorder %s68, %s71
    %p77 = scmp.eq.s32.totalorder %s16, 0
    %p78 = por %p76, %p77
    %p79 = scmp.ne.s32.totalorder %s68, %s71
    %p80 = scmp.eq.s32.totalorder %s21, 3
    %p81 = por %p79, %p80
    %p82 = scmp.ne.s32.totalorder %s71, %s72
    %p83 = scmp.eq.s32.totalorder %s21, 0
    %p84 = por %p82, %p83
    %p85 = scmp.ne.s32.totalorder %s71, %s72
    %p86 = scmp.eq.s32.totalorder %s22, 3
    %p87 = por %p85, %p86
    %p89 = scmp.ne.s32.totalorder %s72, %s88
    %p90 = scmp.eq.s32.totalorder %s22, 0
    %p91 = por %p89, %p90
    %s92 = ssub.s32 %s23, %s35
    %s93 = ssub.s32 %s24, %s31
    %s94 = sor.u32 %s92, %s93
    %p95 = scmp.eq.s32.totalorder %s94, 0
    %s97 = sadd.s32 %s96, 1
    %s98 = scalar_select %p95, %s96, %s97
    %p101 = pneg %p95
    %p102 = scmp.eq.s32.totalorder %s16, 3
    %p103 = por %p101, %p102
    %p104 = scmp.ne.s32.totalorder %s96, %s99
    %p105 = scmp.eq.s32.totalorder %s16, 0
    %p106 = por %p104, %p105
    %p107 = scmp.ne.s32.totalorder %s96, %s99
    %p108 = scmp.eq.s32.totalorder %s21, 3
    %p109 = por %p107, %p108
    %p110 = scmp.ne.s32.totalorder %s99, %s100
    %p111 = scmp.eq.s32.totalorder %s21, 0
    %p112 = por %p110, %p111
    %p113 = scmp.ne.s32.totalorder %s99, %s100
    %p114 = scmp.eq.s32.totalorder %s22, 3
    %p115 = por %p113, %p114
    %p117 = scmp.ne.s32.totalorder %s100, %s116
    %p118 = scmp.eq.s32.totalorder %s22, 0
    %p119 = por %p117, %p118
    %s121 = sadd.s32 %s120, 1
    %p124 = scmp.eq.s32.totalorder %s16, 3
    %p125 = scmp.ne.s32.totalorder %s120, %s122
    %p126 = scmp.eq.s32.totalorder %s16, 0
    %p127 = por %p125, %p126
    %p128 = scmp.ne.s32.totalorder %s120, %s122
    %p129 = scmp.eq.s32.totalorder %s21, 3
    %p130 = por %p128, %p129
    %p131 = scmp.ne.s32.totalorder %s122, %s123
    %p132 = scmp.eq.s32.totalorder %s21, 0
    %p133 = por %p131, %p132
    %p134 = scmp.ne.s32.totalorder %s122, %s123
    %p135 = scmp.eq.s32.totalorder %s22, 3
    %p136 = por %p134, %p135
    %p138 = scmp.ne.s32.totalorder %s123, %s137
    %p139 = scmp.eq.s32.totalorder %s22, 0
    %p140 = por %p138, %p139
    %s142 = sadd.s32 %s141, 1
    %p145 = scmp.eq.s32.totalorder %s16, 3
    %p146 = scmp.ne.s32.totalorder %s141, %s143
    %p147 = scmp.eq.s32.totalorder %s16, 0
    %p148 = por %p146, %p147
    %p149 = scmp.ne.s32.totalorder %s141, %s143
    %p150 = scmp.eq.s32.totalorder %s21, 3
    %p151 = por %p149, %p150
    %p152 = scmp.ne.s32.totalorder %s143, %s144
    %p153 = scmp.eq.s32.totalorder %s21, 0
    %p154 = por %p152, %p153
    %p155 = scmp.ne.s32.totalorder %s143, %s144
    %p156 = scmp.eq.s32.totalorder %s22, 3
    %p157 = por %p155, %p156
    %p159 = scmp.ne.s32.totalorder %s144, %s158
    %p160 = scmp.eq.s32.totalorder %s22, 0
    %p161 = por %p159, %p160
    %s163 = sadd.s32 %s162, 1
    %p166 = scmp.eq.s32.totalorder %s16, 3
    %p167 = scmp.ne.s32.totalorder %s162, %s164
    %p168 = scmp.eq.s32.totalorder %s16, 0
    %p169 = por %p167, %p168
    %p170 = scmp.ne.s32.totalorder %s162, %s164
    %p171 = scmp.eq.s32.totalorder %s21, 3
    %p172 = por %p170, %p171
    %p173 = scmp.ne.s32.totalorder %s164, %s165
    %p174 = scmp.eq.s32.totalorder %s21, 0
    %p175 = por %p173, %p174
    %p176 = scmp.ne.s32.totalorder %s164, %s165
    %p177 = scmp.eq.s32.totalorder %s22, 3
    %p178 = por %p176, %p177
    %p180 = scmp.ne.s32.totalorder %s165, %s179
    %p181 = scmp.eq.s32.totalorder %s22, 0
    %p182 = por %p180, %p181
    %s184 = sadd.s32 %s183, 1
    %p187 = scmp.eq.s32.totalorder %s16, 3
    %p188 = scmp.ne.s32.totalorder %s183, %s185
    %p189 = scmp.eq.s32.totalorder %s16, 0
    %p190 = por %p188, %p189
    %p191 = scmp.ne.s32.totalorder %s183, %s185
    %p192 = scmp.eq.s32.totalorder %s21, 3
    %p193 = por %p191, %p192
    %p194 = scmp.ne.s32.totalorder %s185, %s186
    %p195 = scmp.eq.s32.totalorder %s21, 0
    %p196 = por %p194, %p195
    %p197 = scmp.ne.s32.totalorder %s185, %s186
    %p198 = scmp.eq.s32.totalorder %s22, 3
    %p199 = por %p197, %p198
    %p201 = scmp.ne.s32.totalorder %s186, %s200
    %p202 = scmp.eq.s32.totalorder %s22, 0
    %p203 = por %p201, %p202
    %s204 = ssub.s32 %s23, %s35
    %s205 = ssub.s32 %s24, %s31
    %s206 = sor.u32 %s204, %s205
    %p207 = scmp.eq.s32.totalorder %s206, 0
    %s209 = sadd.s32 %s208, 1
    %s210 = scalar_select %p207, %s208, %s209
    %p213 = pneg %p207
    %p214 = scmp.eq.s32.totalorder %s16, 3
    %p215 = por %p213, %p214
    %p216 = scmp.ne.s32.totalorder %s208, %s211
    %p217 = scmp.eq.s32.totalorder %s16, 0
    %p218 = por %p216, %p217
    %p219 = scmp.ne.s32.totalorder %s208, %s211
    %p220 = scmp.eq.s32.totalorder %s21, 3
    %p221 = por %p219, %p220
    %p222 = scmp.ne.s32.totalorder %s211, %s212
    %p223 = scmp.eq.s32.totalorder %s21, 0
    %p224 = por %p222, %p223
    %p225 = scmp.ne.s32.totalorder %s211, %s212
    %p226 = scmp.eq.s32.totalorder %s22, 3
    %p227 = por %p225, %p226
    %p229 = scmp.ne.s32.totalorder %s212, %s228
    %p230 = scmp.eq.s32.totalorder %s22, 0
    %p231 = por %p229, %p230
    %s232 = ssub.s32 %s23, %s35
    %s233 = ssub.s32 %s24, %s31
    %s234 = sor.u32 %s232, %s233
    %p235 = scmp.eq.s32.totalorder %s234, 0
    %s237 = sadd.s32 %s236, 1
    %s238 = scalar_select %p235, %s236, %s237
    %p241 = pneg %p235
    %p242 = scmp.eq.s32.totalorder %s16, 3
    %p243 = por %p241, %p242
    %p244 = scmp.ne.s32.totalorder %s236, %s239
    %p245 = scmp.eq.s32.totalorder %s16, 0
    %p246 = por %p244, %p245
    %p247 = scmp.ne.s32.totalorder %s236, %s239
    %p248 = scmp.eq.s32.totalorder %s21, 3
    %p249 = por %p247, %p248
    %p250 = scmp.ne.s32.totalorder %s239, %s240
    %p251 = scmp.eq.s32.totalorder %s21, 0
    %p252 = por %p250, %p251
    %p253 = scmp.ne.s32.totalorder %s239, %s240
    %p254 = scmp.eq.s32.totalorder %s22, 3
    %p255 = por %p253, %p254
    %p257 = scmp.ne.s32.totalorder %s240, %s256
    %p258 = scmp.eq.s32.totalorder %s22, 0
    %p259 = por %p257, %p258
    %s260 = ssub.s32 %s23, %s35
    %s261 = ssub.s32 %s24, %s31
    %s262 = sor.u32 %s260, %s261
    %p263 = scmp.eq.s32.totalorder %s262, 0
    %s265 = sadd.s32 %s264, 1
    %s266 = scalar_select %p263, %s264, %s265
    %p269 = pneg %p263
    %p270 = scmp.eq.s32.totalorder %s16, 3
    %p271 = por %p269, %p270
    %p272 = scmp.ne.s32.totalorder %s264, %s267
    %p273 = scmp.eq.s32.totalorder %s16, 0
    %p274 = por %p272, %p273
    %p275 = scmp.ne.s32.totalorder %s264, %s267
    %p276 = scmp.eq.s32.totalorder %s21, 3
    %p277 = por %p275, %p276
    %p278 = scmp.ne.s32.totalorder %s267, %s268
    %p279 = scmp.eq.s32.totalorder %s21, 0
    %p280 = por %p278, %p279
    %p281 = scmp.ne.s32.totalorder %s267, %s268
    %p282 = scmp.eq.s32.totalorder %s22, 3
    %p283 = por %p281, %p282
    %p285 = scmp.ne.s32.totalorder %s268, %s284
    %p286 = scmp.eq.s32.totalorder %s22, 0
    %p287 = por %p285, %p286
    %p288 = scmp.le.s32.totalorder 1, %s16
    %p289 = scmp.lt.s32.totalorder %s16, 5
    %p290 = pnand %p288, %p289
    %p291 = pneg %p290
    // Predicated region
    $region9: #{two_conv_block.3} parent=5 // pred_check
      _
    $region10: #{two_conv_block.3} parent=5 // pred_check_branch
      %293 = sbr.rel (%p290) target = $region12
    $region11: #{two_conv_block.3} parent=5 // pred_region
      %s294 = ssub.s32 %s16, 1
      // Predicated region
      $region13: #{two_conv_block.3} parent=11 // pred_check
        %p295 = pneg %p133
      $region14: #{two_conv_block.3} parent=11 // pred_check_branch
        %297 = sbr.rel (%p295) target = $region16
      $region15: #{two_conv_block.3} parent=11 // pred_region
        _
      $region16: #{two_conv_block.3} parent=11 // pred_fallthru
        _
      // Predicated region
      $region17: #{two_conv_block.3} parent=11 // pred_check
        %p298 = pneg %p154
      $region18: #{two_conv_block.3} parent=11 // pred_check_branch
        %300 = sbr.rel (%p298) target = $region20
      $region19: #{two_conv_block.3} parent=11 // pred_region
        _
      $region20: #{two_conv_block.3} parent=11 // pred_fallthru
        _
      // Predicated region
      $region21: #{two_conv_block.3} parent=11 // pred_check
        %p301 = pneg %p175
      $region22: #{two_conv_block.3} parent=11 // pred_check_branch
        %303 = sbr.rel (%p301) target = $region24
      $region23: #{two_conv_block.3} parent=11 // pred_region
        _
      $region24: #{two_conv_block.3} parent=11 // pred_fallthru
        _
      // Predicated region
      $region25: #{two_conv_block.3} parent=11 // pred_check
        %p304 = pneg %p196
      $region26: #{two_conv_block.3} parent=11 // pred_check_branch
        %306 = sbr.rel (%p304) target = $region28
      $region27: #{two_conv_block.3} parent=11 // pred_region
        _
      $region28: #{two_conv_block.3} parent=11 // pred_fallthru
        _
    $region12: #{two_conv_block.3} parent=5 // pred_fallthru
      _
    %p307 = scmp.lt.s32.totalorder %s16, 4
    // Predicated region
    $region29: #{two_conv_block.3} parent=5 // pred_check
      %p308 = pneg %p307
    $region30: #{two_conv_block.3} parent=5 // pred_check_branch
      %310 = sbr.rel (%p308) target = $region32
    $region31: #{two_conv_block.3} parent=5 // pred_region
      // Predicated region
      $region33: #{two_conv_block.3} parent=31 // pred_check
        %p311 = pneg %p50
      $region34: #{two_conv_block.3} parent=31 // pred_check_branch
        %313 = sbr.rel (%p311) target = $region36
      $region35: #{two_conv_block.3} parent=31 // pred_region
        %s314 = smul.u32 8, %s24
        %p315 = scmp.lt.s32.totalorder %s23, 1
        %s316 = scalar_select %p315, %s23, 1
        %p317 = scmp.lt.s32.totalorder %s314, 15
        %s318 = scalar_select %p317, %s314, 15
        %s319 = smul.addr %s318, 2
        %s320 = smul.addr %s316, 32
        %s321 = sadd.s32 %s319, %s320
        %s322 = smul.addr %s321, 8
        %s323 = scalar_lea.vmem %s0, %s322
        %s324 = smul.u32 8, %s24
      $region36: #{two_conv_block.3} parent=31 // pred_fallthru
        _
      // Predicated region
      $region37: #{two_conv_block.3} parent=31 // pred_check
        %p325 = pneg %p78
      $region38: #{two_conv_block.3} parent=31 // pred_check_branch
        %327 = sbr.rel (%p325) target = $region40
      $region39: #{two_conv_block.3} parent=31 // pred_region
        %p328 = scmp.lt.s32.totalorder %s23, 1
        %s329 = scalar_select %p328, %s23, 1
        %p330 = scmp.lt.s32.totalorder %s24, 1
        %s331 = scalar_select %p330, %s24, 1
        %s332 = smul.addr %s331, 2
        %s333 = smul.addr %s329, 4
        %s334 = sadd.s32 %s332, %s333
        %s335 = smul.addr %s334, 8
        %s336 = scalar_lea.vmem %s1, %s335
      $region40: #{two_conv_block.3} parent=31 // pred_fallthru
        _
      // Predicated region
      $region41: #{two_conv_block.3} parent=31 // pred_check
        %p337 = pneg %p106
      $region42: #{two_conv_block.3} parent=31 // pred_check_branch
        %339 = sbr.rel (%p337) target = $region44
      $region43: #{two_conv_block.3} parent=31 // pred_region
        %p340 = scmp.lt.s32.totalorder %s23, 1
        %s341 = scalar_select %p340, %s23, 1
        %p342 = scmp.lt.s32.totalorder %s24, 1
        %s343 = scalar_select %p342, %s24, 1
        %s344 = smul.addr %s343, 2
        %s345 = smul.addr %s341, 4
        %s346 = sadd.s32 %s344, %s345
        %s347 = smul.addr %s346, 8
        %s348 = scalar_lea.vmem %s2, %s347
      $region44: #{two_conv_block.3} parent=31 // pred_fallthru
        _
    $region32: #{two_conv_block.3} parent=5 // pred_fallthru
      _
    %p349 = scmp.le.s32.totalorder 1, %s16
    %p350 = scmp.lt.s32.totalorder %s16, 5
    %p351 = pnand %p349, %p350
    %p352 = pneg %p351
    // Predicated region
    $region45: #{two_conv_block.3} parent=5 // pred_check
      _
    $region46: #{two_conv_block.3} parent=5 // pred_check_branch
      %354 = sbr.rel (%p351) target = $region48
    $region47: #{two_conv_block.3} parent=5 // pred_region
      %s355 = ssub.s32 %s16, 1
      %s356 = smul.u32 8, %s26
      %p357 = scmp.lt.s32.totalorder %s25, 1
      %s358 = scalar_select %p357, %s25, 1
      %p359 = scmp.lt.s32.totalorder %s356, 15
      %s360 = scalar_select %p359, %s356, 15
      %s361 = smul.addr %s360, 2
      %s362 = smul.addr %s358, 32
      %s363 = sadd.s32 %s361, %s362
      %s364 = smul.addr %s363, 8
      %s365 = scalar_lea.vmem %s0, %s364
      %p366 = pneg %p56
      %p367 = pneg %p53
      %p368 = scmp.lt.s32.totalorder %s25, 1
      %s369 = scalar_select %p368, %s25, 1
      %p370 = scmp.lt.s32.totalorder %s26, 1
      %s371 = scalar_select %p370, %s26, 1
      %s372 = smul.addr %s371, 2
      %s373 = smul.addr %s369, 4
      %s374 = sadd.s32 %s372, %s373
      %s375 = smul.addr %s374, 8
      %s376 = scalar_lea.vmem %s1, %s375
      %p377 = pneg %p84
      %p378 = pneg %p81
      %p379 = scmp.lt.s32.totalorder %s25, 1
      %s380 = scalar_select %p379, %s25, 1
      %p381 = scmp.lt.s32.totalorder %s26, 1
      %s382 = scalar_select %p381, %s26, 1
      %s383 = smul.addr %s382, 2
      %s384 = smul.addr %s380, 4
      %s385 = sadd.s32 %s383, %s384
      %s386 = smul.addr %s385, 8
      %s387 = scalar_lea.vmem %s2, %s386
      %p388 = pneg %p112
      %p389 = pneg %p109
      %p390 = pneg %p133
      %p391 = pneg %p130
      %p392 = pneg %p154
      %p393 = pneg %p151
      %p394 = pneg %p175
      %p395 = pneg %p172
      %p396 = pneg %p196
      %p397 = pneg %p193
      %p398 = pneg %p224
      %p399 = pneg %p221
      %s400 = smul.u32 8, %s26
      %p401 = scmp.lt.s32.totalorder %s25, 1
      %s402 = scalar_select %p401, %s25, 1
      %p403 = scmp.lt.s32.totalorder %s400, 15
      %s404 = scalar_select %p403, %s400, 15
      %s405 = smul.addr %s404, 2
      %s406 = smul.addr %s402, 32
      %s407 = sadd.s32 %s405, %s406
      %s408 = smul.addr %s407, 4
      %s409 = scalar_lea.vmem %s7, %s408
      %p410 = pneg %p252
      %p411 = pneg %p249
      %p412 = scmp.lt.s32.totalorder %s25, 1
      %s413 = scalar_select %p412, %s25, 1
      %p414 = scmp.lt.s32.totalorder %s26, 1
      %s415 = scalar_select %p414, %s26, 1
      %s416 = smul.addr %s413, 2
      %s417 = sadd.s32 %s415, %s416
      %s418 = scalar_lea.vmem %s8, %s417
      %p419 = pneg %p280
      %p420 = pneg %p277
      %p421 = scmp.lt.s32.totalorder %s25, 1
      %s422 = scalar_select %p421, %s25, 1
      %p423 = scmp.lt.s32.totalorder %s26, 1
      %s424 = scalar_select %p423, %s26, 1
      %s425 = smul.addr %s422, 2
      %s426 = sadd.s32 %s424, %s425
      %s427 = scalar_lea.vmem %s9, %s426
      %s428 = smul.u32 8, %s26
      %p429 = scmp.lt.s32.totalorder %s25, 1
      %s430 = scalar_select %p429, %s25, 1
      %p431 = scmp.lt.s32.totalorder %s428, 15
      %s432 = scalar_select %p431, %s428, 15
      %s433 = smul.addr %s432, 2
      %s434 = smul.addr %s430, 32
      %s435 = sadd.s32 %s433, %s434
      %s436 = smul.addr %s435, 8
      %s437 = scalar_lea.vmem %s0, %s436
      %s438 = smul.u32 8, %s26
      %p439 = scmp.lt.s32.totalorder %s25, 1
      %s440 = scalar_select %p439, %s25, 1
      %p441 = scmp.lt.s32.totalorder %s26, 1
      %s442 = scalar_select %p441, %s26, 1
      %s443 = smul.addr %s442, 2
      %s444 = smul.addr %s440, 4
      %s445 = sadd.s32 %s443, %s444
      %s446 = smul.addr %s445, 8
      %s447 = scalar_lea.vmem %s1, %s446
      %p448 = scmp.lt.s32.totalorder %s25, 1
      %s449 = scalar_select %p448, %s25, 1
      %p450 = scmp.lt.s32.totalorder %s26, 1
      %s451 = scalar_select %p450, %s26, 1
      %s452 = smul.addr %s451, 2
      %s453 = smul.addr %s449, 4
      %s454 = sadd.s32 %s452, %s453
      %s455 = smul.addr %s454, 8
      %s456 = scalar_lea.vmem %s2, %s455
      %s457 = smul.u32 8, %s26
      %p458 = scmp.lt.s32.totalorder %s25, 1
      %s459 = scalar_select %p458, %s25, 1
      %p460 = scmp.lt.s32.totalorder %s457, 15
      %s461 = scalar_select %p460, %s457, 15
      %s462 = smul.addr %s461, 2
      %s463 = smul.addr %s459, 32
      %s464 = sadd.s32 %s462, %s463
      %s465 = smul.addr %s464, 4
      %s466 = scalar_lea.vmem %s7, %s465
      %s467 = smul.u32 8, %s26
      %p468 = scmp.lt.s32.totalorder %s25, 1
      %s469 = scalar_select %p468, %s25, 1
      %p470 = scmp.lt.s32.totalorder %s26, 1
      %s471 = scalar_select %p470, %s26, 1
      %s472 = smul.addr %s469, 2
      %s473 = sadd.s32 %s471, %s472
      %s474 = scalar_lea.vmem %s8, %s473
      %p475 = scmp.lt.s32.totalorder %s25, 1
      %s476 = scalar_select %p475, %s25, 1
      %p477 = scmp.lt.s32.totalorder %s26, 1
      %s478 = scalar_select %p477, %s26, 1
      %s479 = smul.addr %s476, 2
      %s480 = sadd.s32 %s478, %s479
      %s481 = scalar_lea.vmem %s9, %s480
      %vm483 = vcmask 1040384
      %vm484 = vsmask.f32 256
      %vm485 = vmand %vm483, %vm484
      %v486 = vld [vmem:[#allocation2] sm:$0x1]
      %v487 = vsel %vm485, 0, %v486
      %488 = vst [vmem:[#allocation2] sm:$0x1] %v487
      %v489 = vld [vmem:[#allocation2 + $0xc] sm:$0x1]
      %v490 = vsel %vm485, 0, %v489
      %491 = vst [vmem:[#allocation2 + $0xc] sm:$0x1] %v490
      %v492 = vld [vmem:[#allocation2 + $0x18] sm:$0x1]
      %v493 = vsel %vm485, 0, %v492
      %494 = vst [vmem:[#allocation2 + $0x18] sm:$0x1] %v493
      %v495 = vld [vmem:[#allocation2 + $0x24] sm:$0x1]
      %v496 = vsel %vm485, 0, %v495
      %497 = vst [vmem:[#allocation2 + $0x24] sm:$0x1] %v496
      %v498 = vld [vmem:[#allocation2 + $0x30] sm:$0x1]
      %v499 = vsel %vm485, 0, %v498
      %500 = vst [vmem:[#allocation2 + $0x30] sm:$0x1] %v499
      %v501 = vld [vmem:[#allocation2 + $0x3c] sm:$0x1]
      %v502 = vsel %vm485, 0, %v501
      %503 = vst [vmem:[#allocation2 + $0x3c] sm:$0x1] %v502
      %v504 = vld [vmem:[#allocation2 + $0x48] sm:$0x1]
      %v505 = vsel %vm485, 0, %v504
      %506 = vst [vmem:[#allocation2 + $0x48] sm:$0x1] %v505
      %v507 = vld [vmem:[#allocation2 + $0x54] sm:$0x1]
      %v508 = vsel %vm485, 0, %v507
      %509 = vst [vmem:[#allocation2 + $0x54] sm:$0x1] %v508
      %v510 = vld [vmem:[#allocation2 + $0x60] sm:$0x1]
      %v511 = vsel %vm485, 0, %v510
      %512 = vst [vmem:[#allocation2 + $0x60] sm:$0x1] %v511
      %v513 = vld [vmem:[#allocation2 + $0x6c] sm:$0x1]
      %v514 = vsel %vm485, 0, %v513
      %515 = vst [vmem:[#allocation2 + $0x6c] sm:$0x1] %v514
      %vm516 = vsmask.f32 7938
      %vm517 = vmand %vm483, %vm516
      %v518 = vld [vmem:[#allocation2 + $0x8] sm:$0x1]
      %v519 = vsel %vm517, 0, %v518
      %520 = vst [vmem:[#allocation2 + $0x8] sm:$0x1] %v519
      %v521 = vld [vmem:[#allocation2 + $0x14] sm:$0x1]
      %v522 = vsel %vm517, 0, %v521
      %523 = vst [vmem:[#allocation2 + $0x14] sm:$0x1] %v522
      %v524 = vld [vmem:[#allocation2 + $0x20] sm:$0x1]
      %v525 = vsel %vm517, 0, %v524
      %526 = vst [vmem:[#allocation2 + $0x20] sm:$0x1] %v525
      %v527 = vld [vmem:[#allocation2 + $0x2c] sm:$0x1]
      %v528 = vsel %vm517, 0, %v527
      %529 = vst [vmem:[#allocation2 + $0x2c] sm:$0x1] %v528
      %v530 = vld [vmem:[#allocation2 + $0x38] sm:$0x1]
      %v531 = vsel %vm517, 0, %v530
      %532 = vst [vmem:[#allocation2 + $0x38] sm:$0x1] %v531
      %v533 = vld [vmem:[#allocation2 + $0x44] sm:$0x1]
      %v534 = vsel %vm517, 0, %v533
      %535 = vst [vmem:[#allocation2 + $0x44] sm:$0x1] %v534
      %v536 = vld [vmem:[#allocation2 + $0x50] sm:$0x1]
      %v537 = vsel %vm517, 0, %v536
      %538 = vst [vmem:[#allocation2 + $0x50] sm:$0x1] %v537
      %v539 = vld [vmem:[#allocation2 + $0x5c] sm:$0x1]
      %v540 = vsel %vm517, 0, %v539
      %541 = vst [vmem:[#allocation2 + $0x5c] sm:$0x1] %v540
      %v542 = vld [vmem:[#allocation2 + $0x68] sm:$0x1]
      %v543 = vsel %vm517, 0, %v542
      %544 = vst [vmem:[#allocation2 + $0x68] sm:$0x1] %v543
      %v545 = vld [vmem:[#allocation2 + $0x74] sm:$0x1]
      %v546 = vsel %vm517, 0, %v545
      %547 = vst [vmem:[#allocation2 + $0x74] sm:$0x1] %v546
      %v548 = vld [vmem:[%s437] sm:$0xff]
      %v549 = vld [vmem:[%s437 + $0x8] sm:$0xff]
      %v550 = vld [vmem:[%s437 + $0x10] sm:$0xff]
      %v551 = vld [vmem:[%s437 + $0x18] sm:$0xff]
      %v552 = vld [vmem:[%s437 + $0x20] sm:$0xff]
      %v553 = vld [vmem:[%s437 + $0x28] sm:$0xff]
      %v554 = vld [vmem:[%s437 + $0x30] sm:$0xff]
      %v555 = vld [vmem:[%s437 + $0x38] sm:$0xff]
      %v556 = vld [vmem:[%s437 + $0x40] sm:$0xff]
      %v557 = vld [vmem:[%s437 + $0x48] sm:$0xff]
      %v558 = vld [vmem:[%s437 + $0x50] sm:$0xff]
      %v559 = vld [vmem:[%s437 + $0x58] sm:$0xff]
      %v560 = vld [vmem:[%s437 + $0x60] sm:$0xff]
      %v561 = vld [vmem:[%s437 + $0x68] sm:$0xff]
      %v562 = vld [vmem:[%s437 + $0x70] sm:$0xff]
      %v563 = vld [vmem:[%s437 + $0x78] sm:$0xff]
      %v564 = vpack.c.bf16 %v549, %v548
      %v565 = vpack.c.bf16 %v551, %v550
      %v566 = vpack.c.bf16 %v553, %v552
      %v567 = vpack.c.bf16 %v555, %v554
      %v568 = vpack.c.bf16 %v557, %v556
      %v569 = vpack.c.bf16 %v559, %v558
      %v570 = vpack.c.bf16 %v561, %v560
      %v571 = vpack.c.bf16 %v563, %v562
      %v580 = vunpack.c.l.b16 %v564
      %v581 = vunpack.c.h.b16 %v564
      %v582 = vunpack.c.l.b16 %v565
      %v583 = vunpack.c.h.b16 %v565
      %v584 = vunpack.c.l.b16 %v566
      %v585 = vunpack.c.h.b16 %v566
      %v586 = vunpack.c.l.b16 %v567
      %v587 = vunpack.c.h.b16 %v567
      %v588 = vunpack.c.l.b16 %v568
      %v589 = vunpack.c.h.b16 %v568
      %v590 = vunpack.c.l.b16 %v569
      %v591 = vunpack.c.h.b16 %v569
      %v592 = vunpack.c.l.b16 %v570
      %v593 = vunpack.c.h.b16 %v570
      %v594 = vunpack.c.l.b16 %v571
      %v595 = vunpack.c.h.b16 %v571
      %v596 = vpack.c.b16 %v580, %v580
      %v597 = vpack.c.b16 %v581, %v581
      %v598 = vpack.c.b16 %v582, %v582
      %v599 = vpack.c.b16 %v583, %v583
      %v600 = vpack.c.b16 %v584, %v584
      %v601 = vpack.c.b16 %v585, %v585
      %v602 = vpack.c.b16 %v586, %v586
      %v603 = vpack.c.b16 %v587, %v587
      %v604 = vpack.c.b16 %v588, %v588
      %v605 = vpack.c.b16 %v589, %v589
      %v606 = vpack.c.b16 %v590, %v590
      %v607 = vpack.c.b16 %v591, %v591
      %v608 = vpack.c.b16 %v592, %v592
      %v609 = vpack.c.b16 %v593, %v593
      %v610 = vpack.c.b16 %v594, %v594
      %v611 = vpack.c.b16 %v595, %v595
      %vm612 = vsmask.f32 4368
      %vm613 = vmor %vm484, %vm612
      %v615 = vshrl.u32 %v596, 16
      %v617 = vrot.slane %v615, 7
      %v618 = vshll.u32 %v596, 16
      %v620 = vor.u32 %v617, %v618
      %v621 = vrot.slane %v617, 4
      %v623 = vshrl.u32 %v597, 16
      %v625 = vrot.slane %v623, 7
      %v626 = vshll.u32 %v597, 16
      %v628 = vor.u32 %v625, %v626
      %v629 = vsel %vm613, %v621, %v628
      %v630 = vrot.slane %v625, 4
      %v632 = vshrl.u32 %v598, 16
      %v634 = vrot.slane %v632, 7
      %v635 = vshll.u32 %v598, 16
      %v637 = vor.u32 %v634, %v635
      %v638 = vrot.slane %v634, 4
      %v640 = vshrl.u32 %v599, 16
      %v642 = vrot.slane %v640, 7
      %v643 = vshll.u32 %v599, 16
      %v645 = vor.u32 %v642, %v643
      %v646 = vsel %vm613, %v638, %v645
      %v647 = vrot.slane %v642, 4
      %v649 = vshrl.u32 %v600, 16
      %v651 = vrot.slane %v649, 7
      %v652 = vshll.u32 %v600, 16
      %v654 = vor.u32 %v651, %v652
      %v655 = vrot.slane %v651, 4
      %v657 = vshrl.u32 %v601, 16
      %v659 = vrot.slane %v657, 7
      %v660 = vshll.u32 %v601, 16
      %v662 = vor.u32 %v659, %v660
      %v663 = vsel %vm613, %v655, %v662
      %v664 = vrot.slane %v659, 4
      %v666 = vshrl.u32 %v602, 16
      %v668 = vrot.slane %v666, 7
      %v669 = vshll.u32 %v602, 16
      %v671 = vor.u32 %v668, %v669
      %v672 = vrot.slane %v668, 4
      %v674 = vshrl.u32 %v603, 16
      %v676 = vrot.slane %v674, 7
      %v677 = vshll.u32 %v603, 16
      %v679 = vor.u32 %v676, %v677
      %v680 = vsel %vm613, %v672, %v679
      %v681 = vrot.slane %v676, 4
      %v683 = vshrl.u32 %v604, 16
      %v685 = vrot.slane %v683, 7
      %v686 = vshll.u32 %v604, 16
      %v688 = vor.u32 %v685, %v686
      %v689 = vrot.slane %v685, 4
      %v691 = vshrl.u32 %v605, 16
      %v693 = vrot.slane %v691, 7
      %v694 = vshll.u32 %v605, 16
      %v696 = vor.u32 %v693, %v694
      %v697 = vsel %vm613, %v689, %v696
      %v698 = vrot.slane %v693, 4
      %v700 = vshrl.u32 %v606, 16
      %v702 = vrot.slane %v700, 7
      %v703 = vshll.u32 %v606, 16
      %v705 = vor.u32 %v702, %v703
      %v706 = vrot.slane %v702, 4
      %v708 = vshrl.u32 %v607, 16
      %v710 = vrot.slane %v708, 7
      %v711 = vshll.u32 %v607, 16
      %v713 = vor.u32 %v710, %v711
      %v714 = vsel %vm613, %v706, %v713
      %v715 = vrot.slane %v710, 4
      %v717 = vshrl.u32 %v608, 16
      %v719 = vrot.slane %v717, 7
      %v720 = vshll.u32 %v608, 16
      %v722 = vor.u32 %v719, %v720
      %v723 = vrot.slane %v719, 4
      %v725 = vshrl.u32 %v609, 16
      %v727 = vrot.slane %v725, 7
      %v728 = vshll.u32 %v609, 16
      %v730 = vor.u32 %v727, %v728
      %v731 = vsel %vm613, %v723, %v730
      %v732 = vrot.slane %v727, 4
      %v734 = vshrl.u32 %v610, 16
      %v736 = vrot.slane %v734, 7
      %v737 = vshll.u32 %v610, 16
      %v739 = vor.u32 %v736, %v737
      %v740 = vrot.slane %v736, 4
      %v742 = vshrl.u32 %v611, 16
      %v744 = vrot.slane %v742, 7
      %v745 = vshll.u32 %v611, 16
      %v747 = vor.u32 %v744, %v745
      %v748 = vsel %vm613, %v740, %v747
      %v749 = vrot.slane %v744, 4
      %s774 = scalar_lea.vmem [#allocation2], 12
      %vm775 = vcmask 1043456
      %vm776 = vmand %vm775, %vm516
      %v777 = vld [vmem:[%s774] sm:$0xf]
      %v778 = vsel %vm776, %v620, %v777
      %779 = vst [vmem:[%s774] sm:$0xf] %v778
      %780 = vst [vmem:[%s774 + $0x4] sm:$0xf] %v629
      %v781 = vld [vmem:[%s774 + $0x8] sm:$0x1]
      %v782 = vsel %vm485, %v630, %v781
      %783 = vst [vmem:[%s774 + $0x8] sm:$0x1] %v782
      %v784 = vld [vmem:[%s774 + $0xc] sm:$0xf]
      %v785 = vsel %vm776, %v637, %v784
      %786 = vst [vmem:[%s774 + $0xc] sm:$0xf] %v785
      %787 = vst [vmem:[%s774 + $0x10] sm:$0xf] %v646
      %v788 = vld [vmem:[%s774 + $0x14] sm:$0x1]
      %v789 = vsel %vm485, %v647, %v788
      %790 = vst [vmem:[%s774 + $0x14] sm:$0x1] %v789
      %v791 = vld [vmem:[%s774 + $0x18] sm:$0xf]
      %v792 = vsel %vm776, %v654, %v791
      %793 = vst [vmem:[%s774 + $0x18] sm:$0xf] %v792
      %794 = vst [vmem:[%s774 + $0x1c] sm:$0xf] %v663
      %v795 = vld [vmem:[%s774 + $0x20] sm:$0x1]
      %v796 = vsel %vm485, %v664, %v795
      %797 = vst [vmem:[%s774 + $0x20] sm:$0x1] %v796
      %v798 = vld [vmem:[%s774 + $0x24] sm:$0xf]
      %v799 = vsel %vm776, %v671, %v798
      %800 = vst [vmem:[%s774 + $0x24] sm:$0xf] %v799
      %801 = vst [vmem:[%s774 + $0x28] sm:$0xf] %v680
      %v802 = vld [vmem:[%s774 + $0x2c] sm:$0x1]
      %v803 = vsel %vm485, %v681, %v802
      %804 = vst [vmem:[%s774 + $0x2c] sm:$0x1] %v803
      %v805 = vld [vmem:[%s774 + $0x30] sm:$0xf]
      %v806 = vsel %vm776, %v688, %v805
      %807 = vst [vmem:[%s774 + $0x30] sm:$0xf] %v806
      %808 = vst [vmem:[%s774 + $0x34] sm:$0xf] %v697
      %v809 = vld [vmem:[%s774 + $0x38] sm:$0x1]
      %v810 = vsel %vm485, %v698, %v809
      %811 = vst [vmem:[%s774 + $0x38] sm:$0x1] %v810
      %v812 = vld [vmem:[%s774 + $0x3c] sm:$0xf]
      %v813 = vsel %vm776, %v705, %v812
      %814 = vst [vmem:[%s774 + $0x3c] sm:$0xf] %v813
      %815 = vst [vmem:[%s774 + $0x40] sm:$0xf] %v714
      %v816 = vld [vmem:[%s774 + $0x44] sm:$0x1]
      %v817 = vsel %vm485, %v715, %v816
      %818 = vst [vmem:[%s774 + $0x44] sm:$0x1] %v817
      %v819 = vld [vmem:[%s774 + $0x48] sm:$0xf]
      %v820 = vsel %vm776, %v722, %v819
      %821 = vst [vmem:[%s774 + $0x48] sm:$0xf] %v820
      %822 = vst [vmem:[%s774 + $0x4c] sm:$0xf] %v731
      %v823 = vld [vmem:[%s774 + $0x50] sm:$0x1]
      %v824 = vsel %vm485, %v732, %v823
      %825 = vst [vmem:[%s774 + $0x50] sm:$0x1] %v824
      %v826 = vld [vmem:[%s774 + $0x54] sm:$0xf]
      %v827 = vsel %vm776, %v739, %v826
      %828 = vst [vmem:[%s774 + $0x54] sm:$0xf] %v827
      %829 = vst [vmem:[%s774 + $0x58] sm:$0xf] %v748
      %v830 = vld [vmem:[%s774 + $0x5c] sm:$0x1]
      %v831 = vsel %vm485, %v749, %v830
      %832 = vst [vmem:[%s774 + $0x5c] sm:$0x1] %v831
      %p833 = scmp.gt.s32.totalorder %s26, 0
      // Predicated region
      $region49: #{two_conv_block.3} parent=47 // pred_check
        %p834 = pneg %p833
      $region50: #{two_conv_block.3} parent=47 // pred_check_branch
        %836 = sbr.rel (%p834) target = $region52
      $region51: #{two_conv_block.3} parent=47 // pred_region
        %v837 = vld [vmem:[%s447] sm:$0xff]
        %v838 = vld [vmem:[%s447 + $0x8] sm:$0xff]
        %v839 = vpack.c.bf16 %v838, %v837
        %v841 = vunpack.c.l.b16 %v839
        %v842 = vunpack.c.h.b16 %v839
        %v843 = vpack.c.b16 %v841, %v841
        %v844 = vpack.c.b16 %v842, %v842
        %v846 = vshrl.u32 %v843, 16
        %v848 = vrot.slane %v846, 7
        %v849 = vshll.u32 %v843, 16
        %v851 = vor.u32 %v848, %v849
        %v852 = vrot.slane %v848, 4
        %v854 = vshrl.u32 %v844, 16
        %v856 = vrot.slane %v854, 7
        %v857 = vshll.u32 %v844, 16
        %v859 = vor.u32 %v856, %v857
        %v860 = vsel %vm613, %v852, %v859
        %v861 = vrot.slane %v856, 4
        %v865 = vld [vmem:[#allocation2] sm:$0xf]
        %v866 = vsel %vm776, %v851, %v865
        %867 = vst [vmem:[#allocation2] sm:$0xf] %v866
        %868 = vst [vmem:[#allocation2 + $0x4] sm:$0xf] %v860
        %v869 = vld [vmem:[#allocation2 + $0x8] sm:$0x1]
        %v870 = vsel %vm485, %v861, %v869
        %871 = vst [vmem:[#allocation2 + $0x8] sm:$0x1] %v870
      $region52: #{two_conv_block.3} parent=47 // pred_fallthru
        _
      %p872 = scmp.eq.s32.totalorder %s26, 0
      // Predicated region
      $region53: #{two_conv_block.3} parent=47 // pred_check
        %p873 = pneg %p872
      $region54: #{two_conv_block.3} parent=47 // pred_check_branch
        %875 = sbr.rel (%p873) target = $region56
      $region55: #{two_conv_block.3} parent=47 // pred_region
        %v876 = vld [vmem:[#allocation2] sm:$0xf]
        %v877 = vsel %vm776, 0, %v876
        %878 = vst [vmem:[#allocation2] sm:$0xf] %v877
        %879 = vst [vmem:[#allocation2 + $0x4] sm:$0xf] 0
        %v880 = vld [vmem:[#allocation2 + $0x8] sm:$0x1]
        %v881 = vsel %vm485, 0, %v880
        %882 = vst [vmem:[#allocation2 + $0x8] sm:$0x1] %v881
      $region56: #{two_conv_block.3} parent=47 // pred_fallthru
        _
      %p883 = scmp.lt.s32.totalorder %s26, 1
      // Predicated region
      $region57: #{two_conv_block.3} parent=47 // pred_check
        %p884 = pneg %p883
      $region58: #{two_conv_block.3} parent=47 // pred_check_branch
        %886 = sbr.rel (%p884) target = $region60
      $region59: #{two_conv_block.3} parent=47 // pred_region
        %v887 = vld [vmem:[%s456] sm:$0xff]
        %v888 = vld [vmem:[%s456 + $0x8] sm:$0xff]
        %v889 = vpack.c.bf16 %v888, %v887
        %v891 = vunpack.c.l.b16 %v889
        %v892 = vunpack.c.h.b16 %v889
        %v893 = vpack.c.b16 %v891, %v891
        %v894 = vpack.c.b16 %v892, %v892
        %v896 = vshrl.u32 %v893, 16
        %v898 = vrot.slane %v896, 7
        %v899 = vshll.u32 %v893, 16
        %v901 = vor.u32 %v898, %v899
        %v902 = vrot.slane %v898, 4
        %v904 = vshrl.u32 %v894, 16
        %v906 = vrot.slane %v904, 7
        %v907 = vshll.u32 %v894, 16
        %v909 = vor.u32 %v906, %v907
        %v910 = vsel %vm613, %v902, %v909
        %v911 = vrot.slane %v906, 4
        %s915 = scalar_lea.vmem [#allocation2], 108
        %v916 = vld [vmem:[%s915] sm:$0xf]
        %v917 = vsel %vm776, %v901, %v916
        %918 = vst [vmem:[%s915] sm:$0xf] %v917
        %919 = vst [vmem:[%s915 + $0x4] sm:$0xf] %v910
        %v920 = vld [vmem:[%s915 + $0x8] sm:$0x1]
        %v921 = vsel %vm485, %v911, %v920
        %922 = vst [vmem:[%s915 + $0x8] sm:$0x1] %v921
      $region60: #{two_conv_block.3} parent=47 // pred_fallthru
        _
      %p923 = scmp.eq.s32.totalorder %s26, 1
      // Predicated region
      $region61: #{two_conv_block.3} parent=47 // pred_check
        %p924 = pneg %p923
      $region62: #{two_conv_block.3} parent=47 // pred_check_branch
        %926 = sbr.rel (%p924) target = $region64
      $region63: #{two_conv_block.3} parent=47 // pred_region
        %s927 = scalar_lea.vmem [#allocation2], 108
        %v928 = vld [vmem:[%s927] sm:$0xf]
        %v929 = vsel %vm776, 0, %v928
        %930 = vst [vmem:[%s927] sm:$0xf] %v929
        %931 = vst [vmem:[%s927 + $0x4] sm:$0xf] 0
        %v932 = vld [vmem:[%s927 + $0x8] sm:$0x1]
        %v933 = vsel %vm485, 0, %v932
        %934 = vst [vmem:[%s927 + $0x8] sm:$0x1] %v933
      $region64: #{two_conv_block.3} parent=47 // pred_fallthru
        _
      %v935 = vld [vmem:[#allocation2] sm:$0xf]
      %v936 = vld [vmem:[#allocation2 + $0x4] sm:$0xf]
      %v937 = vld [vmem:[#allocation2 + $0xc] sm:$0xf]
      %v938 = vld [vmem:[#allocation2 + $0x10] sm:$0xf]
      %v939 = vld [vmem:[#allocation2 + $0x18] sm:$0xf]
      %v940 = vld [vmem:[#allocation2 + $0x1c] sm:$0xf]
      %v941 = vld [vmem:[#allocation2 + $0x24] sm:$0xf]
      %v942 = vld [vmem:[#allocation2 + $0x28] sm:$0xf]
      %v943 = vld [vmem:[#allocation2 + $0x30] sm:$0xf]
      %v944 = vld [vmem:[#allocation2 + $0x34] sm:$0xf]
      %v945 = vld [vmem:[#allocation2 + $0x3c] sm:$0xf]
      %v946 = vld [vmem:[#allocation2 + $0x40] sm:$0xf]
      %v947 = vld [vmem:[#allocation2 + $0x48] sm:$0xf]
      %v948 = vld [vmem:[#allocation2 + $0x4c] sm:$0xf]
      %v949 = vld [vmem:[#allocation2 + $0x54] sm:$0xf]
      %v950 = vld [vmem:[#allocation2 + $0x58] sm:$0xf]
      %v967 = vunpack.c.l.b16 %v935
      %v968 = vunpack.c.l.b16 %v936
      %v969 = vunpack.c.l.b16 %v937
      %v970 = vunpack.c.l.b16 %v938
      %v971 = vunpack.c.l.b16 %v939
      %v972 = vunpack.c.l.b16 %v940
      %v973 = vunpack.c.l.b16 %v941
      %v974 = vunpack.c.l.b16 %v942
      %v975 = vunpack.c.l.b16 %v943
      %v976 = vunpack.c.l.b16 %v944
      %v977 = vunpack.c.l.b16 %v945
      %v978 = vunpack.c.l.b16 %v946
      %v979 = vunpack.c.l.b16 %v947
      %v980 = vunpack.c.l.b16 %v948
      %v981 = vunpack.c.l.b16 %v949
      %v982 = vunpack.c.l.b16 %v950
      %v983 = vpack.c.b16 %v968, %v967
      %v984 = vpack.c.b16 %v970, %v969
      %v985 = vpack.c.b16 %v972, %v971
      %v986 = vpack.c.b16 %v974, %v973
      %v987 = vpack.c.b16 %v976, %v975
      %v988 = vpack.c.b16 %v978, %v977
      %v989 = vpack.c.b16 %v980, %v979
      %v990 = vpack.c.b16 %v982, %v981
      %999 = vst [vmem:[#allocation3] sm:$0xff] %v983
      %1000 = vst [vmem:[#allocation3 + $0x18] sm:$0xff] %v984
      %1001 = vst [vmem:[#allocation3 + $0x30] sm:$0xff] %v985
      %1002 = vst [vmem:[#allocation3 + $0x48] sm:$0xff] %v986
      %1003 = vst [vmem:[#allocation3 + $0x60] sm:$0xff] %v987
      %1004 = vst [vmem:[#allocation3 + $0x78] sm:$0xff] %v988
      %1005 = vst [vmem:[#allocation3 + $0x90] sm:$0xff] %v989
      %1006 = vst [vmem:[#allocation3 + $0xa8] sm:$0xff] %v990
      %v1007 = vld [vmem:[#allocation2] sm:$0xf]
      %v1008 = vld [vmem:[#allocation2 + $0x4] sm:$0xf]
      %v1009 = vld [vmem:[#allocation2 + $0x8] sm:$0x1]
      %v1010 = vld [vmem:[#allocation2 + $0xc] sm:$0xf]
      %v1011 = vld [vmem:[#allocation2 + $0x10] sm:$0xf]
      %v1012 = vld [vmem:[#allocation2 + $0x14] sm:$0x1]
      %v1013 = vld [vmem:[#allocation2 + $0x18] sm:$0xf]
      %v1014 = vld [vmem:[#allocation2 + $0x1c] sm:$0xf]
      %v1015 = vld [vmem:[#allocation2 + $0x20] sm:$0x1]
      %v1016 = vld [vmem:[#allocation2 + $0x24] sm:$0xf]
      %v1017 = vld [vmem:[#allocation2 + $0x28] sm:$0xf]
      %v1018 = vld [vmem:[#allocation2 + $0x2c] sm:$0x1]
      %v1019 = vld [vmem:[#allocation2 + $0x30] sm:$0xf]
      %v1020 = vld [vmem:[#allocation2 + $0x34] sm:$0xf]
      %v1021 = vld [vmem:[#allocation2 + $0x38] sm:$0x1]
      %v1022 = vld [vmem:[#allocation2 + $0x3c] sm:$0xf]
      %v1023 = vld [vmem:[#allocation2 + $0x40] sm:$0xf]
      %v1024 = vld [vmem:[#allocation2 + $0x44] sm:$0x1]
      %v1025 = vld [vmem:[#allocation2 + $0x48] sm:$0xf]
      %v1026 = vld [vmem:[#allocation2 + $0x4c] sm:$0xf]
      %v1027 = vld [vmem:[#allocation2 + $0x50] sm:$0x1]
      %v1028 = vld [vmem:[#allocation2 + $0x54] sm:$0xf]
      %v1029 = vld [vmem:[#allocation2 + $0x58] sm:$0xf]
      %v1030 = vld [vmem:[#allocation2 + $0x5c] sm:$0x1]
      %vm1031 = vsmask.f32 3328
      %vm1032 = vsmask.f32 7440
      %vm1033 = vmor %vm1031, %vm1032
      %v1035 = vshrl.u32 %v1007, 16
      %v1037 = vrot.slane %v1035, 4
      %v1038 = vshll.u32 %v1007, 16
      %v1040 = vrot.slane %v1038, 5
      %v1041 = vor.u32 %v1037, %v1040
      %v1042 = vrot.slane %v1041, 4
      %v1044 = vshll.u32 %v1008, 16
      %v1046 = vrot.slane %v1044, 5
      %v1047 = vsel %vm1033, %v1042, %v1046
      %v1048 = vshrl.u32 %v1008, 16
      %v1050 = vrot.slane %v1048, 4
      %v1051 = vor.u32 %v1050, %v1046
      %v1052 = vrot.slane %v1051, 4
      %v1054 = vshll.u32 %v1009, 16
      %v1056 = vrot.slane %v1054, 5
      %v1057 = vsel %vm1033, %v1052, %v1056
      %v1059 = vshrl.u32 %v1010, 16
      %v1061 = vrot.slane %v1059, 4
      %v1062 = vshll.u32 %v1010, 16
      %v1064 = vrot.slane %v1062, 5
      %v1065 = vor.u32 %v1061, %v1064
      %v1066 = vrot.slane %v1065, 4
      %v1068 = vshll.u32 %v1011, 16
      %v1070 = vrot.slane %v1068, 5
      %v1071 = vsel %vm1033, %v1066, %v1070
      %v1072 = vshrl.u32 %v1011, 16
      %v1074 = vrot.slane %v1072, 4
      %v1075 = vor.u32 %v1074, %v1070
      %v1076 = vrot.slane %v1075, 4
      %v1078 = vshll.u32 %v1012, 16
      %v1080 = vrot.slane %v1078, 5
      %v1081 = vsel %vm1033, %v1076, %v1080
      %v1083 = vshrl.u32 %v1013, 16
      %v1085 = vrot.slane %v1083, 4
      %v1086 = vshll.u32 %v1013, 16
      %v1088 = vrot.slane %v1086, 5
      %v1089 = vor.u32 %v1085, %v1088
      %v1090 = vrot.slane %v1089, 4
      %v1092 = vshll.u32 %v1014, 16
      %v1094 = vrot.slane %v1092, 5
      %v1095 = vsel %vm1033, %v1090, %v1094
      %v1096 = vshrl.u32 %v1014, 16
      %v1098 = vrot.slane %v1096, 4
      %v1099 = vor.u32 %v1098, %v1094
      %v1100 = vrot.slane %v1099, 4
      %v1102 = vshll.u32 %v1015, 16
      %v1104 = vrot.slane %v1102, 5
      %v1105 = vsel %vm1033, %v1100, %v1104
      %v1107 = vshrl.u32 %v1016, 16
      %v1109 = vrot.slane %v1107, 4
      %v1110 = vshll.u32 %v1016, 16
      %v1112 = vrot.slane %v1110, 5
      %v1113 = vor.u32 %v1109, %v1112
      %v1114 = vrot.slane %v1113, 4
      %v1116 = vshll.u32 %v1017, 16
      %v1118 = vrot.slane %v1116, 5
      %v1119 = vsel %vm1033, %v1114, %v1118
      %v1120 = vshrl.u32 %v1017, 16
      %v1122 = vrot.slane %v1120, 4
      %v1123 = vor.u32 %v1122, %v1118
      %v1124 = vrot.slane %v1123, 4
      %v1126 = vshll.u32 %v1018, 16
      %v1128 = vrot.slane %v1126, 5
      %v1129 = vsel %vm1033, %v1124, %v1128
      %v1131 = vshrl.u32 %v1019, 16
      %v1133 = vrot.slane %v1131, 4
      %v1134 = vshll.u32 %v1019, 16
      %v1136 = vrot.slane %v1134, 5
      %v1137 = vor.u32 %v1133, %v1136
      %v1138 = vrot.slane %v1137, 4
      %v1140 = vshll.u32 %v1020, 16
      %v1142 = vrot.slane %v1140, 5
      %v1143 = vsel %vm1033, %v1138, %v1142
      %v1144 = vshrl.u32 %v1020, 16
      %v1146 = vrot.slane %v1144, 4
      %v1147 = vor.u32 %v1146, %v1142
      %v1148 = vrot.slane %v1147, 4
      %v1150 = vshll.u32 %v1021, 16
      %v1152 = vrot.slane %v1150, 5
      %v1153 = vsel %vm1033, %v1148, %v1152
      %v1155 = vshrl.u32 %v1022, 16
      %v1157 = vrot.slane %v1155, 4
      %v1158 = vshll.u32 %v1022, 16
      %v1160 = vrot.slane %v1158, 5
      %v1161 = vor.u32 %v1157, %v1160
      %v1162 = vrot.slane %v1161, 4
      %v1164 = vshll.u32 %v1023, 16
      %v1166 = vrot.slane %v1164, 5
      %v1167 = vsel %vm1033, %v1162, %v1166
      %v1168 = vshrl.u32 %v1023, 16
      %v1170 = vrot.slane %v1168, 4
      %v1171 = vor.u32 %v1170, %v1166
      %v1172 = vrot.slane %v1171, 4
      %v1174 = vshll.u32 %v1024, 16
      %v1176 = vrot.slane %v1174, 5
      %v1177 = vsel %vm1033, %v1172, %v1176
      %v1179 = vshrl.u32 %v1025, 16
      %v1181 = vrot.slane %v1179, 4
      %v1182 = vshll.u32 %v1025, 16
      %v1184 = vrot.slane %v1182, 5
      %v1185 = vor.u32 %v1181, %v1184
      %v1186 = vrot.slane %v1185, 4
      %v1188 = vshll.u32 %v1026, 16
      %v1190 = vrot.slane %v1188, 5
      %v1191 = vsel %vm1033, %v1186, %v1190
      %v1192 = vshrl.u32 %v1026, 16
      %v1194 = vrot.slane %v1192, 4
      %v1195 = vor.u32 %v1194, %v1190
      %v1196 = vrot.slane %v1195, 4
      %v1198 = vshll.u32 %v1027, 16
      %v1200 = vrot.slane %v1198, 5
      %v1201 = vsel %vm1033, %v1196, %v1200
      %v1203 = vshrl.u32 %v1028, 16
      %v1205 = vrot.slane %v1203, 4
      %v1206 = vshll.u32 %v1028, 16
      %v1208 = vrot.slane %v1206, 5
      %v1209 = vor.u32 %v1205, %v1208
      %v1210 = vrot.slane %v1209, 4
      %v1212 = vshll.u32 %v1029, 16
      %v1214 = vrot.slane %v1212, 5
      %v1215 = vsel %vm1033, %v1210, %v1214
      %v1216 = vshrl.u32 %v1029, 16
      %v1218 = vrot.slane %v1216, 4
      %v1219 = vor.u32 %v1218, %v1214
      %v1220 = vrot.slane %v1219, 4
      %v1222 = vshll.u32 %v1030, 16
      %v1224 = vrot.slane %v1222, 5
      %v1225 = vsel %vm1033, %v1220, %v1224
      %v1226 = vunpack.c.l.b16 %v1047
      %v1227 = vunpack.c.l.b16 %v1057
      %v1228 = vunpack.c.l.b16 %v1071
      %v1229 = vunpack.c.l.b16 %v1081
      %v1230 = vunpack.c.l.b16 %v1095
      %v1231 = vunpack.c.l.b16 %v1105
      %v1232 = vunpack.c.l.b16 %v1119
      %v1233 = vunpack.c.l.b16 %v1129
      %v1234 = vunpack.c.l.b16 %v1143
      %v1235 = vunpack.c.l.b16 %v1153
      %v1236 = vunpack.c.l.b16 %v1167
      %v1237 = vunpack.c.l.b16 %v1177
      %v1238 = vunpack.c.l.b16 %v1191
      %v1239 = vunpack.c.l.b16 %v1201
      %v1240 = vunpack.c.l.b16 %v1215
      %v1241 = vunpack.c.l.b16 %v1225
      %v1242 = vpack.c.b16 %v1227, %v1226
      %v1243 = vpack.c.b16 %v1229, %v1228
      %v1244 = vpack.c.b16 %v1231, %v1230
      %v1245 = vpack.c.b16 %v1233, %v1232
      %v1246 = vpack.c.b16 %v1235, %v1234
      %v1247 = vpack.c.b16 %v1237, %v1236
      %v1248 = vpack.c.b16 %v1239, %v1238
      %v1249 = vpack.c.b16 %v1241, %v1240
      %1258 = vst [vmem:[#allocation3 + $0x8] sm:$0xff] %v1242
      %1259 = vst [vmem:[#allocation3 + $0x20] sm:$0xff] %v1243
      %1260 = vst [vmem:[#allocation3 + $0x38] sm:$0xff] %v1244
      %1261 = vst [vmem:[#allocation3 + $0x50] sm:$0xff] %v1245
      %1262 = vst [vmem:[#allocation3 + $0x68] sm:$0xff] %v1246
      %1263 = vst [vmem:[#allocation3 + $0x80] sm:$0xff] %v1247
      %1264 = vst [vmem:[#allocation3 + $0x98] sm:$0xff] %v1248
      %1265 = vst [vmem:[#allocation3 + $0xb0] sm:$0xff] %v1249
      %v1266 = vld [vmem:[#allocation2] sm:$0xe]
      %v1267 = vld [vmem:[#allocation2 + $0x4] sm:$0xf]
      %v1268 = vld [vmem:[#allocation2 + $0x8] sm:$0x1]
      %v1269 = vld [vmem:[#allocation2 + $0xc] sm:$0xe]
      %v1270 = vld [vmem:[#allocation2 + $0x10] sm:$0xf]
      %v1271 = vld [vmem:[#allocation2 + $0x14] sm:$0x1]
      %v1272 = vld [vmem:[#allocation2 + $0x18] sm:$0xe]
      %v1273 = vld [vmem:[#allocation2 + $0x1c] sm:$0xf]
      %v1274 = vld [vmem:[#allocation2 + $0x20] sm:$0x1]
      %v1275 = vld [vmem:[#allocation2 + $0x24] sm:$0xe]
      %v1276 = vld [vmem:[#allocation2 + $0x28] sm:$0xf]
      %v1277 = vld [vmem:[#allocation2 + $0x2c] sm:$0x1]
      %v1278 = vld [vmem:[#allocation2 + $0x30] sm:$0xe]
      %v1279 = vld [vmem:[#allocation2 + $0x34] sm:$0xf]
      %v1280 = vld [vmem:[#allocation2 + $0x38] sm:$0x1]
      %v1281 = vld [vmem:[#allocation2 + $0x3c] sm:$0xe]
      %v1282 = vld [vmem:[#allocation2 + $0x40] sm:$0xf]
      %v1283 = vld [vmem:[#allocation2 + $0x44] sm:$0x1]
      %v1284 = vld [vmem:[#allocation2 + $0x48] sm:$0xe]
      %v1285 = vld [vmem:[#allocation2 + $0x4c] sm:$0xf]
      %v1286 = vld [vmem:[#allocation2 + $0x50] sm:$0x1]
      %v1287 = vld [vmem:[#allocation2 + $0x54] sm:$0xe]
      %v1288 = vld [vmem:[#allocation2 + $0x58] sm:$0xf]
      %v1289 = vld [vmem:[#allocation2 + $0x5c] sm:$0x1]
      %vm1314 = vcmask 1042432
      %vm1315 = vcmask 1046532
      %vm1316 = vmor %vm1314, %vm1315
      %v1317 = vrot.slane %v1266, 5
      %v1318 = vrot.slane %v1317, 4
      %v1319 = vrot.slane %v1267, 5
      %v1320 = vsel %vm1316, %v1318, %v1319
      %v1321 = vrot.slane %v1319, 4
      %v1322 = vrot.slane %v1268, 5
      %v1323 = vsel %vm1316, %v1321, %v1322
      %v1324 = vrot.slane %v1269, 5
      %v1325 = vrot.slane %v1324, 4
      %v1326 = vrot.slane %v1270, 5
      %v1327 = vsel %vm1316, %v1325, %v1326
      %v1328 = vrot.slane %v1326, 4
      %v1329 = vrot.slane %v1271, 5
      %v1330 = vsel %vm1316, %v1328, %v1329
      %v1331 = vrot.slane %v1272, 5
      %v1332 = vrot.slane %v1331, 4
      %v1333 = vrot.slane %v1273, 5
      %v1334 = vsel %vm1316, %v1332, %v1333
      %v1335 = vrot.slane %v1333, 4
      %v1336 = vrot.slane %v1274, 5
      %v1337 = vsel %vm1316, %v1335, %v1336
      %v1338 = vrot.slane %v1275, 5
      %v1339 = vrot.slane %v1338, 4
      %v1340 = vrot.slane %v1276, 5
      %v1341 = vsel %vm1316, %v1339, %v1340
      %v1342 = vrot.slane %v1340, 4
      %v1343 = vrot.slane %v1277, 5
      %v1344 = vsel %vm1316, %v1342, %v1343
      %v1345 = vrot.slane %v1278, 5
      %v1346 = vrot.slane %v1345, 4
      %v1347 = vrot.slane %v1279, 5
      %v1348 = vsel %vm1316, %v1346, %v1347
      %v1349 = vrot.slane %v1347, 4
      %v1350 = vrot.slane %v1280, 5
      %v1351 = vsel %vm1316, %v1349, %v1350
      %v1352 = vrot.slane %v1281, 5
      %v1353 = vrot.slane %v1352, 4
      %v1354 = vrot.slane %v1282, 5
      %v1355 = vsel %vm1316, %v1353, %v1354
      %v1356 = vrot.slane %v1354, 4
      %v1357 = vrot.slane %v1283, 5
      %v1358 = vsel %vm1316, %v1356, %v1357
      %v1359 = vrot.slane %v1284, 5
      %v1360 = vrot.slane %v1359, 4
      %v1361 = vrot.slane %v1285, 5
      %v1362 = vsel %vm1316, %v1360, %v1361
      %v1363 = vrot.slane %v1361, 4
      %v1364 = vrot.slane %v1286, 5
      %v1365 = vsel %vm1316, %v1363, %v1364
      %v1366 = vrot.slane %v1287, 5
      %v1367 = vrot.slane %v1366, 4
      %v1368 = vrot.slane %v1288, 5
      %v1369 = vsel %vm1316, %v1367, %v1368
      %v1370 = vrot.slane %v1368, 4
      %v1371 = vrot.slane %v1289, 5
      %v1372 = vsel %vm1316, %v1370, %v1371
      %v1373 = vunpack.c.l.b16 %v1320
      %v1374 = vunpack.c.l.b16 %v1323
      %v1375 = vunpack.c.l.b16 %v1327
      %v1376 = vunpack.c.l.b16 %v1330
      %v1377 = vunpack.c.l.b16 %v1334
      %v1378 = vunpack.c.l.b16 %v1337
      %v1379 = vunpack.c.l.b16 %v1341
      %v1380 = vunpack.c.l.b16 %v1344
      %v1381 = vunpack.c.l.b16 %v1348
      %v1382 = vunpack.c.l.b16 %v1351
      %v1383 = vunpack.c.l.b16 %v1355
      %v1384 = vunpack.c.l.b16 %v1358
      %v1385 = vunpack.c.l.b16 %v1362
      %v1386 = vunpack.c.l.b16 %v1365
      %v1387 = vunpack.c.l.b16 %v1369
      %v1388 = vunpack.c.l.b16 %v1372
      %v1389 = vpack.c.b16 %v1374, %v1373
      %v1390 = vpack.c.b16 %v1376, %v1375
      %v1391 = vpack.c.b16 %v1378, %v1377
      %v1392 = vpack.c.b16 %v1380, %v1379
      %v1393 = vpack.c.b16 %v1382, %v1381
      %v1394 = vpack.c.b16 %v1384, %v1383
      %v1395 = vpack.c.b16 %v1386, %v1385
      %v1396 = vpack.c.b16 %v1388, %v1387
      %1405 = vst [vmem:[#allocation3 + $0x10] sm:$0xff] %v1389
      %1406 = vst [vmem:[#allocation3 + $0x28] sm:$0xff] %v1390
      %1407 = vst [vmem:[#allocation3 + $0x40] sm:$0xff] %v1391
      %1408 = vst [vmem:[#allocation3 + $0x58] sm:$0xff] %v1392
      %1409 = vst [vmem:[#allocation3 + $0x70] sm:$0xff] %v1393
      %1410 = vst [vmem:[#allocation3 + $0x88] sm:$0xff] %v1394
      %1411 = vst [vmem:[#allocation3 + $0xa0] sm:$0xff] %v1395
      %1412 = vst [vmem:[#allocation3 + $0xb8] sm:$0xff] %v1396
      %v1413 = vld [vmem:[#allocation3] sm:$0xff]
      %v1414 = vld [vmem:[#allocation3 + $0x8] sm:$0xff]
      %v1415 = vld [vmem:[#allocation3 + $0x10] sm:$0xff]
      %v1416 = vld [vmem:[#allocation3 + $0x18] sm:$0xff]
      %v1417 = vld [vmem:[#allocation3 + $0x20] sm:$0xff]
      %v1418 = vld [vmem:[#allocation3 + $0x28] sm:$0xff]
      %v1419 = vld [vmem:[#allocation3 + $0x30] sm:$0xff]
      %v1420 = vld [vmem:[#allocation3 + $0x38] sm:$0xff]
      %v1421 = vld [vmem:[#allocation3 + $0x40] sm:$0xff]
      %v1422 = vld [vmem:[#allocation3 + $0x48] sm:$0xff]
      %v1423 = vld [vmem:[#allocation3 + $0x50] sm:$0xff]
      %v1424 = vld [vmem:[#allocation3 + $0x58] sm:$0xff]
      %v1425 = vld [vmem:[#allocation3 + $0x60] sm:$0xff]
      %v1426 = vld [vmem:[#allocation3 + $0x68] sm:$0xff]
      %v1427 = vld [vmem:[#allocation3 + $0x70] sm:$0xff]
      %v1428 = vld [vmem:[#allocation3 + $0x78] sm:$0xff]
      %v1429 = vld [vmem:[#allocation3 + $0x80] sm:$0xff]
      %v1430 = vld [vmem:[#allocation3 + $0x88] sm:$0xff]
      %v1431 = vld [vmem:[#allocation3 + $0x90] sm:$0xff]
      %v1432 = vld [vmem:[#allocation3 + $0x98] sm:$0xff]
      %v1433 = vld [vmem:[#allocation3 + $0xa0] sm:$0xff]
      %v1434 = vld [vmem:[#allocation3 + $0xa8] sm:$0xff]
      %v1435 = vld [vmem:[#allocation3 + $0xb0] sm:$0xff]
      %v1436 = vld [vmem:[#allocation3 + $0xb8] sm:$0xff]
      %v1437 = vld [vmem:[%s3] sm:$0xf]
      %v1438 = vld [vmem:[%s3 + $0x4] sm:$0xf]
      %v1439 = vld [vmem:[%s3 + $0x8] sm:$0xf]
      %v1440 = vld [vmem:[%s3 + $0xc] sm:$0xf]
      %v1441 = vld [vmem:[%s3 + $0x10] sm:$0xf]
      %v1442 = vld [vmem:[%s3 + $0x14] sm:$0xf]
      %v1443 = vld [vmem:[%s3 + $0x18] sm:$0xf]
      %v1444 = vld [vmem:[%s3 + $0x1c] sm:$0xf]
      %v1445 = vld [vmem:[%s3 + $0x20] sm:$0xf]
      %v1446 = vld [vmem:[%s3 + $0x24] sm:$0xf]
      %v1447 = vld [vmem:[%s3 + $0x28] sm:$0xf]
      %v1448 = vld [vmem:[%s3 + $0x2c] sm:$0xf]
      %v1449 = vld [vmem:[%s3 + $0x30] sm:$0xf]
      %v1450 = vld [vmem:[%s3 + $0x34] sm:$0xf]
      %v1451 = vld [vmem:[%s3 + $0x38] sm:$0xf]
      %v1452 = vld [vmem:[%s3 + $0x3c] sm:$0xf]
      %v1453 = vld [vmem:[%s3 + $0x40] sm:$0xf]
      %v1454 = vld [vmem:[%s3 + $0x44] sm:$0xf]
      %v1455 = vld [vmem:[%s3 + $0x48] sm:$0xf]
      %v1456 = vld [vmem:[%s3 + $0x4c] sm:$0xf]
      %v1457 = vld [vmem:[%s3 + $0x50] sm:$0xf]
      %v1458 = vld [vmem:[%s3 + $0x54] sm:$0xf]
      %v1459 = vld [vmem:[%s3 + $0x58] sm:$0xf]
      %v1460 = vld [vmem:[%s3 + $0x5c] sm:$0xf]
      %v1461 = vld [vmem:[%s3 + $0x60] sm:$0xf]
      %v1462 = vld [vmem:[%s3 + $0x64] sm:$0xf]
      %v1463 = vld [vmem:[%s3 + $0x68] sm:$0xf]
      %v1464 = vld [vmem:[%s3 + $0x6c] sm:$0xf]
      %v1465 = vld [vmem:[%s3 + $0x70] sm:$0xf]
      %v1466 = vld [vmem:[%s3 + $0x74] sm:$0xf]
      %v1467 = vld [vmem:[%s3 + $0x78] sm:$0xf]
      %v1468 = vld [vmem:[%s3 + $0x7c] sm:$0xf]
      %v1469 = vld [vmem:[%s3 + $0x80] sm:$0xf]
      %v1470 = vld [vmem:[%s3 + $0x84] sm:$0xf]
      %v1471 = vld [vmem:[%s3 + $0x88] sm:$0xf]
      %v1472 = vld [vmem:[%s3 + $0x8c] sm:$0xf]
      %v1473 = vld [vmem:[%s3 + $0x90] sm:$0xf]
      %v1474 = vld [vmem:[%s3 + $0x94] sm:$0xf]
      %v1475 = vld [vmem:[%s3 + $0x98] sm:$0xf]
      %v1476 = vld [vmem:[%s3 + $0x9c] sm:$0xf]
      %v1477 = vld [vmem:[%s3 + $0xa0] sm:$0xf]
      %v1478 = vld [vmem:[%s3 + $0xa4] sm:$0xf]
      %v1479 = vld [vmem:[%s3 + $0xa8] sm:$0xf]
      %v1480 = vld [vmem:[%s3 + $0xac] sm:$0xf]
      %v1481 = vld [vmem:[%s3 + $0xb0] sm:$0xf]
      %v1482 = vld [vmem:[%s3 + $0xb4] sm:$0xf]
      %v1483 = vld [vmem:[%s3 + $0xb8] sm:$0xf]
      %v1484 = vld [vmem:[%s3 + $0xbc] sm:$0xf]
      %v1485 = vld [vmem:[%s774] sm:$0xf]
      %v1486 = vld [vmem:[%s774 + $0x4] sm:$0xf]
      %v1487 = vld [vmem:[%s774 + $0xc] sm:$0xf]
      %v1488 = vld [vmem:[%s774 + $0x10] sm:$0xf]
      %v1489 = vld [vmem:[%s774 + $0x18] sm:$0xf]
      %v1490 = vld [vmem:[%s774 + $0x1c] sm:$0xf]
      %v1491 = vld [vmem:[%s774 + $0x24] sm:$0xf]
      %v1492 = vld [vmem:[%s774 + $0x28] sm:$0xf]
      %v1493 = vld [vmem:[%s774 + $0x30] sm:$0xf]
      %v1494 = vld [vmem:[%s774 + $0x34] sm:$0xf]
      %v1495 = vld [vmem:[%s774 + $0x3c] sm:$0xf]
      %v1496 = vld [vmem:[%s774 + $0x40] sm:$0xf]
      %v1497 = vld [vmem:[%s774 + $0x48] sm:$0xf]
      %v1498 = vld [vmem:[%s774 + $0x4c] sm:$0xf]
      %v1499 = vld [vmem:[%s774 + $0x54] sm:$0xf]
      %v1500 = vld [vmem:[%s774 + $0x58] sm:$0xf]
      %v1517 = vunpack.c.l.b16 %v1485
      %v1518 = vunpack.c.l.b16 %v1486
      %v1519 = vunpack.c.l.b16 %v1487
      %v1520 = vunpack.c.l.b16 %v1488
      %v1521 = vunpack.c.l.b16 %v1489
      %v1522 = vunpack.c.l.b16 %v1490
      %v1523 = vunpack.c.l.b16 %v1491
      %v1524 = vunpack.c.l.b16 %v1492
      %v1525 = vunpack.c.l.b16 %v1493
      %v1526 = vunpack.c.l.b16 %v1494
      %v1527 = vunpack.c.l.b16 %v1495
      %v1528 = vunpack.c.l.b16 %v1496
      %v1529 = vunpack.c.l.b16 %v1497
      %v1530 = vunpack.c.l.b16 %v1498
      %v1531 = vunpack.c.l.b16 %v1499
      %v1532 = vunpack.c.l.b16 %v1500
      %v1533 = vpack.c.b16 %v1518, %v1517
      %v1534 = vpack.c.b16 %v1520, %v1519
      %v1535 = vpack.c.b16 %v1522, %v1521
      %v1536 = vpack.c.b16 %v1524, %v1523
      %v1537 = vpack.c.b16 %v1526, %v1525
      %v1538 = vpack.c.b16 %v1528, %v1527
      %v1539 = vpack.c.b16 %v1530, %v1529
      %v1540 = vpack.c.b16 %v1532, %v1531
      %1549 = vst [vmem:[#allocation3] sm:$0xff] %v1533
      %1550 = vst [vmem:[#allocation3 + $0x18] sm:$0xff] %v1534
      %1551 = vst [vmem:[#allocation3 + $0x30] sm:$0xff] %v1535
      %1552 = vst [vmem:[#allocation3 + $0x48] sm:$0xff] %v1536
      %1553 = vst [vmem:[#allocation3 + $0x60] sm:$0xff] %v1537
      %1554 = vst [vmem:[#allocation3 + $0x78] sm:$0xff] %v1538
      %1555 = vst [vmem:[#allocation3 + $0x90] sm:$0xff] %v1539
      %1556 = vst [vmem:[#allocation3 + $0xa8] sm:$0xff] %v1540
      %v1557 = vld [vmem:[%s774] sm:$0xf]
      %v1558 = vld [vmem:[%s774 + $0x4] sm:$0xf]
      %v1559 = vld [vmem:[%s774 + $0x8] sm:$0x1]
      %v1560 = vld [vmem:[%s774 + $0xc] sm:$0xf]
      %v1561 = vld [vmem:[%s774 + $0x10] sm:$0xf]
      %v1562 = vld [vmem:[%s774 + $0x14] sm:$0x1]
      %v1563 = vld [vmem:[%s774 + $0x18] sm:$0xf]
      %v1564 = vld [vmem:[%s774 + $0x1c] sm:$0xf]
      %v1565 = vld [vmem:[%s774 + $0x20] sm:$0x1]
      %v1566 = vld [vmem:[%s774 + $0x24] sm:$0xf]
      %v1567 = vld [vmem:[%s774 + $0x28] sm:$0xf]
      %v1568 = vld [vmem:[%s774 + $0x2c] sm:$0x1]
      %v1569 = vld [vmem:[%s774 + $0x30] sm:$0xf]
      %v1570 = vld [vmem:[%s774 + $0x34] sm:$0xf]
      %v1571 = vld [vmem:[%s774 + $0x38] sm:$0x1]
      %v1572 = vld [vmem:[%s774 + $0x3c] sm:$0xf]
      %v1573 = vld [vmem:[%s774 + $0x40] sm:$0xf]
      %v1574 = vld [vmem:[%s774 + $0x44] sm:$0x1]
      %v1575 = vld [vmem:[%s774 + $0x48] sm:$0xf]
      %v1576 = vld [vmem:[%s774 + $0x4c] sm:$0xf]
      %v1577 = vld [vmem:[%s774 + $0x50] sm:$0x1]
      %v1578 = vld [vmem:[%s774 + $0x54] sm:$0xf]
      %v1579 = vld [vmem:[%s774 + $0x58] sm:$0xf]
      %v1580 = vld [vmem:[%s774 + $0x5c] sm:$0x1]
      %v1582 = vshrl.u32 %v1557, 16
      %v1584 = vrot.slane %v1582, 4
      %v1585 = vshll.u32 %v1557, 16
      %v1587 = vrot.slane %v1585, 5
      %v1588 = vor.u32 %v1584, %v1587
      %v1589 = vrot.slane %v1588, 4
      %v1591 = vshll.u32 %v1558, 16
      %v1593 = vrot.slane %v1591, 5
      %v1594 = vsel %vm1033, %v1589, %v1593
      %v1595 = vshrl.u32 %v1558, 16
      %v1597 = vrot.slane %v1595, 4
      %v1598 = vor.u32 %v1597, %v1593
      %v1599 = vrot.slane %v1598, 4
      %v1601 = vshll.u32 %v1559, 16
      %v1603 = vrot.slane %v1601, 5
      %v1604 = vsel %vm1033, %v1599, %v1603
      %v1606 = vshrl.u32 %v1560, 16
      %v1608 = vrot.slane %v1606, 4
      %v1609 = vshll.u32 %v1560, 16
      %v1611 = vrot.slane %v1609, 5
      %v1612 = vor.u32 %v1608, %v1611
      %v1613 = vrot.slane %v1612, 4
      %v1615 = vshll.u32 %v1561, 16
      %v1617 = vrot.slane %v1615, 5
      %v1618 = vsel %vm1033, %v1613, %v1617
      %v1619 = vshrl.u32 %v1561, 16
      %v1621 = vrot.slane %v1619, 4
      %v1622 = vor.u32 %v1621, %v1617
      %v1623 = vrot.slane %v1622, 4
      %v1625 = vshll.u32 %v1562, 16
      %v1627 = vrot.slane %v1625, 5
      %v1628 = vsel %vm1033, %v1623, %v1627
      %v1630 = vshrl.u32 %v1563, 16
      %v1632 = vrot.slane %v1630, 4
      %v1633 = vshll.u32 %v1563, 16
      %v1635 = vrot.slane %v1633, 5
      %v1636 = vor.u32 %v1632, %v1635
      %v1637 = vrot.slane %v1636, 4
      %v1639 = vshll.u32 %v1564, 16
      %v1641 = vrot.slane %v1639, 5
      %v1642 = vsel %vm1033, %v1637, %v1641
      %v1643 = vshrl.u32 %v1564, 16
      %v1645 = vrot.slane %v1643, 4
      %v1646 = vor.u32 %v1645, %v1641
      %v1647 = vrot.slane %v1646, 4
      %v1649 = vshll.u32 %v1565, 16
      %v1651 = vrot.slane %v1649, 5
      %v1652 = vsel %vm1033, %v1647, %v1651
      %v1654 = vshrl.u32 %v1566, 16
      %v1656 = vrot.slane %v1654, 4
      %v1657 = vshll.u32 %v1566, 16
      %v1659 = vrot.slane %v1657, 5
      %v1660 = vor.u32 %v1656, %v1659
      %v1661 = vrot.slane %v1660, 4
      %v1663 = vshll.u32 %v1567, 16
      %v1665 = vrot.slane %v1663, 5
      %v1666 = vsel %vm1033, %v1661, %v1665
      %v1667 = vshrl.u32 %v1567, 16
      %v1669 = vrot.slane %v1667, 4
      %v1670 = vor.u32 %v1669, %v1665
      %v1671 = vrot.slane %v1670, 4
      %v1673 = vshll.u32 %v1568, 16
      %v1675 = vrot.slane %v1673, 5
      %v1676 = vsel %vm1033, %v1671, %v1675
      %v1678 = vshrl.u32 %v1569, 16
      %v1680 = vrot.slane %v1678, 4
      %v1681 = vshll.u32 %v1569, 16
      %v1683 = vrot.slane %v1681, 5
      %v1684 = vor.u32 %v1680, %v1683
      %v1685 = vrot.slane %v1684, 4
      %v1687 = vshll.u32 %v1570, 16
      %v1689 = vrot.slane %v1687, 5
      %v1690 = vsel %vm1033, %v1685, %v1689
      %v1691 = vshrl.u32 %v1570, 16
      %v1693 = vrot.slane %v1691, 4
      %v1694 = vor.u32 %v1693, %v1689
      %v1695 = vrot.slane %v1694, 4
      %v1697 = vshll.u32 %v1571, 16
      %v1699 = vrot.slane %v1697, 5
      %v1700 = vsel %vm1033, %v1695, %v1699
      %v1702 = vshrl.u32 %v1572, 16
      %v1704 = vrot.slane %v1702, 4
      %v1705 = vshll.u32 %v1572, 16
      %v1707 = vrot.slane %v1705, 5
      %v1708 = vor.u32 %v1704, %v1707
      %v1709 = vrot.slane %v1708, 4
      %v1711 = vshll.u32 %v1573, 16
      %v1713 = vrot.slane %v1711, 5
      %v1714 = vsel %vm1033, %v1709, %v1713
      %v1715 = vshrl.u32 %v1573, 16
      %v1717 = vrot.slane %v1715, 4
      %v1718 = vor.u32 %v1717, %v1713
      %v1719 = vrot.slane %v1718, 4
      %v1721 = vshll.u32 %v1574, 16
      %v1723 = vrot.slane %v1721, 5
      %v1724 = vsel %vm1033, %v1719, %v1723
      %v1726 = vshrl.u32 %v1575, 16
      %v1728 = vrot.slane %v1726, 4
      %v1729 = vshll.u32 %v1575, 16
      %v1731 = vrot.slane %v1729, 5
      %v1732 = vor.u32 %v1728, %v1731
      %v1733 = vrot.slane %v1732, 4
      %v1735 = vshll.u32 %v1576, 16
      %v1737 = vrot.slane %v1735, 5
      %v1738 = vsel %vm1033, %v1733, %v1737
      %v1739 = vshrl.u32 %v1576, 16
      %v1741 = vrot.slane %v1739, 4
      %v1742 = vor.u32 %v1741, %v1737
      %v1743 = vrot.slane %v1742, 4
      %v1745 = vshll.u32 %v1577, 16
      %v1747 = vrot.slane %v1745, 5
      %v1748 = vsel %vm1033, %v1743, %v1747
      %v1750 = vshrl.u32 %v1578, 16
      %v1752 = vrot.slane %v1750, 4
      %v1753 = vshll.u32 %v1578, 16
      %v1755 = vrot.slane %v1753, 5
      %v1756 = vor.u32 %v1752, %v1755
      %v1757 = vrot.slane %v1756, 4
      %v1759 = vshll.u32 %v1579, 16
      %v1761 = vrot.slane %v1759, 5
      %v1762 = vsel %vm1033, %v1757, %v1761
      %v1763 = vshrl.u32 %v1579, 16
      %v1765 = vrot.slane %v1763, 4
      %v1766 = vor.u32 %v1765, %v1761
      %v1767 = vrot.slane %v1766, 4
      %v1769 = vshll.u32 %v1580, 16
      %v1771 = vrot.slane %v1769, 5
      %v1772 = vsel %vm1033, %v1767, %v1771
      %v1773 = vunpack.c.l.b16 %v1594
      %v1774 = vunpack.c.l.b16 %v1604
      %v1775 = vunpack.c.l.b16 %v1618
      %v1776 = vunpack.c.l.b16 %v1628
      %v1777 = vunpack.c.l.b16 %v1642
      %v1778 = vunpack.c.l.b16 %v1652
      %v1779 = vunpack.c.l.b16 %v1666
      %v1780 = vunpack.c.l.b16 %v1676
      %v1781 = vunpack.c.l.b16 %v1690
      %v1782 = vunpack.c.l.b16 %v1700
      %v1783 = vunpack.c.l.b16 %v1714
      %v1784 = vunpack.c.l.b16 %v1724
      %v1785 = vunpack.c.l.b16 %v1738
      %v1786 = vunpack.c.l.b16 %v1748
      %v1787 = vunpack.c.l.b16 %v1762
      %v1788 = vunpack.c.l.b16 %v1772
      %v1789 = vpack.c.b16 %v1774, %v1773
      %v1790 = vpack.c.b16 %v1776, %v1775
      %v1791 = vpack.c.b16 %v1778, %v1777
      %v1792 = vpack.c.b16 %v1780, %v1779
      %v1793 = vpack.c.b16 %v1782, %v1781
      %v1794 = vpack.c.b16 %v1784, %v1783
      %v1795 = vpack.c.b16 %v1786, %v1785
      %v1796 = vpack.c.b16 %v1788, %v1787
      %1805 = vst [vmem:[#allocation3 + $0x8] sm:$0xff] %v1789
      %1806 = vst [vmem:[#allocation3 + $0x20] sm:$0xff] %v1790
      %1807 = vst [vmem:[#allocation3 + $0x38] sm:$0xff] %v1791
      %1808 = vst [vmem:[#allocation3 + $0x50] sm:$0xff] %v1792
      %1809 = vst [vmem:[#allocation3 + $0x68] sm:$0xff] %v1793
      %1810 = vst [vmem:[#allocation3 + $0x80] sm:$0xff] %v1794
      %1811 = vst [vmem:[#allocation3 + $0x98] sm:$0xff] %v1795
      %1812 = vst [vmem:[#allocation3 + $0xb0] sm:$0xff] %v1796
      %v1813 = vld [vmem:[%s774] sm:$0xe]
      %v1814 = vld [vmem:[%s774 + $0x4] sm:$0xf]
      %v1815 = vld [vmem:[%s774 + $0x8] sm:$0x1]
      %v1816 = vld [vmem:[%s774 + $0xc] sm:$0xe]
      %v1817 = vld [vmem:[%s774 + $0x10] sm:$0xf]
      %v1818 = vld [vmem:[%s774 + $0x14] sm:$0x1]
      %v1819 = vld [vmem:[%s774 + $0x18] sm:$0xe]
      %v1820 = vld [vmem:[%s774 + $0x1c] sm:$0xf]
      %v1821 = vld [vmem:[%s774 + $0x20] sm:$0x1]
      %v1822 = vld [vmem:[%s774 + $0x24] sm:$0xe]
      %v1823 = vld [vmem:[%s774 + $0x28] sm:$0xf]
      %v1824 = vld [vmem:[%s774 + $0x2c] sm:$0x1]
      %v1825 = vld [vmem:[%s774 + $0x30] sm:$0xe]
      %v1826 = vld [vmem:[%s774 + $0x34] sm:$0xf]
      %v1827 = vld [vmem:[%s774 + $0x38] sm:$0x1]
      %v1828 = vld [vmem:[%s774 + $0x3c] sm:$0xe]
      %v1829 = vld [vmem:[%s774 + $0x40] sm:$0xf]
      %v1830 = vld [vmem:[%s774 + $0x44] sm:$0x1]
      %v1831 = vld [vmem:[%s774 + $0x48] sm:$0xe]
      %v1832 = vld [vmem:[%s774 + $0x4c] sm:$0xf]
      %v1833 = vld [vmem:[%s774 + $0x50] sm:$0x1]
      %v1834 = vld [vmem:[%s774 + $0x54] sm:$0xe]
      %v1835 = vld [vmem:[%s774 + $0x58] sm:$0xf]
      %v1836 = vld [vmem:[%s774 + $0x5c] sm:$0x1]
      %v1861 = vrot.slane %v1813, 5
      %v1862 = vrot.slane %v1861, 4
      %v1863 = vrot.slane %v1814, 5
      %v1864 = vsel %vm1316, %v1862, %v1863
      %v1865 = vrot.slane %v1863, 4
      %v1866 = vrot.slane %v1815, 5
      %v1867 = vsel %vm1316, %v1865, %v1866
      %v1868 = vrot.slane %v1816, 5
      %v1869 = vrot.slane %v1868, 4
      %v1870 = vrot.slane %v1817, 5
      %v1871 = vsel %vm1316, %v1869, %v1870
      %v1872 = vrot.slane %v1870, 4
      %v1873 = vrot.slane %v1818, 5
      %v1874 = vsel %vm1316, %v1872, %v1873
      %v1875 = vrot.slane %v1819, 5
      %v1876 = vrot.slane %v1875, 4
      %v1877 = vrot.slane %v1820, 5
      %v1878 = vsel %vm1316, %v1876, %v1877
      %v1879 = vrot.slane %v1877, 4
      %v1880 = vrot.slane %v1821, 5
      %v1881 = vsel %vm1316, %v1879, %v1880
      %v1882 = vrot.slane %v1822, 5
      %v1883 = vrot.slane %v1882, 4
      %v1884 = vrot.slane %v1823, 5
      %v1885 = vsel %vm1316, %v1883, %v1884
      %v1886 = vrot.slane %v1884, 4
      %v1887 = vrot.slane %v1824, 5
      %v1888 = vsel %vm1316, %v1886, %v1887
      %v1889 = vrot.slane %v1825, 5
      %v1890 = vrot.slane %v1889, 4
      %v1891 = vrot.slane %v1826, 5
      %v1892 = vsel %vm1316, %v1890, %v1891
      %v1893 = vrot.slane %v1891, 4
      %v1894 = vrot.slane %v1827, 5
      %v1895 = vsel %vm1316, %v1893, %v1894
      %v1896 = vrot.slane %v1828, 5
      %v1897 = vrot.slane %v1896, 4
      %v1898 = vrot.slane %v1829, 5
      %v1899 = vsel %vm1316, %v1897, %v1898
      %v1900 = vrot.slane %v1898, 4
      %v1901 = vrot.slane %v1830, 5
      %v1902 = vsel %vm1316, %v1900, %v1901
      %v1903 = vrot.slane %v1831, 5
      %v1904 = vrot.slane %v1903, 4
      %v1905 = vrot.slane %v1832, 5
      %v1906 = vsel %vm1316, %v1904, %v1905
      %v1907 = vrot.slane %v1905, 4
      %v1908 = vrot.slane %v1833, 5
      %v1909 = vsel %vm1316, %v1907, %v1908
      %v1910 = vrot.slane %v1834, 5
      %v1911 = vrot.slane %v1910, 4
      %v1912 = vrot.slane %v1835, 5
      %v1913 = vsel %vm1316, %v1911, %v1912
      %v1914 = vrot.slane %v1912, 4
      %v1915 = vrot.slane %v1836, 5
      %v1916 = vsel %vm1316, %v1914, %v1915
      %v1917 = vunpack.c.l.b16 %v1864
      %v1918 = vunpack.c.l.b16 %v1867
      %v1919 = vunpack.c.l.b16 %v1871
      %v1920 = vunpack.c.l.b16 %v1874
      %v1921 = vunpack.c.l.b16 %v1878
      %v1922 = vunpack.c.l.b16 %v1881
      %v1923 = vunpack.c.l.b16 %v1885
      %v1924 = vunpack.c.l.b16 %v1888
      %v1925 = vunpack.c.l.b16 %v1892
      %v1926 = vunpack.c.l.b16 %v1895
      %v1927 = vunpack.c.l.b16 %v1899
      %v1928 = vunpack.c.l.b16 %v1902
      %v1929 = vunpack.c.l.b16 %v1906
      %v1930 = vunpack.c.l.b16 %v1909
      %v1931 = vunpack.c.l.b16 %v1913
      %v1932 = vunpack.c.l.b16 %v1916
      %v1933 = vpack.c.b16 %v1918, %v1917
      %v1934 = vpack.c.b16 %v1920, %v1919
      %v1935 = vpack.c.b16 %v1922, %v1921
      %v1936 = vpack.c.b16 %v1924, %v1923
      %v1937 = vpack.c.b16 %v1926, %v1925
      %v1938 = vpack.c.b16 %v1928, %v1927
      %v1939 = vpack.c.b16 %v1930, %v1929
      %v1940 = vpack.c.b16 %v1932, %v1931
      %1949 = vst [vmem:[#allocation3 + $0x10] sm:$0xff] %v1933
      %1950 = vst [vmem:[#allocation3 + $0x28] sm:$0xff] %v1934
      %1951 = vst [vmem:[#allocation3 + $0x40] sm:$0xff] %v1935
      %1952 = vst [vmem:[#allocation3 + $0x58] sm:$0xff] %v1936
      %1953 = vst [vmem:[#allocation3 + $0x70] sm:$0xff] %v1937
      %1954 = vst [vmem:[#allocation3 + $0x88] sm:$0xff] %v1938
      %1955 = vst [vmem:[#allocation3 + $0xa0] sm:$0xff] %v1939
      %1956 = vst [vmem:[#allocation3 + $0xb8] sm:$0xff] %v1940
      %v1957 = vld [vmem:[#allocation3] sm:$0xff]
      %v1958 = vld [vmem:[#allocation3 + $0x8] sm:$0xff]
      %v1959 = vld [vmem:[#allocation3 + $0x10] sm:$0xff]
      %v1960 = vld [vmem:[#allocation3 + $0x18] sm:$0xff]
      %v1961 = vld [vmem:[#allocation3 + $0x20] sm:$0xff]
      %v1962 = vld [vmem:[#allocation3 + $0x28] sm:$0xff]
      %v1963 = vld [vmem:[#allocation3 + $0x30] sm:$0xff]
      %v1964 = vld [vmem:[#allocation3 + $0x38] sm:$0xff]
      %v1965 = vld [vmem:[#allocation3 + $0x40] sm:$0xff]
      %v1966 = vld [vmem:[#allocation3 + $0x48] sm:$0xff]
      %v1967 = vld [vmem:[#allocation3 + $0x50] sm:$0xff]
      %v1968 = vld [vmem:[#allocation3 + $0x58] sm:$0xff]
      %v1969 = vld [vmem:[#allocation3 + $0x60] sm:$0xff]
      %v1970 = vld [vmem:[#allocation3 + $0x68] sm:$0xff]
      %v1971 = vld [vmem:[#allocation3 + $0x70] sm:$0xff]
      %v1972 = vld [vmem:[#allocation3 + $0x78] sm:$0xff]
      %v1973 = vld [vmem:[#allocation3 + $0x80] sm:$0xff]
      %v1974 = vld [vmem:[#allocation3 + $0x88] sm:$0xff]
      %v1975 = vld [vmem:[#allocation3 + $0x90] sm:$0xff]
      %v1976 = vld [vmem:[#allocation3 + $0x98] sm:$0xff]
      %v1977 = vld [vmem:[#allocation3 + $0xa0] sm:$0xff]
      %v1978 = vld [vmem:[#allocation3 + $0xa8] sm:$0xff]
      %v1979 = vld [vmem:[#allocation3 + $0xb0] sm:$0xff]
      %v1980 = vld [vmem:[#allocation3 + $0xb8] sm:$0xff]
      %s1981 = scalar_lea.vmem %s3, 192
      %v1982 = vld [vmem:[%s1981] sm:$0xf]
      %v1983 = vld [vmem:[%s1981 + $0x4] sm:$0xf]
      %v1984 = vld [vmem:[%s1981 + $0x8] sm:$0xf]
      %v1985 = vld [vmem:[%s1981 + $0xc] sm:$0xf]
      %v1986 = vld [vmem:[%s1981 + $0x10] sm:$0xf]
      %v1987 = vld [vmem:[%s1981 + $0x14] sm:$0xf]
      %v1988 = vld [vmem:[%s1981 + $0x18] sm:$0xf]
      %v1989 = vld [vmem:[%s1981 + $0x1c] sm:$0xf]
      %v1990 = vld [vmem:[%s1981 + $0x20] sm:$0xf]
      %v1991 = vld [vmem:[%s1981 + $0x24] sm:$0xf]
      %v1992 = vld [vmem:[%s1981 + $0x28] sm:$0xf]
      %v1993 = vld [vmem:[%s1981 + $0x2c] sm:$0xf]
      %v1994 = vld [vmem:[%s1981 + $0x30] sm:$0xf]
      %v1995 = vld [vmem:[%s1981 + $0x34] sm:$0xf]
      %v1996 = vld [vmem:[%s1981 + $0x38] sm:$0xf]
      %v1997 = vld [vmem:[%s1981 + $0x3c] sm:$0xf]
      %v1998 = vld [vmem:[%s1981 + $0x40] sm:$0xf]
      %v1999 = vld [vmem:[%s1981 + $0x44] sm:$0xf]
      %v2000 = vld [vmem:[%s1981 + $0x48] sm:$0xf]
      %v2001 = vld [vmem:[%s1981 + $0x4c] sm:$0xf]
      %v2002 = vld [vmem:[%s1981 + $0x50] sm:$0xf]
      %v2003 = vld [vmem:[%s1981 + $0x54] sm:$0xf]
      %v2004 = vld [vmem:[%s1981 + $0x58] sm:$0xf]
      %v2005 = vld [vmem:[%s1981 + $0x5c] sm:$0xf]
      %v2006 = vld [vmem:[%s1981 + $0x60] sm:$0xf]
      %v2007 = vld [vmem:[%s1981 + $0x64] sm:$0xf]
      %v2008 = vld [vmem:[%s1981 + $0x68] sm:$0xf]
      %v2009 = vld [vmem:[%s1981 + $0x6c] sm:$0xf]
      %v2010 = vld [vmem:[%s1981 + $0x70] sm:$0xf]
      %v2011 = vld [vmem:[%s1981 + $0x74] sm:$0xf]
      %v2012 = vld [vmem:[%s1981 + $0x78] sm:$0xf]
      %v2013 = vld [vmem:[%s1981 + $0x7c] sm:$0xf]
      %v2014 = vld [vmem:[%s1981 + $0x80] sm:$0xf]
      %v2015 = vld [vmem:[%s1981 + $0x84] sm:$0xf]
      %v2016 = vld [vmem:[%s1981 + $0x88] sm:$0xf]
      %v2017 = vld [vmem:[%s1981 + $0x8c] sm:$0xf]
      %v2018 = vld [vmem:[%s1981 + $0x90] sm:$0xf]
      %v2019 = vld [vmem:[%s1981 + $0x94] sm:$0xf]
      %v2020 = vld [vmem:[%s1981 + $0x98] sm:$0xf]
      %v2021 = vld [vmem:[%s1981 + $0x9c] sm:$0xf]
      %v2022 = vld [vmem:[%s1981 + $0xa0] sm:$0xf]
      %v2023 = vld [vmem:[%s1981 + $0xa4] sm:$0xf]
      %v2024 = vld [vmem:[%s1981 + $0xa8] sm:$0xf]
      %v2025 = vld [vmem:[%s1981 + $0xac] sm:$0xf]
      %v2026 = vld [vmem:[%s1981 + $0xb0] sm:$0xf]
      %v2027 = vld [vmem:[%s1981 + $0xb4] sm:$0xf]
      %v2028 = vld [vmem:[%s1981 + $0xb8] sm:$0xf]
      %v2029 = vld [vmem:[%s1981 + $0xbc] sm:$0xf]
      %v2078 = vunpack.c.l.b16 %v1982
      %v2079 = vunpack.c.l.b16 %v1983
      %v2080 = vunpack.c.l.b16 %v1984
      %v2081 = vunpack.c.l.b16 %v1985
      %v2082 = vunpack.c.l.b16 %v1986
      %v2083 = vunpack.c.l.b16 %v1987
      %v2084 = vunpack.c.l.b16 %v1988
      %v2085 = vunpack.c.l.b16 %v1989
      %v2086 = vunpack.c.l.b16 %v1990
      %v2087 = vunpack.c.l.b16 %v1991
      %v2088 = vunpack.c.l.b16 %v1992
      %v2089 = vunpack.c.l.b16 %v1993
      %v2090 = vunpack.c.l.b16 %v1994
      %v2091 = vunpack.c.l.b16 %v1995
      %v2092 = vunpack.c.l.b16 %v1996
      %v2093 = vunpack.c.l.b16 %v1997
      %v2094 = vunpack.c.l.b16 %v1998
      %v2095 = vunpack.c.l.b16 %v1999
      %v2096 = vunpack.c.l.b16 %v2000
      %v2097 = vunpack.c.l.b16 %v2001
      %v2098 = vunpack.c.l.b16 %v2002
      %v2099 = vunpack.c.l.b16 %v2003
      %v2100 = vunpack.c.l.b16 %v2004
      %v2101 = vunpack.c.l.b16 %v2005
      %v2102 = vunpack.c.l.b16 %v2006
      %v2103 = vunpack.c.l.b16 %v2007
      %v2104 = vunpack.c.l.b16 %v2008
      %v2105 = vunpack.c.l.b16 %v2009
      %v2106 = vunpack.c.l.b16 %v2010
      %v2107 = vunpack.c.l.b16 %v2011
      %v2108 = vunpack.c.l.b16 %v2012
      %v2109 = vunpack.c.l.b16 %v2013
      %v2110 = vunpack.c.l.b16 %v2014
      %v2111 = vunpack.c.l.b16 %v2015
      %v2112 = vunpack.c.l.b16 %v2016
      %v2113 = vunpack.c.l.b16 %v2017
      %v2114 = vunpack.c.l.b16 %v2018
      %v2115 = vunpack.c.l.b16 %v2019
      %v2116 = vunpack.c.l.b16 %v2020
      %v2117 = vunpack.c.l.b16 %v2021
      %v2118 = vunpack.c.l.b16 %v2022
      %v2119 = vunpack.c.l.b16 %v2023
      %v2120 = vunpack.c.l.b16 %v2024
      %v2121 = vunpack.c.l.b16 %v2025
      %v2122 = vunpack.c.l.b16 %v2026
      %v2123 = vunpack.c.l.b16 %v2027
      %v2124 = vunpack.c.l.b16 %v2028
      %v2125 = vunpack.c.l.b16 %v2029
      %v2126 = vpack.c.b16 %v2079, %v2078
      %v2127 = vpack.c.b16 %v2081, %v2080
      %v2128 = vpack.c.b16 %v2083, %v2082
      %v2129 = vpack.c.b16 %v2085, %v2084
      %v2130 = vpack.c.b16 %v2087, %v2086
      %v2131 = vpack.c.b16 %v2089, %v2088
      %v2132 = vpack.c.b16 %v2091, %v2090
      %v2133 = vpack.c.b16 %v2093, %v2092
      %v2134 = vpack.c.b16 %v2095, %v2094
      %v2135 = vpack.c.b16 %v2097, %v2096
      %v2136 = vpack.c.b16 %v2099, %v2098
      %v2137 = vpack.c.b16 %v2101, %v2100
      %v2138 = vpack.c.b16 %v2103, %v2102
      %v2139 = vpack.c.b16 %v2105, %v2104
      %v2140 = vpack.c.b16 %v2107, %v2106
      %v2141 = vpack.c.b16 %v2109, %v2108
      %v2142 = vpack.c.b16 %v2111, %v2110
      %v2143 = vpack.c.b16 %v2113, %v2112
      %v2144 = vpack.c.b16 %v2115, %v2114
      %v2145 = vpack.c.b16 %v2117, %v2116
      %v2146 = vpack.c.b16 %v2119, %v2118
      %v2147 = vpack.c.b16 %v2121, %v2120
      %v2148 = vpack.c.b16 %v2123, %v2122
      %v2149 = vpack.c.b16 %v2125, %v2124
      %2174 = vmatprep.subr.bf16.mxu0 0
      %2175 = vmatpush1.bf16.msra.mxu0 %v2126
      %2176 = vmatprep.subr.bf16.mxu0 0
      %2177 = vmatpush1.bf16.msra.mxu0 %v2127
      %2178 = vmatprep.subr.bf16.mxu0 0
      %2179 = vmatpush1.bf16.msra.mxu0 %v2128
      %2180 = vmatprep.subr.bf16.mxu0 0
      %2181 = vmatpush1.bf16.msra.mxu0 %v2129
      %2182 = vmatprep.subr.bf16.mxu0 0
      %2183 = vmatpush1.bf16.msra.mxu0 %v2130
      %2184 = vmatprep.subr.bf16.mxu0 0
      %2185 = vmatpush1.bf16.msra.mxu0 %v2131
      %2186 = vmatprep.subr.bf16.mxu0 0
      %2187 = vmatpush1.bf16.msra.mxu0 %v2132
      %2188 = vmatprep.subr.bf16.mxu0 0
      %2189 = vmatpush1.bf16.msra.mxu0 %v2133
      %2190 = vmatprep.subr.bf16.mxu0 0
      %2191 = vmatpush1.bf16.msra.mxu0 %v2134
      %2192 = vmatprep.subr.bf16.mxu0 0
      %2193 = vmatpush1.bf16.msra.mxu0 %v2135
      %2194 = vmatprep.subr.bf16.mxu0 0
      %2195 = vmatpush1.bf16.msra.mxu0 %v2136
      %2196 = vmatprep.subr.bf16.mxu0 0
      %2197 = vmatpush1.bf16.msra.mxu0 %v2137
      %2198 = vmatprep.subr.bf16.mxu0 0
      %2199 = vmatpush1.bf16.msra.mxu0 %v2138
      %2200 = vmatprep.subr.bf16.mxu0 0
      %2201 = vmatpush1.bf16.msra.mxu0 %v2139
      %2202 = vmatprep.subr.bf16.mxu0 0
      %2203 = vmatpush1.bf16.msra.mxu0 %v2140
      %2204 = vmatprep.subr.bf16.mxu0 0
      %2205 = vmatpush1.bf16.msra.mxu0 %v2141
      %2206 = vmatprep.mubr.bf16.mxu0 %v1958
      %2207 = vmatmul.mubr.bf16.gmra.mrb[0].mxu0 %v1957
      %v2208 = vpop.f32.mrb[0].mxu0
      %v2209 = vadd.f32 0.0, %v2208
      %v2210 = vpop.f32.mrb[0].mxu0
      %v2211 = vpop.f32.mrb[0].mxu0
      %v2212 = vadd.f32 0.0, %v2211
      %v2213 = vpop.f32.mrb[0].mxu0
      %2214 = vmatprep.mubr.bf16.mxu0 %v1961
      %2215 = vmatmul.mubr.bf16.gmra.mrb[0].mxu0 %v1960
      %v2216 = vpop.f32.mrb[0].mxu0
      %v2217 = vadd.f32 0.0, %v2216
      %v2218 = vpop.f32.mrb[0].mxu0
      %v2219 = vpop.f32.mrb[0].mxu0
      %v2220 = vadd.f32 0.0, %v2219
      %v2221 = vpop.f32.mrb[0].mxu0
      %2222 = vmatprep.mubr.bf16.mxu0 %v1964
      %2223 = vmatmul.mubr.bf16.gmra.mrb[0].mxu0 %v1963
      %v2224 = vpop.f32.mrb[0].mxu0
      %v2225 = vadd.f32 0.0, %v2224
      %v2226 = vpop.f32.mrb[0].mxu0
      %v2227 = vpop.f32.mrb[0].mxu0
      %v2228 = vadd.f32 0.0, %v2227
      %v2229 = vpop.f32.mrb[0].mxu0
      %2230 = vmatprep.mubr.bf16.mxu0 %v1967
      %2231 = vmatmul.mubr.bf16.gmra.mrb[0].mxu0 %v1966
      %v2232 = vpop.f32.mrb[0].mxu0
      %v2233 = vadd.f32 0.0, %v2232
      %v2234 = vpop.f32.mrb[0].mxu0
      %v2235 = vpop.f32.mrb[0].mxu0
      %v2236 = vadd.f32 0.0, %v2235
      %v2237 = vpop.f32.mrb[0].mxu0
      %2238 = vmatprep.mubr.bf16.mxu0 %v1970
      %2239 = vmatmul.mubr.bf16.gmra.mrb[0].mxu0 %v1969
      %v2240 = vpop.f32.mrb[0].mxu0
      %v2241 = vadd.f32 0.0, %v2240
      %v2242 = vpop.f32.mrb[0].mxu0
      %v2243 = vpop.f32.mrb[0].mxu0
      %v2244 = vadd.f32 0.0, %v2243
      %v2245 = vpop.f32.mrb[0].mxu0
      %2246 = vmatprep.mubr.bf16.mxu0 %v1973
      %2247 = vmatmul.mubr.bf16.gmra.mrb[0].mxu0 %v1972
      %v2248 = vpop.f32.mrb[0].mxu0
      %v2249 = vadd.f32 0.0, %v2248
      %v2250 = vpop.f32.mrb[0].mxu0
      %v2251 = vpop.f32.mrb[0].mxu0
      %v2252 = vadd.f32 0.0, %v2251
      %v2253 = vpop.f32.mrb[0].mxu0
      %2254 = vmatprep.mubr.bf16.mxu0 %v1976
      %2255 = vmatmul.mubr.bf16.gmra.mrb[0].mxu0 %v1975
      %v2256 = vpop.f32.mrb[0].mxu0
      %v2257 = vadd.f32 0.0, %v2256
      %v2258 = vpop.f32.mrb[0].mxu0
      %v2259 = vpop.f32.mrb[0].mxu0
      %v2260 = vadd.f32 0.0, %v2259
      %v2261 = vpop.f32.mrb[0].mxu0
      %2262 = vmatprep.mubr.bf16.mxu0 %v1979
      %2263 = vmatmul.mubr.bf16.gmra.mrb[0].mxu0 %v1978
      %v2264 = vpop.f32.mrb[0].mxu0
      %v2265 = vadd.f32 0.0, %v2264
      %v2266 = vpop.f32.mrb[0].mxu0
      %v2267 = vpop.f32.mrb[0].mxu0
      %v2268 = vadd.f32 0.0, %v2267
      %v2269 = vpop.f32.mrb[0].mxu0
      %2270 = vdwg.mxu0
      %2271 = vmatprep.subr.bf16.mxu0 0
      %2272 = vmatpush1.bf16.msra.mxu0 %v2142
      %2273 = vmatprep.subr.bf16.mxu0 0
      %2274 = vmatpush1.bf16.msra.mxu0 %v2143
      %2275 = vmatprep.subr.bf16.mxu0 0
      %2276 = vmatpush1.bf16.msra.mxu0 %v2144
      %2277 = vmatprep.subr.bf16.mxu0 0
      %2278 = vmatpush1.bf16.msra.mxu0 %v2145
      %2279 = vmatprep.subr.bf16.mxu0 0
      %2280 = vmatpush1.bf16.msra.mxu0 %v2146
      %2281 = vmatprep.subr.bf16.mxu0 0
      %2282 = vmatpush1.bf16.msra.mxu0 %v2147
      %2283 = vmatprep.subr.bf16.mxu0 0
      %2284 = vmatpush1.bf16.msra.mxu0 %v2148
      %2285 = vmatprep.subr.bf16.mxu0 0
      %2286 = vmatpush1.bf16.msra.mxu0 %v2149
      %2287 = vmatprep.subr.bf16.mxu0 0
      %2288 = vmatpush1.bf16.msra.mxu0 0
      %2289 = vmatprep.subr.bf16.mxu0 0
      %2290 = vmatpush1.bf16.msra.mxu0 0
      %2291 = vmatprep.subr.bf16.mxu0 0
      %2292 = vmatpush1.bf16.msra.mxu0 0
      %2293 = vmatprep.subr.bf16.mxu0 0
      %2294 = vmatpush1.bf16.msra.mxu0 0
      %2295 = vmatprep.subr.bf16.mxu0 0
      %2296 = vmatpush1.bf16.msra.mxu0 0
      %2297 = vmatprep.subr.bf16.mxu0 0
      %2298 = vmatpush1.bf16.msra.mxu0 0
      %2299 = vmatprep.subr.bf16.mxu0 0
      %2300 = vmatpush1.bf16.msra.mxu0 0
      %2301 = vmatprep.subr.bf16.mxu0 0
      %2302 = vmatpush1.bf16.msra.mxu0 0
      %2303 = vmatprep.mubr.bf16.mxu0 0
      %2304 = vmatmul.mubr.bf16.gmra.mrb[0].mxu0 %v1959
      %v2305 = vpop.f32.mrb[0].mxu0
      %v2306 = vadd.f32 %v2209, %v2305
      %v2307 = vpop.f32.mrb[0].mxu0
      %v2308 = vpop.f32.mrb[0].mxu0
      %v2309 = vadd.f32 %v2212, %v2308
      %v2310 = vpop.f32.mrb[0].mxu0
      %2311 = vmatprep.mubr.bf16.mxu0 0
      %2312 = vmatmul.mubr.bf16.gmra.mrb[0].mxu0 %v1962
      %v2313 = vpop.f32.mrb[0].mxu0
      %v2314 = vadd.f32 %v2217, %v2313
      %v2315 = vpop.f32.mrb[0].mxu0
      %v2316 = vpop.f32.mrb[0].mxu0
      %v2317 = vadd.f32 %v2220, %v2316
      %v2318 = vpop.f32.mrb[0].mxu0
      %2319 = vmatprep.mubr.bf16.mxu0 0
      %2320 = vmatmul.mubr.bf16.gmra.mrb[0].mxu0 %v1965
      %v2321 = vpop.f32.mrb[0].mxu0
      %v2322 = vadd.f32 %v2225, %v2321
      %v2323 = vpop.f32.mrb[0].mxu0
      %v2324 = vpop.f32.mrb[0].mxu0
      %v2325 = vadd.f32 %v2228, %v2324
      %v2326 = vpop.f32.mrb[0].mxu0
      %2327 = vmatprep.mubr.bf16.mxu0 0
      %2328 = vmatmul.mubr.bf16.gmra.mrb[0].mxu0 %v1968
      %v2329 = vpop.f32.mrb[0].mxu0
      %v2330 = vadd.f32 %v2233, %v2329
      %v2331 = vpop.f32.mrb[0].mxu0
      %v2332 = vpop.f32.mrb[0].mxu0
      %v2333 = vadd.f32 %v2236, %v2332
      %v2334 = vpop.f32.mrb[0].mxu0
      %2335 = vmatprep.mubr.bf16.mxu0 0
      %2336 = vmatmul.mubr.bf16.gmra.mrb[0].mxu0 %v1971
      %v2337 = vpop.f32.mrb[0].mxu0
      %v2338 = vadd.f32 %v2241, %v2337
      %v2339 = vpop.f32.mrb[0].mxu0
      %v2340 = vpop.f32.mrb[0].mxu0
      %v2341 = vadd.f32 %v2244, %v2340
      %v2342 = vpop.f32.mrb[0].mxu0
      %2343 = vmatprep.mubr.bf16.mxu0 0
      %2344 = vmatmul.mubr.bf16.gmra.mrb[0].mxu0 %v1974
      %v2345 = vpop.f32.mrb[0].mxu0
      %v2346 = vadd.f32 %v2249, %v2345
      %v2347 = vpop.f32.mrb[0].mxu0
      %v2348 = vpop.f32.mrb[0].mxu0
      %v2349 = vadd.f32 %v2252, %v2348
      %v2350 = vpop.f32.mrb[0].mxu0
      %2351 = vmatprep.mubr.bf16.mxu0 0
      %2352 = vmatmul.mubr.bf16.gmra.mrb[0].mxu0 %v1977
      %v2353 = vpop.f32.mrb[0].mxu0
      %v2354 = vadd.f32 %v2257, %v2353
      %v2355 = vpop.f32.mrb[0].mxu0
      %v2356 = vpop.f32.mrb[0].mxu0
      %v2357 = vadd.f32 %v2260, %v2356
      %v2358 = vpop.f32.mrb[0].mxu0
      %2359 = vmatprep.mubr.bf16.mxu0 0
      %2360 = vmatmul.mubr.bf16.gmra.mrb[0].mxu0 %v1980
      %v2361 = vpop.f32.mrb[0].mxu0
      %v2362 = vadd.f32 %v2265, %v2361
      %v2363 = vpop.f32.mrb[0].mxu0
      %v2364 = vpop.f32.mrb[0].mxu0
      %v2365 = vadd.f32 %v2268, %v2364
      %v2366 = vpop.f32.mrb[0].mxu0
      %2367 = vdwg.mxu0
      %v2416 = vunpack.c.l.b16 %v1437
      %v2417 = vunpack.c.l.b16 %v1438
      %v2418 = vunpack.c.l.b16 %v1439
      %v2419 = vunpack.c.l.b16 %v1440
      %v2420 = vunpack.c.l.b16 %v1441
      %v2421 = vunpack.c.l.b16 %v1442
      %v2422 = vunpack.c.l.b16 %v1443
      %v2423 = vunpack.c.l.b16 %v1444
      %v2424 = vunpack.c.l.b16 %v1445
      %v2425 = vunpack.c.l.b16 %v1446
      %v2426 = vunpack.c.l.b16 %v1447
      %v2427 = vunpack.c.l.b16 %v1448
      %v2428 = vunpack.c.l.b16 %v1449
      %v2429 = vunpack.c.l.b16 %v1450
      %v2430 = vunpack.c.l.b16 %v1451
      %v2431 = vunpack.c.l.b16 %v1452
      %v2432 = vunpack.c.l.b16 %v1453
      %v2433 = vunpack.c.l.b16 %v1454
      %v2434 = vunpack.c.l.b16 %v1455
      %v2435 = vunpack.c.l.b16 %v1456
      %v2436 = vunpack.c.l.b16 %v1457
      %v2437 = vunpack.c.l.b16 %v1458
      %v2438 = vunpack.c.l.b16 %v1459
      %v2439 = vunpack.c.l.b16 %v1460
      %v2440 = vunpack.c.l.b16 %v1461
      %v2441 = vunpack.c.l.b16 %v1462
      %v2442 = vunpack.c.l.b16 %v1463
      %v2443 = vunpack.c.l.b16 %v1464
      %v2444 = vunpack.c.l.b16 %v1465
      %v2445 = vunpack.c.l.b16 %v1466
      %v2446 = vunpack.c.l.b16 %v1467
      %v2447 = vunpack.c.l.b16 %v1468
      %v2448 = vunpack.c.l.b16 %v1469
      %v2449 = vunpack.c.l.b16 %v1470
      %v2450 = vunpack.c.l.b16 %v1471
      %v2451 = vunpack.c.l.b16 %v1472
      %v2452 = vunpack.c.l.b16 %v1473
      %v2453 = vunpack.c.l.b16 %v1474
      %v2454 = vunpack.c.l.b16 %v1475
      %v2455 = vunpack.c.l.b16 %v1476
      %v2456 = vunpack.c.l.b16 %v1477
      %v2457 = vunpack.c.l.b16 %v1478
      %v2458 = vunpack.c.l.b16 %v1479
      %v2459 = vunpack.c.l.b16 %v1480
      %v2460 = vunpack.c.l.b16 %v1481
      %v2461 = vunpack.c.l.b16 %v1482
      %v2462 = vunpack.c.l.b16 %v1483
      %v2463 = vunpack.c.l.b16 %v1484
      %v2464 = vpack.c.b16 %v2417, %v2416
      %v2465 = vpack.c.b16 %v2419, %v2418
      %v2466 = vpack.c.b16 %v2421, %v2420
      %v2467 = vpack.c.b16 %v2423, %v2422
      %v2468 = vpack.c.b16 %v2425, %v2424
      %v2469 = vpack.c.b16 %v2427, %v2426
      %v2470 = vpack.c.b16 %v2429, %v2428
      %v2471 = vpack.c.b16 %v2431, %v2430
      %v2472 = vpack.c.b16 %v2433, %v2432
      %v2473 = vpack.c.b16 %v2435, %v2434
      %v2474 = vpack.c.b16 %v2437, %v2436
      %v2475 = vpack.c.b16 %v2439, %v2438
      %v2476 = vpack.c.b16 %v2441, %v2440
      %v2477 = vpack.c.b16 %v2443, %v2442
      %v2478 = vpack.c.b16 %v2445, %v2444
      %v2479 = vpack.c.b16 %v2447, %v2446
      %v2480 = vpack.c.b16 %v2449, %v2448
      %v2481 = vpack.c.b16 %v2451, %v2450
      %v2482 = vpack.c.b16 %v2453, %v2452
      %v2483 = vpack.c.b16 %v2455, %v2454
      %v2484 = vpack.c.b16 %v2457, %v2456
      %v2485 = vpack.c.b16 %v2459, %v2458
      %v2486 = vpack.c.b16 %v2461, %v2460
      %v2487 = vpack.c.b16 %v2463, %v2462
      %2512 = vmatprep.subr.bf16.mxu0 0
      %2513 = vmatpush1.bf16.msra.mxu0 %v2464
      %2514 = vmatprep.subr.bf16.mxu0 0
      %2515 = vmatpush1.bf16.msra.mxu0 %v2465
      %2516 = vmatprep.subr.bf16.mxu0 0
      %2517 = vmatpush1.bf16.msra.mxu0 %v2466
      %2518 = vmatprep.subr.bf16.mxu0 0
      %2519 = vmatpush1.bf16.msra.mxu0 %v2467
      %2520 = vmatprep.subr.bf16.mxu0 0
      %2521 = vmatpush1.bf16.msra.mxu0 %v2468
      %2522 = vmatprep.subr.bf16.mxu0 0
      %2523 = vmatpush1.bf16.msra.mxu0 %v2469
      %2524 = vmatprep.subr.bf16.mxu0 0
      %2525 = vmatpush1.bf16.msra.mxu0 %v2470
      %2526 = vmatprep.subr.bf16.mxu0 0
      %2527 = vmatpush1.bf16.msra.mxu0 %v2471
      %2528 = vmatprep.subr.bf16.mxu0 0
      %2529 = vmatpush1.bf16.msra.mxu0 %v2472
      %2530 = vmatprep.subr.bf16.mxu0 0
      %2531 = vmatpush1.bf16.msra.mxu0 %v2473
      %2532 = vmatprep.subr.bf16.mxu0 0
      %2533 = vmatpush1.bf16.msra.mxu0 %v2474
      %2534 = vmatprep.subr.bf16.mxu0 0
      %2535 = vmatpush1.bf16.msra.mxu0 %v2475
      %2536 = vmatprep.subr.bf16.mxu0 0
      %2537 = vmatpush1.bf16.msra.mxu0 %v2476
      %2538 = vmatprep.subr.bf16.mxu0 0
      %2539 = vmatpush1.bf16.msra.mxu0 %v2477
      %2540 = vmatprep.subr.bf16.mxu0 0
      %2541 = vmatpush1.bf16.msra.mxu0 %v2478
      %2542 = vmatprep.subr.bf16.mxu0 0
      %2543 = vmatpush1.bf16.msra.mxu0 %v2479
      %2544 = vmatprep.mubr.bf16.mxu0 %v1414
      %2545 = vmatmul.mubr.bf16.gmra.mrb[0].mxu0 %v1413
      %v2546 = vpop.f32.mrb[0].mxu0
      %v2547 = vadd.f32 %v2306, %v2546
      %v2548 = vpop.f32.mrb[0].mxu0
      %v2549 = vpop.f32.mrb[0].mxu0
      %v2550 = vadd.f32 %v2309, %v2549
      %v2551 = vpop.f32.mrb[0].mxu0
      %2552 = vmatprep.mubr.bf16.mxu0 %v1417
      %2553 = vmatmul.mubr.bf16.gmra.mrb[0].mxu0 %v1416
      %v2554 = vpop.f32.mrb[0].mxu0
      %v2555 = vadd.f32 %v2314, %v2554
      %v2556 = vpop.f32.mrb[0].mxu0
      %v2557 = vpop.f32.mrb[0].mxu0
      %v2558 = vadd.f32 %v2317, %v2557
      %v2559 = vpop.f32.mrb[0].mxu0
      %2560 = vmatprep.mubr.bf16.mxu0 %v1420
      %2561 = vmatmul.mubr.bf16.gmra.mrb[0].mxu0 %v1419
      %v2562 = vpop.f32.mrb[0].mxu0
      %v2563 = vadd.f32 %v2322, %v2562
      %v2564 = vpop.f32.mrb[0].mxu0
      %v2565 = vpop.f32.mrb[0].mxu0
      %v2566 = vadd.f32 %v2325, %v2565
      %v2567 = vpop.f32.mrb[0].mxu0
      %2568 = vmatprep.mubr.bf16.mxu0 %v1423
      %2569 = vmatmul.mubr.bf16.gmra.mrb[0].mxu0 %v1422
      %v2570 = vpop.f32.mrb[0].mxu0
      %v2571 = vadd.f32 %v2330, %v2570
      %v2572 = vpop.f32.mrb[0].mxu0
      %v2573 = vpop.f32.mrb[0].mxu0
      %v2574 = vadd.f32 %v2333, %v2573
      %v2575 = vpop.f32.mrb[0].mxu0
      %2576 = vmatprep.mubr.bf16.mxu0 %v1426
      %2577 = vmatmul.mubr.bf16.gmra.mrb[0].mxu0 %v1425
      %v2578 = vpop.f32.mrb[0].mxu0
      %v2579 = vadd.f32 %v2338, %v2578
      %v2580 = vpop.f32.mrb[0].mxu0
      %v2581 = vpop.f32.mrb[0].mxu0
      %v2582 = vadd.f32 %v2341, %v2581
      %v2583 = vpop.f32.mrb[0].mxu0
      %2584 = vmatprep.mubr.bf16.mxu0 %v1429
      %2585 = vmatmul.mubr.bf16.gmra.mrb[0].mxu0 %v1428
      %v2586 = vpop.f32.mrb[0].mxu0
      %v2587 = vadd.f32 %v2346, %v2586
      %v2588 = vpop.f32.mrb[0].mxu0
      %v2589 = vpop.f32.mrb[0].mxu0
      %v2590 = vadd.f32 %v2349, %v2589
      %v2591 = vpop.f32.mrb[0].mxu0
      %2592 = vmatprep.mubr.bf16.mxu0 %v1432
      %2593 = vmatmul.mubr.bf16.gmra.mrb[0].mxu0 %v1431
      %v2594 = vpop.f32.mrb[0].mxu0
      %v2595 = vadd.f32 %v2354, %v2594
      %v2596 = vpop.f32.mrb[0].mxu0
      %v2597 = vpop.f32.mrb[0].mxu0
      %v2598 = vadd.f32 %v2357, %v2597
      %v2599 = vpop.f32.mrb[0].mxu0
      %2600 = vmatprep.mubr.bf16.mxu0 %v1435
      %2601 = vmatmul.mubr.bf16.gmra.mrb[0].mxu0 %v1434
      %v2602 = vpop.f32.mrb[0].mxu0
      %v2603 = vadd.f32 %v2362, %v2602
      %v2604 = vpop.f32.mrb[0].mxu0
      %v2605 = vpop.f32.mrb[0].mxu0
      %v2606 = vadd.f32 %v2365, %v2605
      %v2607 = vpop.f32.mrb[0].mxu0
      %2608 = vdwg.mxu0
      %2609 = vmatprep.subr.bf16.mxu0 0
      %2610 = vmatpush1.bf16.msra.mxu0 %v2480
      %2611 = vmatprep.subr.bf16.mxu0 0
      %2612 = vmatpush1.bf16.msra.mxu0 %v2481
      %2613 = vmatprep.subr.bf16.mxu0 0
      %2614 = vmatpush1.bf16.msra.mxu0 %v2482
      %2615 = vmatprep.subr.bf16.mxu0 0
      %2616 = vmatpush1.bf16.msra.mxu0 %v2483
      %2617 = vmatprep.subr.bf16.mxu0 0
      %2618 = vmatpush1.bf16.msra.mxu0 %v2484
      %2619 = vmatprep.subr.bf16.mxu0 0
      %2620 = vmatpush1.bf16.msra.mxu0 %v2485
      %2621 = vmatprep.subr.bf16.mxu0 0
      %2622 = vmatpush1.bf16.msra.mxu0 %v2486
      %2623 = vmatprep.subr.bf16.mxu0 0
      %2624 = vmatpush1.bf16.msra.mxu0 %v2487
      %2625 = vmatprep.subr.bf16.mxu0 0
      %2626 = vmatpush1.bf16.msra.mxu0 0
      %2627 = vmatprep.subr.bf16.mxu0 0
      %2628 = vmatpush1.bf16.msra.mxu0 0
      %2629 = vmatprep.subr.bf16.mxu0 0
      %2630 = vmatpush1.bf16.msra.mxu0 0
      %2631 = vmatprep.subr.bf16.mxu0 0
      %2632 = vmatpush1.bf16.msra.mxu0 0
      %2633 = vmatprep.subr.bf16.mxu0 0
      %2634 = vmatpush1.bf16.msra.mxu0 0
      %2635 = vmatprep.subr.bf16.mxu0 0
      %2636 = vmatpush1.bf16.msra.mxu0 0
      %2637 = vmatprep.subr.bf16.mxu0 0
      %2638 = vmatpush1.bf16.msra.mxu0 0
      %2639 = vmatprep.subr.bf16.mxu0 0
      %2640 = vmatpush1.bf16.msra.mxu0 0
      %2641 = vmatprep.mubr.bf16.mxu0 0
      %2642 = vmatmul.mubr.bf16.gmra.mrb[0].mxu0 %v1415
      %v2643 = vpop.f32.mrb[0].mxu0
      %v2644 = vadd.f32 %v2547, %v2643
      %v2645 = vpop.f32.mrb[0].mxu0
      %v2646 = vpop.f32.mrb[0].mxu0
      %v2647 = vadd.f32 %v2550, %v2646
      %v2648 = vpop.f32.mrb[0].mxu0
      %2649 = vmatprep.mubr.bf16.mxu0 0
      %2650 = vmatmul.mubr.bf16.gmra.mrb[0].mxu0 %v1418
      %v2651 = vpop.f32.mrb[0].mxu0
      %v2652 = vadd.f32 %v2555, %v2651
      %v2653 = vpop.f32.mrb[0].mxu0
      %v2654 = vpop.f32.mrb[0].mxu0
      %v2655 = vadd.f32 %v2558, %v2654
      %v2656 = vpop.f32.mrb[0].mxu0
      %2657 = vmatprep.mubr.bf16.mxu0 0
      %2658 = vmatmul.mubr.bf16.gmra.mrb[0].mxu0 %v1421
      %v2659 = vpop.f32.mrb[0].mxu0
      %v2660 = vadd.f32 %v2563, %v2659
      %v2661 = vpop.f32.mrb[0].mxu0
      %v2662 = vpop.f32.mrb[0].mxu0
      %v2663 = vadd.f32 %v2566, %v2662
      %v2664 = vpop.f32.mrb[0].mxu0
      %2665 = vmatprep.mubr.bf16.mxu0 0
      %2666 = vmatmul.mubr.bf16.gmra.mrb[0].mxu0 %v1424
      %v2667 = vpop.f32.mrb[0].mxu0
      %v2668 = vadd.f32 %v2571, %v2667
      %v2669 = vpop.f32.mrb[0].mxu0
      %v2670 = vpop.f32.mrb[0].mxu0
      %v2671 = vadd.f32 %v2574, %v2670
      %v2672 = vpop.f32.mrb[0].mxu0
      %2673 = vmatprep.mubr.bf16.mxu0 0
      %2674 = vmatmul.mubr.bf16.gmra.mrb[0].mxu0 %v1427
      %v2675 = vpop.f32.mrb[0].mxu0
      %v2676 = vadd.f32 %v2579, %v2675
      %v2677 = vpop.f32.mrb[0].mxu0
      %v2678 = vpop.f32.mrb[0].mxu0
      %v2679 = vadd.f32 %v2582, %v2678
      %v2680 = vpop.f32.mrb[0].mxu0
      %2681 = vmatprep.mubr.bf16.mxu0 0
      %2682 = vmatmul.mubr.bf16.gmra.mrb[0].mxu0 %v1430
      %v2683 = vpop.f32.mrb[0].mxu0
      %v2684 = vadd.f32 %v2587, %v2683
      %v2685 = vpop.f32.mrb[0].mxu0
      %v2686 = vpop.f32.mrb[0].mxu0
      %v2687 = vadd.f32 %v2590, %v2686
      %v2688 = vpop.f32.mrb[0].mxu0
      %2689 = vmatprep.mubr.bf16.mxu0 0
      %2690 = vmatmul.mubr.bf16.gmra.mrb[0].mxu0 %v1433
      %v2691 = vpop.f32.mrb[0].mxu0
      %v2692 = vadd.f32 %v2595, %v2691
      %v2693 = vpop.f32.mrb[0].mxu0
      %v2694 = vpop.f32.mrb[0].mxu0
      %v2695 = vadd.f32 %v2598, %v2694
      %v2696 = vpop.f32.mrb[0].mxu0
      %2697 = vmatprep.mubr.bf16.mxu0 0
      %2698 = vmatmul.mubr.bf16.gmra.mrb[0].mxu0 %v1436
      %v2699 = vpop.f32.mrb[0].mxu0
      %v2700 = vadd.f32 %v2603, %v2699
      %v2701 = vpop.f32.mrb[0].mxu0
      %v2702 = vpop.f32.mrb[0].mxu0
      %v2703 = vadd.f32 %v2606, %v2702
      %v2704 = vpop.f32.mrb[0].mxu0
      %2705 = vdwg.mxu0
      %s2706 = scalar_lea.vmem [#allocation2], 24
      %v2707 = vld [vmem:[%s2706] sm:$0xf]
      %v2708 = vld [vmem:[%s2706 + $0x4] sm:$0xf]
      %v2709 = vld [vmem:[%s2706 + $0xc] sm:$0xf]
      %v2710 = vld [vmem:[%s2706 + $0x10] sm:$0xf]
      %v2711 = vld [vmem:[%s2706 + $0x18] sm:$0xf]
      %v2712 = vld [vmem:[%s2706 + $0x1c] sm:$0xf]
      %v2713 = vld [vmem:[%s2706 + $0x24] sm:$0xf]
      %v2714 = vld [vmem:[%s2706 + $0x28] sm:$0xf]
      %v2715 = vld [vmem:[%s2706 + $0x30] sm:$0xf]
      %v2716 = vld [vmem:[%s2706 + $0x34] sm:$0xf]
      %v2717 = vld [vmem:[%s2706 + $0x3c] sm:$0xf]
      %v2718 = vld [vmem:[%s2706 + $0x40] sm:$0xf]
      %v2719 = vld [vmem:[%s2706 + $0x48] sm:$0xf]
      %v2720 = vld [vmem:[%s2706 + $0x4c] sm:$0xf]
      %v2721 = vld [vmem:[%s2706 + $0x54] sm:$0xf]
      %v2722 = vld [vmem:[%s2706 + $0x58] sm:$0xf]
      %v2739 = vunpack.c.l.b16 %v2707
      %v2740 = vunpack.c.l.b16 %v2708
      %v2741 = vunpack.c.l.b16 %v2709
      %v2742 = vunpack.c.l.b16 %v2710
      %v2743 = vunpack.c.l.b16 %v2711
      %v2744 = vunpack.c.l.b16 %v2712
      %v2745 = vunpack.c.l.b16 %v2713
      %v2746 = vunpack.c.l.b16 %v2714
      %v2747 = vunpack.c.l.b16 %v2715
      %v2748 = vunpack.c.l.b16 %v2716
      %v2749 = vunpack.c.l.b16 %v2717
      %v2750 = vunpack.c.l.b16 %v2718
      %v2751 = vunpack.c.l.b16 %v2719
      %v2752 = vunpack.c.l.b16 %v2720
      %v2753 = vunpack.c.l.b16 %v2721
      %v2754 = vunpack.c.l.b16 %v2722
      %v2755 = vpack.c.b16 %v2740, %v2739
      %v2756 = vpack.c.b16 %v2742, %v2741
      %v2757 = vpack.c.b16 %v2744, %v2743
      %v2758 = vpack.c.b16 %v2746, %v2745
      %v2759 = vpack.c.b16 %v2748, %v2747
      %v2760 = vpack.c.b16 %v2750, %v2749
      %v2761 = vpack.c.b16 %v2752, %v2751
      %v2762 = vpack.c.b16 %v2754, %v2753
      %2771 = vst [vmem:[#allocation3] sm:$0xff] %v2755
      %2772 = vst [vmem:[#allocation3 + $0x18] sm:$0xff] %v2756
      %2773 = vst [vmem:[#allocation3 + $0x30] sm:$0xff] %v2757
      %2774 = vst [vmem:[#allocation3 + $0x48] sm:$0xff] %v2758
      %2775 = vst [vmem:[#allocation3 + $0x60] sm:$0xff] %v2759
      %2776 = vst [vmem:[#allocation3 + $0x78] sm:$0xff] %v2760
      %2777 = vst [vmem:[#allocation3 + $0x90] sm:$0xff] %v2761
      %2778 = vst [vmem:[#allocation3 + $0xa8] sm:$0xff] %v2762
      %v2779 = vld [vmem:[%s2706] sm:$0xf]
      %v2780 = vld [vmem:[%s2706 + $0x4] sm:$0xf]
      %v2781 = vld [vmem:[%s2706 + $0x8] sm:$0x1]
      %v2782 = vld [vmem:[%s2706 + $0xc] sm:$0xf]
      %v2783 = vld [vmem:[%s2706 + $0x10] sm:$0xf]
      %v2784 = vld [vmem:[%s2706 + $0x14] sm:$0x1]
      %v2785 = vld [vmem:[%s2706 + $0x18] sm:$0xf]
      %v2786 = vld [vmem:[%s2706 + $0x1c] sm:$0xf]
      %v2787 = vld [vmem:[%s2706 + $0x20] sm:$0x1]
      %v2788 = vld [vmem:[%s2706 + $0x24] sm:$0xf]
      %v2789 = vld [vmem:[%s2706 + $0x28] sm:$0xf]
      %v2790 = vld [vmem:[%s2706 + $0x2c] sm:$0x1]
      %v2791 = vld [vmem:[%s2706 + $0x30] sm:$0xf]
      %v2792 = vld [vmem:[%s2706 + $0x34] sm:$0xf]
      %v2793 = vld [vmem:[%s2706 + $0x38] sm:$0x1]
      %v2794 = vld [vmem:[%s2706 + $0x3c] sm:$0xf]
      %v2795 = vld [vmem:[%s2706 + $0x40] sm:$0xf]
      %v2796 = vld [vmem:[%s2706 + $0x44] sm:$0x1]
      %v2797 = vld [vmem:[%s2706 + $0x48] sm:$0xf]
      %v2798 = vld [vmem:[%s2706 + $0x4c] sm:$0xf]
      %v2799 = vld [vmem:[%s2706 + $0x50] sm:$0x1]
      %v2800 = vld [vmem:[%s2706 + $0x54] sm:$0xf]
      %v2801 = vld [vmem:[%s2706 + $0x58] sm:$0xf]
      %v2802 = vld [vmem:[%s2706 + $0x5c] sm:$0x1]
      %v2804 = vshrl.u32 %v2779, 16
      %v2806 = vrot.slane %v2804, 4
      %v2807 = vshll.u32 %v2779, 16
      %v2809 = vrot.slane %v2807, 5
      %v2810 = vor.u32 %v2806, %v2809
      %v2811 = vrot.slane %v2810, 4
      %v2813 = vshll.u32 %v2780, 16
      %v2815 = vrot.slane %v2813, 5
      %v2816 = vsel %vm1033, %v2811, %v2815
      %v2817 = vshrl.u32 %v2780, 16
      %v2819 = vrot.slane %v2817, 4
      %v2820 = vor.u32 %v2819, %v2815
      %v2821 = vrot.slane %v2820, 4
      %v2823 = vshll.u32 %v2781, 16
      %v2825 = vrot.slane %v2823, 5
      %v2826 = vsel %vm1033, %v2821, %v2825
      %v2828 = vshrl.u32 %v2782, 16
      %v2830 = vrot.slane %v2828, 4
      %v2831 = vshll.u32 %v2782, 16
      %v2833 = vrot.slane %v2831, 5
      %v2834 = vor.u32 %v2830, %v2833
      %v2835 = vrot.slane %v2834, 4
      %v2837 = vshll.u32 %v2783, 16
      %v2839 = vrot.slane %v2837, 5
      %v2840 = vsel %vm1033, %v2835, %v2839
      %v2841 = vshrl.u32 %v2783, 16
      %v2843 = vrot.slane %v2841, 4
      %v2844 = vor.u32 %v2843, %v2839
      %v2845 = vrot.slane %v2844, 4
      %v2847 = vshll.u32 %v2784, 16
      %v2849 = vrot.slane %v2847, 5
      %v2850 = vsel %vm1033, %v2845, %v2849
      %v2852 = vshrl.u32 %v2785, 16
      %v2854 = vrot.slane %v2852, 4
      %v2855 = vshll.u32 %v2785, 16
      %v2857 = vrot.slane %v2855, 5
      %v2858 = vor.u32 %v2854, %v2857
      %v2859 = vrot.slane %v2858, 4
      %v2861 = vshll.u32 %v2786, 16
      %v2863 = vrot.slane %v2861, 5
      %v2864 = vsel %vm1033, %v2859, %v2863
      %v2865 = vshrl.u32 %v2786, 16
      %v2867 = vrot.slane %v2865, 4
      %v2868 = vor.u32 %v2867, %v2863
      %v2869 = vrot.slane %v2868, 4
      %v2871 = vshll.u32 %v2787, 16
      %v2873 = vrot.slane %v2871, 5
      %v2874 = vsel %vm1033, %v2869, %v2873
      %v2876 = vshrl.u32 %v2788, 16
      %v2878 = vrot.slane %v2876, 4
      %v2879 = vshll.u32 %v2788, 16
      %v2881 = vrot.slane %v2879, 5
      %v2882 = vor.u32 %v2878, %v2881
      %v2883 = vrot.slane %v2882, 4
      %v2885 = vshll.u32 %v2789, 16
      %v2887 = vrot.slane %v2885, 5
      %v2888 = vsel %vm1033, %v2883, %v2887
      %v2889 = vshrl.u32 %v2789, 16
      %v2891 = vrot.slane %v2889, 4
      %v2892 = vor.u32 %v2891, %v2887
      %v2893 = vrot.slane %v2892, 4
      %v2895 = vshll.u32 %v2790, 16
      %v2897 = vrot.slane %v2895, 5
      %v2898 = vsel %vm1033, %v2893, %v2897
      %v2900 = vshrl.u32 %v2791, 16
      %v2902 = vrot.slane %v2900, 4
      %v2903 = vshll.u32 %v2791, 16
      %v2905 = vrot.slane %v2903, 5
      %v2906 = vor.u32 %v2902, %v2905
      %v2907 = vrot.slane %v2906, 4
      %v2909 = vshll.u32 %v2792, 16
      %v2911 = vrot.slane %v2909, 5
      %v2912 = vsel %vm1033, %v2907, %v2911
      %v2913 = vshrl.u32 %v2792, 16
      %v2915 = vrot.slane %v2913, 4
      %v2916 = vor.u32 %v2915, %v2911
      %v2917 = vrot.slane %v2916, 4
      %v2919 = vshll.u32 %v2793, 16
      %v2921 = vrot.slane %v2919, 5
      %v2922 = vsel %vm1033, %v2917, %v2921
      %v2924 = vshrl.u32 %v2794, 16
      %v2926 = vrot.slane %v2924, 4
      %v2927 = vshll.u32 %v2794, 16
      %v2929 = vrot.slane %v2927, 5
      %v2930 = vor.u32 %v2926, %v2929
      %v2931 = vrot.slane %v2930, 4
      %v2933 = vshll.u32 %v2795, 16
      %v2935 = vrot.slane %v2933, 5
      %v2936 = vsel %vm1033, %v2931, %v2935
      %v2937 = vshrl.u32 %v2795, 16
      %v2939 = vrot.slane %v2937, 4
      %v2940 = vor.u32 %v2939, %v2935
      %v2941 = vrot.slane %v2940, 4
      %v2943 = vshll.u32 %v2796, 16
      %v2945 = vrot.slane %v2943, 5
      %v2946 = vsel %vm1033, %v2941, %v2945
      %v2948 = vshrl.u32 %v2797, 16
      %v2950 = vrot.slane %v2948, 4
      %v2951 = vshll.u32 %v2797, 16
      %v2953 = vrot.slane %v2951, 5
      %v2954 = vor.u32 %v2950, %v2953
      %v2955 = vrot.slane %v2954, 4
      %v2957 = vshll.u32 %v2798, 16
      %v2959 = vrot.slane %v2957, 5
      %v2960 = vsel %vm1033, %v2955, %v2959
      %v2961 = vshrl.u32 %v2798, 16
      %v2963 = vrot.slane %v2961, 4
      %v2964 = vor.u32 %v2963, %v2959
      %v2965 = vrot.slane %v2964, 4
      %v2967 = vshll.u32 %v2799, 16
      %v2969 = vrot.slane %v2967, 5
      %v2970 = vsel %vm1033, %v2965, %v2969
      %v2972 = vshrl.u32 %v2800, 16
      %v2974 = vrot.slane %v2972, 4
      %v2975 = vshll.u32 %v2800, 16
      %v2977 = vrot.slane %v2975, 5
      %v2978 = vor.u32 %v2974, %v2977
      %v2979 = vrot.slane %v2978, 4
      %v2981 = vshll.u32 %v2801, 16
      %v2983 = vrot.slane %v2981, 5
      %v2984 = vsel %vm1033, %v2979, %v2983
      %v2985 = vshrl.u32 %v2801, 16
      %v2987 = vrot.slane %v2985, 4
      %v2988 = vor.u32 %v2987, %v2983
      %v2989 = vrot.slane %v2988, 4
      %v2991 = vshll.u32 %v2802, 16
      %v2993 = vrot.slane %v2991, 5
      %v2994 = vsel %vm1033, %v2989, %v2993
      %v2995 = vunpack.c.l.b16 %v2816
      %v2996 = vunpack.c.l.b16 %v2826
      %v2997 = vunpack.c.l.b16 %v2840
      %v2998 = vunpack.c.l.b16 %v2850
      %v2999 = vunpack.c.l.b16 %v2864
      %v3000 = vunpack.c.l.b16 %v2874
      %v3001 = vunpack.c.l.b16 %v2888
      %v3002 = vunpack.c.l.b16 %v2898
      %v3003 = vunpack.c.l.b16 %v2912
      %v3004 = vunpack.c.l.b16 %v2922
      %v3005 = vunpack.c.l.b16 %v2936
      %v3006 = vunpack.c.l.b16 %v2946
      %v3007 = vunpack.c.l.b16 %v2960
      %v3008 = vunpack.c.l.b16 %v2970
      %v3009 = vunpack.c.l.b16 %v2984
      %v3010 = vunpack.c.l.b16 %v2994
      %v3011 = vpack.c.b16 %v2996, %v2995
      %v3012 = vpack.c.b16 %v2998, %v2997
      %v3013 = vpack.c.b16 %v3000, %v2999
      %v3014 = vpack.c.b16 %v3002, %v3001
      %v3015 = vpack.c.b16 %v3004, %v3003
      %v3016 = vpack.c.b16 %v3006, %v3005
      %v3017 = vpack.c.b16 %v3008, %v3007
      %v3018 = vpack.c.b16 %v3010, %v3009
      %3027 = vst [vmem:[#allocation3 + $0x8] sm:$0xff] %v3011
      %3028 = vst [vmem:[#allocation3 + $0x20] sm:$0xff] %v3012
      %3029 = vst [vmem:[#allocation3 + $0x38] sm:$0xff] %v3013
      %3030 = vst [vmem:[#allocation3 + $0x50] sm:$0xff] %v3014
      %3031 = vst [vmem:[#allocation3 + $0x68] sm:$0xff] %v3015
      %3032 = vst [vmem:[#allocation3 + $0x80] sm:$0xff] %v3016
      %3033 = vst [vmem:[#allocation3 + $0x98] sm:$0xff] %v3017
      %3034 = vst [vmem:[#allocation3 + $0xb0] sm:$0xff] %v3018
      %v3035 = vld [vmem:[%s2706] sm:$0xe]
      %v3036 = vld [vmem:[%s2706 + $0x4] sm:$0xf]
      %v3037 = vld [vmem:[%s2706 + $0x8] sm:$0x1]
      %v3038 = vld [vmem:[%s2706 + $0xc] sm:$0xe]
      %v3039 = vld [vmem:[%s2706 + $0x10] sm:$0xf]
      %v3040 = vld [vmem:[%s2706 + $0x14] sm:$0x1]
      %v3041 = vld [vmem:[%s2706 + $0x18] sm:$0xe]
      %v3042 = vld [vmem:[%s2706 + $0x1c] sm:$0xf]
      %v3043 = vld [vmem:[%s2706 + $0x20] sm:$0x1]
      %v3044 = vld [vmem:[%s2706 + $0x24] sm:$0xe]
      %v3045 = vld [vmem:[%s2706 + $0x28] sm:$0xf]
      %v3046 = vld [vmem:[%s2706 + $0x2c] sm:$0x1]
      %v3047 = vld [vmem:[%s2706 + $0x30] sm:$0xe]
      %v3048 = vld [vmem:[%s2706 + $0x34] sm:$0xf]
      %v3049 = vld [vmem:[%s2706 + $0x38] sm:$0x1]
      %v3050 = vld [vmem:[%s2706 + $0x3c] sm:$0xe]
      %v3051 = vld [vmem:[%s2706 + $0x40] sm:$0xf]
      %v3052 = vld [vmem:[%s2706 + $0x44] sm:$0x1]
      %v3053 = vld [vmem:[%s2706 + $0x48] sm:$0xe]
      %v3054 = vld [vmem:[%s2706 + $0x4c] sm:$0xf]
      %v3055 = vld [vmem:[%s2706 + $0x50] sm:$0x1]
      %v3056 = vld [vmem:[%s2706 + $0x54] sm:$0xe]
      %v3057 = vld [vmem:[%s2706 + $0x58] sm:$0xf]
      %v3058 = vld [vmem:[%s2706 + $0x5c] sm:$0x1]
      %v3083 = vrot.slane %v3035, 5
      %v3084 = vrot.slane %v3083, 4
      %v3085 = vrot.slane %v3036, 5
      %v3086 = vsel %vm1316, %v3084, %v3085
      %v3087 = vrot.slane %v3085, 4
      %v3088 = vrot.slane %v3037, 5
      %v3089 = vsel %vm1316, %v3087, %v3088
      %v3090 = vrot.slane %v3038, 5
      %v3091 = vrot.slane %v3090, 4
      %v3092 = vrot.slane %v3039, 5
      %v3093 = vsel %vm1316, %v3091, %v3092
      %v3094 = vrot.slane %v3092, 4
      %v3095 = vrot.slane %v3040, 5
      %v3096 = vsel %vm1316, %v3094, %v3095
      %v3097 = vrot.slane %v3041, 5
      %v3098 = vrot.slane %v3097, 4
      %v3099 = vrot.slane %v3042, 5
      %v3100 = vsel %vm1316, %v3098, %v3099
      %v3101 = vrot.slane %v3099, 4
      %v3102 = vrot.slane %v3043, 5
      %v3103 = vsel %vm1316, %v3101, %v3102
      %v3104 = vrot.slane %v3044, 5
      %v3105 = vrot.slane %v3104, 4
      %v3106 = vrot.slane %v3045, 5
      %v3107 = vsel %vm1316, %v3105, %v3106
      %v3108 = vrot.slane %v3106, 4
      %v3109 = vrot.slane %v3046, 5
      %v3110 = vsel %vm1316, %v3108, %v3109
      %v3111 = vrot.slane %v3047, 5
      %v3112 = vrot.slane %v3111, 4
      %v3113 = vrot.slane %v3048, 5
      %v3114 = vsel %vm1316, %v3112, %v3113
      %v3115 = vrot.slane %v3113, 4
      %v3116 = vrot.slane %v3049, 5
      %v3117 = vsel %vm1316, %v3115, %v3116
      %v3118 = vrot.slane %v3050, 5
      %v3119 = vrot.slane %v3118, 4
      %v3120 = vrot.slane %v3051, 5
      %v3121 = vsel %vm1316, %v3119, %v3120
      %v3122 = vrot.slane %v3120, 4
      %v3123 = vrot.slane %v3052, 5
      %v3124 = vsel %vm1316, %v3122, %v3123
      %v3125 = vrot.slane %v3053, 5
      %v3126 = vrot.slane %v3125, 4
      %v3127 = vrot.slane %v3054, 5
      %v3128 = vsel %vm1316, %v3126, %v3127
      %v3129 = vrot.slane %v3127, 4
      %v3130 = vrot.slane %v3055, 5
      %v3131 = vsel %vm1316, %v3129, %v3130
      %v3132 = vrot.slane %v3056, 5
      %v3133 = vrot.slane %v3132, 4
      %v3134 = vrot.slane %v3057, 5
      %v3135 = vsel %vm1316, %v3133, %v3134
      %v3136 = vrot.slane %v3134, 4
      %v3137 = vrot.slane %v3058, 5
      %v3138 = vsel %vm1316, %v3136, %v3137
      %v3139 = vunpack.c.l.b16 %v3086
      %v3140 = vunpack.c.l.b16 %v3089
      %v3141 = vunpack.c.l.b16 %v3093
      %v3142 = vunpack.c.l.b16 %v3096
      %v3143 = vunpack.c.l.b16 %v3100
      %v3144 = vunpack.c.l.b16 %v3103
      %v3145 = vunpack.c.l.b16 %v3107
      %v3146 = vunpack.c.l.b16 %v3110
      %v3147 = vunpack.c.l.b16 %v3114
      %v3148 = vunpack.c.l.b16 %v3117
      %v3149 = vunpack.c.l.b16 %v3121
      %v3150 = vunpack.c.l.b16 %v3124
      %v3151 = vunpack.c.l.b16 %v3128
      %v3152 = vunpack.c.l.b16 %v3131
      %v3153 = vunpack.c.l.b16 %v3135
      %v3154 = vunpack.c.l.b16 %v3138
      %v3155 = vpack.c.b16 %v3140, %v3139
      %v3156 = vpack.c.b16 %v3142, %v3141
      %v3157 = vpack.c.b16 %v3144, %v3143
      %v3158 = vpack.c.b16 %v3146, %v3145
      %v3159 = vpack.c.b16 %v3148, %v3147
      %v3160 = vpack.c.b16 %v3150, %v3149
      %v3161 = vpack.c.b16 %v3152, %v3151
      %v3162 = vpack.c.b16 %v3154, %v3153
      %3171 = vst [vmem:[#allocation3 + $0x10] sm:$0xff] %v3155
      %3172 = vst [vmem:[#allocation3 + $0x28] sm:$0xff] %v3156
      %3173 = vst [vmem:[#allocation3 + $0x40] sm:$0xff] %v3157
      %3174 = vst [vmem:[#allocation3 + $0x58] sm:$0xff] %v3158
      %3175 = vst [vmem:[#allocation3 + $0x70] sm:$0xff] %v3159
      %3176 = vst [vmem:[#allocation3 + $0x88] sm:$0xff] %v3160
      %3177 = vst [vmem:[#allocation3 + $0xa0] sm:$0xff] %v3161
      %3178 = vst [vmem:[#allocation3 + $0xb8] sm:$0xff] %v3162
      %v3179 = vld [vmem:[#allocation3] sm:$0xff]
      %v3180 = vld [vmem:[#allocation3 + $0x8] sm:$0xff]
      %v3181 = vld [vmem:[#allocation3 + $0x10] sm:$0xff]
      %v3182 = vld [vmem:[#allocation3 + $0x18] sm:$0xff]
      %v3183 = vld [vmem:[#allocation3 + $0x20] sm:$0xff]
      %v3184 = vld [vmem:[#allocation3 + $0x28] sm:$0xff]
      %v3185 = vld [vmem:[#allocation3 + $0x30] sm:$0xff]
      %v3186 = vld [vmem:[#allocation3 + $0x38] sm:$0xff]
      %v3187 = vld [vmem:[#allocation3 + $0x40] sm:$0xff]
      %v3188 = vld [vmem:[#allocation3 + $0x48] sm:$0xff]
      %v3189 = vld [vmem:[#allocation3 + $0x50] sm:$0xff]
      %v3190 = vld [vmem:[#allocation3 + $0x58] sm:$0xff]
      %v3191 = vld [vmem:[#allocation3 + $0x60] sm:$0xff]
      %v3192 = vld [vmem:[#allocation3 + $0x68] sm:$0xff]
      %v3193 = vld [vmem:[#allocation3 + $0x70] sm:$0xff]
      %v3194 = vld [vmem:[#allocation3 + $0x78] sm:$0xff]
      %v3195 = vld [vmem:[#allocation3 + $0x80] sm:$0xff]
      %v3196 = vld [vmem:[#allocation3 + $0x88] sm:$0xff]
      %v3197 = vld [vmem:[#allocation3 + $0x90] sm:$0xff]
      %v3198 = vld [vmem:[#allocation3 + $0x98] sm:$0xff]
      %v3199 = vld [vmem:[#allocation3 + $0xa0] sm:$0xff]
      %v3200 = vld [vmem:[#allocation3 + $0xa8] sm:$0xff]
      %v3201 = vld [vmem:[#allocation3 + $0xb0] sm:$0xff]
      %v3202 = vld [vmem:[#allocation3 + $0xb8] sm:$0xff]
      %s3203 = scalar_lea.vmem %s3, 384
      %v3204 = vld [vmem:[%s3203] sm:$0xf]
      %v3205 = vld [vmem:[%s3203 + $0x4] sm:$0xf]
      %v3206 = vld [vmem:[%s3203 + $0x8] sm:$0xf]
      %v3207 = vld [vmem:[%s3203 + $0xc] sm:$0xf]
      %v3208 = vld [vmem:[%s3203 + $0x10] sm:$0xf]
      %v3209 = vld [vmem:[%s3203 + $0x14] sm:$0xf]
      %v3210 = vld [vmem:[%s3203 + $0x18] sm:$0xf]
      %v3211 = vld [vmem:[%s3203 + $0x1c] sm:$0xf]
      %v3212 = vld [vmem:[%s3203 + $0x20] sm:$0xf]
      %v3213 = vld [vmem:[%s3203 + $0x24] sm:$0xf]
      %v3214 = vld [vmem:[%s3203 + $0x28] sm:$0xf]
      %v3215 = vld [vmem:[%s3203 + $0x2c] sm:$0xf]
      %v3216 = vld [vmem:[%s3203 + $0x30] sm:$0xf]
      %v3217 = vld [vmem:[%s3203 + $0x34] sm:$0xf]
      %v3218 = vld [vmem:[%s3203 + $0x38] sm:$0xf]
      %v3219 = vld [vmem:[%s3203 + $0x3c] sm:$0xf]
      %v3220 = vld [vmem:[%s3203 + $0x40] sm:$0xf]
      %v3221 = vld [vmem:[%s3203 + $0x44] sm:$0xf]
      %v3222 = vld [vmem:[%s3203 + $0x48] sm:$0xf]
      %v3223 = vld [vmem:[%s3203 + $0x4c] sm:$0xf]
      %v3224 = vld [vmem:[%s3203 + $0x50] sm:$0xf]
      %v3225 = vld [vmem:[%s3203 + $0x54] sm:$0xf]
      %v3226 = vld [vmem:[%s3203 + $0x58] sm:$0xf]
      %v3227 = vld [vmem:[%s3203 + $0x5c] sm:$0xf]
      %v3228 = vld [vmem:[%s3203 + $0x60] sm:$0xf]
      %v3229 = vld [vmem:[%s3203 + $0x64] sm:$0xf]
      %v3230 = vld [vmem:[%s3203 + $0x68] sm:$0xf]
      %v3231 = vld [vmem:[%s3203 + $0x6c] sm:$0xf]
      %v3232 = vld [vmem:[%s3203 + $0x70] sm:$0xf]
      %v3233 = vld [vmem:[%s3203 + $0x74] sm:$0xf]
      %v3234 = vld [vmem:[%s3203 + $0x78] sm:$0xf]
      %v3235 = vld [vmem:[%s3203 + $0x7c] sm:$0xf]
      %v3236 = vld [vmem:[%s3203 + $0x80] sm:$0xf]
      %v3237 = vld [vmem:[%s3203 + $0x84] sm:$0xf]
      %v3238 = vld [vmem:[%s3203 + $0x88] sm:$0xf]
      %v3239 = vld [vmem:[%s3203 + $0x8c] sm:$0xf]
      %v3240 = vld [vmem:[%s3203 + $0x90] sm:$0xf]
      %v3241 = vld [vmem:[%s3203 + $0x94] sm:$0xf]
      %v3242 = vld [vmem:[%s3203 + $0x98] sm:$0xf]
      %v3243 = vld [vmem:[%s3203 + $0x9c] sm:$0xf]
      %v3244 = vld [vmem:[%s3203 + $0xa0] sm:$0xf]
      %v3245 = vld [vmem:[%s3203 + $0xa4] sm:$0xf]
      %v3246 = vld [vmem:[%s3203 + $0xa8] sm:$0xf]
      %v3247 = vld [vmem:[%s3203 + $0xac] sm:$0xf]
      %v3248 = vld [vmem:[%s3203 + $0xb0] sm:$0xf]
      %v3249 = vld [vmem:[%s3203 + $0xb4] sm:$0xf]
      %v3250 = vld [vmem:[%s3203 + $0xb8] sm:$0xf]
      %v3251 = vld [vmem:[%s3203 + $0xbc] sm:$0xf]
      %v3300 = vunpack.c.l.b16 %v3204
      %v3301 = vunpack.c.l.b16 %v3205
      %v3302 = vunpack.c.l.b16 %v3206
      %v3303 = vunpack.c.l.b16 %v3207
      %v3304 = vunpack.c.l.b16 %v3208
      %v3305 = vunpack.c.l.b16 %v3209
      %v3306 = vunpack.c.l.b16 %v3210
      %v3307 = vunpack.c.l.b16 %v3211
      %v3308 = vunpack.c.l.b16 %v3212
      %v3309 = vunpack.c.l.b16 %v3213
      %v3310 = vunpack.c.l.b16 %v3214
      %v3311 = vunpack.c.l.b16 %v3215
      %v3312 = vunpack.c.l.b16 %v3216
      %v3313 = vunpack.c.l.b16 %v3217
      %v3314 = vunpack.c.l.b16 %v3218
      %v3315 = vunpack.c.l.b16 %v3219
      %v3316 = vunpack.c.l.b16 %v3220
      %v3317 = vunpack.c.l.b16 %v3221
      %v3318 = vunpack.c.l.b16 %v3222
      %v3319 = vunpack.c.l.b16 %v3223
      %v3320 = vunpack.c.l.b16 %v3224
      %v3321 = vunpack.c.l.b16 %v3225
      %v3322 = vunpack.c.l.b16 %v3226
      %v3323 = vunpack.c.l.b16 %v3227
      %v3324 = vunpack.c.l.b16 %v3228
      %v3325 = vunpack.c.l.b16 %v3229
      %v3326 = vunpack.c.l.b16 %v3230
      %v3327 = vunpack.c.l.b16 %v3231
      %v3328 = vunpack.c.l.b16 %v3232
      %v3329 = vunpack.c.l.b16 %v3233
      %v3330 = vunpack.c.l.b16 %v3234
      %v3331 = vunpack.c.l.b16 %v3235
      %v3332 = vunpack.c.l.b16 %v3236
      %v3333 = vunpack.c.l.b16 %v3237
      %v3334 = vunpack.c.l.b16 %v3238
      %v3335 = vunpack.c.l.b16 %v3239
      %v3336 = vunpack.c.l.b16 %v3240
      %v3337 = vunpack.c.l.b16 %v3241
      %v3338 = vunpack.c.l.b16 %v3242
      %v3339 = vunpack.c.l.b16 %v3243
      %v3340 = vunpack.c.l.b16 %v3244
      %v3341 = vunpack.c.l.b16 %v3245
      %v3342 = vunpack.c.l.b16 %v3246
      %v3343 = vunpack.c.l.b16 %v3247
      %v3344 = vunpack.c.l.b16 %v3248
      %v3345 = vunpack.c.l.b16 %v3249
      %v3346 = vunpack.c.l.b16 %v3250
      %v3347 = vunpack.c.l.b16 %v3251
      %v3348 = vpack.c.b16 %v3301, %v3300
      %v3349 = vpack.c.b16 %v3303, %v3302
      %v3350 = vpack.c.b16 %v3305, %v3304
      %v3351 = vpack.c.b16 %v3307, %v3306
      %v3352 = vpack.c.b16 %v3309, %v3308
      %v3353 = vpack.c.b16 %v3311, %v3310
      %v3354 = vpack.c.b16 %v3313, %v3312
      %v3355 = vpack.c.b16 %v3315, %v3314
      %v3356 = vpack.c.b16 %v3317, %v3316
      %v3357 = vpack.c.b16 %v3319, %v3318
      %v3358 = vpack.c.b16 %v3321, %v3320
      %v3359 = vpack.c.b16 %v3323, %v3322
      %v3360 = vpack.c.b16 %v3325, %v3324
      %v3361 = vpack.c.b16 %v3327, %v3326
      %v3362 = vpack.c.b16 %v3329, %v3328
      %v3363 = vpack.c.b16 %v3331, %v3330
      %v3364 = vpack.c.b16 %v3333, %v3332
      %v3365 = vpack.c.b16 %v3335, %v3334
      %v3366 = vpack.c.b16 %v3337, %v3336
      %v3367 = vpack.c.b16 %v3339, %v3338
      %v3368 = vpack.c.b16 %v3341, %v3340
      %v3369 = vpack.c.b16 %v3343, %v3342
      %v3370 = vpack.c.b16 %v3345, %v3344
      %v3371 = vpack.c.b16 %v3347, %v3346
      %3396 = vmatprep.subr.bf16.mxu0 0
      %3397 = vmatpush1.bf16.msra.mxu0 %v3348
      %3398 = vmatprep.subr.bf16.mxu0 0
      %3399 = vmatpush1.bf16.msra.mxu0 %v3349
      %3400 = vmatprep.subr.bf16.mxu0 0
      %3401 = vmatpush1.bf16.msra.mxu0 %v3350
      %3402 = vmatprep.subr.bf16.mxu0 0
      %3403 = vmatpush1.bf16.msra.mxu0 %v3351
      %3404 = vmatprep.subr.bf16.mxu0 0
      %3405 = vmatpush1.bf16.msra.mxu0 %v3352
      %3406 = vmatprep.subr.bf16.mxu0 0
      %3407 = vmatpush1.bf16.msra.mxu0 %v3353
      %3408 = vmatprep.subr.bf16.mxu0 0
      %3409 = vmatpush1.bf16.msra.mxu0 %v3354
      %3410 = vmatprep.subr.bf16.mxu0 0
      %3411 = vmatpush1.bf16.msra.mxu0 %v3355
      %3412 = vmatprep.subr.bf16.mxu0 0
      %3413 = vmatpush1.bf16.msra.mxu0 %v3356
      %3414 = vmatprep.subr.bf16.mxu0 0
      %3415 = vmatpush1.bf16.msra.mxu0 %v3357
      %3416 = vmatprep.subr.bf16.mxu0 0
      %3417 = vmatpush1.bf16.msra.mxu0 %v3358
      %3418 = vmatprep.subr.bf16.mxu0 0
      %3419 = vmatpush1.bf16.msra.mxu0 %v3359
      %3420 = vmatprep.subr.bf16.mxu0 0
      %3421 = vmatpush1.bf16.msra.mxu0 %v3360
      %3422 = vmatprep.subr.bf16.mxu0 0
      %3423 = vmatpush1.bf16.msra.mxu0 %v3361
      %3424 = vmatprep.subr.bf16.mxu0 0
      %3425 = vmatpush1.bf16.msra.mxu0 %v3362
      %3426 = vmatprep.subr.bf16.mxu0 0
      %3427 = vmatpush1.bf16.msra.mxu0 %v3363
      %3428 = vmatprep.mubr.bf16.mxu0 %v3180
      %3429 = vmatmul.mubr.bf16.gmra.mrb[0].mxu0 %v3179
      %v3430 = vpop.f32.mrb[0].mxu0
      %v3431 = vadd.f32 0.0, %v3430
      %v3432 = vpop.f32.mrb[0].mxu0
      %v3433 = vpop.f32.mrb[0].mxu0
      %v3434 = vadd.f32 0.0, %v3433
      %v3435 = vpop.f32.mrb[0].mxu0
      %3436 = vmatprep.mubr.bf16.mxu0 %v3183
      %3437 = vmatmul.mubr.bf16.gmra.mrb[0].mxu0 %v3182
      %v3438 = vpop.f32.mrb[0].mxu0
      %v3439 = vadd.f32 0.0, %v3438
      %v3440 = vpop.f32.mrb[0].mxu0
      %v3441 = vpop.f32.mrb[0].mxu0
      %v3442 = vadd.f32 0.0, %v3441
      %v3443 = vpop.f32.mrb[0].mxu0
      %3444 = vmatprep.mubr.bf16.mxu0 %v3186
      %3445 = vmatmul.mubr.bf16.gmra.mrb[0].mxu0 %v3185
      %v3446 = vpop.f32.mrb[0].mxu0
      %v3447 = vadd.f32 0.0, %v3446
      %v3448 = vpop.f32.mrb[0].mxu0
      %v3449 = vpop.f32.mrb[0].mxu0
      %v3450 = vadd.f32 0.0, %v3449
      %v3451 = vpop.f32.mrb[0].mxu0
      %3452 = vmatprep.mubr.bf16.mxu0 %v3189
      %3453 = vmatmul.mubr.bf16.gmra.mrb[0].mxu0 %v3188
      %v3454 = vpop.f32.mrb[0].mxu0
      %v3455 = vadd.f32 0.0, %v3454
      %v3456 = vpop.f32.mrb[0].mxu0
      %v3457 = vpop.f32.mrb[0].mxu0
      %v3458 = vadd.f32 0.0, %v3457
      %v3459 = vpop.f32.mrb[0].mxu0
      %3460 = vmatprep.mubr.bf16.mxu0 %v3192
      %3461 = vmatmul.mubr.bf16.gmra.mrb[0].mxu0 %v3191
      %v3462 = vpop.f32.mrb[0].mxu0
      %v3463 = vadd.f32 0.0, %v3462
      %v3464 = vpop.f32.mrb[0].mxu0
      %v3465 = vpop.f32.mrb[0].mxu0
      %v3466 = vadd.f32 0.0, %v3465
      %v3467 = vpop.f32.mrb[0].mxu0
      %3468 = vmatprep.mubr.bf16.mxu0 %v3195
      %3469 = vmatmul.mubr.bf16.gmra.mrb[0].mxu0 %v3194
      %v3470 = vpop.f32.mrb[0].mxu0
      %v3471 = vadd.f32 0.0, %v3470
      %v3472 = vpop.f32.mrb[0].mxu0
      %v3473 = vpop.f32.mrb[0].mxu0
      %v3474 = vadd.f32 0.0, %v3473
      %v3475 = vpop.f32.mrb[0].mxu0
      %3476 = vmatprep.mubr.bf16.mxu0 %v3198
      %3477 = vmatmul.mubr.bf16.gmra.mrb[0].mxu0 %v3197
      %v3478 = vpop.f32.mrb[0].mxu0
      %v3479 = vadd.f32 0.0, %v3478
      %v3480 = vpop.f32.mrb[0].mxu0
      %v3481 = vpop.f32.mrb[0].mxu0
      %v3482 = vadd.f32 0.0, %v3481
      %v3483 = vpop.f32.mrb[0].mxu0
      %3484 = vmatprep.mubr.bf16.mxu0 %v3201
      %3485 = vmatmul.mubr.bf16.gmra.mrb[0].mxu0 %v3200
      %v3486 = vpop.f32.mrb[0].mxu0
      %v3487 = vadd.f32 0.0, %v3486
      %v3488 = vpop.f32.mrb[0].mxu0
      %v3489 = vpop.f32.mrb[0].mxu0
      %v3490 = vadd.f32 0.0, %v3489
      %v3491 = vpop.f32.mrb[0].mxu0
      %3492 = vdwg.mxu0
      %3493 = vmatprep.subr.bf16.mxu0 0
      %3494 = vmatpush1.bf16.msra.mxu0 %v3364
      %3495 = vmatprep.subr.bf16.mxu0 0
      %3496 = vmatpush1.bf16.msra.mxu0 %v3365
      %3497 = vmatprep.subr.bf16.mxu0 0
      %3498 = vmatpush1.bf16.msra.mxu0 %v3366
      %3499 = vmatprep.subr.bf16.mxu0 0
      %3500 = vmatpush1.bf16.msra.mxu0 %v3367
      %3501 = vmatprep.subr.bf16.mxu0 0
      %3502 = vmatpush1.bf16.msra.mxu0 %v3368
      %3503 = vmatprep.subr.bf16.mxu0 0
      %3504 = vmatpush1.bf16.msra.mxu0 %v3369
      %3505 = vmatprep.subr.bf16.mxu0 0
      %3506 = vmatpush1.bf16.msra.mxu0 %v3370
      %3507 = vmatprep.subr.bf16.mxu0 0
      %3508 = vmatpush1.bf16.msra.mxu0 %v3371
      %3509 = vmatprep.subr.bf16.mxu0 0
      %3510 = vmatpush1.bf16.msra.mxu0 0
      %3511 = vmatprep.subr.bf16.mxu0 0
      %3512 = vmatpush1.bf16.msra.mxu0 0
      %3513 = vmatprep.subr.bf16.mxu0 0
      %3514 = vmatpush1.bf16.msra.mxu0 0
      %3515 = vmatprep.subr.bf16.mxu0 0
      %3516 = vmatpush1.bf16.msra.mxu0 0
      %3517 = vmatprep.subr.bf16.mxu0 0
      %3518 = vmatpush1.bf16.msra.mxu0 0
      %3519 = vmatprep.subr.bf16.mxu0 0
      %3520 = vmatpush1.bf16.msra.mxu0 0
      %3521 = vmatprep.subr.bf16.mxu0 0
      %3522 = vmatpush1.bf16.msra.mxu0 0
      %3523 = vmatprep.subr.bf16.mxu0 0
      %3524 = vmatpush1.bf16.msra.mxu0 0
      %3525 = vmatprep.mubr.bf16.mxu0 0
      %3526 = vmatmul.mubr.bf16.gmra.mrb[0].mxu0 %v3181
      %v3527 = vpop.f32.mrb[0].mxu0
      %v3528 = vadd.f32 %v3431, %v3527
      %v3529 = vpop.f32.mrb[0].mxu0
      %v3530 = vpop.f32.mrb[0].mxu0
      %v3531 = vadd.f32 %v3434, %v3530
      %v3532 = vpop.f32.mrb[0].mxu0
      %3533 = vmatprep.mubr.bf16.mxu0 0
      %3534 = vmatmul.mubr.bf16.gmra.mrb[0].mxu0 %v3184
      %v3535 = vpop.f32.mrb[0].mxu0
      %v3536 = vadd.f32 %v3439, %v3535
      %v3537 = vpop.f32.mrb[0].mxu0
      %v3538 = vpop.f32.mrb[0].mxu0
      %v3539 = vadd.f32 %v3442, %v3538
      %v3540 = vpop.f32.mrb[0].mxu0
      %3541 = vmatprep.mubr.bf16.mxu0 0
      %3542 = vmatmul.mubr.bf16.gmra.mrb[0].mxu0 %v3187
      %v3543 = vpop.f32.mrb[0].mxu0
      %v3544 = vadd.f32 %v3447, %v3543
      %v3545 = vpop.f32.mrb[0].mxu0
      %v3546 = vpop.f32.mrb[0].mxu0
      %v3547 = vadd.f32 %v3450, %v3546
      %v3548 = vpop.f32.mrb[0].mxu0
      %3549 = vmatprep.mubr.bf16.mxu0 0
      %3550 = vmatmul.mubr.bf16.gmra.mrb[0].mxu0 %v3190
      %v3551 = vpop.f32.mrb[0].mxu0
      %v3552 = vadd.f32 %v3455, %v3551
      %v3553 = vpop.f32.mrb[0].mxu0
      %v3554 = vpop.f32.mrb[0].mxu0
      %v3555 = vadd.f32 %v3458, %v3554
      %v3556 = vpop.f32.mrb[0].mxu0
      %3557 = vmatprep.mubr.bf16.mxu0 0
      %3558 = vmatmul.mubr.bf16.gmra.mrb[0].mxu0 %v3193
      %v3559 = vpop.f32.mrb[0].mxu0
      %v3560 = vadd.f32 %v3463, %v3559
      %v3561 = vpop.f32.mrb[0].mxu0
      %v3562 = vpop.f32.mrb[0].mxu0
      %v3563 = vadd.f32 %v3466, %v3562
      %v3564 = vpop.f32.mrb[0].mxu0
      %3565 = vmatprep.mubr.bf16.mxu0 0
      %3566 = vmatmul.mubr.bf16.gmra.mrb[0].mxu0 %v3196
      %v3567 = vpop.f32.mrb[0].mxu0
      %v3568 = vadd.f32 %v3471, %v3567
      %v3569 = vpop.f32.mrb[0].mxu0
      %v3570 = vpop.f32.mrb[0].mxu0
      %v3571 = vadd.f32 %v3474, %v3570
      %v3572 = vpop.f32.mrb[0].mxu0
      %3573 = vmatprep.mubr.bf16.mxu0 0
      %3574 = vmatmul.mubr.bf16.gmra.mrb[0].mxu0 %v3199
      %v3575 = vpop.f32.mrb[0].mxu0
      %v3576 = vadd.f32 %v3479, %v3575
      %v3577 = vpop.f32.mrb[0].mxu0
      %v3578 = vpop.f32.mrb[0].mxu0
      %v3579 = vadd.f32 %v3482, %v3578
      %v3580 = vpop.f32.mrb[0].mxu0
      %3581 = vmatprep.mubr.bf16.mxu0 0
      %3582 = vmatmul.mubr.bf16.gmra.mrb[0].mxu0 %v3202
      %v3583 = vpop.f32.mrb[0].mxu0
      %v3584 = vadd.f32 %v3487, %v3583
      %v3585 = vpop.f32.mrb[0].mxu0
      %v3586 = vpop.f32.mrb[0].mxu0
      %v3587 = vadd.f32 %v3490, %v3586
      %v3588 = vpop.f32.mrb[0].mxu0
      %3589 = vdwg.mxu0
      %v3590 = vadd.f32 %v2644, %v3528
      %v3591 = vadd.f32 %v2647, %v3531
      %v3592 = vadd.f32 %v2652, %v3536
      %v3593 = vadd.f32 %v2655, %v3539
      %v3594 = vadd.f32 %v2660, %v3544
      %v3595 = vadd.f32 %v2663, %v3547
      %v3596 = vadd.f32 %v2668, %v3552
      %v3597 = vadd.f32 %v2671, %v3555
      %v3598 = vadd.f32 %v2676, %v3560
      %v3599 = vadd.f32 %v2679, %v3563
      %v3600 = vadd.f32 %v2684, %v3568
      %v3601 = vadd.f32 %v2687, %v3571
      %v3602 = vadd.f32 %v2692, %v3576
      %v3603 = vadd.f32 %v2695, %v3579
      %v3604 = vadd.f32 %v2700, %v3584
      %v3605 = vadd.f32 %v2703, %v3587
      %v3606 = vld [vmem:[%s4] sm:$0x1]
      %v3608 = vlaneseq
      %v3609 = vshrl.u32 %v3608, 7
      %v3610 = vsub.s32 0, %v3609
      %v3611 = vrot.slane %v3606, %v3610
      %v3613 = vadd.f32 %v3590, %v3611
      %v3614 = vadd.f32 %v3591, %v3611
      %v3615 = vadd.f32 %v3592, %v3611
      %v3616 = vadd.f32 %v3593, %v3611
      %v3617 = vadd.f32 %v3594, %v3611
      %v3618 = vadd.f32 %v3595, %v3611
      %v3619 = vadd.f32 %v3596, %v3611
      %v3620 = vadd.f32 %v3597, %v3611
      %v3621 = vadd.f32 %v3598, %v3611
      %v3622 = vadd.f32 %v3599, %v3611
      %v3623 = vadd.f32 %v3600, %v3611
      %v3624 = vadd.f32 %v3601, %v3611
      %v3625 = vadd.f32 %v3602, %v3611
      %v3626 = vadd.f32 %v3603, %v3611
      %v3627 = vadd.f32 %v3604, %v3611
      %v3628 = vadd.f32 %v3605, %v3611
      %v3629 = vadd.f32 %v3613, %v3614
      %v3630 = vadd.f32 %v3629, %v3615
      %v3631 = vadd.f32 %v3630, %v3616
      %v3632 = vadd.f32 %v3631, %v3617
      %v3633 = vadd.f32 %v3632, %v3618
      %v3634 = vadd.f32 %v3633, %v3619
      %v3635 = vadd.f32 %v3634, %v3620
      %v3636 = vadd.f32 %v3635, %v3621
      %v3637 = vadd.f32 %v3636, %v3622
      %v3638 = vadd.f32 %v3637, %v3623
      %v3639 = vadd.f32 %v3638, %v3624
      %v3640 = vadd.f32 %v3639, %v3625
      %v3641 = vadd.f32 %v3640, %v3626
      %v3642 = vadd.f32 %v3641, %v3627
      %v3643 = vadd.f32 %v3642, %v3628
      %v3644 = vrot.slane %v3643, 4
      %v3645 = vadd.f32 %v3643, %v3644
      %v3646 = vrot.slane %v3645, 2
      %v3647 = vadd.f32 %v3645, %v3646
      %v3648 = vrot.slane %v3647, 1
      %v3649 = vadd.f32 %v3647, %v3648
      %3650 = vst [vmem:[%s474] sm:$0x1] %v3649
      %v3651 = vmul.f32 %v3613, %v3613
      %v3652 = vmul.f32 %v3614, %v3614
      %v3653 = vmul.f32 %v3615, %v3615
      %v3654 = vmul.f32 %v3616, %v3616
      %v3655 = vmul.f32 %v3617, %v3617
      %v3656 = vmul.f32 %v3618, %v3618
      %v3657 = vmul.f32 %v3619, %v3619
      %v3658 = vmul.f32 %v3620, %v3620
      %v3659 = vmul.f32 %v3621, %v3621
      %v3660 = vmul.f32 %v3622, %v3622
      %v3661 = vmul.f32 %v3623, %v3623
      %v3662 = vmul.f32 %v3624, %v3624
      %v3663 = vmul.f32 %v3625, %v3625
      %v3664 = vmul.f32 %v3626, %v3626
      %v3665 = vmul.f32 %v3627, %v3627
      %v3666 = vmul.f32 %v3628, %v3628
      %v3667 = vadd.f32 %v3651, %v3652
      %v3668 = vadd.f32 %v3667, %v3653
      %v3669 = vadd.f32 %v3668, %v3654
      %v3670 = vadd.f32 %v3669, %v3655
      %v3671 = vadd.f32 %v3670, %v3656
      %v3672 = vadd.f32 %v3671, %v3657
      %v3673 = vadd.f32 %v3672, %v3658
      %v3674 = vadd.f32 %v3673, %v3659
      %v3675 = vadd.f32 %v3674, %v3660
      %v3676 = vadd.f32 %v3675, %v3661
      %v3677 = vadd.f32 %v3676, %v3662
      %v3678 = vadd.f32 %v3677, %v3663
      %v3679 = vadd.f32 %v3678, %v3664
      %v3680 = vadd.f32 %v3679, %v3665
      %v3681 = vadd.f32 %v3680, %v3666
      %v3682 = vrot.slane %v3681, 4
      %v3683 = vadd.f32 %v3681, %v3682
      %v3684 = vrot.slane %v3683, 2
      %v3685 = vadd.f32 %v3683, %v3684
      %v3686 = vrot.slane %v3685, 1
      %v3687 = vadd.f32 %v3685, %v3686
      %3688 = vst [vmem:[%s481] sm:$0x1] %v3687
      %v3689 = vpack.c.bf16 %v3614, %v3613
      %v3690 = vpack.c.bf16 %v3616, %v3615
      %v3691 = vpack.c.bf16 %v3618, %v3617
      %v3692 = vpack.c.bf16 %v3620, %v3619
      %v3693 = vpack.c.bf16 %v3622, %v3621
      %v3694 = vpack.c.bf16 %v3624, %v3623
      %v3695 = vpack.c.bf16 %v3626, %v3625
      %v3696 = vpack.c.bf16 %v3628, %v3627
      %v3705 = vunpack.c.l.b16 %v3689
      %v3706 = vunpack.c.h.b16 %v3689
      %v3707 = vunpack.c.l.b16 %v3690
      %v3708 = vunpack.c.h.b16 %v3690
      %v3709 = vunpack.c.l.b16 %v3691
      %v3710 = vunpack.c.h.b16 %v3691
      %v3711 = vunpack.c.l.b16 %v3692
      %v3712 = vunpack.c.h.b16 %v3692
      %v3713 = vunpack.c.l.b16 %v3693
      %v3714 = vunpack.c.h.b16 %v3693
      %v3715 = vunpack.c.l.b16 %v3694
      %v3716 = vunpack.c.h.b16 %v3694
      %v3717 = vunpack.c.l.b16 %v3695
      %v3718 = vunpack.c.h.b16 %v3695
      %v3719 = vunpack.c.l.b16 %v3696
      %v3720 = vunpack.c.h.b16 %v3696
      %v3721 = vpack.c.b16 %v3705, %v3705
      %v3722 = vpack.c.b16 %v3706, %v3706
      %v3723 = vpack.c.b16 %v3707, %v3707
      %v3724 = vpack.c.b16 %v3708, %v3708
      %v3725 = vpack.c.b16 %v3709, %v3709
      %v3726 = vpack.c.b16 %v3710, %v3710
      %v3727 = vpack.c.b16 %v3711, %v3711
      %v3728 = vpack.c.b16 %v3712, %v3712
      %v3729 = vpack.c.b16 %v3713, %v3713
      %v3730 = vpack.c.b16 %v3714, %v3714
      %v3731 = vpack.c.b16 %v3715, %v3715
      %v3732 = vpack.c.b16 %v3716, %v3716
      %v3733 = vpack.c.b16 %v3717, %v3717
      %v3734 = vpack.c.b16 %v3718, %v3718
      %v3735 = vpack.c.b16 %v3719, %v3719
      %v3736 = vpack.c.b16 %v3720, %v3720
      %3753 = vst [vmem:[%s466] sm:$0xf] %v3721
      %3754 = vst [vmem:[%s466 + $0x4] sm:$0xf] %v3722
      %3755 = vst [vmem:[%s466 + $0x8] sm:$0xf] %v3723
      %3756 = vst [vmem:[%s466 + $0xc] sm:$0xf] %v3724
      %3757 = vst [vmem:[%s466 + $0x10] sm:$0xf] %v3725
      %3758 = vst [vmem:[%s466 + $0x14] sm:$0xf] %v3726
      %3759 = vst [vmem:[%s466 + $0x18] sm:$0xf] %v3727
      %3760 = vst [vmem:[%s466 + $0x1c] sm:$0xf] %v3728
      %3761 = vst [vmem:[%s466 + $0x20] sm:$0xf] %v3729
      %3762 = vst [vmem:[%s466 + $0x24] sm:$0xf] %v3730
      %3763 = vst [vmem:[%s466 + $0x28] sm:$0xf] %v3731
      %3764 = vst [vmem:[%s466 + $0x2c] sm:$0xf] %v3732
      %3765 = vst [vmem:[%s466 + $0x30] sm:$0xf] %v3733
      %3766 = vst [vmem:[%s466 + $0x34] sm:$0xf] %v3734
      %3767 = vst [vmem:[%s466 + $0x38] sm:$0xf] %v3735
      %3768 = vst [vmem:[%s466 + $0x3c] sm:$0xf] %v3736
      %s3769 = smul.u32 8, %s26
      %p3770 = scmp.lt.s32.totalorder %s25, 1
      %s3771 = scalar_select %p3770, %s25, 1
      %p3772 = scmp.lt.s32.totalorder %s3769, 15
      %s3773 = scalar_select %p3772, %s3769, 15
      %s3774 = smul.addr %s3773, 2
      %s3775 = smul.addr %s3771, 32
      %s3776 = sadd.s32 %s3774, %s3775
      %s3777 = smul.addr %s3776, 4
      %s3778 = scalar_lea.vmem %s7, %s3777
      %p3779 = scmp.lt.s32.totalorder %s25, 1
      %s3780 = scalar_select %p3779, %s25, 1
      %p3781 = scmp.lt.s32.totalorder %s26, 1
      %s3782 = scalar_select %p3781, %s26, 1
      %s3783 = smul.addr %s3780, 2
      %s3784 = sadd.s32 %s3782, %s3783
      %s3785 = scalar_lea.vmem %s8, %s3784
      %p3786 = scmp.lt.s32.totalorder %s25, 1
      %s3787 = scalar_select %p3786, %s25, 1
      %p3788 = scmp.lt.s32.totalorder %s26, 1
      %s3789 = scalar_select %p3788, %s26, 1
      %s3790 = smul.addr %s3787, 2
      %s3791 = sadd.s32 %s3789, %s3790
      %s3792 = scalar_lea.vmem %s9, %s3791
      // Predicated region
      $region65: #{two_conv_block.3} parent=47 // pred_check
        %p3793 = pneg %p221
      $region66: #{two_conv_block.3} parent=47 // pred_check_branch
        %3795 = sbr.rel (%p3793) target = $region68
      $region67: #{two_conv_block.3} parent=47 // pred_region
        %s3796 = smul.u32 8, %s26
      $region68: #{two_conv_block.3} parent=47 // pred_fallthru
        _
      // Predicated region
      $region69: #{two_conv_block.3} parent=47 // pred_check
        %p3797 = pneg %p249
      $region70: #{two_conv_block.3} parent=47 // pred_check_branch
        %3799 = sbr.rel (%p3797) target = $region72
      $region71: #{two_conv_block.3} parent=47 // pred_region
        _
      $region72: #{two_conv_block.3} parent=47 // pred_fallthru
        _
      // Predicated region
      $region73: #{two_conv_block.3} parent=47 // pred_check
        %p3800 = pneg %p277
      $region74: #{two_conv_block.3} parent=47 // pred_check_branch
        %3802 = sbr.rel (%p3800) target = $region76
      $region75: #{two_conv_block.3} parent=47 // pred_region
        _
      $region76: #{two_conv_block.3} parent=47 // pred_fallthru
        _
    $region48: #{two_conv_block.3} parent=5 // pred_fallthru
      _
    %p3803 = scmp.le.s32.totalorder 2, %s16
    // Predicated region
    $region77: #{two_conv_block.3} parent=5 // pred_check
      %p3804 = pneg %p3803
    $region78: #{two_conv_block.3} parent=5 // pred_check_branch
      %3806 = sbr.rel (%p3804) target = $region80
    $region79: #{two_conv_block.3} parent=5 // pred_region
      %s3807 = ssub.s32 %s16, 2
      // Predicated region
      $region81: #{two_conv_block.3} parent=79 // pred_check
        %p3808 = pneg %p227
      $region82: #{two_conv_block.3} parent=79 // pred_check_branch
        %3810 = sbr.rel (%p3808) target = $region84
      $region83: #{two_conv_block.3} parent=79 // pred_region
        %s3811 = smul.u32 8, %s28
        %p3812 = scmp.lt.s32.totalorder %s27, 1
        %s3813 = scalar_select %p3812, %s27, 1
        %p3814 = scmp.lt.s32.totalorder %s3811, 15
        %s3815 = scalar_select %p3814, %s3811, 15
        %s3816 = smul.addr %s3815, 2
        %s3817 = smul.addr %s3813, 32
        %s3818 = sadd.s32 %s3816, %s3817
        %s3819 = smul.addr %s3818, 4
        %s3820 = scalar_lea.vmem %s7, %s3819
      $region84: #{two_conv_block.3} parent=79 // pred_fallthru
        _
      // Predicated region
      $region85: #{two_conv_block.3} parent=79 // pred_check
        %p3821 = pneg %p255
      $region86: #{two_conv_block.3} parent=79 // pred_check_branch
        %3823 = sbr.rel (%p3821) target = $region88
      $region87: #{two_conv_block.3} parent=79 // pred_region
        %p3824 = scmp.lt.s32.totalorder %s27, 1
        %s3825 = scalar_select %p3824, %s27, 1
        %p3826 = scmp.lt.s32.totalorder %s28, 1
        %s3827 = scalar_select %p3826, %s28, 1
        %s3828 = smul.addr %s3825, 2
        %s3829 = sadd.s32 %s3827, %s3828
        %s3830 = scalar_lea.vmem %s8, %s3829
      $region88: #{two_conv_block.3} parent=79 // pred_fallthru
        _
      // Predicated region
      $region89: #{two_conv_block.3} parent=79 // pred_check
        %p3831 = pneg %p283
      $region90: #{two_conv_block.3} parent=79 // pred_check_branch
        %3833 = sbr.rel (%p3831) target = $region92
      $region91: #{two_conv_block.3} parent=79 // pred_region
        %p3834 = scmp.lt.s32.totalorder %s27, 1
        %s3835 = scalar_select %p3834, %s27, 1
        %p3836 = scmp.lt.s32.totalorder %s28, 1
        %s3837 = scalar_select %p3836, %s28, 1
        %s3838 = smul.addr %s3835, 2
        %s3839 = sadd.s32 %s3837, %s3838
        %s3840 = scalar_lea.vmem %s9, %s3839
      $region92: #{two_conv_block.3} parent=79 // pred_fallthru
        _
    $region80: #{two_conv_block.3} parent=5 // pred_fallthru
      _
  $region6: #{two_conv_block.3} parent=0 // loop_footer
    %s20 = sadd.s32 1, %s16
  $region7: #{two_conv_block.3} parent=0 // loop_footer_branch
    %15 = sbr.rel target = $region3
  $region8: #{two_conv_block.3} parent=0 // loop_exit
    _

// kernel: two_conv_block.4
$region0: #{two_conv_block.4}
  #allocation0 [shape = 'u32[]', space=smem, size = 0x4, offset = 0x4, fixed_abs, tag = 'smem constant byte address 0x4 - core index']
  #allocation1 [shape = 'u32[144,128]{1,0:T(1,128)}', space=vmem, size = 0x12000, scoped, tag = 'internal scratch']
  #allocation2 [shape = 'bf16[10,18,128]{2,1,0:T(8,128)(2,1)}', space=vmem, size = 0xf000, scoped, tag = 'scratch operand']
  #allocation3 [shape = 'bf16[128,384]{1,0:T(16,128)(2,1)}', space=vmem, size = 0x18000, scoped, tag = 'scratch operand']
  %s0 = inlined_call_operand.vmem [shape: bf16[2,16,16,128], index: 0, kind: input, shape index: {}]
  %s1 = inlined_call_operand.vmem [shape: bf16[2,2,16,128], index: 1, kind: input, shape index: {}]
  %s2 = inlined_call_operand.vmem [shape: bf16[2,2,16,128], index: 2, kind: input, shape index: {}]
  %s3 = inlined_call_operand.vmem [shape: bf16[3,384,128], index: 3, kind: input, shape index: {}]
  %s4 = inlined_call_operand.vmem [shape: f32[1,128], index: 4, kind: input, shape index: {}]
  %s5 = inlined_call_operand.vmem [shape: f32[1,128], index: 5, kind: input, shape index: {}]
  %s6 = inlined_call_operand.vmem [shape: f32[1,128], index: 6, kind: input, shape index: {}]
  %s7 = inlined_call_operand.vmem [shape: bf16[2,16,16,128], index: 7, kind: output, shape index: {0}]
  %s8 = inlined_call_operand.vmem [shape: f32[2,2,1,128], index: 8, kind: output, shape index: {1}]
  %s9 = inlined_call_operand.vmem [shape: f32[2,2,1,128], index: 9, kind: output, shape index: {2}]
  %10 = xla_tuple %s7, %s8, %s9
  %s11 = sld [smem:[#allocation0]]
  $region93: #{two_conv_block.4} parent=0
    _
  %s13 = ssub.s32 1, %s11
  %s14 = scalar_select 0, %s13, %s11
  loop: start=0, step=1, limit=6
  $region2: #{two_conv_block.4} parent=0 // loop_pre_header
    _
  $region3: #{two_conv_block.4} parent=0 // loop_header
    %s16 = sphi 0, %s20
    %p17 = scmp.ge.s32.totalorder %s16, 6
    %s23 = sphi 0, %s35
    %s24 = sphi 0, %s31
    %s25 = sphi 0, %s23
    %s26 = sphi 0, %s24
    %s27 = sphi 0, %s25
    %s28 = sphi 0, %s26
    %s40 = sphi 0, %s42
    %s43 = sphi 0, %s40
    %s44 = sphi 0, %s43
    %s60 = sphi 0, %s44
    %s68 = sphi 0, %s70
    %s71 = sphi 0, %s68
    %s72 = sphi 0, %s71
    %s88 = sphi 0, %s72
    %s96 = sphi 0, %s98
    %s99 = sphi 0, %s96
    %s100 = sphi 0, %s99
    %s116 = sphi 0, %s100
    %s120 = sphi 0, %s120
    %s122 = sphi 0, %s120
    %s123 = sphi 0, %s122
    %s137 = sphi 0, %s123
    %s141 = sphi 0, %s141
    %s143 = sphi 0, %s141
    %s144 = sphi 0, %s143
    %s158 = sphi 0, %s144
    %s162 = sphi 0, %s162
    %s164 = sphi 0, %s162
    %s165 = sphi 0, %s164
    %s179 = sphi 0, %s165
    %s183 = sphi 0, %s183
    %s185 = sphi 0, %s183
    %s186 = sphi 0, %s185
    %s200 = sphi 0, %s186
    %s208 = sphi 0, %s210
    %s211 = sphi 0, %s208
    %s212 = sphi 0, %s211
    %s228 = sphi 0, %s212
    %s236 = sphi 0, %s238
    %s239 = sphi 0, %s236
    %s240 = sphi 0, %s239
    %s256 = sphi 0, %s240
    %s264 = sphi 0, %s266
    %s267 = sphi 0, %s264
    %s268 = sphi 0, %s267
    %s284 = sphi 0, %s268
  $region4: #{two_conv_block.4} parent=0 // loop_header_branch
    %19 = sbr.rel (%p17) target = $region8
  $region5: #{two_conv_block.4} parent=0 // loop_body
    %s21 = ssub.s32 %s16, 1
    %s22 = ssub.s32 %s16, 2
    %s29 = sadd.s32 1, %s24
    %p30 = scmp.ge.s32.totalorder %s29, 2
    %s31 = scalar_select %p30, 0, %s29
    %s32 = sadd.s32 1, %s23
    %s33 = scalar_select %p30, %s32, %s23
    %p34 = scmp.ge.s32.totalorder %s33, 2
    %s35 = scalar_select %p34, 0, %s33
    %s36 = ssub.s32 %s23, %s35
    %s37 = ssub.s32 %s24, %s31
    %s38 = sor.u32 %s36, %s37
    %p39 = scmp.eq.s32.totalorder %s38, 0
    %s41 = sadd.s32 %s40, 1
    %s42 = scalar_select %p39, %s40, %s41
    %p45 = pneg %p39
    %p46 = scmp.eq.s32.totalorder %s16, 3
    %p47 = por %p45, %p46
    %p48 = scmp.ne.s32.totalorder %s40, %s43
    %p49 = scmp.eq.s32.totalorder %s16, 0
    %p50 = por %p48, %p49
    %p51 = scmp.ne.s32.totalorder %s40, %s43
    %p52 = scmp.eq.s32.totalorder %s21, 3
    %p53 = por %p51, %p52
    %p54 = scmp.ne.s32.totalorder %s43, %s44
    %p55 = scmp.eq.s32.totalorder %s21, 0
    %p56 = por %p54, %p55
    %p57 = scmp.ne.s32.totalorder %s43, %s44
    %p58 = scmp.eq.s32.totalorder %s22, 3
    %p59 = por %p57, %p58
    %p61 = scmp.ne.s32.totalorder %s44, %s60
    %p62 = scmp.eq.s32.totalorder %s22, 0
    %p63 = por %p61, %p62
    %s64 = ssub.s32 %s23, %s35
    %s65 = ssub.s32 %s24, %s31
    %s66 = sor.u32 %s64, %s65
    %p67 = scmp.eq.s32.totalorder %s66, 0
    %s69 = sadd.s32 %s68, 1
    %s70 = scalar_select %p67, %s68, %s69
    %p73 = pneg %p67
    %p74 = scmp.eq.s32.totalorder %s16, 3
    %p75 = por %p73, %p74
    %p76 = scmp.ne.s32.totalorder %s68, %s71
    %p77 = scmp.eq.s32.totalorder %s16, 0
    %p78 = por %p76, %p77
    %p79 = scmp.ne.s32.totalorder %s68, %s71
    %p80 = scmp.eq.s32.totalorder %s21, 3
    %p81 = por %p79, %p80
    %p82 = scmp.ne.s32.totalorder %s71, %s72
    %p83 = scmp.eq.s32.totalorder %s21, 0
    %p84 = por %p82, %p83
    %p85 = scmp.ne.s32.totalorder %s71, %s72
    %p86 = scmp.eq.s32.totalorder %s22, 3
    %p87 = por %p85, %p86
    %p89 = scmp.ne.s32.totalorder %s72, %s88
    %p90 = scmp.eq.s32.totalorder %s22, 0
    %p91 = por %p89, %p90
    %s92 = ssub.s32 %s23, %s35
    %s93 = ssub.s32 %s24, %s31
    %s94 = sor.u32 %s92, %s93
    %p95 = scmp.eq.s32.totalorder %s94, 0
    %s97 = sadd.s32 %s96, 1
    %s98 = scalar_select %p95, %s96, %s97
    %p101 = pneg %p95
    %p102 = scmp.eq.s32.totalorder %s16, 3
    %p103 = por %p101, %p102
    %p104 = scmp.ne.s32.totalorder %s96, %s99
    %p105 = scmp.eq.s32.totalorder %s16, 0
    %p106 = por %p104, %p105
    %p107 = scmp.ne.s32.totalorder %s96, %s99
    %p108 = scmp.eq.s32.totalorder %s21, 3
    %p109 = por %p107, %p108
    %p110 = scmp.ne.s32.totalorder %s99, %s100
    %p111 = scmp.eq.s32.totalorder %s21, 0
    %p112 = por %p110, %p111
    %p113 = scmp.ne.s32.totalorder %s99, %s100
    %p114 = scmp.eq.s32.totalorder %s22, 3
    %p115 = por %p113, %p114
    %p117 = scmp.ne.s32.totalorder %s100, %s116
    %p118 = scmp.eq.s32.totalorder %s22, 0
    %p119 = por %p117, %p118
    %s121 = sadd.s32 %s120, 1
    %p124 = scmp.eq.s32.totalorder %s16, 3
    %p125 = scmp.ne.s32.totalorder %s120, %s122
    %p126 = scmp.eq.s32.totalorder %s16, 0
    %p127 = por %p125, %p126
    %p128 = scmp.ne.s32.totalorder %s120, %s122
    %p129 = scmp.eq.s32.totalorder %s21, 3
    %p130 = por %p128, %p129
    %p131 = scmp.ne.s32.totalorder %s122, %s123
    %p132 = scmp.eq.s32.totalorder %s21, 0
    %p133 = por %p131, %p132
    %p134 = scmp.ne.s32.totalorder %s122, %s123
    %p135 = scmp.eq.s32.totalorder %s22, 3
    %p136 = por %p134, %p135
    %p138 = scmp.ne.s32.totalorder %s123, %s137
    %p139 = scmp.eq.s32.totalorder %s22, 0
    %p140 = por %p138, %p139
    %s142 = sadd.s32 %s141, 1
    %p145 = scmp.eq.s32.totalorder %s16, 3
    %p146 = scmp.ne.s32.totalorder %s141, %s143
    %p147 = scmp.eq.s32.totalorder %s16, 0
    %p148 = por %p146, %p147
    %p149 = scmp.ne.s32.totalorder %s141, %s143
    %p150 = scmp.eq.s32.totalorder %s21, 3
    %p151 = por %p149, %p150
    %p152 = scmp.ne.s32.totalorder %s143, %s144
    %p153 = scmp.eq.s32.totalorder %s21, 0
    %p154 = por %p152, %p153
    %p155 = scmp.ne.s32.totalorder %s143, %s144
    %p156 = scmp.eq.s32.totalorder %s22, 3
    %p157 = por %p155, %p156
    %p159 = scmp.ne.s32.totalorder %s144, %s158
    %p160 = scmp.eq.s32.totalorder %s22, 0
    %p161 = por %p159, %p160
    %s163 = sadd.s32 %s162, 1
    %p166 = scmp.eq.s32.totalorder %s16, 3
    %p167 = scmp.ne.s32.totalorder %s162, %s164
    %p168 = scmp.eq.s32.totalorder %s16, 0
    %p169 = por %p167, %p168
    %p170 = scmp.ne.s32.totalorder %s162, %s164
    %p171 = scmp.eq.s32.totalorder %s21, 3
    %p172 = por %p170, %p171
    %p173 = scmp.ne.s32.totalorder %s164, %s165
    %p174 = scmp.eq.s32.totalorder %s21, 0
    %p175 = por %p173, %p174
    %p176 = scmp.ne.s32.totalorder %s164, %s165
    %p177 = scmp.eq.s32.totalorder %s22, 3
    %p178 = por %p176, %p177
    %p180 = scmp.ne.s32.totalorder %s165, %s179
    %p181 = scmp.eq.s32.totalorder %s22, 0
    %p182 = por %p180, %p181
    %s184 = sadd.s32 %s183, 1
    %p187 = scmp.eq.s32.totalorder %s16, 3
    %p188 = scmp.ne.s32.totalorder %s183, %s185
    %p189 = scmp.eq.s32.totalorder %s16, 0
    %p190 = por %p188, %p189
    %p191 = scmp.ne.s32.totalorder %s183, %s185
    %p192 = scmp.eq.s32.totalorder %s21, 3
    %p193 = por %p191, %p192
    %p194 = scmp.ne.s32.totalorder %s185, %s186
    %p195 = scmp.eq.s32.totalorder %s21, 0
    %p196 = por %p194, %p195
    %p197 = scmp.ne.s32.totalorder %s185, %s186
    %p198 = scmp.eq.s32.totalorder %s22, 3
    %p199 = por %p197, %p198
    %p201 = scmp.ne.s32.totalorder %s186, %s200
    %p202 = scmp.eq.s32.totalorder %s22, 0
    %p203 = por %p201, %p202
    %s204 = ssub.s32 %s23, %s35
    %s205 = ssub.s32 %s24, %s31
    %s206 = sor.u32 %s204, %s205
    %p207 = scmp.eq.s32.totalorder %s206, 0
    %s209 = sadd.s32 %s208, 1
    %s210 = scalar_select %p207, %s208, %s209
    %p213 = pneg %p207
    %p214 = scmp.eq.s32.totalorder %s16, 3
    %p215 = por %p213, %p214
    %p216 = scmp.ne.s32.totalorder %s208, %s211
    %p217 = scmp.eq.s32.totalorder %s16, 0
    %p218 = por %p216, %p217
    %p219 = scmp.ne.s32.totalorder %s208, %s211
    %p220 = scmp.eq.s32.totalorder %s21, 3
    %p221 = por %p219, %p220
    %p222 = scmp.ne.s32.totalorder %s211, %s212
    %p223 = scmp.eq.s32.totalorder %s21, 0
    %p224 = por %p222, %p223
    %p225 = scmp.ne.s32.totalorder %s211, %s212
    %p226 = scmp.eq.s32.totalorder %s22, 3
    %p227 = por %p225, %p226
    %p229 = scmp.ne.s32.totalorder %s212, %s228
    %p230 = scmp.eq.s32.totalorder %s22, 0
    %p231 = por %p229, %p230
    %s232 = ssub.s32 %s23, %s35
    %s233 = ssub.s32 %s24, %s31
    %s234 = sor.u32 %s232, %s233
    %p235 = scmp.eq.s32.totalorder %s234, 0
    %s237 = sadd.s32 %s236, 1
    %s238 = scalar_select %p235, %s236, %s237
    %p241 = pneg %p235
    %p242 = scmp.eq.s32.totalorder %s16, 3
    %p243 = por %p241, %p242
    %p244 = scmp.ne.s32.totalorder %s236, %s239
    %p245 = scmp.eq.s32.totalorder %s16, 0
    %p246 = por %p244, %p245
    %p247 = scmp.ne.s32.totalorder %s236, %s239
    %p248 = scmp.eq.s32.totalorder %s21, 3
    %p249 = por %p247, %p248
    %p250 = scmp.ne.s32.totalorder %s239, %s240
    %p251 = scmp.eq.s32.totalorder %s21, 0
    %p252 = por %p250, %p251
    %p253 = scmp.ne.s32.totalorder %s239, %s240
    %p254 = scmp.eq.s32.totalorder %s22, 3
    %p255 = por %p253, %p254
    %p257 = scmp.ne.s32.totalorder %s240, %s256
    %p258 = scmp.eq.s32.totalorder %s22, 0
    %p259 = por %p257, %p258
    %s260 = ssub.s32 %s23, %s35
    %s261 = ssub.s32 %s24, %s31
    %s262 = sor.u32 %s260, %s261
    %p263 = scmp.eq.s32.totalorder %s262, 0
    %s265 = sadd.s32 %s264, 1
    %s266 = scalar_select %p263, %s264, %s265
    %p269 = pneg %p263
    %p270 = scmp.eq.s32.totalorder %s16, 3
    %p271 = por %p269, %p270
    %p272 = scmp.ne.s32.totalorder %s264, %s267
    %p273 = scmp.eq.s32.totalorder %s16, 0
    %p274 = por %p272, %p273
    %p275 = scmp.ne.s32.totalorder %s264, %s267
    %p276 = scmp.eq.s32.totalorder %s21, 3
    %p277 = por %p275, %p276
    %p278 = scmp.ne.s32.totalorder %s267, %s268
    %p279 = scmp.eq.s32.totalorder %s21, 0
    %p280 = por %p278, %p279
    %p281 = scmp.ne.s32.totalorder %s267, %s268
    %p282 = scmp.eq.s32.totalorder %s22, 3
    %p283 = por %p281, %p282
    %p285 = scmp.ne.s32.totalorder %s268, %s284
    %p286 = scmp.eq.s32.totalorder %s22, 0
    %p287 = por %p285, %p286
    %p288 = scmp.le.s32.totalorder 1, %s16
    %p289 = scmp.lt.s32.totalorder %s16, 5
    %p290 = pnand %p288, %p289
    %p291 = pneg %p290
    // Predicated region
    $region9: #{two_conv_block.4} parent=5 // pred_check
      _
    $region10: #{two_conv_block.4} parent=5 // pred_check_branch
      %293 = sbr.rel (%p290) target = $region12
    $region11: #{two_conv_block.4} parent=5 // pred_region
      %s294 = ssub.s32 %s16, 1
      // Predicated region
      $region13: #{two_conv_block.4} parent=11 // pred_check
        %p295 = pneg %p133
      $region14: #{two_conv_block.4} parent=11 // pred_check_branch
        %297 = sbr.rel (%p295) target = $region16
      $region15: #{two_conv_block.4} parent=11 // pred_region
        _
      $region16: #{two_conv_block.4} parent=11 // pred_fallthru
        _
      // Predicated region
      $region17: #{two_conv_block.4} parent=11 // pred_check
        %p298 = pneg %p154
      $region18: #{two_conv_block.4} parent=11 // pred_check_branch
        %300 = sbr.rel (%p298) target = $region20
      $region19: #{two_conv_block.4} parent=11 // pred_region
        _
      $region20: #{two_conv_block.4} parent=11 // pred_fallthru
        _
      // Predicated region
      $region21: #{two_conv_block.4} parent=11 // pred_check
        %p301 = pneg %p175
      $region22: #{two_conv_block.4} parent=11 // pred_check_branch
        %303 = sbr.rel (%p301) target = $region24
      $region23: #{two_conv_block.4} parent=11 // pred_region
        _
      $region24: #{two_conv_block.4} parent=11 // pred_fallthru
        _
      // Predicated region
      $region25: #{two_conv_block.4} parent=11 // pred_check
        %p304 = pneg %p196
      $region26: #{two_conv_block.4} parent=11 // pred_check_branch
        %306 = sbr.rel (%p304) target = $region28
      $region27: #{two_conv_block.4} parent=11 // pred_region
        _
      $region28: #{two_conv_block.4} parent=11 // pred_fallthru
        _
    $region12: #{two_conv_block.4} parent=5 // pred_fallthru
      _
    %p307 = scmp.lt.s32.totalorder %s16, 4
    // Predicated region
    $region29: #{two_conv_block.4} parent=5 // pred_check
      %p308 = pneg %p307
    $region30: #{two_conv_block.4} parent=5 // pred_check_branch
      %310 = sbr.rel (%p308) target = $region32
    $region31: #{two_conv_block.4} parent=5 // pred_region
      // Predicated region
      $region33: #{two_conv_block.4} parent=31 // pred_check
        %p311 = pneg %p50
      $region34: #{two_conv_block.4} parent=31 // pred_check_branch
        %313 = sbr.rel (%p311) target = $region36
      $region35: #{two_conv_block.4} parent=31 // pred_region
        %s314 = smul.u32 8, %s24
        %p315 = scmp.lt.s32.totalorder %s23, 1
        %s316 = scalar_select %p315, %s23, 1
        %p317 = scmp.lt.s32.totalorder %s314, 15
        %s318 = scalar_select %p317, %s314, 15
        %s319 = smul.addr %s318, 2
        %s320 = smul.addr %s316, 32
        %s321 = sadd.s32 %s319, %s320
        %s322 = smul.addr %s321, 4
        %s323 = scalar_lea.vmem %s0, %s322
        %s324 = smul.u32 8, %s24
      $region36: #{two_conv_block.4} parent=31 // pred_fallthru
        _
      // Predicated region
      $region37: #{two_conv_block.4} parent=31 // pred_check
        %p325 = pneg %p78
      $region38: #{two_conv_block.4} parent=31 // pred_check_branch
        %327 = sbr.rel (%p325) target = $region40
      $region39: #{two_conv_block.4} parent=31 // pred_region
        %p328 = scmp.lt.s32.totalorder %s23, 1
        %s329 = scalar_select %p328, %s23, 1
        %p330 = scmp.lt.s32.totalorder %s24, 1
        %s331 = scalar_select %p330, %s24, 1
        %s332 = smul.addr %s331, 2
        %s333 = smul.addr %s329, 4
        %s334 = sadd.s32 %s332, %s333
        %s335 = smul.addr %s334, 4
        %s336 = scalar_lea.vmem %s1, %s335
      $region40: #{two_conv_block.4} parent=31 // pred_fallthru
        _
      // Predicated region
      $region41: #{two_conv_block.4} parent=31 // pred_check
        %p337 = pneg %p106
      $region42: #{two_conv_block.4} parent=31 // pred_check_branch
        %339 = sbr.rel (%p337) target = $region44
      $region43: #{two_conv_block.4} parent=31 // pred_region
        %p340 = scmp.lt.s32.totalorder %s23, 1
        %s341 = scalar_select %p340, %s23, 1
        %p342 = scmp.lt.s32.totalorder %s24, 1
        %s343 = scalar_select %p342, %s24, 1
        %s344 = smul.addr %s343, 2
        %s345 = smul.addr %s341, 4
        %s346 = sadd.s32 %s344, %s345
        %s347 = smul.addr %s346, 4
        %s348 = scalar_lea.vmem %s2, %s347
      $region44: #{two_conv_block.4} parent=31 // pred_fallthru
        _
    $region32: #{two_conv_block.4} parent=5 // pred_fallthru
      _
    %p349 = scmp.le.s32.totalorder 1, %s16
    %p350 = scmp.lt.s32.totalorder %s16, 5
    %p351 = pnand %p349, %p350
    %p352 = pneg %p351
    // Predicated region
    $region45: #{two_conv_block.4} parent=5 // pred_check
      _
    $region46: #{two_conv_block.4} parent=5 // pred_check_branch
      %354 = sbr.rel (%p351) target = $region48
    $region47: #{two_conv_block.4} parent=5 // pred_region
      %s355 = ssub.s32 %s16, 1
      %s356 = smul.u32 8, %s26
      %p357 = scmp.lt.s32.totalorder %s25, 1
      %s358 = scalar_select %p357, %s25, 1
      %p359 = scmp.lt.s32.totalorder %s356, 15
      %s360 = scalar_select %p359, %s356, 15
      %s361 = smul.addr %s360, 2
      %s362 = smul.addr %s358, 32
      %s363 = sadd.s32 %s361, %s362
      %s364 = smul.addr %s363, 4
      %s365 = scalar_lea.vmem %s0, %s364
      %p366 = pneg %p56
      %p367 = pneg %p53
      %p368 = scmp.lt.s32.totalorder %s25, 1
      %s369 = scalar_select %p368, %s25, 1
      %p370 = scmp.lt.s32.totalorder %s26, 1
      %s371 = scalar_select %p370, %s26, 1
      %s372 = smul.addr %s371, 2
      %s373 = smul.addr %s369, 4
      %s374 = sadd.s32 %s372, %s373
      %s375 = smul.addr %s374, 4
      %s376 = scalar_lea.vmem %s1, %s375
      %p377 = pneg %p84
      %p378 = pneg %p81
      %p379 = scmp.lt.s32.totalorder %s25, 1
      %s380 = scalar_select %p379, %s25, 1
      %p381 = scmp.lt.s32.totalorder %s26, 1
      %s382 = scalar_select %p381, %s26, 1
      %s383 = smul.addr %s382, 2
      %s384 = smul.addr %s380, 4
      %s385 = sadd.s32 %s383, %s384
      %s386 = smul.addr %s385, 4
      %s387 = scalar_lea.vmem %s2, %s386
      %p388 = pneg %p112
      %p389 = pneg %p109
      %p390 = pneg %p133
      %p391 = pneg %p130
      %p392 = pneg %p154
      %p393 = pneg %p151
      %p394 = pneg %p175
      %p395 = pneg %p172
      %p396 = pneg %p196
      %p397 = pneg %p193
      %p398 = pneg %p224
      %p399 = pneg %p221
      %s400 = smul.u32 8, %s26
      %p401 = scmp.lt.s32.totalorder %s25, 1
      %s402 = scalar_select %p401, %s25, 1
      %p403 = scmp.lt.s32.totalorder %s400, 15
      %s404 = scalar_select %p403, %s400, 15
      %s405 = smul.addr %s404, 2
      %s406 = smul.addr %s402, 32
      %s407 = sadd.s32 %s405, %s406
      %s408 = smul.addr %s407, 4
      %s409 = scalar_lea.vmem %s7, %s408
      %p410 = pneg %p252
      %p411 = pneg %p249
      %p412 = scmp.lt.s32.totalorder %s25, 1
      %s413 = scalar_select %p412, %s25, 1
      %p414 = scmp.lt.s32.totalorder %s26, 1
      %s415 = scalar_select %p414, %s26, 1
      %s416 = smul.addr %s413, 2
      %s417 = sadd.s32 %s415, %s416
      %s418 = scalar_lea.vmem %s8, %s417
      %p419 = pneg %p280
      %p420 = pneg %p277
      %p421 = scmp.lt.s32.totalorder %s25, 1
      %s422 = scalar_select %p421, %s25, 1
      %p423 = scmp.lt.s32.totalorder %s26, 1
      %s424 = scalar_select %p423, %s26, 1
      %s425 = smul.addr %s422, 2
      %s426 = sadd.s32 %s424, %s425
      %s427 = scalar_lea.vmem %s9, %s426
      %s428 = smul.u32 8, %s26
      %p429 = scmp.lt.s32.totalorder %s25, 1
      %s430 = scalar_select %p429, %s25, 1
      %p431 = scmp.lt.s32.totalorder %s428, 15
      %s432 = scalar_select %p431, %s428, 15
      %s433 = smul.addr %s432, 2
      %s434 = smul.addr %s430, 32
      %s435 = sadd.s32 %s433, %s434
      %s436 = smul.addr %s435, 4
      %s437 = scalar_lea.vmem %s0, %s436
      %s438 = smul.u32 8, %s26
      %p439 = scmp.lt.s32.totalorder %s25, 1
      %s440 = scalar_select %p439, %s25, 1
      %p441 = scmp.lt.s32.totalorder %s26, 1
      %s442 = scalar_select %p441, %s26, 1
      %s443 = smul.addr %s442, 2
      %s444 = smul.addr %s440, 4
      %s445 = sadd.s32 %s443, %s444
      %s446 = smul.addr %s445, 4
      %s447 = scalar_lea.vmem %s1, %s446
      %p448 = scmp.lt.s32.totalorder %s25, 1
      %s449 = scalar_select %p448, %s25, 1
      %p450 = scmp.lt.s32.totalorder %s26, 1
      %s451 = scalar_select %p450, %s26, 1
      %s452 = smul.addr %s451, 2
      %s453 = smul.addr %s449, 4
      %s454 = sadd.s32 %s452, %s453
      %s455 = smul.addr %s454, 4
      %s456 = scalar_lea.vmem %s2, %s455
      %s457 = smul.u32 8, %s26
      %p458 = scmp.lt.s32.totalorder %s25, 1
      %s459 = scalar_select %p458, %s25, 1
      %p460 = scmp.lt.s32.totalorder %s457, 15
      %s461 = scalar_select %p460, %s457, 15
      %s462 = smul.addr %s461, 2
      %s463 = smul.addr %s459, 32
      %s464 = sadd.s32 %s462, %s463
      %s465 = smul.addr %s464, 4
      %s466 = scalar_lea.vmem %s7, %s465
      %s467 = smul.u32 8, %s26
      %p468 = scmp.lt.s32.totalorder %s25, 1
      %s469 = scalar_select %p468, %s25, 1
      %p470 = scmp.lt.s32.totalorder %s26, 1
      %s471 = scalar_select %p470, %s26, 1
      %s472 = smul.addr %s469, 2
      %s473 = sadd.s32 %s471, %s472
      %s474 = scalar_lea.vmem %s8, %s473
      %p475 = scmp.lt.s32.totalorder %s25, 1
      %s476 = scalar_select %p475, %s25, 1
      %p477 = scmp.lt.s32.totalorder %s26, 1
      %s478 = scalar_select %p477, %s26, 1
      %s479 = smul.addr %s476, 2
      %s480 = sadd.s32 %s478, %s479
      %s481 = scalar_lea.vmem %s9, %s480
      %vm483 = vcmask 1040384
      %vm484 = vsmask.f32 256
      %vm485 = vmand %vm483, %vm484
      %v486 = vld [vmem:[#allocation2] sm:$0x1]
      %v487 = vsel %vm485, 0, %v486
      %488 = vst [vmem:[#allocation2] sm:$0x1] %v487
      %v489 = vld [vmem:[#allocation2 + $0xc] sm:$0x1]
      %v490 = vsel %vm485, 0, %v489
      %491 = vst [vmem:[#allocation2 + $0xc] sm:$0x1] %v490
      %v492 = vld [vmem:[#allocation2 + $0x18] sm:$0x1]
      %v493 = vsel %vm485, 0, %v492
      %494 = vst [vmem:[#allocation2 + $0x18] sm:$0x1] %v493
      %v495 = vld [vmem:[#allocation2 + $0x24] sm:$0x1]
      %v496 = vsel %vm485, 0, %v495
      %497 = vst [vmem:[#allocation2 + $0x24] sm:$0x1] %v496
      %v498 = vld [vmem:[#allocation2 + $0x30] sm:$0x1]
      %v499 = vsel %vm485, 0, %v498
      %500 = vst [vmem:[#allocation2 + $0x30] sm:$0x1] %v499
      %v501 = vld [vmem:[#allocation2 + $0x3c] sm:$0x1]
      %v502 = vsel %vm485, 0, %v501
      %503 = vst [vmem:[#allocation2 + $0x3c] sm:$0x1] %v502
      %v504 = vld [vmem:[#allocation2 + $0x48] sm:$0x1]
      %v505 = vsel %vm485, 0, %v504
      %506 = vst [vmem:[#allocation2 + $0x48] sm:$0x1] %v505
      %v507 = vld [vmem:[#allocation2 + $0x54] sm:$0x1]
      %v508 = vsel %vm485, 0, %v507
      %509 = vst [vmem:[#allocation2 + $0x54] sm:$0x1] %v508
      %v510 = vld [vmem:[#allocation2 + $0x60] sm:$0x1]
      %v511 = vsel %vm485, 0, %v510
      %512 = vst [vmem:[#allocation2 + $0x60] sm:$0x1] %v511
      %v513 = vld [vmem:[#allocation2 + $0x6c] sm:$0x1]
      %v514 = vsel %vm485, 0, %v513
      %515 = vst [vmem:[#allocation2 + $0x6c] sm:$0x1] %v514
      %vm516 = vsmask.f32 7938
      %vm517 = vmand %vm483, %vm516
      %v518 = vld [vmem:[#allocation2 + $0x8] sm:$0x1]
      %v519 = vsel %vm517, 0, %v518
      %520 = vst [vmem:[#allocation2 + $0x8] sm:$0x1] %v519
      %v521 = vld [vmem:[#allocation2 + $0x14] sm:$0x1]
      %v522 = vsel %vm517, 0, %v521
      %523 = vst [vmem:[#allocation2 + $0x14] sm:$0x1] %v522
      %v524 = vld [vmem:[#allocation2 + $0x20] sm:$0x1]
      %v525 = vsel %vm517, 0, %v524
      %526 = vst [vmem:[#allocation2 + $0x20] sm:$0x1] %v525
      %v527 = vld [vmem:[#allocation2 + $0x2c] sm:$0x1]
      %v528 = vsel %vm517, 0, %v527
      %529 = vst [vmem:[#allocation2 + $0x2c] sm:$0x1] %v528
      %v530 = vld [vmem:[#allocation2 + $0x38] sm:$0x1]
      %v531 = vsel %vm517, 0, %v530
      %532 = vst [vmem:[#allocation2 + $0x38] sm:$0x1] %v531
      %v533 = vld [vmem:[#allocation2 + $0x44] sm:$0x1]
      %v534 = vsel %vm517, 0, %v533
      %535 = vst [vmem:[#allocation2 + $0x44] sm:$0x1] %v534
      %v536 = vld [vmem:[#allocation2 + $0x50] sm:$0x1]
      %v537 = vsel %vm517, 0, %v536
      %538 = vst [vmem:[#allocation2 + $0x50] sm:$0x1] %v537
      %v539 = vld [vmem:[#allocation2 + $0x5c] sm:$0x1]
      %v540 = vsel %vm517, 0, %v539
      %541 = vst [vmem:[#allocation2 + $0x5c] sm:$0x1] %v540
      %v542 = vld [vmem:[#allocation2 + $0x68] sm:$0x1]
      %v543 = vsel %vm517, 0, %v542
      %544 = vst [vmem:[#allocation2 + $0x68] sm:$0x1] %v543
      %v545 = vld [vmem:[#allocation2 + $0x74] sm:$0x1]
      %v546 = vsel %vm517, 0, %v545
      %547 = vst [vmem:[#allocation2 + $0x74] sm:$0x1] %v546
      %v548 = vld [vmem:[%s437] sm:$0xf]
      %v549 = vld [vmem:[%s437 + $0x4] sm:$0xf]
      %v550 = vld [vmem:[%s437 + $0x8] sm:$0xf]
      %v551 = vld [vmem:[%s437 + $0xc] sm:$0xf]
      %v552 = vld [vmem:[%s437 + $0x10] sm:$0xf]
      %v553 = vld [vmem:[%s437 + $0x14] sm:$0xf]
      %v554 = vld [vmem:[%s437 + $0x18] sm:$0xf]
      %v555 = vld [vmem:[%s437 + $0x1c] sm:$0xf]
      %v556 = vld [vmem:[%s437 + $0x20] sm:$0xf]
      %v557 = vld [vmem:[%s437 + $0x24] sm:$0xf]
      %v558 = vld [vmem:[%s437 + $0x28] sm:$0xf]
      %v559 = vld [vmem:[%s437 + $0x2c] sm:$0xf]
      %v560 = vld [vmem:[%s437 + $0x30] sm:$0xf]
      %v561 = vld [vmem:[%s437 + $0x34] sm:$0xf]
      %v562 = vld [vmem:[%s437 + $0x38] sm:$0xf]
      %v563 = vld [vmem:[%s437 + $0x3c] sm:$0xf]
      %v564 = vunpack.c.l.bf16 %v548
      %v565 = vunpack.c.l.bf16 %v549
      %v566 = vunpack.c.l.bf16 %v550
      %v567 = vunpack.c.l.bf16 %v551
      %v568 = vunpack.c.l.bf16 %v552
      %v569 = vunpack.c.l.bf16 %v553
      %v570 = vunpack.c.l.bf16 %v554
      %v571 = vunpack.c.l.bf16 %v555
      %v572 = vunpack.c.l.bf16 %v556
      %v573 = vunpack.c.l.bf16 %v557
      %v574 = vunpack.c.l.bf16 %v558
      %v575 = vunpack.c.l.bf16 %v559
      %v576 = vunpack.c.l.bf16 %v560
      %v577 = vunpack.c.l.bf16 %v561
      %v578 = vunpack.c.l.bf16 %v562
      %v579 = vunpack.c.l.bf16 %v563
      %v580 = vld [vmem:[%s5] sm:$0x1]
      %v582 = vlaneseq
      %v583 = vshrl.u32 %v582, 7
      %v584 = vsub.s32 0, %v583
      %v585 = vrot.slane %v580, %v584
      %v587 = vmul.f32 %v564, %v585
      %v588 = vmul.f32 %v565, %v585
      %v589 = vmul.f32 %v566, %v585
      %v590 = vmul.f32 %v567, %v585
      %v591 = vmul.f32 %v568, %v585
      %v592 = vmul.f32 %v569, %v585
      %v593 = vmul.f32 %v570, %v585
      %v594 = vmul.f32 %v571, %v585
      %v595 = vmul.f32 %v572, %v585
      %v596 = vmul.f32 %v573, %v585
      %v597 = vmul.f32 %v574, %v585
      %v598 = vmul.f32 %v575, %v585
      %v599 = vmul.f32 %v576, %v585
      %v600 = vmul.f32 %v577, %v585
      %v601 = vmul.f32 %v578, %v585
      %v602 = vmul.f32 %v579, %v585
      %v603 = vld [vmem:[%s6] sm:$0x1]
      %v605 = vlaneseq
      %v606 = vshrl.u32 %v605, 7
      %v607 = vsub.s32 0, %v606
      %v608 = vrot.slane %v603, %v607
      %v610 = vadd.f32 %v587, %v608
      %v611 = vadd.f32 %v588, %v608
      %v612 = vadd.f32 %v589, %v608
      %v613 = vadd.f32 %v590, %v608
      %v614 = vadd.f32 %v591, %v608
      %v615 = vadd.f32 %v592, %v608
      %v616 = vadd.f32 %v593, %v608
      %v617 = vadd.f32 %v594, %v608
      %v618 = vadd.f32 %v595, %v608
      %v619 = vadd.f32 %v596, %v608
      %v620 = vadd.f32 %v597, %v608
      %v621 = vadd.f32 %v598, %v608
      %v622 = vadd.f32 %v599, %v608
      %v623 = vadd.f32 %v600, %v608
      %v624 = vadd.f32 %v601, %v608
      %v625 = vadd.f32 %v602, %v608
      %v626 = vmax.f32 %v610, 0.0
      %v627 = vmax.f32 %v611, 0.0
      %v628 = vmax.f32 %v612, 0.0
      %v629 = vmax.f32 %v613, 0.0
      %v630 = vmax.f32 %v614, 0.0
      %v631 = vmax.f32 %v615, 0.0
      %v632 = vmax.f32 %v616, 0.0
      %v633 = vmax.f32 %v617, 0.0
      %v634 = vmax.f32 %v618, 0.0
      %v635 = vmax.f32 %v619, 0.0
      %v636 = vmax.f32 %v620, 0.0
      %v637 = vmax.f32 %v621, 0.0
      %v638 = vmax.f32 %v622, 0.0
      %v639 = vmax.f32 %v623, 0.0
      %v640 = vmax.f32 %v624, 0.0
      %v641 = vmax.f32 %v625, 0.0
      %v642 = vpack.c.bf16 %v627, %v626
      %v643 = vpack.c.bf16 %v629, %v628
      %v644 = vpack.c.bf16 %v631, %v630
      %v645 = vpack.c.bf16 %v633, %v632
      %v646 = vpack.c.bf16 %v635, %v634
      %v647 = vpack.c.bf16 %v637, %v636
      %v648 = vpack.c.bf16 %v639, %v638
      %v649 = vpack.c.bf16 %v641, %v640
      %v658 = vunpack.c.l.b16 %v642
      %v659 = vunpack.c.h.b16 %v642
      %v660 = vunpack.c.l.b16 %v643
      %v661 = vunpack.c.h.b16 %v643
      %v662 = vunpack.c.l.b16 %v644
      %v663 = vunpack.c.h.b16 %v644
      %v664 = vunpack.c.l.b16 %v645
      %v665 = vunpack.c.h.b16 %v645
      %v666 = vunpack.c.l.b16 %v646
      %v667 = vunpack.c.h.b16 %v646
      %v668 = vunpack.c.l.b16 %v647
      %v669 = vunpack.c.h.b16 %v647
      %v670 = vunpack.c.l.b16 %v648
      %v671 = vunpack.c.h.b16 %v648
      %v672 = vunpack.c.l.b16 %v649
      %v673 = vunpack.c.h.b16 %v649
      %v674 = vpack.c.b16 %v658, %v658
      %v675 = vpack.c.b16 %v659, %v659
      %v676 = vpack.c.b16 %v660, %v660
      %v677 = vpack.c.b16 %v661, %v661
      %v678 = vpack.c.b16 %v662, %v662
      %v679 = vpack.c.b16 %v663, %v663
      %v680 = vpack.c.b16 %v664, %v664
      %v681 = vpack.c.b16 %v665, %v665
      %v682 = vpack.c.b16 %v666, %v666
      %v683 = vpack.c.b16 %v667, %v667
      %v684 = vpack.c.b16 %v668, %v668
      %v685 = vpack.c.b16 %v669, %v669
      %v686 = vpack.c.b16 %v670, %v670
      %v687 = vpack.c.b16 %v671, %v671
      %v688 = vpack.c.b16 %v672, %v672
      %v689 = vpack.c.b16 %v673, %v673
      %vm690 = vsmask.f32 4368
      %vm691 = vmor %vm484, %vm690
      %v693 = vshrl.u32 %v674, 16
      %v695 = vrot.slane %v693, 7
      %v696 = vshll.u32 %v674, 16
      %v698 = vor.u32 %v695, %v696
      %v699 = vrot.slane %v695, 4
      %v701 = vshrl.u32 %v675, 16
      %v703 = vrot.slane %v701, 7
      %v704 = vshll.u32 %v675, 16
      %v706 = vor.u32 %v703, %v704
      %v707 = vsel %vm691, %v699, %v706
      %v708 = vrot.slane %v703, 4
      %v710 = vshrl.u32 %v676, 16
      %v712 = vrot.slane %v710, 7
      %v713 = vshll.u32 %v676, 16
      %v715 = vor.u32 %v712, %v713
      %v716 = vrot.slane %v712, 4
      %v718 = vshrl.u32 %v677, 16
      %v720 = vrot.slane %v718, 7
      %v721 = vshll.u32 %v677, 16
      %v723 = vor.u32 %v720, %v721
      %v724 = vsel %vm691, %v716, %v723
      %v725 = vrot.slane %v720, 4
      %v727 = vshrl.u32 %v678, 16
      %v729 = vrot.slane %v727, 7
      %v730 = vshll.u32 %v678, 16
      %v732 = vor.u32 %v729, %v730
      %v733 = vrot.slane %v729, 4
      %v735 = vshrl.u32 %v679, 16
      %v737 = vrot.slane %v735, 7
      %v738 = vshll.u32 %v679, 16
      %v740 = vor.u32 %v737, %v738
      %v741 = vsel %vm691, %v733, %v740
      %v742 = vrot.slane %v737, 4
      %v744 = vshrl.u32 %v680, 16
      %v746 = vrot.slane %v744, 7
      %v747 = vshll.u32 %v680, 16
      %v749 = vor.u32 %v746, %v747
      %v750 = vrot.slane %v746, 4
      %v752 = vshrl.u32 %v681, 16
      %v754 = vrot.slane %v752, 7
      %v755 = vshll.u32 %v681, 16
      %v757 = vor.u32 %v754, %v755
      %v758 = vsel %vm691, %v750, %v757
      %v759 = vrot.slane %v754, 4
      %v761 = vshrl.u32 %v682, 16
      %v763 = vrot.slane %v761, 7
      %v764 = vshll.u32 %v682, 16
      %v766 = vor.u32 %v763, %v764
      %v767 = vrot.slane %v763, 4
      %v769 = vshrl.u32 %v683, 16
      %v771 = vrot.slane %v769, 7
      %v772 = vshll.u32 %v683, 16
      %v774 = vor.u32 %v771, %v772
      %v775 = vsel %vm691, %v767, %v774
      %v776 = vrot.slane %v771, 4
      %v778 = vshrl.u32 %v684, 16
      %v780 = vrot.slane %v778, 7
      %v781 = vshll.u32 %v684, 16
      %v783 = vor.u32 %v780, %v781
      %v784 = vrot.slane %v780, 4
      %v786 = vshrl.u32 %v685, 16
      %v788 = vrot.slane %v786, 7
      %v789 = vshll.u32 %v685, 16
      %v791 = vor.u32 %v788, %v789
      %v792 = vsel %vm691, %v784, %v791
      %v793 = vrot.slane %v788, 4
      %v795 = vshrl.u32 %v686, 16
      %v797 = vrot.slane %v795, 7
      %v798 = vshll.u32 %v686, 16
      %v800 = vor.u32 %v797, %v798
      %v801 = vrot.slane %v797, 4
      %v803 = vshrl.u32 %v687, 16
      %v805 = vrot.slane %v803, 7
      %v806 = vshll.u32 %v687, 16
      %v808 = vor.u32 %v805, %v806
      %v809 = vsel %vm691, %v801, %v808
      %v810 = vrot.slane %v805, 4
      %v812 = vshrl.u32 %v688, 16
      %v814 = vrot.slane %v812, 7
      %v815 = vshll.u32 %v688, 16
      %v817 = vor.u32 %v814, %v815
      %v818 = vrot.slane %v814, 4
      %v820 = vshrl.u32 %v689, 16
      %v822 = vrot.slane %v820, 7
      %v823 = vshll.u32 %v689, 16
      %v825 = vor.u32 %v822, %v823
      %v826 = vsel %vm691, %v818, %v825
      %v827 = vrot.slane %v822, 4
      %s852 = scalar_lea.vmem [#allocation2], 12
      %vm853 = vcmask 1043456
      %vm854 = vmand %vm853, %vm516
      %v855 = vld [vmem:[%s852] sm:$0xf]
      %v856 = vsel %vm854, %v698, %v855
      %857 = vst [vmem:[%s852] sm:$0xf] %v856
      %858 = vst [vmem:[%s852 + $0x4] sm:$0xf] %v707
      %v859 = vld [vmem:[%s852 + $0x8] sm:$0x1]
      %v860 = vsel %vm485, %v708, %v859
      %861 = vst [vmem:[%s852 + $0x8] sm:$0x1] %v860
      %v862 = vld [vmem:[%s852 + $0xc] sm:$0xf]
      %v863 = vsel %vm854, %v715, %v862
      %864 = vst [vmem:[%s852 + $0xc] sm:$0xf] %v863
      %865 = vst [vmem:[%s852 + $0x10] sm:$0xf] %v724
      %v866 = vld [vmem:[%s852 + $0x14] sm:$0x1]
      %v867 = vsel %vm485, %v725, %v866
      %868 = vst [vmem:[%s852 + $0x14] sm:$0x1] %v867
      %v869 = vld [vmem:[%s852 + $0x18] sm:$0xf]
      %v870 = vsel %vm854, %v732, %v869
      %871 = vst [vmem:[%s852 + $0x18] sm:$0xf] %v870
      %872 = vst [vmem:[%s852 + $0x1c] sm:$0xf] %v741
      %v873 = vld [vmem:[%s852 + $0x20] sm:$0x1]
      %v874 = vsel %vm485, %v742, %v873
      %875 = vst [vmem:[%s852 + $0x20] sm:$0x1] %v874
      %v876 = vld [vmem:[%s852 + $0x24] sm:$0xf]
      %v877 = vsel %vm854, %v749, %v876
      %878 = vst [vmem:[%s852 + $0x24] sm:$0xf] %v877
      %879 = vst [vmem:[%s852 + $0x28] sm:$0xf] %v758
      %v880 = vld [vmem:[%s852 + $0x2c] sm:$0x1]
      %v881 = vsel %vm485, %v759, %v880
      %882 = vst [vmem:[%s852 + $0x2c] sm:$0x1] %v881
      %v883 = vld [vmem:[%s852 + $0x30] sm:$0xf]
      %v884 = vsel %vm854, %v766, %v883
      %885 = vst [vmem:[%s852 + $0x30] sm:$0xf] %v884
      %886 = vst [vmem:[%s852 + $0x34] sm:$0xf] %v775
      %v887 = vld [vmem:[%s852 + $0x38] sm:$0x1]
      %v888 = vsel %vm485, %v776, %v887
      %889 = vst [vmem:[%s852 + $0x38] sm:$0x1] %v888
      %v890 = vld [vmem:[%s852 + $0x3c] sm:$0xf]
      %v891 = vsel %vm854, %v783, %v890
      %892 = vst [vmem:[%s852 + $0x3c] sm:$0xf] %v891
      %893 = vst [vmem:[%s852 + $0x40] sm:$0xf] %v792
      %v894 = vld [vmem:[%s852 + $0x44] sm:$0x1]
      %v895 = vsel %vm485, %v793, %v894
      %896 = vst [vmem:[%s852 + $0x44] sm:$0x1] %v895
      %v897 = vld [vmem:[%s852 + $0x48] sm:$0xf]
      %v898 = vsel %vm854, %v800, %v897
      %899 = vst [vmem:[%s852 + $0x48] sm:$0xf] %v898
      %900 = vst [vmem:[%s852 + $0x4c] sm:$0xf] %v809
      %v901 = vld [vmem:[%s852 + $0x50] sm:$0x1]
      %v902 = vsel %vm485, %v810, %v901
      %903 = vst [vmem:[%s852 + $0x50] sm:$0x1] %v902
      %v904 = vld [vmem:[%s852 + $0x54] sm:$0xf]
      %v905 = vsel %vm854, %v817, %v904
      %906 = vst [vmem:[%s852 + $0x54] sm:$0xf] %v905
      %907 = vst [vmem:[%s852 + $0x58] sm:$0xf] %v826
      %v908 = vld [vmem:[%s852 + $0x5c] sm:$0x1]
      %v909 = vsel %vm485, %v827, %v908
      %910 = vst [vmem:[%s852 + $0x5c] sm:$0x1] %v909
      %p911 = scmp.gt.s32.totalorder %s26, 0
      // Predicated region
      $region49: #{two_conv_block.4} parent=47 // pred_check
        %p912 = pneg %p911
      $region50: #{two_conv_block.4} parent=47 // pred_check_branch
        %914 = sbr.rel (%p912) target = $region52
      $region51: #{two_conv_block.4} parent=47 // pred_region
        %v915 = vld [vmem:[%s447] sm:$0xf]
        %v916 = vld [vmem:[%s447 + $0x4] sm:$0xf]
        %v917 = vunpack.c.l.bf16 %v915
        %v918 = vunpack.c.l.bf16 %v916
        %v919 = vld [vmem:[%s5] sm:$0x1]
        %v921 = vlaneseq
        %v922 = vshrl.u32 %v921, 7
        %v923 = vsub.s32 0, %v922
        %v924 = vrot.slane %v919, %v923
        %v926 = vmul.f32 %v917, %v924
        %v927 = vmul.f32 %v918, %v924
        %v928 = vld [vmem:[%s6] sm:$0x1]
        %v930 = vlaneseq
        %v931 = vshrl.u32 %v930, 7
        %v932 = vsub.s32 0, %v931
        %v933 = vrot.slane %v928, %v932
        %v935 = vadd.f32 %v926, %v933
        %v936 = vadd.f32 %v927, %v933
        %v937 = vmax.f32 %v935, 0.0
        %v938 = vmax.f32 %v936, 0.0
        %v939 = vpack.c.bf16 %v938, %v937
        %v941 = vunpack.c.l.b16 %v939
        %v942 = vunpack.c.h.b16 %v939
        %v943 = vpack.c.b16 %v941, %v941
        %v944 = vpack.c.b16 %v942, %v942
        %v946 = vshrl.u32 %v943, 16
        %v948 = vrot.slane %v946, 7
        %v949 = vshll.u32 %v943, 16
        %v951 = vor.u32 %v948, %v949
        %v952 = vrot.slane %v948, 4
        %v954 = vshrl.u32 %v944, 16
        %v956 = vrot.slane %v954, 7
        %v957 = vshll.u32 %v944, 16
        %v959 = vor.u32 %v956, %v957
        %v960 = vsel %vm691, %v952, %v959
        %v961 = vrot.slane %v956, 4
        %v965 = vld [vmem:[#allocation2] sm:$0xf]
        %v966 = vsel %vm854, %v951, %v965
        %967 = vst [vmem:[#allocation2] sm:$0xf] %v966
        %968 = vst [vmem:[#allocation2 + $0x4] sm:$0xf] %v960
        %v969 = vld [vmem:[#allocation2 + $0x8] sm:$0x1]
        %v970 = vsel %vm485, %v961, %v969
        %971 = vst [vmem:[#allocation2 + $0x8] sm:$0x1] %v970
      $region52: #{two_conv_block.4} parent=47 // pred_fallthru
        _
      %p972 = scmp.eq.s32.totalorder %s26, 0
      // Predicated region
      $region53: #{two_conv_block.4} parent=47 // pred_check
        %p973 = pneg %p972
      $region54: #{two_conv_block.4} parent=47 // pred_check_branch
        %975 = sbr.rel (%p973) target = $region56
      $region55: #{two_conv_block.4} parent=47 // pred_region
        %v976 = vld [vmem:[#allocation2] sm:$0xf]
        %v977 = vsel %vm854, 0, %v976
        %978 = vst [vmem:[#allocation2] sm:$0xf] %v977
        %979 = vst [vmem:[#allocation2 + $0x4] sm:$0xf] 0
        %v980 = vld [vmem:[#allocation2 + $0x8] sm:$0x1]
        %v981 = vsel %vm485, 0, %v980
        %982 = vst [vmem:[#allocation2 + $0x8] sm:$0x1] %v981
      $region56: #{two_conv_block.4} parent=47 // pred_fallthru
        _
      %p983 = scmp.lt.s32.totalorder %s26, 1
      // Predicated region
      $region57: #{two_conv_block.4} parent=47 // pred_check
        %p984 = pneg %p983
      $region58: #{two_conv_block.4} parent=47 // pred_check_branch
        %986 = sbr.rel (%p984) target = $region60
      $region59: #{two_conv_block.4} parent=47 // pred_region
        %v987 = vld [vmem:[%s456] sm:$0xf]
        %v988 = vld [vmem:[%s456 + $0x4] sm:$0xf]
        %v989 = vunpack.c.l.bf16 %v987
        %v990 = vunpack.c.l.bf16 %v988
        %v991 = vld [vmem:[%s5] sm:$0x1]
        %v993 = vlaneseq
        %v994 = vshrl.u32 %v993, 7
        %v995 = vsub.s32 0, %v994
        %v996 = vrot.slane %v991, %v995
        %v998 = vmul.f32 %v989, %v996
        %v999 = vmul.f32 %v990, %v996
        %v1000 = vld [vmem:[%s6] sm:$0x1]
        %v1002 = vlaneseq
        %v1003 = vshrl.u32 %v1002, 7
        %v1004 = vsub.s32 0, %v1003
        %v1005 = vrot.slane %v1000, %v1004
        %v1007 = vadd.f32 %v998, %v1005
        %v1008 = vadd.f32 %v999, %v1005
        %v1009 = vmax.f32 %v1007, 0.0
        %v1010 = vmax.f32 %v1008, 0.0
        %v1011 = vpack.c.bf16 %v1010, %v1009
        %v1013 = vunpack.c.l.b16 %v1011
        %v1014 = vunpack.c.h.b16 %v1011
        %v1015 = vpack.c.b16 %v1013, %v1013
        %v1016 = vpack.c.b16 %v1014, %v1014
        %v1018 = vshrl.u32 %v1015, 16
        %v1020 = vrot.slane %v1018, 7
        %v1021 = vshll.u32 %v1015, 16
        %v1023 = vor.u32 %v1020, %v1021
        %v1024 = vrot.slane %v1020, 4
        %v1026 = vshrl.u32 %v1016, 16
        %v1028 = vrot.slane %v1026, 7
        %v1029 = vshll.u32 %v1016, 16
        %v1031 = vor.u32 %v1028, %v1029
        %v1032 = vsel %vm691, %v1024, %v1031
        %v1033 = vrot.slane %v1028, 4
        %s1037 = scalar_lea.vmem [#allocation2], 108
        %v1038 = vld [vmem:[%s1037] sm:$0xf]
        %v1039 = vsel %vm854, %v1023, %v1038
        %1040 = vst [vmem:[%s1037] sm:$0xf] %v1039
        %1041 = vst [vmem:[%s1037 + $0x4] sm:$0xf] %v1032
        %v1042 = vld [vmem:[%s1037 + $0x8] sm:$0x1]
        %v1043 = vsel %vm485, %v1033, %v1042
        %1044 = vst [vmem:[%s1037 + $0x8] sm:$0x1] %v1043
      $region60: #{two_conv_block.4} parent=47 // pred_fallthru
        _
      %p1045 = scmp.eq.s32.totalorder %s26, 1
      // Predicated region
      $region61: #{two_conv_block.4} parent=47 // pred_check
        %p1046 = pneg %p1045
      $region62: #{two_conv_block.4} parent=47 // pred_check_branch
        %1048 = sbr.rel (%p1046) target = $region64
      $region63: #{two_conv_block.4} parent=47 // pred_region
        %s1049 = scalar_lea.vmem [#allocation2], 108
        %v1050 = vld [vmem:[%s1049] sm:$0xf]
        %v1051 = vsel %vm854, 0, %v1050
        %1052 = vst [vmem:[%s1049] sm:$0xf] %v1051
        %1053 = vst [vmem:[%s1049 + $0x4] sm:$0xf] 0
        %v1054 = vld [vmem:[%s1049 + $0x8] sm:$0x1]
        %v1055 = vsel %vm485, 0, %v1054
        %1056 = vst [vmem:[%s1049 + $0x8] sm:$0x1] %v1055
      $region64: #{two_conv_block.4} parent=47 // pred_fallthru
        _
      %v1057 = vld [vmem:[#allocation2] sm:$0xf]
      %v1058 = vld [vmem:[#allocation2 + $0x4] sm:$0xf]
      %v1059 = vld [vmem:[#allocation2 + $0xc] sm:$0xf]
      %v1060 = vld [vmem:[#allocation2 + $0x10] sm:$0xf]
      %v1061 = vld [vmem:[#allocation2 + $0x18] sm:$0xf]
      %v1062 = vld [vmem:[#allocation2 + $0x1c] sm:$0xf]
      %v1063 = vld [vmem:[#allocation2 + $0x24] sm:$0xf]
      %v1064 = vld [vmem:[#allocation2 + $0x28] sm:$0xf]
      %v1065 = vld [vmem:[#allocation2 + $0x30] sm:$0xf]
      %v1066 = vld [vmem:[#allocation2 + $0x34] sm:$0xf]
      %v1067 = vld [vmem:[#allocation2 + $0x3c] sm:$0xf]
      %v1068 = vld [vmem:[#allocation2 + $0x40] sm:$0xf]
      %v1069 = vld [vmem:[#allocation2 + $0x48] sm:$0xf]
      %v1070 = vld [vmem:[#allocation2 + $0x4c] sm:$0xf]
      %v1071 = vld [vmem:[#allocation2 + $0x54] sm:$0xf]
      %v1072 = vld [vmem:[#allocation2 + $0x58] sm:$0xf]
      %v1089 = vunpack.c.l.b16 %v1057
      %v1090 = vunpack.c.l.b16 %v1058
      %v1091 = vunpack.c.l.b16 %v1059
      %v1092 = vunpack.c.l.b16 %v1060
      %v1093 = vunpack.c.l.b16 %v1061
      %v1094 = vunpack.c.l.b16 %v1062
      %v1095 = vunpack.c.l.b16 %v1063
      %v1096 = vunpack.c.l.b16 %v1064
      %v1097 = vunpack.c.l.b16 %v1065
      %v1098 = vunpack.c.l.b16 %v1066
      %v1099 = vunpack.c.l.b16 %v1067
      %v1100 = vunpack.c.l.b16 %v1068
      %v1101 = vunpack.c.l.b16 %v1069
      %v1102 = vunpack.c.l.b16 %v1070
      %v1103 = vunpack.c.l.b16 %v1071
      %v1104 = vunpack.c.l.b16 %v1072
      %v1105 = vpack.c.b16 %v1090, %v1089
      %v1106 = vpack.c.b16 %v1092, %v1091
      %v1107 = vpack.c.b16 %v1094, %v1093
      %v1108 = vpack.c.b16 %v1096, %v1095
      %v1109 = vpack.c.b16 %v1098, %v1097
      %v1110 = vpack.c.b16 %v1100, %v1099
      %v1111 = vpack.c.b16 %v1102, %v1101
      %v1112 = vpack.c.b16 %v1104, %v1103
      %1121 = vst [vmem:[#allocation3] sm:$0xff] %v1105
      %1122 = vst [vmem:[#allocation3 + $0x18] sm:$0xff] %v1106
      %1123 = vst [vmem:[#allocation3 + $0x30] sm:$0xff] %v1107
      %1124 = vst [vmem:[#allocation3 + $0x48] sm:$0xff] %v1108
      %1125 = vst [vmem:[#allocation3 + $0x60] sm:$0xff] %v1109
      %1126 = vst [vmem:[#allocation3 + $0x78] sm:$0xff] %v1110
      %1127 = vst [vmem:[#allocation3 + $0x90] sm:$0xff] %v1111
      %1128 = vst [vmem:[#allocation3 + $0xa8] sm:$0xff] %v1112
      %v1129 = vld [vmem:[#allocation2] sm:$0xf]
      %v1130 = vld [vmem:[#allocation2 + $0x4] sm:$0xf]
      %v1131 = vld [vmem:[#allocation2 + $0x8] sm:$0x1]
      %v1132 = vld [vmem:[#allocation2 + $0xc] sm:$0xf]
      %v1133 = vld [vmem:[#allocation2 + $0x10] sm:$0xf]
      %v1134 = vld [vmem:[#allocation2 + $0x14] sm:$0x1]
      %v1135 = vld [vmem:[#allocation2 + $0x18] sm:$0xf]
      %v1136 = vld [vmem:[#allocation2 + $0x1c] sm:$0xf]
      %v1137 = vld [vmem:[#allocation2 + $0x20] sm:$0x1]
      %v1138 = vld [vmem:[#allocation2 + $0x24] sm:$0xf]
      %v1139 = vld [vmem:[#allocation2 + $0x28] sm:$0xf]
      %v1140 = vld [vmem:[#allocation2 + $0x2c] sm:$0x1]
      %v1141 = vld [vmem:[#allocation2 + $0x30] sm:$0xf]
      %v1142 = vld [vmem:[#allocation2 + $0x34] sm:$0xf]
      %v1143 = vld [vmem:[#allocation2 + $0x38] sm:$0x1]
      %v1144 = vld [vmem:[#allocation2 + $0x3c] sm:$0xf]
      %v1145 = vld [vmem:[#allocation2 + $0x40] sm:$0xf]
      %v1146 = vld [vmem:[#allocation2 + $0x44] sm:$0x1]
      %v1147 = vld [vmem:[#allocation2 + $0x48] sm:$0xf]
      %v1148 = vld [vmem:[#allocation2 + $0x4c] sm:$0xf]
      %v1149 = vld [vmem:[#allocation2 + $0x50] sm:$0x1]
      %v1150 = vld [vmem:[#allocation2 + $0x54] sm:$0xf]
      %v1151 = vld [vmem:[#allocation2 + $0x58] sm:$0xf]
      %v1152 = vld [vmem:[#allocation2 + $0x5c] sm:$0x1]
      %vm1153 = vsmask.f32 3328
      %vm1154 = vsmask.f32 7440
      %vm1155 = vmor %vm1153, %vm1154
      %v1157 = vshrl.u32 %v1129, 16
      %v1159 = vrot.slane %v1157, 4
      %v1160 = vshll.u32 %v1129, 16
      %v1162 = vrot.slane %v1160, 5
      %v1163 = vor.u32 %v1159, %v1162
      %v1164 = vrot.slane %v1163, 4
      %v1166 = vshll.u32 %v1130, 16
      %v1168 = vrot.slane %v1166, 5
      %v1169 = vsel %vm1155, %v1164, %v1168
      %v1170 = vshrl.u32 %v1130, 16
      %v1172 = vrot.slane %v1170, 4
      %v1173 = vor.u32 %v1172, %v1168
      %v1174 = vrot.slane %v1173, 4
      %v1176 = vshll.u32 %v1131, 16
      %v1178 = vrot.slane %v1176, 5
      %v1179 = vsel %vm1155, %v1174, %v1178
      %v1181 = vshrl.u32 %v1132, 16
      %v1183 = vrot.slane %v1181, 4
      %v1184 = vshll.u32 %v1132, 16
      %v1186 = vrot.slane %v1184, 5
      %v1187 = vor.u32 %v1183, %v1186
      %v1188 = vrot.slane %v1187, 4
      %v1190 = vshll.u32 %v1133, 16
      %v1192 = vrot.slane %v1190, 5
      %v1193 = vsel %vm1155, %v1188, %v1192
      %v1194 = vshrl.u32 %v1133, 16
      %v1196 = vrot.slane %v1194, 4
      %v1197 = vor.u32 %v1196, %v1192
      %v1198 = vrot.slane %v1197, 4
      %v1200 = vshll.u32 %v1134, 16
      %v1202 = vrot.slane %v1200, 5
      %v1203 = vsel %vm1155, %v1198, %v1202
      %v1205 = vshrl.u32 %v1135, 16
      %v1207 = vrot.slane %v1205, 4
      %v1208 = vshll.u32 %v1135, 16
      %v1210 = vrot.slane %v1208, 5
      %v1211 = vor.u32 %v1207, %v1210
      %v1212 = vrot.slane %v1211, 4
      %v1214 = vshll.u32 %v1136, 16
      %v1216 = vrot.slane %v1214, 5
      %v1217 = vsel %vm1155, %v1212, %v1216
      %v1218 = vshrl.u32 %v1136, 16
      %v1220 = vrot.slane %v1218, 4
      %v1221 = vor.u32 %v1220, %v1216
      %v1222 = vrot.slane %v1221, 4
      %v1224 = vshll.u32 %v1137, 16
      %v1226 = vrot.slane %v1224, 5
      %v1227 = vsel %vm1155, %v1222, %v1226
      %v1229 = vshrl.u32 %v1138, 16
      %v1231 = vrot.slane %v1229, 4
      %v1232 = vshll.u32 %v1138, 16
      %v1234 = vrot.slane %v1232, 5
      %v1235 = vor.u32 %v1231, %v1234
      %v1236 = vrot.slane %v1235, 4
      %v1238 = vshll.u32 %v1139, 16
      %v1240 = vrot.slane %v1238, 5
      %v1241 = vsel %vm1155, %v1236, %v1240
      %v1242 = vshrl.u32 %v1139, 16
      %v1244 = vrot.slane %v1242, 4
      %v1245 = vor.u32 %v1244, %v1240
      %v1246 = vrot.slane %v1245, 4
      %v1248 = vshll.u32 %v1140, 16
      %v1250 = vrot.slane %v1248, 5
      %v1251 = vsel %vm1155, %v1246, %v1250
      %v1253 = vshrl.u32 %v1141, 16
      %v1255 = vrot.slane %v1253, 4
      %v1256 = vshll.u32 %v1141, 16
      %v1258 = vrot.slane %v1256, 5
      %v1259 = vor.u32 %v1255, %v1258
      %v1260 = vrot.slane %v1259, 4
      %v1262 = vshll.u32 %v1142, 16
      %v1264 = vrot.slane %v1262, 5
      %v1265 = vsel %vm1155, %v1260, %v1264
      %v1266 = vshrl.u32 %v1142, 16
      %v1268 = vrot.slane %v1266, 4
      %v1269 = vor.u32 %v1268, %v1264
      %v1270 = vrot.slane %v1269, 4
      %v1272 = vshll.u32 %v1143, 16
      %v1274 = vrot.slane %v1272, 5
      %v1275 = vsel %vm1155, %v1270, %v1274
      %v1277 = vshrl.u32 %v1144, 16
      %v1279 = vrot.slane %v1277, 4
      %v1280 = vshll.u32 %v1144, 16
      %v1282 = vrot.slane %v1280, 5
      %v1283 = vor.u32 %v1279, %v1282
      %v1284 = vrot.slane %v1283, 4
      %v1286 = vshll.u32 %v1145, 16
      %v1288 = vrot.slane %v1286, 5
      %v1289 = vsel %vm1155, %v1284, %v1288
      %v1290 = vshrl.u32 %v1145, 16
      %v1292 = vrot.slane %v1290, 4
      %v1293 = vor.u32 %v1292, %v1288
      %v1294 = vrot.slane %v1293, 4
      %v1296 = vshll.u32 %v1146, 16
      %v1298 = vrot.slane %v1296, 5
      %v1299 = vsel %vm1155, %v1294, %v1298
      %v1301 = vshrl.u32 %v1147, 16
      %v1303 = vrot.slane %v1301, 4
      %v1304 = vshll.u32 %v1147, 16
      %v1306 = vrot.slane %v1304, 5
      %v1307 = vor.u32 %v1303, %v1306
      %v1308 = vrot.slane %v1307, 4
      %v1310 = vshll.u32 %v1148, 16
      %v1312 = vrot.slane %v1310, 5
      %v1313 = vsel %vm1155, %v1308, %v1312
      %v1314 = vshrl.u32 %v1148, 16
      %v1316 = vrot.slane %v1314, 4
      %v1317 = vor.u32 %v1316, %v1312
      %v1318 = vrot.slane %v1317, 4
      %v1320 = vshll.u32 %v1149, 16
      %v1322 = vrot.slane %v1320, 5
      %v1323 = vsel %vm1155, %v1318, %v1322
      %v1325 = vshrl.u32 %v1150, 16
      %v1327 = vrot.slane %v1325, 4
      %v1328 = vshll.u32 %v1150, 16
      %v1330 = vrot.slane %v1328, 5
      %v1331 = vor.u32 %v1327, %v1330
      %v1332 = vrot.slane %v1331, 4
      %v1334 = vshll.u32 %v1151, 16
      %v1336 = vrot.slane %v1334, 5
      %v1337 = vsel %vm1155, %v1332, %v1336
      %v1338 = vshrl.u32 %v1151, 16
      %v1340 = vrot.slane %v1338, 4
      %v1341 = vor.u32 %v1340, %v1336
      %v1342 = vrot.slane %v1341, 4
      %v1344 = vshll.u32 %v1152, 16
      %v1346 = vrot.slane %v1344, 5
      %v1347 = vsel %vm1155, %v1342, %v1346
      %v1348 = vunpack.c.l.b16 %v1169
      %v1349 = vunpack.c.l.b16 %v1179
      %v1350 = vunpack.c.l.b16 %v1193
      %v1351 = vunpack.c.l.b16 %v1203
      %v1352 = vunpack.c.l.b16 %v1217
      %v1353 = vunpack.c.l.b16 %v1227
      %v1354 = vunpack.c.l.b16 %v1241
      %v1355 = vunpack.c.l.b16 %v1251
      %v1356 = vunpack.c.l.b16 %v1265
      %v1357 = vunpack.c.l.b16 %v1275
      %v1358 = vunpack.c.l.b16 %v1289
      %v1359 = vunpack.c.l.b16 %v1299
      %v1360 = vunpack.c.l.b16 %v1313
      %v1361 = vunpack.c.l.b16 %v1323
      %v1362 = vunpack.c.l.b16 %v1337
      %v1363 = vunpack.c.l.b16 %v1347
      %v1364 = vpack.c.b16 %v1349, %v1348
      %v1365 = vpack.c.b16 %v1351, %v1350
      %v1366 = vpack.c.b16 %v1353, %v1352
      %v1367 = vpack.c.b16 %v1355, %v1354
      %v1368 = vpack.c.b16 %v1357, %v1356
      %v1369 = vpack.c.b16 %v1359, %v1358
      %v1370 = vpack.c.b16 %v1361, %v1360
      %v1371 = vpack.c.b16 %v1363, %v1362
      %1380 = vst [vmem:[#allocation3 + $0x8] sm:$0xff] %v1364
      %1381 = vst [vmem:[#allocation3 + $0x20] sm:$0xff] %v1365
      %1382 = vst [vmem:[#allocation3 + $0x38] sm:$0xff] %v1366
      %1383 = vst [vmem:[#allocation3 + $0x50] sm:$0xff] %v1367
      %1384 = vst [vmem:[#allocation3 + $0x68] sm:$0xff] %v1368
      %1385 = vst [vmem:[#allocation3 + $0x80] sm:$0xff] %v1369
      %1386 = vst [vmem:[#allocation3 + $0x98] sm:$0xff] %v1370
      %1387 = vst [vmem:[#allocation3 + $0xb0] sm:$0xff] %v1371
      %v1388 = vld [vmem:[#allocation2] sm:$0xe]
      %v1389 = vld [vmem:[#allocation2 + $0x4] sm:$0xf]
      %v1390 = vld [vmem:[#allocation2 + $0x8] sm:$0x1]
      %v1391 = vld [vmem:[#allocation2 + $0xc] sm:$0xe]
      %v1392 = vld [vmem:[#allocation2 + $0x10] sm:$0xf]
      %v1393 = vld [vmem:[#allocation2 + $0x14] sm:$0x1]
      %v1394 = vld [vmem:[#allocation2 + $0x18] sm:$0xe]
      %v1395 = vld [vmem:[#allocation2 + $0x1c] sm:$0xf]
      %v1396 = vld [vmem:[#allocation2 + $0x20] sm:$0x1]
      %v1397 = vld [vmem:[#allocation2 + $0x24] sm:$0xe]
      %v1398 = vld [vmem:[#allocation2 + $0x28] sm:$0xf]
      %v1399 = vld [vmem:[#allocation2 + $0x2c] sm:$0x1]
      %v1400 = vld [vmem:[#allocation2 + $0x30] sm:$0xe]
      %v1401 = vld [vmem:[#allocation2 + $0x34] sm:$0xf]
      %v1402 = vld [vmem:[#allocation2 + $0x38] sm:$0x1]
      %v1403 = vld [vmem:[#allocation2 + $0x3c] sm:$0xe]
      %v1404 = vld [vmem:[#allocation2 + $0x40] sm:$0xf]
      %v1405 = vld [vmem:[#allocation2 + $0x44] sm:$0x1]
      %v1406 = vld [vmem:[#allocation2 + $0x48] sm:$0xe]
      %v1407 = vld [vmem:[#allocation2 + $0x4c] sm:$0xf]
      %v1408 = vld [vmem:[#allocation2 + $0x50] sm:$0x1]
      %v1409 = vld [vmem:[#allocation2 + $0x54] sm:$0xe]
      %v1410 = vld [vmem:[#allocation2 + $0x58] sm:$0xf]
      %v1411 = vld [vmem:[#allocation2 + $0x5c] sm:$0x1]
      %vm1436 = vcmask 1042432
      %vm1437 = vcmask 1046532
      %vm1438 = vmor %vm1436, %vm1437
      %v1439 = vrot.slane %v1388, 5
      %v1440 = vrot.slane %v1439, 4
      %v1441 = vrot.slane %v1389, 5
      %v1442 = vsel %vm1438, %v1440, %v1441
      %v1443 = vrot.slane %v1441, 4
      %v1444 = vrot.slane %v1390, 5
      %v1445 = vsel %vm1438, %v1443, %v1444
      %v1446 = vrot.slane %v1391, 5
      %v1447 = vrot.slane %v1446, 4
      %v1448 = vrot.slane %v1392, 5
      %v1449 = vsel %vm1438, %v1447, %v1448
      %v1450 = vrot.slane %v1448, 4
      %v1451 = vrot.slane %v1393, 5
      %v1452 = vsel %vm1438, %v1450, %v1451
      %v1453 = vrot.slane %v1394, 5
      %v1454 = vrot.slane %v1453, 4
      %v1455 = vrot.slane %v1395, 5
      %v1456 = vsel %vm1438, %v1454, %v1455
      %v1457 = vrot.slane %v1455, 4
      %v1458 = vrot.slane %v1396, 5
      %v1459 = vsel %vm1438, %v1457, %v1458
      %v1460 = vrot.slane %v1397, 5
      %v1461 = vrot.slane %v1460, 4
      %v1462 = vrot.slane %v1398, 5
      %v1463 = vsel %vm1438, %v1461, %v1462
      %v1464 = vrot.slane %v1462, 4
      %v1465 = vrot.slane %v1399, 5
      %v1466 = vsel %vm1438, %v1464, %v1465
      %v1467 = vrot.slane %v1400, 5
      %v1468 = vrot.slane %v1467, 4
      %v1469 = vrot.slane %v1401, 5
      %v1470 = vsel %vm1438, %v1468, %v1469
      %v1471 = vrot.slane %v1469, 4
      %v1472 = vrot.slane %v1402, 5
      %v1473 = vsel %vm1438, %v1471, %v1472
      %v1474 = vrot.slane %v1403, 5
      %v1475 = vrot.slane %v1474, 4
      %v1476 = vrot.slane %v1404, 5
      %v1477 = vsel %vm1438, %v1475, %v1476
      %v1478 = vrot.slane %v1476, 4
      %v1479 = vrot.slane %v1405, 5
      %v1480 = vsel %vm1438, %v1478, %v1479
      %v1481 = vrot.slane %v1406, 5
      %v1482 = vrot.slane %v1481, 4
      %v1483 = vrot.slane %v1407, 5
      %v1484 = vsel %vm1438, %v1482, %v1483
      %v1485 = vrot.slane %v1483, 4
      %v1486 = vrot.slane %v1408, 5
      %v1487 = vsel %vm1438, %v1485, %v1486
      %v1488 = vrot.slane %v1409, 5
      %v1489 = vrot.slane %v1488, 4
      %v1490 = vrot.slane %v1410, 5
      %v1491 = vsel %vm1438, %v1489, %v1490
      %v1492 = vrot.slane %v1490, 4
      %v1493 = vrot.slane %v1411, 5
      %v1494 = vsel %vm1438, %v1492, %v1493
      %v1495 = vunpack.c.l.b16 %v1442
      %v1496 = vunpack.c.l.b16 %v1445
      %v1497 = vunpack.c.l.b16 %v1449
      %v1498 = vunpack.c.l.b16 %v1452
      %v1499 = vunpack.c.l.b16 %v1456
      %v1500 = vunpack.c.l.b16 %v1459
      %v1501 = vunpack.c.l.b16 %v1463
      %v1502 = vunpack.c.l.b16 %v1466
      %v1503 = vunpack.c.l.b16 %v1470
      %v1504 = vunpack.c.l.b16 %v1473
      %v1505 = vunpack.c.l.b16 %v1477
      %v1506 = vunpack.c.l.b16 %v1480
      %v1507 = vunpack.c.l.b16 %v1484
      %v1508 = vunpack.c.l.b16 %v1487
      %v1509 = vunpack.c.l.b16 %v1491
      %v1510 = vunpack.c.l.b16 %v1494
      %v1511 = vpack.c.b16 %v1496, %v1495
      %v1512 = vpack.c.b16 %v1498, %v1497
      %v1513 = vpack.c.b16 %v1500, %v1499
      %v1514 = vpack.c.b16 %v1502, %v1501
      %v1515 = vpack.c.b16 %v1504, %v1503
      %v1516 = vpack.c.b16 %v1506, %v1505
      %v1517 = vpack.c.b16 %v1508, %v1507
      %v1518 = vpack.c.b16 %v1510, %v1509
      %1527 = vst [vmem:[#allocation3 + $0x10] sm:$0xff] %v1511
      %1528 = vst [vmem:[#allocation3 + $0x28] sm:$0xff] %v1512
      %1529 = vst [vmem:[#allocation3 + $0x40] sm:$0xff] %v1513
      %1530 = vst [vmem:[#allocation3 + $0x58] sm:$0xff] %v1514
      %1531 = vst [vmem:[#allocation3 + $0x70] sm:$0xff] %v1515
      %1532 = vst [vmem:[#allocation3 + $0x88] sm:$0xff] %v1516
      %1533 = vst [vmem:[#allocation3 + $0xa0] sm:$0xff] %v1517
      %1534 = vst [vmem:[#allocation3 + $0xb8] sm:$0xff] %v1518
      %v1535 = vld [vmem:[#allocation3] sm:$0xff]
      %v1536 = vld [vmem:[#allocation3 + $0x8] sm:$0xff]
      %v1537 = vld [vmem:[#allocation3 + $0x10] sm:$0xff]
      %v1538 = vld [vmem:[#allocation3 + $0x18] sm:$0xff]
      %v1539 = vld [vmem:[#allocation3 + $0x20] sm:$0xff]
      %v1540 = vld [vmem:[#allocation3 + $0x28] sm:$0xff]
      %v1541 = vld [vmem:[#allocation3 + $0x30] sm:$0xff]
      %v1542 = vld [vmem:[#allocation3 + $0x38] sm:$0xff]
      %v1543 = vld [vmem:[#allocation3 + $0x40] sm:$0xff]
      %v1544 = vld [vmem:[#allocation3 + $0x48] sm:$0xff]
      %v1545 = vld [vmem:[#allocation3 + $0x50] sm:$0xff]
      %v1546 = vld [vmem:[#allocation3 + $0x58] sm:$0xff]
      %v1547 = vld [vmem:[#allocation3 + $0x60] sm:$0xff]
      %v1548 = vld [vmem:[#allocation3 + $0x68] sm:$0xff]
      %v1549 = vld [vmem:[#allocation3 + $0x70] sm:$0xff]
      %v1550 = vld [vmem:[#allocation3 + $0x78] sm:$0xff]
      %v1551 = vld [vmem:[#allocation3 + $0x80] sm:$0xff]
      %v1552 = vld [vmem:[#allocation3 + $0x88] sm:$0xff]
      %v1553 = vld [vmem:[#allocation3 + $0x90] sm:$0xff]
      %v1554 = vld [vmem:[#allocation3 + $0x98] sm:$0xff]
      %v1555 = vld [vmem:[#allocation3 + $0xa0] sm:$0xff]
      %v1556 = vld [vmem:[#allocation3 + $0xa8] sm:$0xff]
      %v1557 = vld [vmem:[#allocation3 + $0xb0] sm:$0xff]
      %v1558 = vld [vmem:[#allocation3 + $0xb8] sm:$0xff]
      %v1559 = vld [vmem:[%s3] sm:$0xf]
      %v1560 = vld [vmem:[%s3 + $0x4] sm:$0xf]
      %v1561 = vld [vmem:[%s3 + $0x8] sm:$0xf]
      %v1562 = vld [vmem:[%s3 + $0xc] sm:$0xf]
      %v1563 = vld [vmem:[%s3 + $0x10] sm:$0xf]
      %v1564 = vld [vmem:[%s3 + $0x14] sm:$0xf]
      %v1565 = vld [vmem:[%s3 + $0x18] sm:$0xf]
      %v1566 = vld [vmem:[%s3 + $0x1c] sm:$0xf]
      %v1567 = vld [vmem:[%s3 + $0x20] sm:$0xf]
      %v1568 = vld [vmem:[%s3 + $0x24] sm:$0xf]
      %v1569 = vld [vmem:[%s3 + $0x28] sm:$0xf]
      %v1570 = vld [vmem:[%s3 + $0x2c] sm:$0xf]
      %v1571 = vld [vmem:[%s3 + $0x30] sm:$0xf]
      %v1572 = vld [vmem:[%s3 + $0x34] sm:$0xf]
      %v1573 = vld [vmem:[%s3 + $0x38] sm:$0xf]
      %v1574 = vld [vmem:[%s3 + $0x3c] sm:$0xf]
      %v1575 = vld [vmem:[%s3 + $0x40] sm:$0xf]
      %v1576 = vld [vmem:[%s3 + $0x44] sm:$0xf]
      %v1577 = vld [vmem:[%s3 + $0x48] sm:$0xf]
      %v1578 = vld [vmem:[%s3 + $0x4c] sm:$0xf]
      %v1579 = vld [vmem:[%s3 + $0x50] sm:$0xf]
      %v1580 = vld [vmem:[%s3 + $0x54] sm:$0xf]
      %v1581 = vld [vmem:[%s3 + $0x58] sm:$0xf]
      %v1582 = vld [vmem:[%s3 + $0x5c] sm:$0xf]
      %v1583 = vld [vmem:[%s3 + $0x60] sm:$0xf]
      %v1584 = vld [vmem:[%s3 + $0x64] sm:$0xf]
      %v1585 = vld [vmem:[%s3 + $0x68] sm:$0xf]
      %v1586 = vld [vmem:[%s3 + $0x6c] sm:$0xf]
      %v1587 = vld [vmem:[%s3 + $0x70] sm:$0xf]
      %v1588 = vld [vmem:[%s3 + $0x74] sm:$0xf]
      %v1589 = vld [vmem:[%s3 + $0x78] sm:$0xf]
      %v1590 = vld [vmem:[%s3 + $0x7c] sm:$0xf]
      %v1591 = vld [vmem:[%s3 + $0x80] sm:$0xf]
      %v1592 = vld [vmem:[%s3 + $0x84] sm:$0xf]
      %v1593 = vld [vmem:[%s3 + $0x88] sm:$0xf]
      %v1594 = vld [vmem:[%s3 + $0x8c] sm:$0xf]
      %v1595 = vld [vmem:[%s3 + $0x90] sm:$0xf]
      %v1596 = vld [vmem:[%s3 + $0x94] sm:$0xf]
      %v1597 = vld [vmem:[%s3 + $0x98] sm:$0xf]
      %v1598 = vld [vmem:[%s3 + $0x9c] sm:$0xf]
      %v1599 = vld [vmem:[%s3 + $0xa0] sm:$0xf]
      %v1600 = vld [vmem:[%s3 + $0xa4] sm:$0xf]
      %v1601 = vld [vmem:[%s3 + $0xa8] sm:$0xf]
      %v1602 = vld [vmem:[%s3 + $0xac] sm:$0xf]
      %v1603 = vld [vmem:[%s3 + $0xb0] sm:$0xf]
      %v1604 = vld [vmem:[%s3 + $0xb4] sm:$0xf]
      %v1605 = vld [vmem:[%s3 + $0xb8] sm:$0xf]
      %v1606 = vld [vmem:[%s3 + $0xbc] sm:$0xf]
      %v1607 = vld [vmem:[%s852] sm:$0xf]
      %v1608 = vld [vmem:[%s852 + $0x4] sm:$0xf]
      %v1609 = vld [vmem:[%s852 + $0xc] sm:$0xf]
      %v1610 = vld [vmem:[%s852 + $0x10] sm:$0xf]
      %v1611 = vld [vmem:[%s852 + $0x18] sm:$0xf]
      %v1612 = vld [vmem:[%s852 + $0x1c] sm:$0xf]
      %v1613 = vld [vmem:[%s852 + $0x24] sm:$0xf]
      %v1614 = vld [vmem:[%s852 + $0x28] sm:$0xf]
      %v1615 = vld [vmem:[%s852 + $0x30] sm:$0xf]
      %v1616 = vld [vmem:[%s852 + $0x34] sm:$0xf]
      %v1617 = vld [vmem:[%s852 + $0x3c] sm:$0xf]
      %v1618 = vld [vmem:[%s852 + $0x40] sm:$0xf]
      %v1619 = vld [vmem:[%s852 + $0x48] sm:$0xf]
      %v1620 = vld [vmem:[%s852 + $0x4c] sm:$0xf]
      %v1621 = vld [vmem:[%s852 + $0x54] sm:$0xf]
      %v1622 = vld [vmem:[%s852 + $0x58] sm:$0xf]
      %v1639 = vunpack.c.l.b16 %v1607
      %v1640 = vunpack.c.l.b16 %v1608
      %v1641 = vunpack.c.l.b16 %v1609
      %v1642 = vunpack.c.l.b16 %v1610
      %v1643 = vunpack.c.l.b16 %v1611
      %v1644 = vunpack.c.l.b16 %v1612
      %v1645 = vunpack.c.l.b16 %v1613
      %v1646 = vunpack.c.l.b16 %v1614
      %v1647 = vunpack.c.l.b16 %v1615
      %v1648 = vunpack.c.l.b16 %v1616
      %v1649 = vunpack.c.l.b16 %v1617
      %v1650 = vunpack.c.l.b16 %v1618
      %v1651 = vunpack.c.l.b16 %v1619
      %v1652 = vunpack.c.l.b16 %v1620
      %v1653 = vunpack.c.l.b16 %v1621
      %v1654 = vunpack.c.l.b16 %v1622
      %v1655 = vpack.c.b16 %v1640, %v1639
      %v1656 = vpack.c.b16 %v1642, %v1641
      %v1657 = vpack.c.b16 %v1644, %v1643
      %v1658 = vpack.c.b16 %v1646, %v1645
      %v1659 = vpack.c.b16 %v1648, %v1647
      %v1660 = vpack.c.b16 %v1650, %v1649
      %v1661 = vpack.c.b16 %v1652, %v1651
      %v1662 = vpack.c.b16 %v1654, %v1653
      %1671 = vst [vmem:[#allocation3] sm:$0xff] %v1655
      %1672 = vst [vmem:[#allocation3 + $0x18] sm:$0xff] %v1656
      %1673 = vst [vmem:[#allocation3 + $0x30] sm:$0xff] %v1657
      %1674 = vst [vmem:[#allocation3 + $0x48] sm:$0xff] %v1658
      %1675 = vst [vmem:[#allocation3 + $0x60] sm:$0xff] %v1659
      %1676 = vst [vmem:[#allocation3 + $0x78] sm:$0xff] %v1660
      %1677 = vst [vmem:[#allocation3 + $0x90] sm:$0xff] %v1661
      %1678 = vst [vmem:[#allocation3 + $0xa8] sm:$0xff] %v1662
      %v1679 = vld [vmem:[%s852] sm:$0xf]
      %v1680 = vld [vmem:[%s852 + $0x4] sm:$0xf]
      %v1681 = vld [vmem:[%s852 + $0x8] sm:$0x1]
      %v1682 = vld [vmem:[%s852 + $0xc] sm:$0xf]
      %v1683 = vld [vmem:[%s852 + $0x10] sm:$0xf]
      %v1684 = vld [vmem:[%s852 + $0x14] sm:$0x1]
      %v1685 = vld [vmem:[%s852 + $0x18] sm:$0xf]
      %v1686 = vld [vmem:[%s852 + $0x1c] sm:$0xf]
      %v1687 = vld [vmem:[%s852 + $0x20] sm:$0x1]
      %v1688 = vld [vmem:[%s852 + $0x24] sm:$0xf]
      %v1689 = vld [vmem:[%s852 + $0x28] sm:$0xf]
      %v1690 = vld [vmem:[%s852 + $0x2c] sm:$0x1]
      %v1691 = vld [vmem:[%s852 + $0x30] sm:$0xf]
      %v1692 = vld [vmem:[%s852 + $0x34] sm:$0xf]
      %v1693 = vld [vmem:[%s852 + $0x38] sm:$0x1]
      %v1694 = vld [vmem:[%s852 + $0x3c] sm:$0xf]
      %v1695 = vld [vmem:[%s852 + $0x40] sm:$0xf]
      %v1696 = vld [vmem:[%s852 + $0x44] sm:$0x1]
      %v1697 = vld [vmem:[%s852 + $0x48] sm:$0xf]
      %v1698 = vld [vmem:[%s852 + $0x4c] sm:$0xf]
      %v1699 = vld [vmem:[%s852 + $0x50] sm:$0x1]
      %v1700 = vld [vmem:[%s852 + $0x54] sm:$0xf]
      %v1701 = vld [vmem:[%s852 + $0x58] sm:$0xf]
      %v1702 = vld [vmem:[%s852 + $0x5c] sm:$0x1]
      %v1704 = vshrl.u32 %v1679, 16
      %v1706 = vrot.slane %v1704, 4
      %v1707 = vshll.u32 %v1679, 16
      %v1709 = vrot.slane %v1707, 5
      %v1710 = vor.u32 %v1706, %v1709
      %v1711 = vrot.slane %v1710, 4
      %v1713 = vshll.u32 %v1680, 16
      %v1715 = vrot.slane %v1713, 5
      %v1716 = vsel %vm1155, %v1711, %v1715
      %v1717 = vshrl.u32 %v1680, 16
      %v1719 = vrot.slane %v1717, 4
      %v1720 = vor.u32 %v1719, %v1715
      %v1721 = vrot.slane %v1720, 4
      %v1723 = vshll.u32 %v1681, 16
      %v1725 = vrot.slane %v1723, 5
      %v1726 = vsel %vm1155, %v1721, %v1725
      %v1728 = vshrl.u32 %v1682, 16
      %v1730 = vrot.slane %v1728, 4
      %v1731 = vshll.u32 %v1682, 16
      %v1733 = vrot.slane %v1731, 5
      %v1734 = vor.u32 %v1730, %v1733
      %v1735 = vrot.slane %v1734, 4
      %v1737 = vshll.u32 %v1683, 16
      %v1739 = vrot.slane %v1737, 5
      %v1740 = vsel %vm1155, %v1735, %v1739
      %v1741 = vshrl.u32 %v1683, 16
      %v1743 = vrot.slane %v1741, 4
      %v1744 = vor.u32 %v1743, %v1739
      %v1745 = vrot.slane %v1744, 4
      %v1747 = vshll.u32 %v1684, 16
      %v1749 = vrot.slane %v1747, 5
      %v1750 = vsel %vm1155, %v1745, %v1749
      %v1752 = vshrl.u32 %v1685, 16
      %v1754 = vrot.slane %v1752, 4
      %v1755 = vshll.u32 %v1685, 16
      %v1757 = vrot.slane %v1755, 5
      %v1758 = vor.u32 %v1754, %v1757
      %v1759 = vrot.slane %v1758, 4
      %v1761 = vshll.u32 %v1686, 16
      %v1763 = vrot.slane %v1761, 5
      %v1764 = vsel %vm1155, %v1759, %v1763
      %v1765 = vshrl.u32 %v1686, 16
      %v1767 = vrot.slane %v1765, 4
      %v1768 = vor.u32 %v1767, %v1763
      %v1769 = vrot.slane %v1768, 4
      %v1771 = vshll.u32 %v1687, 16
      %v1773 = vrot.slane %v1771, 5
      %v1774 = vsel %vm1155, %v1769, %v1773
      %v1776 = vshrl.u32 %v1688, 16
      %v1778 = vrot.slane %v1776, 4
      %v1779 = vshll.u32 %v1688, 16
      %v1781 = vrot.slane %v1779, 5
      %v1782 = vor.u32 %v1778, %v1781
      %v1783 = vrot.slane %v1782, 4
      %v1785 = vshll.u32 %v1689, 16
      %v1787 = vrot.slane %v1785, 5
      %v1788 = vsel %vm1155, %v1783, %v1787
      %v1789 = vshrl.u32 %v1689, 16
      %v1791 = vrot.slane %v1789, 4
      %v1792 = vor.u32 %v1791, %v1787
      %v1793 = vrot.slane %v1792, 4
      %v1795 = vshll.u32 %v1690, 16
      %v1797 = vrot.slane %v1795, 5
      %v1798 = vsel %vm1155, %v1793, %v1797
      %v1800 = vshrl.u32 %v1691, 16
      %v1802 = vrot.slane %v1800, 4
      %v1803 = vshll.u32 %v1691, 16
      %v1805 = vrot.slane %v1803, 5
      %v1806 = vor.u32 %v1802, %v1805
      %v1807 = vrot.slane %v1806, 4
      %v1809 = vshll.u32 %v1692, 16
      %v1811 = vrot.slane %v1809, 5
      %v1812 = vsel %vm1155, %v1807, %v1811
      %v1813 = vshrl.u32 %v1692, 16
      %v1815 = vrot.slane %v1813, 4
      %v1816 = vor.u32 %v1815, %v1811
      %v1817 = vrot.slane %v1816, 4
      %v1819 = vshll.u32 %v1693, 16
      %v1821 = vrot.slane %v1819, 5
      %v1822 = vsel %vm1155, %v1817, %v1821
      %v1824 = vshrl.u32 %v1694, 16
      %v1826 = vrot.slane %v1824, 4
      %v1827 = vshll.u32 %v1694, 16
      %v1829 = vrot.slane %v1827, 5
      %v1830 = vor.u32 %v1826, %v1829
      %v1831 = vrot.slane %v1830, 4
      %v1833 = vshll.u32 %v1695, 16
      %v1835 = vrot.slane %v1833, 5
      %v1836 = vsel %vm1155, %v1831, %v1835
      %v1837 = vshrl.u32 %v1695, 16
      %v1839 = vrot.slane %v1837, 4
      %v1840 = vor.u32 %v1839, %v1835
      %v1841 = vrot.slane %v1840, 4
      %v1843 = vshll.u32 %v1696, 16
      %v1845 = vrot.slane %v1843, 5
      %v1846 = vsel %vm1155, %v1841, %v1845
      %v1848 = vshrl.u32 %v1697, 16
      %v1850 = vrot.slane %v1848, 4
      %v1851 = vshll.u32 %v1697, 16
      %v1853 = vrot.slane %v1851, 5
      %v1854 = vor.u32 %v1850, %v1853
      %v1855 = vrot.slane %v1854, 4
      %v1857 = vshll.u32 %v1698, 16
      %v1859 = vrot.slane %v1857, 5
      %v1860 = vsel %vm1155, %v1855, %v1859
      %v1861 = vshrl.u32 %v1698, 16
      %v1863 = vrot.slane %v1861, 4
      %v1864 = vor.u32 %v1863, %v1859
      %v1865 = vrot.slane %v1864, 4
      %v1867 = vshll.u32 %v1699, 16
      %v1869 = vrot.slane %v1867, 5
      %v1870 = vsel %vm1155, %v1865, %v1869
      %v1872 = vshrl.u32 %v1700, 16
      %v1874 = vrot.slane %v1872, 4
      %v1875 = vshll.u32 %v1700, 16
      %v1877 = vrot.slane %v1875, 5
      %v1878 = vor.u32 %v1874, %v1877
      %v1879 = vrot.slane %v1878, 4
      %v1881 = vshll.u32 %v1701, 16
      %v1883 = vrot.slane %v1881, 5
      %v1884 = vsel %vm1155, %v1879, %v1883
      %v1885 = vshrl.u32 %v1701, 16
      %v1887 = vrot.slane %v1885, 4
      %v1888 = vor.u32 %v1887, %v1883
      %v1889 = vrot.slane %v1888, 4
      %v1891 = vshll.u32 %v1702, 16
      %v1893 = vrot.slane %v1891, 5
      %v1894 = vsel %vm1155, %v1889, %v1893
      %v1895 = vunpack.c.l.b16 %v1716
      %v1896 = vunpack.c.l.b16 %v1726
      %v1897 = vunpack.c.l.b16 %v1740
      %v1898 = vunpack.c.l.b16 %v1750
      %v1899 = vunpack.c.l.b16 %v1764
      %v1900 = vunpack.c.l.b16 %v1774
      %v1901 = vunpack.c.l.b16 %v1788
      %v1902 = vunpack.c.l.b16 %v1798
      %v1903 = vunpack.c.l.b16 %v1812
      %v1904 = vunpack.c.l.b16 %v1822
      %v1905 = vunpack.c.l.b16 %v1836
      %v1906 = vunpack.c.l.b16 %v1846
      %v1907 = vunpack.c.l.b16 %v1860
      %v1908 = vunpack.c.l.b16 %v1870
      %v1909 = vunpack.c.l.b16 %v1884
      %v1910 = vunpack.c.l.b16 %v1894
      %v1911 = vpack.c.b16 %v1896, %v1895
      %v1912 = vpack.c.b16 %v1898, %v1897
      %v1913 = vpack.c.b16 %v1900, %v1899
      %v1914 = vpack.c.b16 %v1902, %v1901
      %v1915 = vpack.c.b16 %v1904, %v1903
      %v1916 = vpack.c.b16 %v1906, %v1905
      %v1917 = vpack.c.b16 %v1908, %v1907
      %v1918 = vpack.c.b16 %v1910, %v1909
      %1927 = vst [vmem:[#allocation3 + $0x8] sm:$0xff] %v1911
      %1928 = vst [vmem:[#allocation3 + $0x20] sm:$0xff] %v1912
      %1929 = vst [vmem:[#allocation3 + $0x38] sm:$0xff] %v1913
      %1930 = vst [vmem:[#allocation3 + $0x50] sm:$0xff] %v1914
      %1931 = vst [vmem:[#allocation3 + $0x68] sm:$0xff] %v1915
      %1932 = vst [vmem:[#allocation3 + $0x80] sm:$0xff] %v1916
      %1933 = vst [vmem:[#allocation3 + $0x98] sm:$0xff] %v1917
      %1934 = vst [vmem:[#allocation3 + $0xb0] sm:$0xff] %v1918
      %v1935 = vld [vmem:[%s852] sm:$0xe]
      %v1936 = vld [vmem:[%s852 + $0x4] sm:$0xf]
      %v1937 = vld [vmem:[%s852 + $0x8] sm:$0x1]
      %v1938 = vld [vmem:[%s852 + $0xc] sm:$0xe]
      %v1939 = vld [vmem:[%s852 + $0x10] sm:$0xf]
      %v1940 = vld [vmem:[%s852 + $0x14] sm:$0x1]
      %v1941 = vld [vmem:[%s852 + $0x18] sm:$0xe]
      %v1942 = vld [vmem:[%s852 + $0x1c] sm:$0xf]
      %v1943 = vld [vmem:[%s852 + $0x20] sm:$0x1]
      %v1944 = vld [vmem:[%s852 + $0x24] sm:$0xe]
      %v1945 = vld [vmem:[%s852 + $0x28] sm:$0xf]
      %v1946 = vld [vmem:[%s852 + $0x2c] sm:$0x1]
      %v1947 = vld [vmem:[%s852 + $0x30] sm:$0xe]
      %v1948 = vld [vmem:[%s852 + $0x34] sm:$0xf]
      %v1949 = vld [vmem:[%s852 + $0x38] sm:$0x1]
      %v1950 = vld [vmem:[%s852 + $0x3c] sm:$0xe]
      %v1951 = vld [vmem:[%s852 + $0x40] sm:$0xf]
      %v1952 = vld [vmem:[%s852 + $0x44] sm:$0x1]
      %v1953 = vld [vmem:[%s852 + $0x48] sm:$0xe]
      %v1954 = vld [vmem:[%s852 + $0x4c] sm:$0xf]
      %v1955 = vld [vmem:[%s852 + $0x50] sm:$0x1]
      %v1956 = vld [vmem:[%s852 + $0x54] sm:$0xe]
      %v1957 = vld [vmem:[%s852 + $0x58] sm:$0xf]
      %v1958 = vld [vmem:[%s852 + $0x5c] sm:$0x1]
      %v1983 = vrot.slane %v1935, 5
      %v1984 = vrot.slane %v1983, 4
      %v1985 = vrot.slane %v1936, 5
      %v1986 = vsel %vm1438, %v1984, %v1985
      %v1987 = vrot.slane %v1985, 4
      %v1988 = vrot.slane %v1937, 5
      %v1989 = vsel %vm1438, %v1987, %v1988
      %v1990 = vrot.slane %v1938, 5
      %v1991 = vrot.slane %v1990, 4
      %v1992 = vrot.slane %v1939, 5
      %v1993 = vsel %vm1438, %v1991, %v1992
      %v1994 = vrot.slane %v1992, 4
      %v1995 = vrot.slane %v1940, 5
      %v1996 = vsel %vm1438, %v1994, %v1995
      %v1997 = vrot.slane %v1941, 5
      %v1998 = vrot.slane %v1997, 4
      %v1999 = vrot.slane %v1942, 5
      %v2000 = vsel %vm1438, %v1998, %v1999
      %v2001 = vrot.slane %v1999, 4
      %v2002 = vrot.slane %v1943, 5
      %v2003 = vsel %vm1438, %v2001, %v2002
      %v2004 = vrot.slane %v1944, 5
      %v2005 = vrot.slane %v2004, 4
      %v2006 = vrot.slane %v1945, 5
      %v2007 = vsel %vm1438, %v2005, %v2006
      %v2008 = vrot.slane %v2006, 4
      %v2009 = vrot.slane %v1946, 5
      %v2010 = vsel %vm1438, %v2008, %v2009
      %v2011 = vrot.slane %v1947, 5
      %v2012 = vrot.slane %v2011, 4
      %v2013 = vrot.slane %v1948, 5
      %v2014 = vsel %vm1438, %v2012, %v2013
      %v2015 = vrot.slane %v2013, 4
      %v2016 = vrot.slane %v1949, 5
      %v2017 = vsel %vm1438, %v2015, %v2016
      %v2018 = vrot.slane %v1950, 5
      %v2019 = vrot.slane %v2018, 4
      %v2020 = vrot.slane %v1951, 5
      %v2021 = vsel %vm1438, %v2019, %v2020
      %v2022 = vrot.slane %v2020, 4
      %v2023 = vrot.slane %v1952, 5
      %v2024 = vsel %vm1438, %v2022, %v2023
      %v2025 = vrot.slane %v1953, 5
      %v2026 = vrot.slane %v2025, 4
      %v2027 = vrot.slane %v1954, 5
      %v2028 = vsel %vm1438, %v2026, %v2027
      %v2029 = vrot.slane %v2027, 4
      %v2030 = vrot.slane %v1955, 5
      %v2031 = vsel %vm1438, %v2029, %v2030
      %v2032 = vrot.slane %v1956, 5
      %v2033 = vrot.slane %v2032, 4
      %v2034 = vrot.slane %v1957, 5
      %v2035 = vsel %vm1438, %v2033, %v2034
      %v2036 = vrot.slane %v2034, 4
      %v2037 = vrot.slane %v1958, 5
      %v2038 = vsel %vm1438, %v2036, %v2037
      %v2039 = vunpack.c.l.b16 %v1986
      %v2040 = vunpack.c.l.b16 %v1989
      %v2041 = vunpack.c.l.b16 %v1993
      %v2042 = vunpack.c.l.b16 %v1996
      %v2043 = vunpack.c.l.b16 %v2000
      %v2044 = vunpack.c.l.b16 %v2003
      %v2045 = vunpack.c.l.b16 %v2007
      %v2046 = vunpack.c.l.b16 %v2010
      %v2047 = vunpack.c.l.b16 %v2014
      %v2048 = vunpack.c.l.b16 %v2017
      %v2049 = vunpack.c.l.b16 %v2021
      %v2050 = vunpack.c.l.b16 %v2024
      %v2051 = vunpack.c.l.b16 %v2028
      %v2052 = vunpack.c.l.b16 %v2031
      %v2053 = vunpack.c.l.b16 %v2035
      %v2054 = vunpack.c.l.b16 %v2038
      %v2055 = vpack.c.b16 %v2040, %v2039
      %v2056 = vpack.c.b16 %v2042, %v2041
      %v2057 = vpack.c.b16 %v2044, %v2043
      %v2058 = vpack.c.b16 %v2046, %v2045
      %v2059 = vpack.c.b16 %v2048, %v2047
      %v2060 = vpack.c.b16 %v2050, %v2049
      %v2061 = vpack.c.b16 %v2052, %v2051
      %v2062 = vpack.c.b16 %v2054, %v2053
      %2071 = vst [vmem:[#allocation3 + $0x10] sm:$0xff] %v2055
      %2072 = vst [vmem:[#allocation3 + $0x28] sm:$0xff] %v2056
      %2073 = vst [vmem:[#allocation3 + $0x40] sm:$0xff] %v2057
      %2074 = vst [vmem:[#allocation3 + $0x58] sm:$0xff] %v2058
      %2075 = vst [vmem:[#allocation3 + $0x70] sm:$0xff] %v2059
      %2076 = vst [vmem:[#allocation3 + $0x88] sm:$0xff] %v2060
      %2077 = vst [vmem:[#allocation3 + $0xa0] sm:$0xff] %v2061
      %2078 = vst [vmem:[#allocation3 + $0xb8] sm:$0xff] %v2062
      %v2079 = vld [vmem:[#allocation3] sm:$0xff]
      %v2080 = vld [vmem:[#allocation3 + $0x8] sm:$0xff]
      %v2081 = vld [vmem:[#allocation3 + $0x10] sm:$0xff]
      %v2082 = vld [vmem:[#allocation3 + $0x18] sm:$0xff]
      %v2083 = vld [vmem:[#allocation3 + $0x20] sm:$0xff]
      %v2084 = vld [vmem:[#allocation3 + $0x28] sm:$0xff]
      %v2085 = vld [vmem:[#allocation3 + $0x30] sm:$0xff]
      %v2086 = vld [vmem:[#allocation3 + $0x38] sm:$0xff]
      %v2087 = vld [vmem:[#allocation3 + $0x40] sm:$0xff]
      %v2088 = vld [vmem:[#allocation3 + $0x48] sm:$0xff]
      %v2089 = vld [vmem:[#allocation3 + $0x50] sm:$0xff]
      %v2090 = vld [vmem:[#allocation3 + $0x58] sm:$0xff]
      %v2091 = vld [vmem:[#allocation3 + $0x60] sm:$0xff]
      %v2092 = vld [vmem:[#allocation3 + $0x68] sm:$0xff]
      %v2093 = vld [vmem:[#allocation3 + $0x70] sm:$0xff]
      %v2094 = vld [vmem:[#allocation3 + $0x78] sm:$0xff]
      %v2095 = vld [vmem:[#allocation3 + $0x80] sm:$0xff]
      %v2096 = vld [vmem:[#allocation3 + $0x88] sm:$0xff]
      %v2097 = vld [vmem:[#allocation3 + $0x90] sm:$0xff]
      %v2098 = vld [vmem:[#allocation3 + $0x98] sm:$0xff]
      %v2099 = vld [vmem:[#allocation3 + $0xa0] sm:$0xff]
      %v2100 = vld [vmem:[#allocation3 + $0xa8] sm:$0xff]
      %v2101 = vld [vmem:[#allocation3 + $0xb0] sm:$0xff]
      %v2102 = vld [vmem:[#allocation3 + $0xb8] sm:$0xff]
      %s2103 = scalar_lea.vmem %s3, 192
      %v2104 = vld [vmem:[%s2103] sm:$0xf]
      %v2105 = vld [vmem:[%s2103 + $0x4] sm:$0xf]
      %v2106 = vld [vmem:[%s2103 + $0x8] sm:$0xf]
      %v2107 = vld [vmem:[%s2103 + $0xc] sm:$0xf]
      %v2108 = vld [vmem:[%s2103 + $0x10] sm:$0xf]
      %v2109 = vld [vmem:[%s2103 + $0x14] sm:$0xf]
      %v2110 = vld [vmem:[%s2103 + $0x18] sm:$0xf]
      %v2111 = vld [vmem:[%s2103 + $0x1c] sm:$0xf]
      %v2112 = vld [vmem:[%s2103 + $0x20] sm:$0xf]
      %v2113 = vld [vmem:[%s2103 + $0x24] sm:$0xf]
      %v2114 = vld [vmem:[%s2103 + $0x28] sm:$0xf]
      %v2115 = vld [vmem:[%s2103 + $0x2c] sm:$0xf]
      %v2116 = vld [vmem:[%s2103 + $0x30] sm:$0xf]
      %v2117 = vld [vmem:[%s2103 + $0x34] sm:$0xf]
      %v2118 = vld [vmem:[%s2103 + $0x38] sm:$0xf]
      %v2119 = vld [vmem:[%s2103 + $0x3c] sm:$0xf]
      %v2120 = vld [vmem:[%s2103 + $0x40] sm:$0xf]
      %v2121 = vld [vmem:[%s2103 + $0x44] sm:$0xf]
      %v2122 = vld [vmem:[%s2103 + $0x48] sm:$0xf]
      %v2123 = vld [vmem:[%s2103 + $0x4c] sm:$0xf]
      %v2124 = vld [vmem:[%s2103 + $0x50] sm:$0xf]
      %v2125 = vld [vmem:[%s2103 + $0x54] sm:$0xf]
      %v2126 = vld [vmem:[%s2103 + $0x58] sm:$0xf]
      %v2127 = vld [vmem:[%s2103 + $0x5c] sm:$0xf]
      %v2128 = vld [vmem:[%s2103 + $0x60] sm:$0xf]
      %v2129 = vld [vmem:[%s2103 + $0x64] sm:$0xf]
      %v2130 = vld [vmem:[%s2103 + $0x68] sm:$0xf]
      %v2131 = vld [vmem:[%s2103 + $0x6c] sm:$0xf]
      %v2132 = vld [vmem:[%s2103 + $0x70] sm:$0xf]
      %v2133 = vld [vmem:[%s2103 + $0x74] sm:$0xf]
      %v2134 = vld [vmem:[%s2103 + $0x78] sm:$0xf]
      %v2135 = vld [vmem:[%s2103 + $0x7c] sm:$0xf]
      %v2136 = vld [vmem:[%s2103 + $0x80] sm:$0xf]
      %v2137 = vld [vmem:[%s2103 + $0x84] sm:$0xf]
      %v2138 = vld [vmem:[%s2103 + $0x88] sm:$0xf]
      %v2139 = vld [vmem:[%s2103 + $0x8c] sm:$0xf]
      %v2140 = vld [vmem:[%s2103 + $0x90] sm:$0xf]
      %v2141 = vld [vmem:[%s2103 + $0x94] sm:$0xf]
      %v2142 = vld [vmem:[%s2103 + $0x98] sm:$0xf]
      %v2143 = vld [vmem:[%s2103 + $0x9c] sm:$0xf]
      %v2144 = vld [vmem:[%s2103 + $0xa0] sm:$0xf]
      %v2145 = vld [vmem:[%s2103 + $0xa4] sm:$0xf]
      %v2146 = vld [vmem:[%s2103 + $0xa8] sm:$0xf]
      %v2147 = vld [vmem:[%s2103 + $0xac] sm:$0xf]
      %v2148 = vld [vmem:[%s2103 + $0xb0] sm:$0xf]
      %v2149 = vld [vmem:[%s2103 + $0xb4] sm:$0xf]
      %v2150 = vld [vmem:[%s2103 + $0xb8] sm:$0xf]
      %v2151 = vld [vmem:[%s2103 + $0xbc] sm:$0xf]
      %v2200 = vunpack.c.l.b16 %v2104
      %v2201 = vunpack.c.l.b16 %v2105
      %v2202 = vunpack.c.l.b16 %v2106
      %v2203 = vunpack.c.l.b16 %v2107
      %v2204 = vunpack.c.l.b16 %v2108
      %v2205 = vunpack.c.l.b16 %v2109
      %v2206 = vunpack.c.l.b16 %v2110
      %v2207 = vunpack.c.l.b16 %v2111
      %v2208 = vunpack.c.l.b16 %v2112
      %v2209 = vunpack.c.l.b16 %v2113
      %v2210 = vunpack.c.l.b16 %v2114
      %v2211 = vunpack.c.l.b16 %v2115
      %v2212 = vunpack.c.l.b16 %v2116
      %v2213 = vunpack.c.l.b16 %v2117
      %v2214 = vunpack.c.l.b16 %v2118
      %v2215 = vunpack.c.l.b16 %v2119
      %v2216 = vunpack.c.l.b16 %v2120
      %v2217 = vunpack.c.l.b16 %v2121
      %v2218 = vunpack.c.l.b16 %v2122
      %v2219 = vunpack.c.l.b16 %v2123
      %v2220 = vunpack.c.l.b16 %v2124
      %v2221 = vunpack.c.l.b16 %v2125
      %v2222 = vunpack.c.l.b16 %v2126
      %v2223 = vunpack.c.l.b16 %v2127
      %v2224 = vunpack.c.l.b16 %v2128
      %v2225 = vunpack.c.l.b16 %v2129
      %v2226 = vunpack.c.l.b16 %v2130
      %v2227 = vunpack.c.l.b16 %v2131
      %v2228 = vunpack.c.l.b16 %v2132
      %v2229 = vunpack.c.l.b16 %v2133
      %v2230 = vunpack.c.l.b16 %v2134
      %v2231 = vunpack.c.l.b16 %v2135
      %v2232 = vunpack.c.l.b16 %v2136
      %v2233 = vunpack.c.l.b16 %v2137
      %v2234 = vunpack.c.l.b16 %v2138
      %v2235 = vunpack.c.l.b16 %v2139
      %v2236 = vunpack.c.l.b16 %v2140
      %v2237 = vunpack.c.l.b16 %v2141
      %v2238 = vunpack.c.l.b16 %v2142
      %v2239 = vunpack.c.l.b16 %v2143
      %v2240 = vunpack.c.l.b16 %v2144
      %v2241 = vunpack.c.l.b16 %v2145
      %v2242 = vunpack.c.l.b16 %v2146
      %v2243 = vunpack.c.l.b16 %v2147
      %v2244 = vunpack.c.l.b16 %v2148
      %v2245 = vunpack.c.l.b16 %v2149
      %v2246 = vunpack.c.l.b16 %v2150
      %v2247 = vunpack.c.l.b16 %v2151
      %v2248 = vpack.c.b16 %v2201, %v2200
      %v2249 = vpack.c.b16 %v2203, %v2202
      %v2250 = vpack.c.b16 %v2205, %v2204
      %v2251 = vpack.c.b16 %v2207, %v2206
      %v2252 = vpack.c.b16 %v2209, %v2208
      %v2253 = vpack.c.b16 %v2211, %v2210
      %v2254 = vpack.c.b16 %v2213, %v2212
      %v2255 = vpack.c.b16 %v2215, %v2214
      %v2256 = vpack.c.b16 %v2217, %v2216
      %v2257 = vpack.c.b16 %v2219, %v2218
      %v2258 = vpack.c.b16 %v2221, %v2220
      %v2259 = vpack.c.b16 %v2223, %v2222
      %v2260 = vpack.c.b16 %v2225, %v2224
      %v2261 = vpack.c.b16 %v2227, %v2226
      %v2262 = vpack.c.b16 %v2229, %v2228
      %v2263 = vpack.c.b16 %v2231, %v2230
      %v2264 = vpack.c.b16 %v2233, %v2232
      %v2265 = vpack.c.b16 %v2235, %v2234
      %v2266 = vpack.c.b16 %v2237, %v2236
      %v2267 = vpack.c.b16 %v2239, %v2238
      %v2268 = vpack.c.b16 %v2241, %v2240
      %v2269 = vpack.c.b16 %v2243, %v2242
      %v2270 = vpack.c.b16 %v2245, %v2244
      %v2271 = vpack.c.b16 %v2247, %v2246
      %2296 = vmatprep.subr.bf16.mxu0 0
      %2297 = vmatpush1.bf16.msra.mxu0 %v2248
      %2298 = vmatprep.subr.bf16.mxu0 0
      %2299 = vmatpush1.bf16.msra.mxu0 %v2249
      %2300 = vmatprep.subr.bf16.mxu0 0
      %2301 = vmatpush1.bf16.msra.mxu0 %v2250
      %2302 = vmatprep.subr.bf16.mxu0 0
      %2303 = vmatpush1.bf16.msra.mxu0 %v2251
      %2304 = vmatprep.subr.bf16.mxu0 0
      %2305 = vmatpush1.bf16.msra.mxu0 %v2252
      %2306 = vmatprep.subr.bf16.mxu0 0
      %2307 = vmatpush1.bf16.msra.mxu0 %v2253
      %2308 = vmatprep.subr.bf16.mxu0 0
      %2309 = vmatpush1.bf16.msra.mxu0 %v2254
      %2310 = vmatprep.subr.bf16.mxu0 0
      %2311 = vmatpush1.bf16.msra.mxu0 %v2255
      %2312 = vmatprep.subr.bf16.mxu0 0
      %2313 = vmatpush1.bf16.msra.mxu0 %v2256
      %2314 = vmatprep.subr.bf16.mxu0 0
      %2315 = vmatpush1.bf16.msra.mxu0 %v2257
      %2316 = vmatprep.subr.bf16.mxu0 0
      %2317 = vmatpush1.bf16.msra.mxu0 %v2258
      %2318 = vmatprep.subr.bf16.mxu0 0
      %2319 = vmatpush1.bf16.msra.mxu0 %v2259
      %2320 = vmatprep.subr.bf16.mxu0 0
      %2321 = vmatpush1.bf16.msra.mxu0 %v2260
      %2322 = vmatprep.subr.bf16.mxu0 0
      %2323 = vmatpush1.bf16.msra.mxu0 %v2261
      %2324 = vmatprep.subr.bf16.mxu0 0
      %2325 = vmatpush1.bf16.msra.mxu0 %v2262
      %2326 = vmatprep.subr.bf16.mxu0 0
      %2327 = vmatpush1.bf16.msra.mxu0 %v2263
      %2328 = vmatprep.mubr.bf16.mxu0 %v2080
      %2329 = vmatmul.mubr.bf16.gmra.mrb[0].mxu0 %v2079
      %v2330 = vpop.f32.mrb[0].mxu0
      %v2331 = vadd.f32 0.0, %v2330
      %v2332 = vpop.f32.mrb[0].mxu0
      %v2333 = vpop.f32.mrb[0].mxu0
      %v2334 = vadd.f32 0.0, %v2333
      %v2335 = vpop.f32.mrb[0].mxu0
      %2336 = vmatprep.mubr.bf16.mxu0 %v2083
      %2337 = vmatmul.mubr.bf16.gmra.mrb[0].mxu0 %v2082
      %v2338 = vpop.f32.mrb[0].mxu0
      %v2339 = vadd.f32 0.0, %v2338
      %v2340 = vpop.f32.mrb[0].mxu0
      %v2341 = vpop.f32.mrb[0].mxu0
      %v2342 = vadd.f32 0.0, %v2341
      %v2343 = vpop.f32.mrb[0].mxu0
      %2344 = vmatprep.mubr.bf16.mxu0 %v2086
      %2345 = vmatmul.mubr.bf16.gmra.mrb[0].mxu0 %v2085
      %v2346 = vpop.f32.mrb[0].mxu0
      %v2347 = vadd.f32 0.0, %v2346
      %v2348 = vpop.f32.mrb[0].mxu0
      %v2349 = vpop.f32.mrb[0].mxu0
      %v2350 = vadd.f32 0.0, %v2349
      %v2351 = vpop.f32.mrb[0].mxu0
      %2352 = vmatprep.mubr.bf16.mxu0 %v2089
      %2353 = vmatmul.mubr.bf16.gmra.mrb[0].mxu0 %v2088
      %v2354 = vpop.f32.mrb[0].mxu0
      %v2355 = vadd.f32 0.0, %v2354
      %v2356 = vpop.f32.mrb[0].mxu0
      %v2357 = vpop.f32.mrb[0].mxu0
      %v2358 = vadd.f32 0.0, %v2357
      %v2359 = vpop.f32.mrb[0].mxu0
      %2360 = vmatprep.mubr.bf16.mxu0 %v2092
      %2361 = vmatmul.mubr.bf16.gmra.mrb[0].mxu0 %v2091
      %v2362 = vpop.f32.mrb[0].mxu0
      %v2363 = vadd.f32 0.0, %v2362
      %v2364 = vpop.f32.mrb[0].mxu0
      %v2365 = vpop.f32.mrb[0].mxu0
      %v2366 = vadd.f32 0.0, %v2365
      %v2367 = vpop.f32.mrb[0].mxu0
      %2368 = vmatprep.mubr.bf16.mxu0 %v2095
      %2369 = vmatmul.mubr.bf16.gmra.mrb[0].mxu0 %v2094
      %v2370 = vpop.f32.mrb[0].mxu0
      %v2371 = vadd.f32 0.0, %v2370
      %v2372 = vpop.f32.mrb[0].mxu0
      %v2373 = vpop.f32.mrb[0].mxu0
      %v2374 = vadd.f32 0.0, %v2373
      %v2375 = vpop.f32.mrb[0].mxu0
      %2376 = vmatprep.mubr.bf16.mxu0 %v2098
      %2377 = vmatmul.mubr.bf16.gmra.mrb[0].mxu0 %v2097
      %v2378 = vpop.f32.mrb[0].mxu0
      %v2379 = vadd.f32 0.0, %v2378
      %v2380 = vpop.f32.mrb[0].mxu0
      %v2381 = vpop.f32.mrb[0].mxu0
      %v2382 = vadd.f32 0.0, %v2381
      %v2383 = vpop.f32.mrb[0].mxu0
      %2384 = vmatprep.mubr.bf16.mxu0 %v2101
      %2385 = vmatmul.mubr.bf16.gmra.mrb[0].mxu0 %v2100
      %v2386 = vpop.f32.mrb[0].mxu0
      %v2387 = vadd.f32 0.0, %v2386
      %v2388 = vpop.f32.mrb[0].mxu0
      %v2389 = vpop.f32.mrb[0].mxu0
      %v2390 = vadd.f32 0.0, %v2389
      %v2391 = vpop.f32.mrb[0].mxu0
      %2392 = vdwg.mxu0
      %2393 = vmatprep.subr.bf16.mxu0 0
      %2394 = vmatpush1.bf16.msra.mxu0 %v2264
      %2395 = vmatprep.subr.bf16.mxu0 0
      %2396 = vmatpush1.bf16.msra.mxu0 %v2265
      %2397 = vmatprep.subr.bf16.mxu0 0
      %2398 = vmatpush1.bf16.msra.mxu0 %v2266
      %2399 = vmatprep.subr.bf16.mxu0 0
      %2400 = vmatpush1.bf16.msra.mxu0 %v2267
      %2401 = vmatprep.subr.bf16.mxu0 0
      %2402 = vmatpush1.bf16.msra.mxu0 %v2268
      %2403 = vmatprep.subr.bf16.mxu0 0
      %2404 = vmatpush1.bf16.msra.mxu0 %v2269
      %2405 = vmatprep.subr.bf16.mxu0 0
      %2406 = vmatpush1.bf16.msra.mxu0 %v2270
      %2407 = vmatprep.subr.bf16.mxu0 0
      %2408 = vmatpush1.bf16.msra.mxu0 %v2271
      %2409 = vmatprep.subr.bf16.mxu0 0
      %2410 = vmatpush1.bf16.msra.mxu0 0
      %2411 = vmatprep.subr.bf16.mxu0 0
      %2412 = vmatpush1.bf16.msra.mxu0 0
      %2413 = vmatprep.subr.bf16.mxu0 0
      %2414 = vmatpush1.bf16.msra.mxu0 0
      %2415 = vmatprep.subr.bf16.mxu0 0
      %2416 = vmatpush1.bf16.msra.mxu0 0
      %2417 = vmatprep.subr.bf16.mxu0 0
      %2418 = vmatpush1.bf16.msra.mxu0 0
      %2419 = vmatprep.subr.bf16.mxu0 0
      %2420 = vmatpush1.bf16.msra.mxu0 0
      %2421 = vmatprep.subr.bf16.mxu0 0
      %2422 = vmatpush1.bf16.msra.mxu0 0
      %2423 = vmatprep.subr.bf16.mxu0 0
      %2424 = vmatpush1.bf16.msra.mxu0 0
      %2425 = vmatprep.mubr.bf16.mxu0 0
      %2426 = vmatmul.mubr.bf16.gmra.mrb[0].mxu0 %v2081
      %v2427 = vpop.f32.mrb[0].mxu0
      %v2428 = vadd.f32 %v2331, %v2427
      %v2429 = vpop.f32.mrb[0].mxu0
      %v2430 = vpop.f32.mrb[0].mxu0
      %v2431 = vadd.f32 %v2334, %v2430
      %v2432 = vpop.f32.mrb[0].mxu0
      %2433 = vmatprep.mubr.bf16.mxu0 0
      %2434 = vmatmul.mubr.bf16.gmra.mrb[0].mxu0 %v2084
      %v2435 = vpop.f32.mrb[0].mxu0
      %v2436 = vadd.f32 %v2339, %v2435
      %v2437 = vpop.f32.mrb[0].mxu0
      %v2438 = vpop.f32.mrb[0].mxu0
      %v2439 = vadd.f32 %v2342, %v2438
      %v2440 = vpop.f32.mrb[0].mxu0
      %2441 = vmatprep.mubr.bf16.mxu0 0
      %2442 = vmatmul.mubr.bf16.gmra.mrb[0].mxu0 %v2087
      %v2443 = vpop.f32.mrb[0].mxu0
      %v2444 = vadd.f32 %v2347, %v2443
      %v2445 = vpop.f32.mrb[0].mxu0
      %v2446 = vpop.f32.mrb[0].mxu0
      %v2447 = vadd.f32 %v2350, %v2446
      %v2448 = vpop.f32.mrb[0].mxu0
      %2449 = vmatprep.mubr.bf16.mxu0 0
      %2450 = vmatmul.mubr.bf16.gmra.mrb[0].mxu0 %v2090
      %v2451 = vpop.f32.mrb[0].mxu0
      %v2452 = vadd.f32 %v2355, %v2451
      %v2453 = vpop.f32.mrb[0].mxu0
      %v2454 = vpop.f32.mrb[0].mxu0
      %v2455 = vadd.f32 %v2358, %v2454
      %v2456 = vpop.f32.mrb[0].mxu0
      %2457 = vmatprep.mubr.bf16.mxu0 0
      %2458 = vmatmul.mubr.bf16.gmra.mrb[0].mxu0 %v2093
      %v2459 = vpop.f32.mrb[0].mxu0
      %v2460 = vadd.f32 %v2363, %v2459
      %v2461 = vpop.f32.mrb[0].mxu0
      %v2462 = vpop.f32.mrb[0].mxu0
      %v2463 = vadd.f32 %v2366, %v2462
      %v2464 = vpop.f32.mrb[0].mxu0
      %2465 = vmatprep.mubr.bf16.mxu0 0
      %2466 = vmatmul.mubr.bf16.gmra.mrb[0].mxu0 %v2096
      %v2467 = vpop.f32.mrb[0].mxu0
      %v2468 = vadd.f32 %v2371, %v2467
      %v2469 = vpop.f32.mrb[0].mxu0
      %v2470 = vpop.f32.mrb[0].mxu0
      %v2471 = vadd.f32 %v2374, %v2470
      %v2472 = vpop.f32.mrb[0].mxu0
      %2473 = vmatprep.mubr.bf16.mxu0 0
      %2474 = vmatmul.mubr.bf16.gmra.mrb[0].mxu0 %v2099
      %v2475 = vpop.f32.mrb[0].mxu0
      %v2476 = vadd.f32 %v2379, %v2475
      %v2477 = vpop.f32.mrb[0].mxu0
      %v2478 = vpop.f32.mrb[0].mxu0
      %v2479 = vadd.f32 %v2382, %v2478
      %v2480 = vpop.f32.mrb[0].mxu0
      %2481 = vmatprep.mubr.bf16.mxu0 0
      %2482 = vmatmul.mubr.bf16.gmra.mrb[0].mxu0 %v2102
      %v2483 = vpop.f32.mrb[0].mxu0
      %v2484 = vadd.f32 %v2387, %v2483
      %v2485 = vpop.f32.mrb[0].mxu0
      %v2486 = vpop.f32.mrb[0].mxu0
      %v2487 = vadd.f32 %v2390, %v2486
      %v2488 = vpop.f32.mrb[0].mxu0
      %2489 = vdwg.mxu0
      %v2538 = vunpack.c.l.b16 %v1559
      %v2539 = vunpack.c.l.b16 %v1560
      %v2540 = vunpack.c.l.b16 %v1561
      %v2541 = vunpack.c.l.b16 %v1562
      %v2542 = vunpack.c.l.b16 %v1563
      %v2543 = vunpack.c.l.b16 %v1564
      %v2544 = vunpack.c.l.b16 %v1565
      %v2545 = vunpack.c.l.b16 %v1566
      %v2546 = vunpack.c.l.b16 %v1567
      %v2547 = vunpack.c.l.b16 %v1568
      %v2548 = vunpack.c.l.b16 %v1569
      %v2549 = vunpack.c.l.b16 %v1570
      %v2550 = vunpack.c.l.b16 %v1571
      %v2551 = vunpack.c.l.b16 %v1572
      %v2552 = vunpack.c.l.b16 %v1573
      %v2553 = vunpack.c.l.b16 %v1574
      %v2554 = vunpack.c.l.b16 %v1575
      %v2555 = vunpack.c.l.b16 %v1576
      %v2556 = vunpack.c.l.b16 %v1577
      %v2557 = vunpack.c.l.b16 %v1578
      %v2558 = vunpack.c.l.b16 %v1579
      %v2559 = vunpack.c.l.b16 %v1580
      %v2560 = vunpack.c.l.b16 %v1581
      %v2561 = vunpack.c.l.b16 %v1582
      %v2562 = vunpack.c.l.b16 %v1583
      %v2563 = vunpack.c.l.b16 %v1584
      %v2564 = vunpack.c.l.b16 %v1585
      %v2565 = vunpack.c.l.b16 %v1586
      %v2566 = vunpack.c.l.b16 %v1587
      %v2567 = vunpack.c.l.b16 %v1588
      %v2568 = vunpack.c.l.b16 %v1589
      %v2569 = vunpack.c.l.b16 %v1590
      %v2570 = vunpack.c.l.b16 %v1591
      %v2571 = vunpack.c.l.b16 %v1592
      %v2572 = vunpack.c.l.b16 %v1593
      %v2573 = vunpack.c.l.b16 %v1594
      %v2574 = vunpack.c.l.b16 %v1595
      %v2575 = vunpack.c.l.b16 %v1596
      %v2576 = vunpack.c.l.b16 %v1597
      %v2577 = vunpack.c.l.b16 %v1598
      %v2578 = vunpack.c.l.b16 %v1599
      %v2579 = vunpack.c.l.b16 %v1600
      %v2580 = vunpack.c.l.b16 %v1601
      %v2581 = vunpack.c.l.b16 %v1602
      %v2582 = vunpack.c.l.b16 %v1603
      %v2583 = vunpack.c.l.b16 %v1604
      %v2584 = vunpack.c.l.b16 %v1605
      %v2585 = vunpack.c.l.b16 %v1606
      %v2586 = vpack.c.b16 %v2539, %v2538
      %v2587 = vpack.c.b16 %v2541, %v2540
      %v2588 = vpack.c.b16 %v2543, %v2542
      %v2589 = vpack.c.b16 %v2545, %v2544
      %v2590 = vpack.c.b16 %v2547, %v2546
      %v2591 = vpack.c.b16 %v2549, %v2548
      %v2592 = vpack.c.b16 %v2551, %v2550
      %v2593 = vpack.c.b16 %v2553, %v2552
      %v2594 = vpack.c.b16 %v2555, %v2554
      %v2595 = vpack.c.b16 %v2557, %v2556
      %v2596 = vpack.c.b16 %v2559, %v2558
      %v2597 = vpack.c.b16 %v2561, %v2560
      %v2598 = vpack.c.b16 %v2563, %v2562
      %v2599 = vpack.c.b16 %v2565, %v2564
      %v2600 = vpack.c.b16 %v2567, %v2566
      %v2601 = vpack.c.b16 %v2569, %v2568
      %v2602 = vpack.c.b16 %v2571, %v2570
      %v2603 = vpack.c.b16 %v2573, %v2572
      %v2604 = vpack.c.b16 %v2575, %v2574
      %v2605 = vpack.c.b16 %v2577, %v2576
      %v2606 = vpack.c.b16 %v2579, %v2578
      %v2607 = vpack.c.b16 %v2581, %v2580
      %v2608 = vpack.c.b16 %v2583, %v2582
      %v2609 = vpack.c.b16 %v2585, %v2584
      %2634 = vmatprep.subr.bf16.mxu0 0
      %2635 = vmatpush1.bf16.msra.mxu0 %v2586
      %2636 = vmatprep.subr.bf16.mxu0 0
      %2637 = vmatpush1.bf16.msra.mxu0 %v2587
      %2638 = vmatprep.subr.bf16.mxu0 0
      %2639 = vmatpush1.bf16.msra.mxu0 %v2588
      %2640 = vmatprep.subr.bf16.mxu0 0
      %2641 = vmatpush1.bf16.msra.mxu0 %v2589
      %2642 = vmatprep.subr.bf16.mxu0 0
      %2643 = vmatpush1.bf16.msra.mxu0 %v2590
      %2644 = vmatprep.subr.bf16.mxu0 0
      %2645 = vmatpush1.bf16.msra.mxu0 %v2591
      %2646 = vmatprep.subr.bf16.mxu0 0
      %2647 = vmatpush1.bf16.msra.mxu0 %v2592
      %2648 = vmatprep.subr.bf16.mxu0 0
      %2649 = vmatpush1.bf16.msra.mxu0 %v2593
      %2650 = vmatprep.subr.bf16.mxu0 0
      %2651 = vmatpush1.bf16.msra.mxu0 %v2594
      %2652 = vmatprep.subr.bf16.mxu0 0
      %2653 = vmatpush1.bf16.msra.mxu0 %v2595
      %2654 = vmatprep.subr.bf16.mxu0 0
      %2655 = vmatpush1.bf16.msra.mxu0 %v2596
      %2656 = vmatprep.subr.bf16.mxu0 0
      %2657 = vmatpush1.bf16.msra.mxu0 %v2597
      %2658 = vmatprep.subr.bf16.mxu0 0
      %2659 = vmatpush1.bf16.msra.mxu0 %v2598
      %2660 = vmatprep.subr.bf16.mxu0 0
      %2661 = vmatpush1.bf16.msra.mxu0 %v2599
      %2662 = vmatprep.subr.bf16.mxu0 0
      %2663 = vmatpush1.bf16.msra.mxu0 %v2600
      %2664 = vmatprep.subr.bf16.mxu0 0
      %2665 = vmatpush1.bf16.msra.mxu0 %v2601
      %2666 = vmatprep.mubr.bf16.mxu0 %v1536
      %2667 = vmatmul.mubr.bf16.gmra.mrb[0].mxu0 %v1535
      %v2668 = vpop.f32.mrb[0].mxu0
      %v2669 = vadd.f32 %v2428, %v2668
      %v2670 = vpop.f32.mrb[0].mxu0
      %v2671 = vpop.f32.mrb[0].mxu0
      %v2672 = vadd.f32 %v2431, %v2671
      %v2673 = vpop.f32.mrb[0].mxu0
      %2674 = vmatprep.mubr.bf16.mxu0 %v1539
      %2675 = vmatmul.mubr.bf16.gmra.mrb[0].mxu0 %v1538
      %v2676 = vpop.f32.mrb[0].mxu0
      %v2677 = vadd.f32 %v2436, %v2676
      %v2678 = vpop.f32.mrb[0].mxu0
      %v2679 = vpop.f32.mrb[0].mxu0
      %v2680 = vadd.f32 %v2439, %v2679
      %v2681 = vpop.f32.mrb[0].mxu0
      %2682 = vmatprep.mubr.bf16.mxu0 %v1542
      %2683 = vmatmul.mubr.bf16.gmra.mrb[0].mxu0 %v1541
      %v2684 = vpop.f32.mrb[0].mxu0
      %v2685 = vadd.f32 %v2444, %v2684
      %v2686 = vpop.f32.mrb[0].mxu0
      %v2687 = vpop.f32.mrb[0].mxu0
      %v2688 = vadd.f32 %v2447, %v2687
      %v2689 = vpop.f32.mrb[0].mxu0
      %2690 = vmatprep.mubr.bf16.mxu0 %v1545
      %2691 = vmatmul.mubr.bf16.gmra.mrb[0].mxu0 %v1544
      %v2692 = vpop.f32.mrb[0].mxu0
      %v2693 = vadd.f32 %v2452, %v2692
      %v2694 = vpop.f32.mrb[0].mxu0
      %v2695 = vpop.f32.mrb[0].mxu0
      %v2696 = vadd.f32 %v2455, %v2695
      %v2697 = vpop.f32.mrb[0].mxu0
      %2698 = vmatprep.mubr.bf16.mxu0 %v1548
      %2699 = vmatmul.mubr.bf16.gmra.mrb[0].mxu0 %v1547
      %v2700 = vpop.f32.mrb[0].mxu0
      %v2701 = vadd.f32 %v2460, %v2700
      %v2702 = vpop.f32.mrb[0].mxu0
      %v2703 = vpop.f32.mrb[0].mxu0
      %v2704 = vadd.f32 %v2463, %v2703
      %v2705 = vpop.f32.mrb[0].mxu0
      %2706 = vmatprep.mubr.bf16.mxu0 %v1551
      %2707 = vmatmul.mubr.bf16.gmra.mrb[0].mxu0 %v1550
      %v2708 = vpop.f32.mrb[0].mxu0
      %v2709 = vadd.f32 %v2468, %v2708
      %v2710 = vpop.f32.mrb[0].mxu0
      %v2711 = vpop.f32.mrb[0].mxu0
      %v2712 = vadd.f32 %v2471, %v2711
      %v2713 = vpop.f32.mrb[0].mxu0
      %2714 = vmatprep.mubr.bf16.mxu0 %v1554
      %2715 = vmatmul.mubr.bf16.gmra.mrb[0].mxu0 %v1553
      %v2716 = vpop.f32.mrb[0].mxu0
      %v2717 = vadd.f32 %v2476, %v2716
      %v2718 = vpop.f32.mrb[0].mxu0
      %v2719 = vpop.f32.mrb[0].mxu0
      %v2720 = vadd.f32 %v2479, %v2719
      %v2721 = vpop.f32.mrb[0].mxu0
      %2722 = vmatprep.mubr.bf16.mxu0 %v1557
      %2723 = vmatmul.mubr.bf16.gmra.mrb[0].mxu0 %v1556
      %v2724 = vpop.f32.mrb[0].mxu0
      %v2725 = vadd.f32 %v2484, %v2724
      %v2726 = vpop.f32.mrb[0].mxu0
      %v2727 = vpop.f32.mrb[0].mxu0
      %v2728 = vadd.f32 %v2487, %v2727
      %v2729 = vpop.f32.mrb[0].mxu0
      %2730 = vdwg.mxu0
      %2731 = vmatprep.subr.bf16.mxu0 0
      %2732 = vmatpush1.bf16.msra.mxu0 %v2602
      %2733 = vmatprep.subr.bf16.mxu0 0
      %2734 = vmatpush1.bf16.msra.mxu0 %v2603
      %2735 = vmatprep.subr.bf16.mxu0 0
      %2736 = vmatpush1.bf16.msra.mxu0 %v2604
      %2737 = vmatprep.subr.bf16.mxu0 0
      %2738 = vmatpush1.bf16.msra.mxu0 %v2605
      %2739 = vmatprep.subr.bf16.mxu0 0
      %2740 = vmatpush1.bf16.msra.mxu0 %v2606
      %2741 = vmatprep.subr.bf16.mxu0 0
      %2742 = vmatpush1.bf16.msra.mxu0 %v2607
      %2743 = vmatprep.subr.bf16.mxu0 0
      %2744 = vmatpush1.bf16.msra.mxu0 %v2608
      %2745 = vmatprep.subr.bf16.mxu0 0
      %2746 = vmatpush1.bf16.msra.mxu0 %v2609
      %2747 = vmatprep.subr.bf16.mxu0 0
      %2748 = vmatpush1.bf16.msra.mxu0 0
      %2749 = vmatprep.subr.bf16.mxu0 0
      %2750 = vmatpush1.bf16.msra.mxu0 0
      %2751 = vmatprep.subr.bf16.mxu0 0
      %2752 = vmatpush1.bf16.msra.mxu0 0
      %2753 = vmatprep.subr.bf16.mxu0 0
      %2754 = vmatpush1.bf16.msra.mxu0 0
      %2755 = vmatprep.subr.bf16.mxu0 0
      %2756 = vmatpush1.bf16.msra.mxu0 0
      %2757 = vmatprep.subr.bf16.mxu0 0
      %2758 = vmatpush1.bf16.msra.mxu0 0
      %2759 = vmatprep.subr.bf16.mxu0 0
      %2760 = vmatpush1.bf16.msra.mxu0 0
      %2761 = vmatprep.subr.bf16.mxu0 0
      %2762 = vmatpush1.bf16.msra.mxu0 0
      %2763 = vmatprep.mubr.bf16.mxu0 0
      %2764 = vmatmul.mubr.bf16.gmra.mrb[0].mxu0 %v1537
      %v2765 = vpop.f32.mrb[0].mxu0
      %v2766 = vadd.f32 %v2669, %v2765
      %v2767 = vpop.f32.mrb[0].mxu0
      %v2768 = vpop.f32.mrb[0].mxu0
      %v2769 = vadd.f32 %v2672, %v2768
      %v2770 = vpop.f32.mrb[0].mxu0
      %2771 = vmatprep.mubr.bf16.mxu0 0
      %2772 = vmatmul.mubr.bf16.gmra.mrb[0].mxu0 %v1540
      %v2773 = vpop.f32.mrb[0].mxu0
      %v2774 = vadd.f32 %v2677, %v2773
      %v2775 = vpop.f32.mrb[0].mxu0
      %v2776 = vpop.f32.mrb[0].mxu0
      %v2777 = vadd.f32 %v2680, %v2776
      %v2778 = vpop.f32.mrb[0].mxu0
      %2779 = vmatprep.mubr.bf16.mxu0 0
      %2780 = vmatmul.mubr.bf16.gmra.mrb[0].mxu0 %v1543
      %v2781 = vpop.f32.mrb[0].mxu0
      %v2782 = vadd.f32 %v2685, %v2781
      %v2783 = vpop.f32.mrb[0].mxu0
      %v2784 = vpop.f32.mrb[0].mxu0
      %v2785 = vadd.f32 %v2688, %v2784
      %v2786 = vpop.f32.mrb[0].mxu0
      %2787 = vmatprep.mubr.bf16.mxu0 0
      %2788 = vmatmul.mubr.bf16.gmra.mrb[0].mxu0 %v1546
      %v2789 = vpop.f32.mrb[0].mxu0
      %v2790 = vadd.f32 %v2693, %v2789
      %v2791 = vpop.f32.mrb[0].mxu0
      %v2792 = vpop.f32.mrb[0].mxu0
      %v2793 = vadd.f32 %v2696, %v2792
      %v2794 = vpop.f32.mrb[0].mxu0
      %2795 = vmatprep.mubr.bf16.mxu0 0
      %2796 = vmatmul.mubr.bf16.gmra.mrb[0].mxu0 %v1549
      %v2797 = vpop.f32.mrb[0].mxu0
      %v2798 = vadd.f32 %v2701, %v2797
      %v2799 = vpop.f32.mrb[0].mxu0
      %v2800 = vpop.f32.mrb[0].mxu0
      %v2801 = vadd.f32 %v2704, %v2800
      %v2802 = vpop.f32.mrb[0].mxu0
      %2803 = vmatprep.mubr.bf16.mxu0 0
      %2804 = vmatmul.mubr.bf16.gmra.mrb[0].mxu0 %v1552
      %v2805 = vpop.f32.mrb[0].mxu0
      %v2806 = vadd.f32 %v2709, %v2805
      %v2807 = vpop.f32.mrb[0].mxu0
      %v2808 = vpop.f32.mrb[0].mxu0
      %v2809 = vadd.f32 %v2712, %v2808
      %v2810 = vpop.f32.mrb[0].mxu0
      %2811 = vmatprep.mubr.bf16.mxu0 0
      %2812 = vmatmul.mubr.bf16.gmra.mrb[0].mxu0 %v1555
      %v2813 = vpop.f32.mrb[0].mxu0
      %v2814 = vadd.f32 %v2717, %v2813
      %v2815 = vpop.f32.mrb[0].mxu0
      %v2816 = vpop.f32.mrb[0].mxu0
      %v2817 = vadd.f32 %v2720, %v2816
      %v2818 = vpop.f32.mrb[0].mxu0
      %2819 = vmatprep.mubr.bf16.mxu0 0
      %2820 = vmatmul.mubr.bf16.gmra.mrb[0].mxu0 %v1558
      %v2821 = vpop.f32.mrb[0].mxu0
      %v2822 = vadd.f32 %v2725, %v2821
      %v2823 = vpop.f32.mrb[0].mxu0
      %v2824 = vpop.f32.mrb[0].mxu0
      %v2825 = vadd.f32 %v2728, %v2824
      %v2826 = vpop.f32.mrb[0].mxu0
      %2827 = vdwg.mxu0
      %s2828 = scalar_lea.vmem [#allocation2], 24
      %v2829 = vld [vmem:[%s2828] sm:$0xf]
      %v2830 = vld [vmem:[%s2828 + $0x4] sm:$0xf]
      %v2831 = vld [vmem:[%s2828 + $0xc] sm:$0xf]
      %v2832 = vld [vmem:[%s2828 + $0x10] sm:$0xf]
      %v2833 = vld [vmem:[%s2828 + $0x18] sm:$0xf]
      %v2834 = vld [vmem:[%s2828 + $0x1c] sm:$0xf]
      %v2835 = vld [vmem:[%s2828 + $0x24] sm:$0xf]
      %v2836 = vld [vmem:[%s2828 + $0x28] sm:$0xf]
      %v2837 = vld [vmem:[%s2828 + $0x30] sm:$0xf]
      %v2838 = vld [vmem:[%s2828 + $0x34] sm:$0xf]
      %v2839 = vld [vmem:[%s2828 + $0x3c] sm:$0xf]
      %v2840 = vld [vmem:[%s2828 + $0x40] sm:$0xf]
      %v2841 = vld [vmem:[%s2828 + $0x48] sm:$0xf]
      %v2842 = vld [vmem:[%s2828 + $0x4c] sm:$0xf]
      %v2843 = vld [vmem:[%s2828 + $0x54] sm:$0xf]
      %v2844 = vld [vmem:[%s2828 + $0x58] sm:$0xf]
      %v2861 = vunpack.c.l.b16 %v2829
      %v2862 = vunpack.c.l.b16 %v2830
      %v2863 = vunpack.c.l.b16 %v2831
      %v2864 = vunpack.c.l.b16 %v2832
      %v2865 = vunpack.c.l.b16 %v2833
      %v2866 = vunpack.c.l.b16 %v2834
      %v2867 = vunpack.c.l.b16 %v2835
      %v2868 = vunpack.c.l.b16 %v2836
      %v2869 = vunpack.c.l.b16 %v2837
      %v2870 = vunpack.c.l.b16 %v2838
      %v2871 = vunpack.c.l.b16 %v2839
      %v2872 = vunpack.c.l.b16 %v2840
      %v2873 = vunpack.c.l.b16 %v2841
      %v2874 = vunpack.c.l.b16 %v2842
      %v2875 = vunpack.c.l.b16 %v2843
      %v2876 = vunpack.c.l.b16 %v2844
      %v2877 = vpack.c.b16 %v2862, %v2861
      %v2878 = vpack.c.b16 %v2864, %v2863
      %v2879 = vpack.c.b16 %v2866, %v2865
      %v2880 = vpack.c.b16 %v2868, %v2867
      %v2881 = vpack.c.b16 %v2870, %v2869
      %v2882 = vpack.c.b16 %v2872, %v2871
      %v2883 = vpack.c.b16 %v2874, %v2873
      %v2884 = vpack.c.b16 %v2876, %v2875
      %2893 = vst [vmem:[#allocation3] sm:$0xff] %v2877
      %2894 = vst [vmem:[#allocation3 + $0x18] sm:$0xff] %v2878
      %2895 = vst [vmem:[#allocation3 + $0x30] sm:$0xff] %v2879
      %2896 = vst [vmem:[#allocation3 + $0x48] sm:$0xff] %v2880
      %2897 = vst [vmem:[#allocation3 + $0x60] sm:$0xff] %v2881
      %2898 = vst [vmem:[#allocation3 + $0x78] sm:$0xff] %v2882
      %2899 = vst [vmem:[#allocation3 + $0x90] sm:$0xff] %v2883
      %2900 = vst [vmem:[#allocation3 + $0xa8] sm:$0xff] %v2884
      %v2901 = vld [vmem:[%s2828] sm:$0xf]
      %v2902 = vld [vmem:[%s2828 + $0x4] sm:$0xf]
      %v2903 = vld [vmem:[%s2828 + $0x8] sm:$0x1]
      %v2904 = vld [vmem:[%s2828 + $0xc] sm:$0xf]
      %v2905 = vld [vmem:[%s2828 + $0x10] sm:$0xf]
      %v2906 = vld [vmem:[%s2828 + $0x14] sm:$0x1]
      %v2907 = vld [vmem:[%s2828 + $0x18] sm:$0xf]
      %v2908 = vld [vmem:[%s2828 + $0x1c] sm:$0xf]
      %v2909 = vld [vmem:[%s2828 + $0x20] sm:$0x1]
      %v2910 = vld [vmem:[%s2828 + $0x24] sm:$0xf]
      %v2911 = vld [vmem:[%s2828 + $0x28] sm:$0xf]
      %v2912 = vld [vmem:[%s2828 + $0x2c] sm:$0x1]
      %v2913 = vld [vmem:[%s2828 + $0x30] sm:$0xf]
      %v2914 = vld [vmem:[%s2828 + $0x34] sm:$0xf]
      %v2915 = vld [vmem:[%s2828 + $0x38] sm:$0x1]
      %v2916 = vld [vmem:[%s2828 + $0x3c] sm:$0xf]
      %v2917 = vld [vmem:[%s2828 + $0x40] sm:$0xf]
      %v2918 = vld [vmem:[%s2828 + $0x44] sm:$0x1]
      %v2919 = vld [vmem:[%s2828 + $0x48] sm:$0xf]
      %v2920 = vld [vmem:[%s2828 + $0x4c] sm:$0xf]
      %v2921 = vld [vmem:[%s2828 + $0x50] sm:$0x1]
      %v2922 = vld [vmem:[%s2828 + $0x54] sm:$0xf]
      %v2923 = vld [vmem:[%s2828 + $0x58] sm:$0xf]
      %v2924 = vld [vmem:[%s2828 + $0x5c] sm:$0x1]
      %v2926 = vshrl.u32 %v2901, 16
      %v2928 = vrot.slane %v2926, 4
      %v2929 = vshll.u32 %v2901, 16
      %v2931 = vrot.slane %v2929, 5
      %v2932 = vor.u32 %v2928, %v2931
      %v2933 = vrot.slane %v2932, 4
      %v2935 = vshll.u32 %v2902, 16
      %v2937 = vrot.slane %v2935, 5
      %v2938 = vsel %vm1155, %v2933, %v2937
      %v2939 = vshrl.u32 %v2902, 16
      %v2941 = vrot.slane %v2939, 4
      %v2942 = vor.u32 %v2941, %v2937
      %v2943 = vrot.slane %v2942, 4
      %v2945 = vshll.u32 %v2903, 16
      %v2947 = vrot.slane %v2945, 5
      %v2948 = vsel %vm1155, %v2943, %v2947
      %v2950 = vshrl.u32 %v2904, 16
      %v2952 = vrot.slane %v2950, 4
      %v2953 = vshll.u32 %v2904, 16
      %v2955 = vrot.slane %v2953, 5
      %v2956 = vor.u32 %v2952, %v2955
      %v2957 = vrot.slane %v2956, 4
      %v2959 = vshll.u32 %v2905, 16
      %v2961 = vrot.slane %v2959, 5
      %v2962 = vsel %vm1155, %v2957, %v2961
      %v2963 = vshrl.u32 %v2905, 16
      %v2965 = vrot.slane %v2963, 4
      %v2966 = vor.u32 %v2965, %v2961
      %v2967 = vrot.slane %v2966, 4
      %v2969 = vshll.u32 %v2906, 16
      %v2971 = vrot.slane %v2969, 5
      %v2972 = vsel %vm1155, %v2967, %v2971
      %v2974 = vshrl.u32 %v2907, 16
      %v2976 = vrot.slane %v2974, 4
      %v2977 = vshll.u32 %v2907, 16
      %v2979 = vrot.slane %v2977, 5
      %v2980 = vor.u32 %v2976, %v2979
      %v2981 = vrot.slane %v2980, 4
      %v2983 = vshll.u32 %v2908, 16
      %v2985 = vrot.slane %v2983, 5
      %v2986 = vsel %vm1155, %v2981, %v2985
      %v2987 = vshrl.u32 %v2908, 16
      %v2989 = vrot.slane %v2987, 4
      %v2990 = vor.u32 %v2989, %v2985
      %v2991 = vrot.slane %v2990, 4
      %v2993 = vshll.u32 %v2909, 16
      %v2995 = vrot.slane %v2993, 5
      %v2996 = vsel %vm1155, %v2991, %v2995
      %v2998 = vshrl.u32 %v2910, 16
      %v3000 = vrot.slane %v2998, 4
      %v3001 = vshll.u32 %v2910, 16
      %v3003 = vrot.slane %v3001, 5
      %v3004 = vor.u32 %v3000, %v3003
      %v3005 = vrot.slane %v3004, 4
      %v3007 = vshll.u32 %v2911, 16
      %v3009 = vrot.slane %v3007, 5
      %v3010 = vsel %vm1155, %v3005, %v3009
      %v3011 = vshrl.u32 %v2911, 16
      %v3013 = vrot.slane %v3011, 4
      %v3014 = vor.u32 %v3013, %v3009
      %v3015 = vrot.slane %v3014, 4
      %v3017 = vshll.u32 %v2912, 16
      %v3019 = vrot.slane %v3017, 5
      %v3020 = vsel %vm1155, %v3015, %v3019
      %v3022 = vshrl.u32 %v2913, 16
      %v3024 = vrot.slane %v3022, 4
      %v3025 = vshll.u32 %v2913, 16
      %v3027 = vrot.slane %v3025, 5
      %v3028 = vor.u32 %v3024, %v3027
      %v3029 = vrot.slane %v3028, 4
      %v3031 = vshll.u32 %v2914, 16
      %v3033 = vrot.slane %v3031, 5
      %v3034 = vsel %vm1155, %v3029, %v3033
      %v3035 = vshrl.u32 %v2914, 16
      %v3037 = vrot.slane %v3035, 4
      %v3038 = vor.u32 %v3037, %v3033
      %v3039 = vrot.slane %v3038, 4
      %v3041 = vshll.u32 %v2915, 16
      %v3043 = vrot.slane %v3041, 5
      %v3044 = vsel %vm1155, %v3039, %v3043
      %v3046 = vshrl.u32 %v2916, 16
      %v3048 = vrot.slane %v3046, 4
      %v3049 = vshll.u32 %v2916, 16
      %v3051 = vrot.slane %v3049, 5
      %v3052 = vor.u32 %v3048, %v3051
      %v3053 = vrot.slane %v3052, 4
      %v3055 = vshll.u32 %v2917, 16
      %v3057 = vrot.slane %v3055, 5
      %v3058 = vsel %vm1155, %v3053, %v3057
      %v3059 = vshrl.u32 %v2917, 16
      %v3061 = vrot.slane %v3059, 4
      %v3062 = vor.u32 %v3061, %v3057
      %v3063 = vrot.slane %v3062, 4
      %v3065 = vshll.u32 %v2918, 16
      %v3067 = vrot.slane %v3065, 5
      %v3068 = vsel %vm1155, %v3063, %v3067
      %v3070 = vshrl.u32 %v2919, 16
      %v3072 = vrot.slane %v3070, 4
      %v3073 = vshll.u32 %v2919, 16
      %v3075 = vrot.slane %v3073, 5
      %v3076 = vor.u32 %v3072, %v3075
      %v3077 = vrot.slane %v3076, 4
      %v3079 = vshll.u32 %v2920, 16
      %v3081 = vrot.slane %v3079, 5
      %v3082 = vsel %vm1155, %v3077, %v3081
      %v3083 = vshrl.u32 %v2920, 16
      %v3085 = vrot.slane %v3083, 4
      %v3086 = vor.u32 %v3085, %v3081
      %v3087 = vrot.slane %v3086, 4
      %v3089 = vshll.u32 %v2921, 16
      %v3091 = vrot.slane %v3089, 5
      %v3092 = vsel %vm1155, %v3087, %v3091
      %v3094 = vshrl.u32 %v2922, 16
      %v3096 = vrot.slane %v3094, 4
      %v3097 = vshll.u32 %v2922, 16
      %v3099 = vrot.slane %v3097, 5
      %v3100 = vor.u32 %v3096, %v3099
      %v3101 = vrot.slane %v3100, 4
      %v3103 = vshll.u32 %v2923, 16
      %v3105 = vrot.slane %v3103, 5
      %v3106 = vsel %vm1155, %v3101, %v3105
      %v3107 = vshrl.u32 %v2923, 16
      %v3109 = vrot.slane %v3107, 4
      %v3110 = vor.u32 %v3109, %v3105
      %v3111 = vrot.slane %v3110, 4
      %v3113 = vshll.u32 %v2924, 16
      %v3115 = vrot.slane %v3113, 5
      %v3116 = vsel %vm1155, %v3111, %v3115
      %v3117 = vunpack.c.l.b16 %v2938
      %v3118 = vunpack.c.l.b16 %v2948
      %v3119 = vunpack.c.l.b16 %v2962
      %v3120 = vunpack.c.l.b16 %v2972
      %v3121 = vunpack.c.l.b16 %v2986
      %v3122 = vunpack.c.l.b16 %v2996
      %v3123 = vunpack.c.l.b16 %v3010
      %v3124 = vunpack.c.l.b16 %v3020
      %v3125 = vunpack.c.l.b16 %v3034
      %v3126 = vunpack.c.l.b16 %v3044
      %v3127 = vunpack.c.l.b16 %v3058
      %v3128 = vunpack.c.l.b16 %v3068
      %v3129 = vunpack.c.l.b16 %v3082
      %v3130 = vunpack.c.l.b16 %v3092
      %v3131 = vunpack.c.l.b16 %v3106
      %v3132 = vunpack.c.l.b16 %v3116
      %v3133 = vpack.c.b16 %v3118, %v3117
      %v3134 = vpack.c.b16 %v3120, %v3119
      %v3135 = vpack.c.b16 %v3122, %v3121
      %v3136 = vpack.c.b16 %v3124, %v3123
      %v3137 = vpack.c.b16 %v3126, %v3125
      %v3138 = vpack.c.b16 %v3128, %v3127
      %v3139 = vpack.c.b16 %v3130, %v3129
      %v3140 = vpack.c.b16 %v3132, %v3131
      %3149 = vst [vmem:[#allocation3 + $0x8] sm:$0xff] %v3133
      %3150 = vst [vmem:[#allocation3 + $0x20] sm:$0xff] %v3134
      %3151 = vst [vmem:[#allocation3 + $0x38] sm:$0xff] %v3135
      %3152 = vst [vmem:[#allocation3 + $0x50] sm:$0xff] %v3136
      %3153 = vst [vmem:[#allocation3 + $0x68] sm:$0xff] %v3137
      %3154 = vst [vmem:[#allocation3 + $0x80] sm:$0xff] %v3138
      %3155 = vst [vmem:[#allocation3 + $0x98] sm:$0xff] %v3139
      %3156 = vst [vmem:[#allocation3 + $0xb0] sm:$0xff] %v3140
      %v3157 = vld [vmem:[%s2828] sm:$0xe]
      %v3158 = vld [vmem:[%s2828 + $0x4] sm:$0xf]
      %v3159 = vld [vmem:[%s2828 + $0x8] sm:$0x1]
      %v3160 = vld [vmem:[%s2828 + $0xc] sm:$0xe]
      %v3161 = vld [vmem:[%s2828 + $0x10] sm:$0xf]
      %v3162 = vld [vmem:[%s2828 + $0x14] sm:$0x1]
      %v3163 = vld [vmem:[%s2828 + $0x18] sm:$0xe]
      %v3164 = vld [vmem:[%s2828 + $0x1c] sm:$0xf]
      %v3165 = vld [vmem:[%s2828 + $0x20] sm:$0x1]
      %v3166 = vld [vmem:[%s2828 + $0x24] sm:$0xe]
      %v3167 = vld [vmem:[%s2828 + $0x28] sm:$0xf]
      %v3168 = vld [vmem:[%s2828 + $0x2c] sm:$0x1]
      %v3169 = vld [vmem:[%s2828 + $0x30] sm:$0xe]
      %v3170 = vld [vmem:[%s2828 + $0x34] sm:$0xf]
      %v3171 = vld [vmem:[%s2828 + $0x38] sm:$0x1]
      %v3172 = vld [vmem:[%s2828 + $0x3c] sm:$0xe]
      %v3173 = vld [vmem:[%s2828 + $0x40] sm:$0xf]
      %v3174 = vld [vmem:[%s2828 + $0x44] sm:$0x1]
      %v3175 = vld [vmem:[%s2828 + $0x48] sm:$0xe]
      %v3176 = vld [vmem:[%s2828 + $0x4c] sm:$0xf]
      %v3177 = vld [vmem:[%s2828 + $0x50] sm:$0x1]
      %v3178 = vld [vmem:[%s2828 + $0x54] sm:$0xe]
      %v3179 = vld [vmem:[%s2828 + $0x58] sm:$0xf]
      %v3180 = vld [vmem:[%s2828 + $0x5c] sm:$0x1]
      %v3205 = vrot.slane %v3157, 5
      %v3206 = vrot.slane %v3205, 4
      %v3207 = vrot.slane %v3158, 5
      %v3208 = vsel %vm1438, %v3206, %v3207
      %v3209 = vrot.slane %v3207, 4
      %v3210 = vrot.slane %v3159, 5
      %v3211 = vsel %vm1438, %v3209, %v3210
      %v3212 = vrot.slane %v3160, 5
      %v3213 = vrot.slane %v3212, 4
      %v3214 = vrot.slane %v3161, 5
      %v3215 = vsel %vm1438, %v3213, %v3214
      %v3216 = vrot.slane %v3214, 4
      %v3217 = vrot.slane %v3162, 5
      %v3218 = vsel %vm1438, %v3216, %v3217
      %v3219 = vrot.slane %v3163, 5
      %v3220 = vrot.slane %v3219, 4
      %v3221 = vrot.slane %v3164, 5
      %v3222 = vsel %vm1438, %v3220, %v3221
      %v3223 = vrot.slane %v3221, 4
      %v3224 = vrot.slane %v3165, 5
      %v3225 = vsel %vm1438, %v3223, %v3224
      %v3226 = vrot.slane %v3166, 5
      %v3227 = vrot.slane %v3226, 4
      %v3228 = vrot.slane %v3167, 5
      %v3229 = vsel %vm1438, %v3227, %v3228
      %v3230 = vrot.slane %v3228, 4
      %v3231 = vrot.slane %v3168, 5
      %v3232 = vsel %vm1438, %v3230, %v3231
      %v3233 = vrot.slane %v3169, 5
      %v3234 = vrot.slane %v3233, 4
      %v3235 = vrot.slane %v3170, 5
      %v3236 = vsel %vm1438, %v3234, %v3235
      %v3237 = vrot.slane %v3235, 4
      %v3238 = vrot.slane %v3171, 5
      %v3239 = vsel %vm1438, %v3237, %v3238
      %v3240 = vrot.slane %v3172, 5
      %v3241 = vrot.slane %v3240, 4
      %v3242 = vrot.slane %v3173, 5
      %v3243 = vsel %vm1438, %v3241, %v3242
      %v3244 = vrot.slane %v3242, 4
      %v3245 = vrot.slane %v3174, 5
      %v3246 = vsel %vm1438, %v3244, %v3245
      %v3247 = vrot.slane %v3175, 5
      %v3248 = vrot.slane %v3247, 4
      %v3249 = vrot.slane %v3176, 5
      %v3250 = vsel %vm1438, %v3248, %v3249
      %v3251 = vrot.slane %v3249, 4
      %v3252 = vrot.slane %v3177, 5
      %v3253 = vsel %vm1438, %v3251, %v3252
      %v3254 = vrot.slane %v3178, 5
      %v3255 = vrot.slane %v3254, 4
      %v3256 = vrot.slane %v3179, 5
      %v3257 = vsel %vm1438, %v3255, %v3256
      %v3258 = vrot.slane %v3256, 4
      %v3259 = vrot.slane %v3180, 5
      %v3260 = vsel %vm1438, %v3258, %v3259
      %v3261 = vunpack.c.l.b16 %v3208
      %v3262 = vunpack.c.l.b16 %v3211
      %v3263 = vunpack.c.l.b16 %v3215
      %v3264 = vunpack.c.l.b16 %v3218
      %v3265 = vunpack.c.l.b16 %v3222
      %v3266 = vunpack.c.l.b16 %v3225
      %v3267 = vunpack.c.l.b16 %v3229
      %v3268 = vunpack.c.l.b16 %v3232
      %v3269 = vunpack.c.l.b16 %v3236
      %v3270 = vunpack.c.l.b16 %v3239
      %v3271 = vunpack.c.l.b16 %v3243
      %v3272 = vunpack.c.l.b16 %v3246
      %v3273 = vunpack.c.l.b16 %v3250
      %v3274 = vunpack.c.l.b16 %v3253
      %v3275 = vunpack.c.l.b16 %v3257
      %v3276 = vunpack.c.l.b16 %v3260
      %v3277 = vpack.c.b16 %v3262, %v3261
      %v3278 = vpack.c.b16 %v3264, %v3263
      %v3279 = vpack.c.b16 %v3266, %v3265
      %v3280 = vpack.c.b16 %v3268, %v3267
      %v3281 = vpack.c.b16 %v3270, %v3269
      %v3282 = vpack.c.b16 %v3272, %v3271
      %v3283 = vpack.c.b16 %v3274, %v3273
      %v3284 = vpack.c.b16 %v3276, %v3275
      %3293 = vst [vmem:[#allocation3 + $0x10] sm:$0xff] %v3277
      %3294 = vst [vmem:[#allocation3 + $0x28] sm:$0xff] %v3278
      %3295 = vst [vmem:[#allocation3 + $0x40] sm:$0xff] %v3279
      %3296 = vst [vmem:[#allocation3 + $0x58] sm:$0xff] %v3280
      %3297 = vst [vmem:[#allocation3 + $0x70] sm:$0xff] %v3281
      %3298 = vst [vmem:[#allocation3 + $0x88] sm:$0xff] %v3282
      %3299 = vst [vmem:[#allocation3 + $0xa0] sm:$0xff] %v3283
      %3300 = vst [vmem:[#allocation3 + $0xb8] sm:$0xff] %v3284
      %v3301 = vld [vmem:[#allocation3] sm:$0xff]
      %v3302 = vld [vmem:[#allocation3 + $0x8] sm:$0xff]
      %v3303 = vld [vmem:[#allocation3 + $0x10] sm:$0xff]
      %v3304 = vld [vmem:[#allocation3 + $0x18] sm:$0xff]
      %v3305 = vld [vmem:[#allocation3 + $0x20] sm:$0xff]
      %v3306 = vld [vmem:[#allocation3 + $0x28] sm:$0xff]
      %v3307 = vld [vmem:[#allocation3 + $0x30] sm:$0xff]
      %v3308 = vld [vmem:[#allocation3 + $0x38] sm:$0xff]
      %v3309 = vld [vmem:[#allocation3 + $0x40] sm:$0xff]
      %v3310 = vld [vmem:[#allocation3 + $0x48] sm:$0xff]
      %v3311 = vld [vmem:[#allocation3 + $0x50] sm:$0xff]
      %v3312 = vld [vmem:[#allocation3 + $0x58] sm:$0xff]
      %v3313 = vld [vmem:[#allocation3 + $0x60] sm:$0xff]
      %v3314 = vld [vmem:[#allocation3 + $0x68] sm:$0xff]
      %v3315 = vld [vmem:[#allocation3 + $0x70] sm:$0xff]
      %v3316 = vld [vmem:[#allocation3 + $0x78] sm:$0xff]
      %v3317 = vld [vmem:[#allocation3 + $0x80] sm:$0xff]
      %v3318 = vld [vmem:[#allocation3 + $0x88] sm:$0xff]
      %v3319 = vld [vmem:[#allocation3 + $0x90] sm:$0xff]
      %v3320 = vld [vmem:[#allocation3 + $0x98] sm:$0xff]
      %v3321 = vld [vmem:[#allocation3 + $0xa0] sm:$0xff]
      %v3322 = vld [vmem:[#allocation3 + $0xa8] sm:$0xff]
      %v3323 = vld [vmem:[#allocation3 + $0xb0] sm:$0xff]
      %v3324 = vld [vmem:[#allocation3 + $0xb8] sm:$0xff]
      %s3325 = scalar_lea.vmem %s3, 384
      %v3326 = vld [vmem:[%s3325] sm:$0xf]
      %v3327 = vld [vmem:[%s3325 + $0x4] sm:$0xf]
      %v3328 = vld [vmem:[%s3325 + $0x8] sm:$0xf]
      %v3329 = vld [vmem:[%s3325 + $0xc] sm:$0xf]
      %v3330 = vld [vmem:[%s3325 + $0x10] sm:$0xf]
      %v3331 = vld [vmem:[%s3325 + $0x14] sm:$0xf]
      %v3332 = vld [vmem:[%s3325 + $0x18] sm:$0xf]
      %v3333 = vld [vmem:[%s3325 + $0x1c] sm:$0xf]
      %v3334 = vld [vmem:[%s3325 + $0x20] sm:$0xf]
      %v3335 = vld [vmem:[%s3325 + $0x24] sm:$0xf]
      %v3336 = vld [vmem:[%s3325 + $0x28] sm:$0xf]
      %v3337 = vld [vmem:[%s3325 + $0x2c] sm:$0xf]
      %v3338 = vld [vmem:[%s3325 + $0x30] sm:$0xf]
      %v3339 = vld [vmem:[%s3325 + $0x34] sm:$0xf]
      %v3340 = vld [vmem:[%s3325 + $0x38] sm:$0xf]
      %v3341 = vld [vmem:[%s3325 + $0x3c] sm:$0xf]
      %v3342 = vld [vmem:[%s3325 + $0x40] sm:$0xf]
      %v3343 = vld [vmem:[%s3325 + $0x44] sm:$0xf]
      %v3344 = vld [vmem:[%s3325 + $0x48] sm:$0xf]
      %v3345 = vld [vmem:[%s3325 + $0x4c] sm:$0xf]
      %v3346 = vld [vmem:[%s3325 + $0x50] sm:$0xf]
      %v3347 = vld [vmem:[%s3325 + $0x54] sm:$0xf]
      %v3348 = vld [vmem:[%s3325 + $0x58] sm:$0xf]
      %v3349 = vld [vmem:[%s3325 + $0x5c] sm:$0xf]
      %v3350 = vld [vmem:[%s3325 + $0x60] sm:$0xf]
      %v3351 = vld [vmem:[%s3325 + $0x64] sm:$0xf]
      %v3352 = vld [vmem:[%s3325 + $0x68] sm:$0xf]
      %v3353 = vld [vmem:[%s3325 + $0x6c] sm:$0xf]
      %v3354 = vld [vmem:[%s3325 + $0x70] sm:$0xf]
      %v3355 = vld [vmem:[%s3325 + $0x74] sm:$0xf]
      %v3356 = vld [vmem:[%s3325 + $0x78] sm:$0xf]
      %v3357 = vld [vmem:[%s3325 + $0x7c] sm:$0xf]
      %v3358 = vld [vmem:[%s3325 + $0x80] sm:$0xf]
      %v3359 = vld [vmem:[%s3325 + $0x84] sm:$0xf]
      %v3360 = vld [vmem:[%s3325 + $0x88] sm:$0xf]
      %v3361 = vld [vmem:[%s3325 + $0x8c] sm:$0xf]
      %v3362 = vld [vmem:[%s3325 + $0x90] sm:$0xf]
      %v3363 = vld [vmem:[%s3325 + $0x94] sm:$0xf]
      %v3364 = vld [vmem:[%s3325 + $0x98] sm:$0xf]
      %v3365 = vld [vmem:[%s3325 + $0x9c] sm:$0xf]
      %v3366 = vld [vmem:[%s3325 + $0xa0] sm:$0xf]
      %v3367 = vld [vmem:[%s3325 + $0xa4] sm:$0xf]
      %v3368 = vld [vmem:[%s3325 + $0xa8] sm:$0xf]
      %v3369 = vld [vmem:[%s3325 + $0xac] sm:$0xf]
      %v3370 = vld [vmem:[%s3325 + $0xb0] sm:$0xf]
      %v3371 = vld [vmem:[%s3325 + $0xb4] sm:$0xf]
      %v3372 = vld [vmem:[%s3325 + $0xb8] sm:$0xf]
      %v3373 = vld [vmem:[%s3325 + $0xbc] sm:$0xf]
      %v3422 = vunpack.c.l.b16 %v3326
      %v3423 = vunpack.c.l.b16 %v3327
      %v3424 = vunpack.c.l.b16 %v3328
      %v3425 = vunpack.c.l.b16 %v3329
      %v3426 = vunpack.c.l.b16 %v3330
      %v3427 = vunpack.c.l.b16 %v3331
      %v3428 = vunpack.c.l.b16 %v3332
      %v3429 = vunpack.c.l.b16 %v3333
      %v3430 = vunpack.c.l.b16 %v3334
      %v3431 = vunpack.c.l.b16 %v3335
      %v3432 = vunpack.c.l.b16 %v3336
      %v3433 = vunpack.c.l.b16 %v3337
      %v3434 = vunpack.c.l.b16 %v3338
      %v3435 = vunpack.c.l.b16 %v3339
      %v3436 = vunpack.c.l.b16 %v3340
      %v3437 = vunpack.c.l.b16 %v3341
      %v3438 = vunpack.c.l.b16 %v3342
      %v3439 = vunpack.c.l.b16 %v3343
      %v3440 = vunpack.c.l.b16 %v3344
      %v3441 = vunpack.c.l.b16 %v3345
      %v3442 = vunpack.c.l.b16 %v3346
      %v3443 = vunpack.c.l.b16 %v3347
      %v3444 = vunpack.c.l.b16 %v3348
      %v3445 = vunpack.c.l.b16 %v3349
      %v3446 = vunpack.c.l.b16 %v3350
      %v3447 = vunpack.c.l.b16 %v3351
      %v3448 = vunpack.c.l.b16 %v3352
      %v3449 = vunpack.c.l.b16 %v3353
      %v3450 = vunpack.c.l.b16 %v3354
      %v3451 = vunpack.c.l.b16 %v3355
      %v3452 = vunpack.c.l.b16 %v3356
      %v3453 = vunpack.c.l.b16 %v3357
      %v3454 = vunpack.c.l.b16 %v3358
      %v3455 = vunpack.c.l.b16 %v3359
      %v3456 = vunpack.c.l.b16 %v3360
      %v3457 = vunpack.c.l.b16 %v3361
      %v3458 = vunpack.c.l.b16 %v3362
      %v3459 = vunpack.c.l.b16 %v3363
      %v3460 = vunpack.c.l.b16 %v3364
      %v3461 = vunpack.c.l.b16 %v3365
      %v3462 = vunpack.c.l.b16 %v3366
      %v3463 = vunpack.c.l.b16 %v3367
      %v3464 = vunpack.c.l.b16 %v3368
      %v3465 = vunpack.c.l.b16 %v3369
      %v3466 = vunpack.c.l.b16 %v3370
      %v3467 = vunpack.c.l.b16 %v3371
      %v3468 = vunpack.c.l.b16 %v3372
      %v3469 = vunpack.c.l.b16 %v3373
      %v3470 = vpack.c.b16 %v3423, %v3422
      %v3471 = vpack.c.b16 %v3425, %v3424
      %v3472 = vpack.c.b16 %v3427, %v3426
      %v3473 = vpack.c.b16 %v3429, %v3428
      %v3474 = vpack.c.b16 %v3431, %v3430
      %v3475 = vpack.c.b16 %v3433, %v3432
      %v3476 = vpack.c.b16 %v3435, %v3434
      %v3477 = vpack.c.b16 %v3437, %v3436
      %v3478 = vpack.c.b16 %v3439, %v3438
      %v3479 = vpack.c.b16 %v3441, %v3440
      %v3480 = vpack.c.b16 %v3443, %v3442
      %v3481 = vpack.c.b16 %v3445, %v3444
      %v3482 = vpack.c.b16 %v3447, %v3446
      %v3483 = vpack.c.b16 %v3449, %v3448
      %v3484 = vpack.c.b16 %v3451, %v3450
      %v3485 = vpack.c.b16 %v3453, %v3452
      %v3486 = vpack.c.b16 %v3455, %v3454
      %v3487 = vpack.c.b16 %v3457, %v3456
      %v3488 = vpack.c.b16 %v3459, %v3458
      %v3489 = vpack.c.b16 %v3461, %v3460
      %v3490 = vpack.c.b16 %v3463, %v3462
      %v3491 = vpack.c.b16 %v3465, %v3464
      %v3492 = vpack.c.b16 %v3467, %v3466
      %v3493 = vpack.c.b16 %v3469, %v3468
      %3518 = vmatprep.subr.bf16.mxu0 0
      %3519 = vmatpush1.bf16.msra.mxu0 %v3470
      %3520 = vmatprep.subr.bf16.mxu0 0
      %3521 = vmatpush1.bf16.msra.mxu0 %v3471
      %3522 = vmatprep.subr.bf16.mxu0 0
      %3523 = vmatpush1.bf16.msra.mxu0 %v3472
      %3524 = vmatprep.subr.bf16.mxu0 0
      %3525 = vmatpush1.bf16.msra.mxu0 %v3473
      %3526 = vmatprep.subr.bf16.mxu0 0
      %3527 = vmatpush1.bf16.msra.mxu0 %v3474
      %3528 = vmatprep.subr.bf16.mxu0 0
      %3529 = vmatpush1.bf16.msra.mxu0 %v3475
      %3530 = vmatprep.subr.bf16.mxu0 0
      %3531 = vmatpush1.bf16.msra.mxu0 %v3476
      %3532 = vmatprep.subr.bf16.mxu0 0
      %3533 = vmatpush1.bf16.msra.mxu0 %v3477
      %3534 = vmatprep.subr.bf16.mxu0 0
      %3535 = vmatpush1.bf16.msra.mxu0 %v3478
      %3536 = vmatprep.subr.bf16.mxu0 0
      %3537 = vmatpush1.bf16.msra.mxu0 %v3479
      %3538 = vmatprep.subr.bf16.mxu0 0
      %3539 = vmatpush1.bf16.msra.mxu0 %v3480
      %3540 = vmatprep.subr.bf16.mxu0 0
      %3541 = vmatpush1.bf16.msra.mxu0 %v3481
      %3542 = vmatprep.subr.bf16.mxu0 0
      %3543 = vmatpush1.bf16.msra.mxu0 %v3482
      %3544 = vmatprep.subr.bf16.mxu0 0
      %3545 = vmatpush1.bf16.msra.mxu0 %v3483
      %3546 = vmatprep.subr.bf16.mxu0 0
      %3547 = vmatpush1.bf16.msra.mxu0 %v3484
      %3548 = vmatprep.subr.bf16.mxu0 0
      %3549 = vmatpush1.bf16.msra.mxu0 %v3485
      %3550 = vmatprep.mubr.bf16.mxu0 %v3302
      %3551 = vmatmul.mubr.bf16.gmra.mrb[0].mxu0 %v3301
      %v3552 = vpop.f32.mrb[0].mxu0
      %v3553 = vadd.f32 0.0, %v3552
      %v3554 = vpop.f32.mrb[0].mxu0
      %v3555 = vpop.f32.mrb[0].mxu0
      %v3556 = vadd.f32 0.0, %v3555
      %v3557 = vpop.f32.mrb[0].mxu0
      %3558 = vmatprep.mubr.bf16.mxu0 %v3305
      %3559 = vmatmul.mubr.bf16.gmra.mrb[0].mxu0 %v3304
      %v3560 = vpop.f32.mrb[0].mxu0
      %v3561 = vadd.f32 0.0, %v3560
      %v3562 = vpop.f32.mrb[0].mxu0
      %v3563 = vpop.f32.mrb[0].mxu0
      %v3564 = vadd.f32 0.0, %v3563
      %v3565 = vpop.f32.mrb[0].mxu0
      %3566 = vmatprep.mubr.bf16.mxu0 %v3308
      %3567 = vmatmul.mubr.bf16.gmra.mrb[0].mxu0 %v3307
      %v3568 = vpop.f32.mrb[0].mxu0
      %v3569 = vadd.f32 0.0, %v3568
      %v3570 = vpop.f32.mrb[0].mxu0
      %v3571 = vpop.f32.mrb[0].mxu0
      %v3572 = vadd.f32 0.0, %v3571
      %v3573 = vpop.f32.mrb[0].mxu0
      %3574 = vmatprep.mubr.bf16.mxu0 %v3311
      %3575 = vmatmul.mubr.bf16.gmra.mrb[0].mxu0 %v3310
      %v3576 = vpop.f32.mrb[0].mxu0
      %v3577 = vadd.f32 0.0, %v3576
      %v3578 = vpop.f32.mrb[0].mxu0
      %v3579 = vpop.f32.mrb[0].mxu0
      %v3580 = vadd.f32 0.0, %v3579
      %v3581 = vpop.f32.mrb[0].mxu0
      %3582 = vmatprep.mubr.bf16.mxu0 %v3314
      %3583 = vmatmul.mubr.bf16.gmra.mrb[0].mxu0 %v3313
      %v3584 = vpop.f32.mrb[0].mxu0
      %v3585 = vadd.f32 0.0, %v3584
      %v3586 = vpop.f32.mrb[0].mxu0
      %v3587 = vpop.f32.mrb[0].mxu0
      %v3588 = vadd.f32 0.0, %v3587
      %v3589 = vpop.f32.mrb[0].mxu0
      %3590 = vmatprep.mubr.bf16.mxu0 %v3317
      %3591 = vmatmul.mubr.bf16.gmra.mrb[0].mxu0 %v3316
      %v3592 = vpop.f32.mrb[0].mxu0
      %v3593 = vadd.f32 0.0, %v3592
      %v3594 = vpop.f32.mrb[0].mxu0
      %v3595 = vpop.f32.mrb[0].mxu0
      %v3596 = vadd.f32 0.0, %v3595
      %v3597 = vpop.f32.mrb[0].mxu0
      %3598 = vmatprep.mubr.bf16.mxu0 %v3320
      %3599 = vmatmul.mubr.bf16.gmra.mrb[0].mxu0 %v3319
      %v3600 = vpop.f32.mrb[0].mxu0
      %v3601 = vadd.f32 0.0, %v3600
      %v3602 = vpop.f32.mrb[0].mxu0
      %v3603 = vpop.f32.mrb[0].mxu0
      %v3604 = vadd.f32 0.0, %v3603
      %v3605 = vpop.f32.mrb[0].mxu0
      %3606 = vmatprep.mubr.bf16.mxu0 %v3323
      %3607 = vmatmul.mubr.bf16.gmra.mrb[0].mxu0 %v3322
      %v3608 = vpop.f32.mrb[0].mxu0
      %v3609 = vadd.f32 0.0, %v3608
      %v3610 = vpop.f32.mrb[0].mxu0
      %v3611 = vpop.f32.mrb[0].mxu0
      %v3612 = vadd.f32 0.0, %v3611
      %v3613 = vpop.f32.mrb[0].mxu0
      %3614 = vdwg.mxu0
      %3615 = vmatprep.subr.bf16.mxu0 0
      %3616 = vmatpush1.bf16.msra.mxu0 %v3486
      %3617 = vmatprep.subr.bf16.mxu0 0
      %3618 = vmatpush1.bf16.msra.mxu0 %v3487
      %3619 = vmatprep.subr.bf16.mxu0 0
      %3620 = vmatpush1.bf16.msra.mxu0 %v3488
      %3621 = vmatprep.subr.bf16.mxu0 0
      %3622 = vmatpush1.bf16.msra.mxu0 %v3489
      %3623 = vmatprep.subr.bf16.mxu0 0
      %3624 = vmatpush1.bf16.msra.mxu0 %v3490
      %3625 = vmatprep.subr.bf16.mxu0 0
      %3626 = vmatpush1.bf16.msra.mxu0 %v3491
      %3627 = vmatprep.subr.bf16.mxu0 0
      %3628 = vmatpush1.bf16.msra.mxu0 %v3492
      %3629 = vmatprep.subr.bf16.mxu0 0
      %3630 = vmatpush1.bf16.msra.mxu0 %v3493
      %3631 = vmatprep.subr.bf16.mxu0 0
      %3632 = vmatpush1.bf16.msra.mxu0 0
      %3633 = vmatprep.subr.bf16.mxu0 0
      %3634 = vmatpush1.bf16.msra.mxu0 0
      %3635 = vmatprep.subr.bf16.mxu0 0
      %3636 = vmatpush1.bf16.msra.mxu0 0
      %3637 = vmatprep.subr.bf16.mxu0 0
      %3638 = vmatpush1.bf16.msra.mxu0 0
      %3639 = vmatprep.subr.bf16.mxu0 0
      %3640 = vmatpush1.bf16.msra.mxu0 0
      %3641 = vmatprep.subr.bf16.mxu0 0
      %3642 = vmatpush1.bf16.msra.mxu0 0
      %3643 = vmatprep.subr.bf16.mxu0 0
      %3644 = vmatpush1.bf16.msra.mxu0 0
      %3645 = vmatprep.subr.bf16.mxu0 0
      %3646 = vmatpush1.bf16.msra.mxu0 0
      %3647 = vmatprep.mubr.bf16.mxu0 0
      %3648 = vmatmul.mubr.bf16.gmra.mrb[0].mxu0 %v3303
      %v3649 = vpop.f32.mrb[0].mxu0
      %v3650 = vadd.f32 %v3553, %v3649
      %v3651 = vpop.f32.mrb[0].mxu0
      %v3652 = vpop.f32.mrb[0].mxu0
      %v3653 = vadd.f32 %v3556, %v3652
      %v3654 = vpop.f32.mrb[0].mxu0
      %3655 = vmatprep.mubr.bf16.mxu0 0
      %3656 = vmatmul.mubr.bf16.gmra.mrb[0].mxu0 %v3306
      %v3657 = vpop.f32.mrb[0].mxu0
      %v3658 = vadd.f32 %v3561, %v3657
      %v3659 = vpop.f32.mrb[0].mxu0
      %v3660 = vpop.f32.mrb[0].mxu0
      %v3661 = vadd.f32 %v3564, %v3660
      %v3662 = vpop.f32.mrb[0].mxu0
      %3663 = vmatprep.mubr.bf16.mxu0 0
      %3664 = vmatmul.mubr.bf16.gmra.mrb[0].mxu0 %v3309
      %v3665 = vpop.f32.mrb[0].mxu0
      %v3666 = vadd.f32 %v3569, %v3665
      %v3667 = vpop.f32.mrb[0].mxu0
      %v3668 = vpop.f32.mrb[0].mxu0
      %v3669 = vadd.f32 %v3572, %v3668
      %v3670 = vpop.f32.mrb[0].mxu0
      %3671 = vmatprep.mubr.bf16.mxu0 0
      %3672 = vmatmul.mubr.bf16.gmra.mrb[0].mxu0 %v3312
      %v3673 = vpop.f32.mrb[0].mxu0
      %v3674 = vadd.f32 %v3577, %v3673
      %v3675 = vpop.f32.mrb[0].mxu0
      %v3676 = vpop.f32.mrb[0].mxu0
      %v3677 = vadd.f32 %v3580, %v3676
      %v3678 = vpop.f32.mrb[0].mxu0
      %3679 = vmatprep.mubr.bf16.mxu0 0
      %3680 = vmatmul.mubr.bf16.gmra.mrb[0].mxu0 %v3315
      %v3681 = vpop.f32.mrb[0].mxu0
      %v3682 = vadd.f32 %v3585, %v3681
      %v3683 = vpop.f32.mrb[0].mxu0
      %v3684 = vpop.f32.mrb[0].mxu0
      %v3685 = vadd.f32 %v3588, %v3684
      %v3686 = vpop.f32.mrb[0].mxu0
      %3687 = vmatprep.mubr.bf16.mxu0 0
      %3688 = vmatmul.mubr.bf16.gmra.mrb[0].mxu0 %v3318
      %v3689 = vpop.f32.mrb[0].mxu0
      %v3690 = vadd.f32 %v3593, %v3689
      %v3691 = vpop.f32.mrb[0].mxu0
      %v3692 = vpop.f32.mrb[0].mxu0
      %v3693 = vadd.f32 %v3596, %v3692
      %v3694 = vpop.f32.mrb[0].mxu0
      %3695 = vmatprep.mubr.bf16.mxu0 0
      %3696 = vmatmul.mubr.bf16.gmra.mrb[0].mxu0 %v3321
      %v3697 = vpop.f32.mrb[0].mxu0
      %v3698 = vadd.f32 %v3601, %v3697
      %v3699 = vpop.f32.mrb[0].mxu0
      %v3700 = vpop.f32.mrb[0].mxu0
      %v3701 = vadd.f32 %v3604, %v3700
      %v3702 = vpop.f32.mrb[0].mxu0
      %3703 = vmatprep.mubr.bf16.mxu0 0
      %3704 = vmatmul.mubr.bf16.gmra.mrb[0].mxu0 %v3324
      %v3705 = vpop.f32.mrb[0].mxu0
      %v3706 = vadd.f32 %v3609, %v3705
      %v3707 = vpop.f32.mrb[0].mxu0
      %v3708 = vpop.f32.mrb[0].mxu0
      %v3709 = vadd.f32 %v3612, %v3708
      %v3710 = vpop.f32.mrb[0].mxu0
      %3711 = vdwg.mxu0
      %v3712 = vadd.f32 %v2766, %v3650
      %v3713 = vadd.f32 %v2769, %v3653
      %v3714 = vadd.f32 %v2774, %v3658
      %v3715 = vadd.f32 %v2777, %v3661
      %v3716 = vadd.f32 %v2782, %v3666
      %v3717 = vadd.f32 %v2785, %v3669
      %v3718 = vadd.f32 %v2790, %v3674
      %v3719 = vadd.f32 %v2793, %v3677
      %v3720 = vadd.f32 %v2798, %v3682
      %v3721 = vadd.f32 %v2801, %v3685
      %v3722 = vadd.f32 %v2806, %v3690
      %v3723 = vadd.f32 %v2809, %v3693
      %v3724 = vadd.f32 %v2814, %v3698
      %v3725 = vadd.f32 %v2817, %v3701
      %v3726 = vadd.f32 %v2822, %v3706
      %v3727 = vadd.f32 %v2825, %v3709
      %v3728 = vld [vmem:[%s4] sm:$0x1]
      %v3730 = vlaneseq
      %v3731 = vshrl.u32 %v3730, 7
      %v3732 = vsub.s32 0, %v3731
      %v3733 = vrot.slane %v3728, %v3732
      %v3735 = vadd.f32 %v3712, %v3733
      %v3736 = vadd.f32 %v3713, %v3733
      %v3737 = vadd.f32 %v3714, %v3733
      %v3738 = vadd.f32 %v3715, %v3733
      %v3739 = vadd.f32 %v3716, %v3733
      %v3740 = vadd.f32 %v3717, %v3733
      %v3741 = vadd.f32 %v3718, %v3733
      %v3742 = vadd.f32 %v3719, %v3733
      %v3743 = vadd.f32 %v3720, %v3733
      %v3744 = vadd.f32 %v3721, %v3733
      %v3745 = vadd.f32 %v3722, %v3733
      %v3746 = vadd.f32 %v3723, %v3733
      %v3747 = vadd.f32 %v3724, %v3733
      %v3748 = vadd.f32 %v3725, %v3733
      %v3749 = vadd.f32 %v3726, %v3733
      %v3750 = vadd.f32 %v3727, %v3733
      %v3751 = vadd.f32 %v3735, %v3736
      %v3752 = vadd.f32 %v3751, %v3737
      %v3753 = vadd.f32 %v3752, %v3738
      %v3754 = vadd.f32 %v3753, %v3739
      %v3755 = vadd.f32 %v3754, %v3740
      %v3756 = vadd.f32 %v3755, %v3741
      %v3757 = vadd.f32 %v3756, %v3742
      %v3758 = vadd.f32 %v3757, %v3743
      %v3759 = vadd.f32 %v3758, %v3744
      %v3760 = vadd.f32 %v3759, %v3745
      %v3761 = vadd.f32 %v3760, %v3746
      %v3762 = vadd.f32 %v3761, %v3747
      %v3763 = vadd.f32 %v3762, %v3748
      %v3764 = vadd.f32 %v3763, %v3749
      %v3765 = vadd.f32 %v3764, %v3750
      %v3766 = vrot.slane %v3765, 4
      %v3767 = vadd.f32 %v3765, %v3766
      %v3768 = vrot.slane %v3767, 2
      %v3769 = vadd.f32 %v3767, %v3768
      %v3770 = vrot.slane %v3769, 1
      %v3771 = vadd.f32 %v3769, %v3770
      %3772 = vst [vmem:[%s474] sm:$0x1] %v3771
      %v3773 = vmul.f32 %v3735, %v3735
      %v3774 = vmul.f32 %v3736, %v3736
      %v3775 = vmul.f32 %v3737, %v3737
      %v3776 = vmul.f32 %v3738, %v3738
      %v3777 = vmul.f32 %v3739, %v3739
      %v3778 = vmul.f32 %v3740, %v3740
      %v3779 = vmul.f32 %v3741, %v3741
      %v3780 = vmul.f32 %v3742, %v3742
      %v3781 = vmul.f32 %v3743, %v3743
      %v3782 = vmul.f32 %v3744, %v3744
      %v3783 = vmul.f32 %v3745, %v3745
      %v3784 = vmul.f32 %v3746, %v3746
      %v3785 = vmul.f32 %v3747, %v3747
      %v3786 = vmul.f32 %v3748, %v3748
      %v3787 = vmul.f32 %v3749, %v3749
      %v3788 = vmul.f32 %v3750, %v3750
      %v3789 = vadd.f32 %v3773, %v3774
      %v3790 = vadd.f32 %v3789, %v3775
      %v3791 = vadd.f32 %v3790, %v3776
      %v3792 = vadd.f32 %v3791, %v3777
      %v3793 = vadd.f32 %v3792, %v3778
      %v3794 = vadd.f32 %v3793, %v3779
      %v3795 = vadd.f32 %v3794, %v3780
      %v3796 = vadd.f32 %v3795, %v3781
      %v3797 = vadd.f32 %v3796, %v3782
      %v3798 = vadd.f32 %v3797, %v3783
      %v3799 = vadd.f32 %v3798, %v3784
      %v3800 = vadd.f32 %v3799, %v3785
      %v3801 = vadd.f32 %v3800, %v3786
      %v3802 = vadd.f32 %v3801, %v3787
      %v3803 = vadd.f32 %v3802, %v3788
      %v3804 = vrot.slane %v3803, 4
      %v3805 = vadd.f32 %v3803, %v3804
      %v3806 = vrot.slane %v3805, 2
      %v3807 = vadd.f32 %v3805, %v3806
      %v3808 = vrot.slane %v3807, 1
      %v3809 = vadd.f32 %v3807, %v3808
      %3810 = vst [vmem:[%s481] sm:$0x1] %v3809
      %v3811 = vpack.c.bf16 %v3736, %v3735
      %v3812 = vpack.c.bf16 %v3738, %v3737
      %v3813 = vpack.c.bf16 %v3740, %v3739
      %v3814 = vpack.c.bf16 %v3742, %v3741
      %v3815 = vpack.c.bf16 %v3744, %v3743
      %v3816 = vpack.c.bf16 %v3746, %v3745
      %v3817 = vpack.c.bf16 %v3748, %v3747
      %v3818 = vpack.c.bf16 %v3750, %v3749
      %v3827 = vunpack.c.l.b16 %v3811
      %v3828 = vunpack.c.h.b16 %v3811
      %v3829 = vunpack.c.l.b16 %v3812
      %v3830 = vunpack.c.h.b16 %v3812
      %v3831 = vunpack.c.l.b16 %v3813
      %v3832 = vunpack.c.h.b16 %v3813
      %v3833 = vunpack.c.l.b16 %v3814
      %v3834 = vunpack.c.h.b16 %v3814
      %v3835 = vunpack.c.l.b16 %v3815
      %v3836 = vunpack.c.h.b16 %v3815
      %v3837 = vunpack.c.l.b16 %v3816
      %v3838 = vunpack.c.h.b16 %v3816
      %v3839 = vunpack.c.l.b16 %v3817
      %v3840 = vunpack.c.h.b16 %v3817
      %v3841 = vunpack.c.l.b16 %v3818
      %v3842 = vunpack.c.h.b16 %v3818
      %v3843 = vpack.c.b16 %v3827, %v3827
      %v3844 = vpack.c.b16 %v3828, %v3828
      %v3845 = vpack.c.b16 %v3829, %v3829
      %v3846 = vpack.c.b16 %v3830, %v3830
      %v3847 = vpack.c.b16 %v3831, %v3831
      %v3848 = vpack.c.b16 %v3832, %v3832
      %v3849 = vpack.c.b16 %v3833, %v3833
      %v3850 = vpack.c.b16 %v3834, %v3834
      %v3851 = vpack.c.b16 %v3835, %v3835
      %v3852 = vpack.c.b16 %v3836, %v3836
      %v3853 = vpack.c.b16 %v3837, %v3837
      %v3854 = vpack.c.b16 %v3838, %v3838
      %v3855 = vpack.c.b16 %v3839, %v3839
      %v3856 = vpack.c.b16 %v3840, %v3840
      %v3857 = vpack.c.b16 %v3841, %v3841
      %v3858 = vpack.c.b16 %v3842, %v3842
      %3875 = vst [vmem:[%s466] sm:$0xf] %v3843
      %3876 = vst [vmem:[%s466 + $0x4] sm:$0xf] %v3844
      %3877 = vst [vmem:[%s466 + $0x8] sm:$0xf] %v3845
      %3878 = vst [vmem:[%s466 + $0xc] sm:$0xf] %v3846
      %3879 = vst [vmem:[%s466 + $0x10] sm:$0xf] %v3847
      %3880 = vst [vmem:[%s466 + $0x14] sm:$0xf] %v3848
      %3881 = vst [vmem:[%s466 + $0x18] sm:$0xf] %v3849
      %3882 = vst [vmem:[%s466 + $0x1c] sm:$0xf] %v3850
      %3883 = vst [vmem:[%s466 + $0x20] sm:$0xf] %v3851
      %3884 = vst [vmem:[%s466 + $0x24] sm:$0xf] %v3852
      %3885 = vst [vmem:[%s466 + $0x28] sm:$0xf] %v3853
      %3886 = vst [vmem:[%s466 + $0x2c] sm:$0xf] %v3854
      %3887 = vst [vmem:[%s466 + $0x30] sm:$0xf] %v3855
      %3888 = vst [vmem:[%s466 + $0x34] sm:$0xf] %v3856
      %3889 = vst [vmem:[%s466 + $0x38] sm:$0xf] %v3857
      %3890 = vst [vmem:[%s466 + $0x3c] sm:$0xf] %v3858
      %s3891 = smul.u32 8, %s26
      %p3892 = scmp.lt.s32.totalorder %s25, 1
      %s3893 = scalar_select %p3892, %s25, 1
      %p3894 = scmp.lt.s32.totalorder %s3891, 15
      %s3895 = scalar_select %p3894, %s3891, 15
      %s3896 = smul.addr %s3895, 2
      %s3897 = smul.addr %s3893, 32
      %s3898 = sadd.s32 %s3896, %s3897
      %s3899 = smul.addr %s3898, 4
      %s3900 = scalar_lea.vmem %s7, %s3899
      %p3901 = scmp.lt.s32.totalorder %s25, 1
      %s3902 = scalar_select %p3901, %s25, 1
      %p3903 = scmp.lt.s32.totalorder %s26, 1
      %s3904 = scalar_select %p3903, %s26, 1
      %s3905 = smul.addr %s3902, 2
      %s3906 = sadd.s32 %s3904, %s3905
      %s3907 = scalar_lea.vmem %s8, %s3906
      %p3908 = scmp.lt.s32.totalorder %s25, 1
      %s3909 = scalar_select %p3908, %s25, 1
      %p3910 = scmp.lt.s32.totalorder %s26, 1
      %s3911 = scalar_select %p3910, %s26, 1
      %s3912 = smul.addr %s3909, 2
      %s3913 = sadd.s32 %s3911, %s3912
      %s3914 = scalar_lea.vmem %s9, %s3913
      // Predicated region
      $region65: #{two_conv_block.4} parent=47 // pred_check
        %p3915 = pneg %p221
      $region66: #{two_conv_block.4} parent=47 // pred_check_branch
        %3917 = sbr.rel (%p3915) target = $region68
      $region67: #{two_conv_block.4} parent=47 // pred_region
        %s3918 = smul.u32 8, %s26
      $region68: #{two_conv_block.4} parent=47 // pred_fallthru
        _
      // Predicated region
      $region69: #{two_conv_block.4} parent=47 // pred_check
        %p3919 = pneg %p249
      $region70: #{two_conv_block.4} parent=47 // pred_check_branch
        %3921 = sbr.rel (%p3919) target = $region72
      $region71: #{two_conv_block.4} parent=47 // pred_region
        _
      $region72: #{two_conv_block.4} parent=47 // pred_fallthru
        _
      // Predicated region
      $region73: #{two_conv_block.4} parent=47 // pred_check
        %p3922 = pneg %p277
      $region74: #{two_conv_block.4} parent=47 // pred_check_branch
        %3924 = sbr.rel (%p3922) target = $region76
      $region75: #{two_conv_block.4} parent=47 // pred_region
        _
      $region76: #{two_conv_block.4} parent=47 // pred_fallthru
        _
    $region48: #{two_conv_block.4} parent=5 // pred_fallthru
      _
    %p3925 = scmp.le.s32.totalorder 2, %s16
    // Predicated region
    $region77: #{two_conv_block.4} parent=5 // pred_check
      %p3926 = pneg %p3925
    $region78: #{two_conv_block.4} parent=5 // pred_check_branch
      %3928 = sbr.rel (%p3926) target = $region80
    $region79: #{two_conv_block.4} parent=5 // pred_region
      %s3929 = ssub.s32 %s16, 2
      // Predicated region
      $region81: #{two_conv_block.4} parent=79 // pred_check
        %p3930 = pneg %p227
      $region82: #{two_conv_block.4} parent=79 // pred_check_branch
        %3932 = sbr.rel (%p3930) target = $region84
      $region83: #{two_conv_block.4} parent=79 // pred_region
        %s3933 = smul.u32 8, %s28
        %p3934 = scmp.lt.s32.totalorder %s27, 1
        %s3935 = scalar_select %p3934, %s27, 1
        %p3936 = scmp.lt.s32.totalorder %s3933, 15
        %s3937 = scalar_select %p3936, %s3933, 15
        %s3938 = smul.addr %s3937, 2
        %s3939 = smul.addr %s3935, 32
        %s3940 = sadd.s32 %s3938, %s3939
        %s3941 = smul.addr %s3940, 4
        %s3942 = scalar_lea.vmem %s7, %s3941
      $region84: #{two_conv_block.4} parent=79 // pred_fallthru
        _
      // Predicated region
      $region85: #{two_conv_block.4} parent=79 // pred_check
        %p3943 = pneg %p255
      $region86: #{two_conv_block.4} parent=79 // pred_check_branch
        %3945 = sbr.rel (%p3943) target = $region88
      $region87: #{two_conv_block.4} parent=79 // pred_region
        %p3946 = scmp.lt.s32.totalorder %s27, 1
        %s3947 = scalar_select %p3946, %s27, 1
        %p3948 = scmp.lt.s32.totalorder %s28, 1
        %s3949 = scalar_select %p3948, %s28, 1
        %s3950 = smul.addr %s3947, 2
        %s3951 = sadd.s32 %s3949, %s3950
        %s3952 = scalar_lea.vmem %s8, %s3951
      $region88: #{two_conv_block.4} parent=79 // pred_fallthru
        _
      // Predicated region
      $region89: #{two_conv_block.4} parent=79 // pred_check
        %p3953 = pneg %p283
      $region90: #{two_conv_block.4} parent=79 // pred_check_branch
        %3955 = sbr.rel (%p3953) target = $region92
      $region91: #{two_conv_block.4} parent=79 // pred_region
        %p3956 = scmp.lt.s32.totalorder %s27, 1
        %s3957 = scalar_select %p3956, %s27, 1
        %p3958 = scmp.lt.s32.totalorder %s28, 1
        %s3959 = scalar_select %p3958, %s28, 1
        %s3960 = smul.addr %s3957, 2
        %s3961 = sadd.s32 %s3959, %s3960
        %s3962 = scalar_lea.vmem %s9, %s3961
      $region92: #{two_conv_block.4} parent=79 // pred_fallthru
        _
    $region80: #{two_conv_block.4} parent=5 // pred_fallthru
      _
  $region6: #{two_conv_block.4} parent=0 // loop_footer
    %s20 = sadd.s32 1, %s16
  $region7: #{two_conv_block.4} parent=0 // loop_footer_branch
    %15 = sbr.rel target = $region3
  $region8: #{two_conv_block.4} parent=0 // loop_exit
    _

</llo_original>
